<compile_context>
chip_gen: v6e
topology: v6e:2x2x1
jax: 0.10.0
libtpu: 0.0.40
codegen_flags: <defaults>
</compile_context>

<pallas_src>
import jax
import jax.numpy as jnp
from jax.experimental import pallas as pl
from jax.experimental.pallas import tpu as pltpu


# ---------------------------------------------------------------------------
# Pallas kernel
# ---------------------------------------------------------------------------
def _forward_rel_kernel(x_ref, wf_ref, bf_ref, eh_ref, et_ref, wb_ref, bb_ref,
                        logits_ref, scl_ref):
    """One tile of (head, tail) pairs.

    x_ref  : (R, TN, 4D)   [hs, rs, ts, rs] per pair/relation, MXU dtype
    wf_ref : (4D, 2E)      fused block-diagonal extractor weight
    bf_ref : (1, 2E)  f32  fused extractor bias
    eh_ref : (2E, E*B)     0/1 expansion matrix (head operand of the outer prod)
    et_ref : (2E, E*B)     0/1 expansion matrix (tail operand)
    wb_ref : (E*B, Lp)     classifier weight (labels padded to 128 lanes)
    bb_ref : (1, Lp)  f32  classifier bias
    """
    R, TN, _ = x_ref.shape
    EB = eh_ref.shape[1]

    # Per-r accumulation of the block outer product: the (TN*R)-wide bilinear
    # slab never exists, and the mean over R needs no reshape/relayout.
    acc = jnp.zeros((TN, EB), jnp.float32)
    for r in range(R):                                   # static unroll, R small
        # Fused extractors: one K=4D, N=2E matmul + one tanh stream.
        ht = jnp.tanh(jnp.dot(x_ref[r], wf_ref[...],
                              preferred_element_type=jnp.float32)
                      + bf_ref[...])                     # (TN, 2E) f32
        ht_m = ht.astype(eh_ref.dtype)
        # Block outer product via MXU expansion (moves the element-repeat /
        # tile relayout work from XLU/VPU onto the mostly idle MXU):
        #   h_exp[n, blk*B*B + i*B + j] = hh[n, blk*B + i]
        #   t_til[n, blk*B*B + i*B + j] = tt[n, blk*B + j]
        h_exp = jnp.dot(ht_m, eh_ref[...], preferred_element_type=jnp.float32)
        t_til = jnp.dot(ht_m, et_ref[...], preferred_element_type=jnp.float32)
        acc = acc + h_exp * t_til                        # (TN, E*B) f32

    bl_mean = acc * (1.0 / R)                            # mean over R (exact hoist)
    scl_ref[...] = bl_mean.astype(scl_ref.dtype)         # bf16 by default

    # Single classifier matmul, K = E*B.
    logits_ref[...] = (jnp.dot(bl_mean.astype(wb_ref.dtype), wb_ref[...],
                               preferred_element_type=jnp.float32)
                       + bb_ref[...])


# ---------------------------------------------------------------------------
# Weight-side preparation (call once at model init -- hoisted per review)
# ---------------------------------------------------------------------------
def _expansion_matrices(E, B, dtype):
    """0/1 matrices mapping the fused extractor output (2E) to the (E*B)
    operands of the block outer product (b1.unsqueeze(4) * b2.unsqueeze(3))."""
    EB = E * B
    m = jnp.arange(EB)
    blk = m // (B * B)
    i = (m // B) % B
    j = m % B
    h_src = blk * B + i            # column of hh inside ht[:, :E]
    t_src = E + blk * B + j        # column of tt inside ht[:, E:]
    rows = jnp.arange(2 * E)[:, None]
    eh = (rows == h_src[None, :]).astype(dtype)
    et = (rows == t_src[None, :]).astype(dtype)
    return eh, et


def prepare_forward_rel_params(wh, bh, wt, bt, wb, bb, *, block_size,
                               mxu_dtype=jnp.bfloat16):
    """Fuse/cast/pad all weights once (not per forward call)."""
    D2, E = wh.shape           # (2*reduced_dim, extractor_dim)
    L = wb.shape[1]
    assert E % block_size == 0

    # Fused block-diagonal extractor weight: x4 = [hs, rs, ts, rs] (4D) ->
    # [head_out | tail_out] (2E).
    z = jnp.zeros_like(wh)
    wf = jnp.concatenate([jnp.concatenate([wh, z], axis=1),
                          jnp.concatenate([z, wt], axis=1)], axis=0)  # (4D, 2E)
    bf = jnp.concatenate([bh, bt], axis=-1)                           # (1, 2E)

    # Pad num_labels to a lane-dense multiple of 128 (unmasked stores).
    Lp = ((L + 127) // 128) * 128
    wbp = jnp.pad(wb, ((0, 0), (0, Lp - L)))
    bbp = jnp.pad(bb, ((0, 0), (0, Lp - L)))

    eh, et = _expansion_matrices(E, block_size, mxu_dtype)

    return {
        "wf": wf.astype(mxu_dtype),
        "bf": bf.astype(jnp.float32),
        "eh": eh,
        "et": et,
        "wb": wbp.astype(mxu_dtype),
        "bb": bbp.astype(jnp.float32),
        "num_labels": L,
        "block_size": block_size,
        "extractor_dim": E,
    }


# ---------------------------------------------------------------------------
# Wrapper
# ---------------------------------------------------------------------------
def _vmem_limit_bytes(tile_n, R, d4, e2, eb, lp, mxu_bytes, scl_bytes):
    dbuf = 2  # Pallas double-buffers pipelined inputs/outputs
    act_in = dbuf * R * tile_n * d4 * mxu_bytes
    weights = dbuf * ((d4 * e2 + 2 * e2 * eb + eb * lp) * mxu_bytes
                      + (e2 + lp) * 4)
    outputs = dbuf * tile_n * (eb * scl_bytes + lp * 4)
    temps = tile_n * (3 * eb + e2) * 4        # acc + h_exp + t_til + ht (f32)
    est = act_in + weights + outputs + temps
    # 1.5x headroom for Mosaic-internal scratch; floor 32 MiB, cap 56 MiB so it
    # stays within every generation's physical VMEM (v7x: 64 MiB per TC).
    return int(min(max(int(est * 1.5), 32 * 1024 * 1024), 56 * 1024 * 1024))


def forward_rel_pallas(hs, ts, rs, params, *, tile_n=512,
                       scl_dtype=jnp.bfloat16, vmem_limit_bytes=None):
    """forward_rel on TPU.  hs/ts/rs: (N, R, reduced_dim) f32.
    Returns (logits (N, num_labels) f32, SCL_bl (N, E*block_size) scl_dtype)."""
    N, R, D = hs.shape
    wf, bf = params["wf"], params["bf"]
    eh, et = params["eh"], params["et"]
    wbp, bbp = params["wb"], params["bb"]
    L = params["num_labels"]
    mxu_dtype = wf.dtype
    D4, E2 = wf.shape
    EB = eh.shape[1]
    Lp = wbp.shape[1]
    assert D4 == 4 * D

    # Activation-side prep (the only per-call preprocessing):
    #   [hs, rs, ts, rs] concat -> (R, N, 4D) so the kernel sees lane-dense
    #   (tile_n, 128) slices per r with no in-kernel reshape.
    x4 = jnp.concatenate([hs, rs, ts, rs], axis=-1)      # (N, R, 4D)
    x4 = jnp.transpose(x4, (1, 0, 2)).astype(mxu_dtype)  # (R, N, 4D)
    n_pad = (-N) % tile_n
    if n_pad:
        x4 = jnp.pad(x4, ((0, 0), (0, n_pad), (0, 0)))
    Np = N + n_pad

    if vmem_limit_bytes is None:
        vmem_limit_bytes = _vmem_limit_bytes(
            tile_n, R, D4, E2, EB, Lp,
            mxu_bytes=jnp.dtype(mxu_dtype).itemsize,
            scl_bytes=jnp.dtype(scl_dtype).itemsize)

    grid = (Np // tile_n,)
    in_specs = [
        pl.BlockSpec((R, tile_n, D4), lambda i: (0, i, 0)),   # x4
        pl.BlockSpec((D4, E2), lambda i: (0, 0)),             # fused extractor W
        pl.BlockSpec((1, E2), lambda i: (0, 0)),              # fused extractor b
        pl.BlockSpec((E2, EB), lambda i: (0, 0)),             # head expansion
        pl.BlockSpec((E2, EB), lambda i: (0, 0)),             # tail expansion
        pl.BlockSpec((EB, Lp), lambda i: (0, 0)),             # bilinear W (padded)
        pl.BlockSpec((1, Lp), lambda i: (0, 0)),              # bilinear b (padded)
    ]
    out_specs = [
        pl.BlockSpec((tile_n, Lp), lambda i: (i, 0)),         # logits (padded)
        pl.BlockSpec((tile_n, EB), lambda i: (i, 0)),         # SCL_bl
    ]
    out_shape = [
        jax.ShapeDtypeStruct((Np, Lp), jnp.float32),
        jax.ShapeDtypeStruct((Np, EB), scl_dtype),
    ]

    logits_p, scl_p = pl.pallas_call(
        _forward_rel_kernel,
        grid=grid,
        in_specs=in_specs,
        out_specs=out_specs,
        out_shape=out_shape,
        compiler_params=pltpu.CompilerParams(
            # TODO(synk): on v7x, profile TC occupancy; switch to
            # pltpu.CORE_PARALLEL / pl.core_map if one TensorCore idles.
            dimension_semantics=("parallel",),
            vmem_limit_bytes=vmem_limit_bytes),
    )(x4, wf, bf, eh, et, wbp, bbp)

    return logits_p[:N, :L], scl_p[:N]


# ---------------------------------------------------------------------------
# Plain-JAX reference (mirrors the PyTorch forward_rel line by line, f32)
# ---------------------------------------------------------------------------
def forward_rel_ref(hs, ts, rs, wh, bh, wt, bt, wb, bb, *, block_size):
    N, R, D = hs.shape
    E = wh.shape[1]
    h = jnp.tanh(jnp.concatenate([hs, rs], -1) @ wh + bh)
    t = jnp.tanh(jnp.concatenate([ts, rs], -1) @ wt + bt)
    b1 = h.reshape(N, R, E // block_size, block_size, 1)
    b2 = t.reshape(N, R, E // block_size, 1, block_size)
    bl = (b1 * b2).reshape(N, R, E * block_size)
    logits = bl @ wb + bb
    return logits.mean(axis=1), bl.mean(axis=1)


# ---------------------------------------------------------------------------
# Driver
# ---------------------------------------------------------------------------
if __name__ == "__main__":
    N = 200           # number of (head, tail) entity pairs (ragged: tests padding)
    R = 4             # Relation_Specific_num
    D = 32            # reduced_dim
    E = 64            # extractor_dim
    BLOCK = 16        # block_size
    L = 8             # config.num_labels

    key = jax.random.PRNGKey(0)
    ks = jax.random.split(key, 9)
    f32 = jnp.float32

    hs = jax.random.normal(ks[0], (N, R, D), f32)
    ts = jax.random.normal(ks[1], (N, R, D), f32)
    rs = jax.random.normal(ks[2], (N, R, D), f32)

    # nn.Linear(2*reduced_dim, extractor_dim) weights, stored (in, out).
    wh = jax.random.normal(ks[3], (2 * D, E), f32) * 0.05
    bh = jax.random.normal(ks[4], (1, E), f32) * 0.05
    wt = jax.random.normal(ks[5], (2 * D, E), f32) * 0.05
    bt = jax.random.normal(ks[6], (1, E), f32) * 0.05
    # nn.Linear(extractor_dim * block_size, num_labels), stored (in, out).
    wb = jax.random.normal(ks[7], (E * BLOCK, L), f32) * 0.05
    bb = jax.random.normal(ks[8], (1, L), f32) * 0.05

    ref_lg, ref_scl = forward_rel_ref(hs, ts, rs, wh, bh, wt, bt, wb, bb,
                                      block_size=BLOCK)

    # --- f32 MXU path, small tile (exercises multi-step grid + padding) ----
    params32 = prepare_forward_rel_params(wh, bh, wt, bt, wb, bb,
                                          block_size=BLOCK,
                                          mxu_dtype=jnp.float32)
    lg32, scl32 = forward_rel_pallas(hs, ts, rs, params32, tile_n=128,
                                     scl_dtype=jnp.float32)
    jax.block_until_ready((lg32, scl32))
    assert lg32.shape == (N, L) and scl32.shape == (N, E * BLOCK)
    assert jnp.allclose(lg32, ref_lg, atol=3e-2, rtol=3e-2)
    assert jnp.allclose(scl32, ref_scl, atol=3e-2, rtol=3e-2)

    # --- bf16 MXU fast path, default tile_n=512, bf16 SCL output -----------
    params16 = prepare_forward_rel_params(wh, bh, wt, bt, wb, bb,
                                          block_size=BLOCK,
                                          mxu_dtype=jnp.bfloat16)
    lg16, scl16 = forward_rel_pallas(hs, ts, rs, params16)   # defaults
    jax.block_until_ready((lg16, scl16))
    assert lg16.shape == (N, L) and scl16.shape == (N, E * BLOCK)
    assert scl16.dtype == jnp.bfloat16
    assert jnp.allclose(lg16, ref_lg, atol=8e-2, rtol=8e-2)
    assert jnp.allclose(scl16.astype(jnp.float32), ref_scl, atol=8e-2, rtol=8e-2)

    print("KERNEL_OK")
</pallas_src>

<mosaic_0001>
module attributes {stable_mosaic.version = 11 : i64} {
  func.func @_forward_rel_kernel(%arg0: i32, %arg1: memref<4x128x128xf32, #tpu.memory_space<vmem>>, %arg2: memref<128x128xf32, #tpu.memory_space<vmem>>, %arg3: memref<1x128xf32, #tpu.memory_space<vmem>>, %arg4: memref<128x1024xf32, #tpu.memory_space<vmem>>, %arg5: memref<128x1024xf32, #tpu.memory_space<vmem>>, %arg6: memref<1024x128xf32, #tpu.memory_space<vmem>>, %arg7: memref<1x128xf32, #tpu.memory_space<vmem>>, %arg8: memref<128x128xf32, #tpu.memory_space<vmem>>, %arg9: memref<128x1024xf32, #tpu.memory_space<vmem>>) attributes {dimension_semantics = [#tpu.dimension_semantics<parallel>], iteration_bounds = array<i64: 2>, scalar_prefetch = 0 : i64, scratch_operands = 0 : i64, tpu.core_type = #tpu.core_type<tc>, window_params = [{transform_indices = @transform_0, window_bounds = array<i64: 4, 128, 128>}, {pipeline_mode = #tpu.pipeline_mode<synchronous>, transform_indices = @transform_1, window_bounds = array<i64: 128, 128>}, {pipeline_mode = #tpu.pipeline_mode<synchronous>, transform_indices = @transform_2, window_bounds = array<i64: 1, 128>}, {pipeline_mode = #tpu.pipeline_mode<synchronous>, transform_indices = @transform_3, window_bounds = array<i64: 128, 1024>}, {pipeline_mode = #tpu.pipeline_mode<synchronous>, transform_indices = @transform_4, window_bounds = array<i64: 128, 1024>}, {pipeline_mode = #tpu.pipeline_mode<synchronous>, transform_indices = @transform_5, window_bounds = array<i64: 1024, 128>}, {pipeline_mode = #tpu.pipeline_mode<synchronous>, transform_indices = @transform_6, window_bounds = array<i64: 1, 128>}, {transform_indices = @transform_7, window_bounds = array<i64: 128, 128>}, {transform_indices = @transform_8, window_bounds = array<i64: 128, 1024>}]} {
    %cst = arith.constant 0.000000e+00 : f32
    %0 = vector.broadcast %cst : f32 to vector<128x1024xf32>
    %c0 = arith.constant 0 : index
    %c0_0 = arith.constant 0 : index
    %c0_1 = arith.constant 0 : index
    %1 = vector.load %arg1[%c0, %c0_0, %c0_1] : memref<4x128x128xf32, #tpu.memory_space<vmem>>, vector<1x128x128xf32>
    %2 = vector.shape_cast %1 : vector<1x128x128xf32> to vector<128x128xf32>
    %c0_2 = arith.constant 0 : index
    %c0_3 = arith.constant 0 : index
    %3 = vector.load %arg2[%c0_2, %c0_3] : memref<128x128xf32, #tpu.memory_space<vmem>>, vector<128x128xf32>
    %cst_4 = arith.constant dense<0.000000e+00> : vector<128x128xf32>
    %4 = tpu.matmul %2, %3, %cst_4 {dimension_numbers = #tpu.dot_dimension_numbers<[1], [0], [0], [1], [0, 0, 1, 1], [], []>} : vector<128x128xf32>, vector<128x128xf32>, vector<128x128xf32> -> vector<128x128xf32>
    %c0_5 = arith.constant 0 : index
    %c0_6 = arith.constant 0 : index
    %5 = vector.load %arg3[%c0_5, %c0_6] : memref<1x128xf32, #tpu.memory_space<vmem>>, vector<1x128xf32>
    %6 = vector.broadcast %5 : vector<1x128xf32> to vector<128x128xf32>
    %7 = arith.addf %4, %6 : vector<128x128xf32>
    %8 = math.tanh %7 : vector<128x128xf32>
    %c0_7 = arith.constant 0 : index
    %c0_8 = arith.constant 0 : index
    %9 = vector.load %arg4[%c0_7, %c0_8] : memref<128x1024xf32, #tpu.memory_space<vmem>>, vector<128x1024xf32>
    %cst_9 = arith.constant dense<0.000000e+00> : vector<128x1024xf32>
    %10 = tpu.matmul %8, %9, %cst_9 {dimension_numbers = #tpu.dot_dimension_numbers<[1], [0], [0], [1], [0, 0, 1, 1], [], []>} : vector<128x128xf32>, vector<128x1024xf32>, vector<128x1024xf32> -> vector<128x1024xf32>
    %c0_10 = arith.constant 0 : index
    %c0_11 = arith.constant 0 : index
    %11 = vector.load %arg5[%c0_10, %c0_11] : memref<128x1024xf32, #tpu.memory_space<vmem>>, vector<128x1024xf32>
    %cst_12 = arith.constant dense<0.000000e+00> : vector<128x1024xf32>
    %12 = tpu.matmul %8, %11, %cst_12 {dimension_numbers = #tpu.dot_dimension_numbers<[1], [0], [0], [1], [0, 0, 1, 1], [], []>} : vector<128x128xf32>, vector<128x1024xf32>, vector<128x1024xf32> -> vector<128x1024xf32>
    %13 = arith.mulf %10, %12 : vector<128x1024xf32>
    %14 = arith.addf %0, %13 : vector<128x1024xf32>
    %c1 = arith.constant 1 : index
    %c0_13 = arith.constant 0 : index
    %c0_14 = arith.constant 0 : index
    %15 = vector.load %arg1[%c1, %c0_13, %c0_14] : memref<4x128x128xf32, #tpu.memory_space<vmem>>, vector<1x128x128xf32>
    %16 = vector.shape_cast %15 : vector<1x128x128xf32> to vector<128x128xf32>
    %c0_15 = arith.constant 0 : index
    %c0_16 = arith.constant 0 : index
    %17 = vector.load %arg2[%c0_15, %c0_16] : memref<128x128xf32, #tpu.memory_space<vmem>>, vector<128x128xf32>
    %cst_17 = arith.constant dense<0.000000e+00> : vector<128x128xf32>
    %18 = tpu.matmul %16, %17, %cst_17 {dimension_numbers = #tpu.dot_dimension_numbers<[1], [0], [0], [1], [0, 0, 1, 1], [], []>} : vector<128x128xf32>, vector<128x128xf32>, vector<128x128xf32> -> vector<128x128xf32>
    %c0_18 = arith.constant 0 : index
    %c0_19 = arith.constant 0 : index
    %19 = vector.load %arg3[%c0_18, %c0_19] : memref<1x128xf32, #tpu.memory_space<vmem>>, vector<1x128xf32>
    %20 = vector.broadcast %19 : vector<1x128xf32> to vector<128x128xf32>
    %21 = arith.addf %18, %20 : vector<128x128xf32>
    %22 = math.tanh %21 : vector<128x128xf32>
    %c0_20 = arith.constant 0 : index
    %c0_21 = arith.constant 0 : index
    %23 = vector.load %arg4[%c0_20, %c0_21] : memref<128x1024xf32, #tpu.memory_space<vmem>>, vector<128x1024xf32>
    %cst_22 = arith.constant dense<0.000000e+00> : vector<128x1024xf32>
    %24 = tpu.matmul %22, %23, %cst_22 {dimension_numbers = #tpu.dot_dimension_numbers<[1], [0], [0], [1], [0, 0, 1, 1], [], []>} : vector<128x128xf32>, vector<128x1024xf32>, vector<128x1024xf32> -> vector<128x1024xf32>
    %c0_23 = arith.constant 0 : index
    %c0_24 = arith.constant 0 : index
    %25 = vector.load %arg5[%c0_23, %c0_24] : memref<128x1024xf32, #tpu.memory_space<vmem>>, vector<128x1024xf32>
    %cst_25 = arith.constant dense<0.000000e+00> : vector<128x1024xf32>
    %26 = tpu.matmul %22, %25, %cst_25 {dimension_numbers = #tpu.dot_dimension_numbers<[1], [0], [0], [1], [0, 0, 1, 1], [], []>} : vector<128x128xf32>, vector<128x1024xf32>, vector<128x1024xf32> -> vector<128x1024xf32>
    %27 = arith.mulf %24, %26 : vector<128x1024xf32>
    %28 = arith.addf %14, %27 : vector<128x1024xf32>
    %c2 = arith.constant 2 : index
    %c0_26 = arith.constant 0 : index
    %c0_27 = arith.constant 0 : index
    %29 = vector.load %arg1[%c2, %c0_26, %c0_27] : memref<4x128x128xf32, #tpu.memory_space<vmem>>, vector<1x128x128xf32>
    %30 = vector.shape_cast %29 : vector<1x128x128xf32> to vector<128x128xf32>
    %c0_28 = arith.constant 0 : index
    %c0_29 = arith.constant 0 : index
    %31 = vector.load %arg2[%c0_28, %c0_29] : memref<128x128xf32, #tpu.memory_space<vmem>>, vector<128x128xf32>
    %cst_30 = arith.constant dense<0.000000e+00> : vector<128x128xf32>
    %32 = tpu.matmul %30, %31, %cst_30 {dimension_numbers = #tpu.dot_dimension_numbers<[1], [0], [0], [1], [0, 0, 1, 1], [], []>} : vector<128x128xf32>, vector<128x128xf32>, vector<128x128xf32> -> vector<128x128xf32>
    %c0_31 = arith.constant 0 : index
    %c0_32 = arith.constant 0 : index
    %33 = vector.load %arg3[%c0_31, %c0_32] : memref<1x128xf32, #tpu.memory_space<vmem>>, vector<1x128xf32>
    %34 = vector.broadcast %33 : vector<1x128xf32> to vector<128x128xf32>
    %35 = arith.addf %32, %34 : vector<128x128xf32>
    %36 = math.tanh %35 : vector<128x128xf32>
    %c0_33 = arith.constant 0 : index
    %c0_34 = arith.constant 0 : index
    %37 = vector.load %arg4[%c0_33, %c0_34] : memref<128x1024xf32, #tpu.memory_space<vmem>>, vector<128x1024xf32>
    %cst_35 = arith.constant dense<0.000000e+00> : vector<128x1024xf32>
    %38 = tpu.matmul %36, %37, %cst_35 {dimension_numbers = #tpu.dot_dimension_numbers<[1], [0], [0], [1], [0, 0, 1, 1], [], []>} : vector<128x128xf32>, vector<128x1024xf32>, vector<128x1024xf32> -> vector<128x1024xf32>
    %c0_36 = arith.constant 0 : index
    %c0_37 = arith.constant 0 : index
    %39 = vector.load %arg5[%c0_36, %c0_37] : memref<128x1024xf32, #tpu.memory_space<vmem>>, vector<128x1024xf32>
    %cst_38 = arith.constant dense<0.000000e+00> : vector<128x1024xf32>
    %40 = tpu.matmul %36, %39, %cst_38 {dimension_numbers = #tpu.dot_dimension_numbers<[1], [0], [0], [1], [0, 0, 1, 1], [], []>} : vector<128x128xf32>, vector<128x1024xf32>, vector<128x1024xf32> -> vector<128x1024xf32>
    %41 = arith.mulf %38, %40 : vector<128x1024xf32>
    %42 = arith.addf %28, %41 : vector<128x1024xf32>
    %c3 = arith.constant 3 : index
    %c0_39 = arith.constant 0 : index
    %c0_40 = arith.constant 0 : index
    %43 = vector.load %arg1[%c3, %c0_39, %c0_40] : memref<4x128x128xf32, #tpu.memory_space<vmem>>, vector<1x128x128xf32>
    %44 = vector.shape_cast %43 : vector<1x128x128xf32> to vector<128x128xf32>
    %c0_41 = arith.constant 0 : index
    %c0_42 = arith.constant 0 : index
    %45 = vector.load %arg2[%c0_41, %c0_42] : memref<128x128xf32, #tpu.memory_space<vmem>>, vector<128x128xf32>
    %cst_43 = arith.constant dense<0.000000e+00> : vector<128x128xf32>
    %46 = tpu.matmul %44, %45, %cst_43 {dimension_numbers = #tpu.dot_dimension_numbers<[1], [0], [0], [1], [0, 0, 1, 1], [], []>} : vector<128x128xf32>, vector<128x128xf32>, vector<128x128xf32> -> vector<128x128xf32>
    %c0_44 = arith.constant 0 : index
    %c0_45 = arith.constant 0 : index
    %47 = vector.load %arg3[%c0_44, %c0_45] : memref<1x128xf32, #tpu.memory_space<vmem>>, vector<1x128xf32>
    %48 = vector.broadcast %47 : vector<1x128xf32> to vector<128x128xf32>
    %49 = arith.addf %46, %48 : vector<128x128xf32>
    %50 = math.tanh %49 : vector<128x128xf32>
    %c0_46 = arith.constant 0 : index
    %c0_47 = arith.constant 0 : index
    %51 = vector.load %arg4[%c0_46, %c0_47] : memref<128x1024xf32, #tpu.memory_space<vmem>>, vector<128x1024xf32>
    %cst_48 = arith.constant dense<0.000000e+00> : vector<128x1024xf32>
    %52 = tpu.matmul %50, %51, %cst_48 {dimension_numbers = #tpu.dot_dimension_numbers<[1], [0], [0], [1], [0, 0, 1, 1], [], []>} : vector<128x128xf32>, vector<128x1024xf32>, vector<128x1024xf32> -> vector<128x1024xf32>
    %c0_49 = arith.constant 0 : index
    %c0_50 = arith.constant 0 : index
    %53 = vector.load %arg5[%c0_49, %c0_50] : memref<128x1024xf32, #tpu.memory_space<vmem>>, vector<128x1024xf32>
    %cst_51 = arith.constant dense<0.000000e+00> : vector<128x1024xf32>
    %54 = tpu.matmul %50, %53, %cst_51 {dimension_numbers = #tpu.dot_dimension_numbers<[1], [0], [0], [1], [0, 0, 1, 1], [], []>} : vector<128x128xf32>, vector<128x1024xf32>, vector<128x1024xf32> -> vector<128x1024xf32>
    %55 = arith.mulf %52, %54 : vector<128x1024xf32>
    %56 = arith.addf %42, %55 : vector<128x1024xf32>
    %cst_52 = arith.constant 2.500000e-01 : f32
    %57 = vector.broadcast %cst_52 : f32 to vector<128x1024xf32>
    %58 = arith.mulf %56, %57 : vector<128x1024xf32>
    %c0_53 = arith.constant 0 : index
    %c0_54 = arith.constant 0 : index
    %59 = vector.load %arg9[%c0_53, %c0_54] : memref<128x1024xf32, #tpu.memory_space<vmem>>, vector<128x1024xf32>
    tpu.vector_store %arg9[%c0_53, %c0_54], %58 {strides = array<i32>} : memref<128x1024xf32, #tpu.memory_space<vmem>>, vector<128x1024xf32>,
    %c0_55 = arith.constant 0 : index
    %c0_56 = arith.constant 0 : index
    %60 = vector.load %arg6[%c0_55, %c0_56] : memref<1024x128xf32, #tpu.memory_space<vmem>>, vector<1024x128xf32>
    %cst_57 = arith.constant dense<0.000000e+00> : vector<128x128xf32>
    %61 = tpu.matmul %58, %60, %cst_57 {dimension_numbers = #tpu.dot_dimension_numbers<[1], [0], [0], [1], [0, 0, 1, 1], [], []>} : vector<128x1024xf32>, vector<1024x128xf32>, vector<128x128xf32> -> vector<128x128xf32>
    %c0_58 = arith.constant 0 : index
    %c0_59 = arith.constant 0 : index
    %62 = vector.load %arg7[%c0_58, %c0_59] : memref<1x128xf32, #tpu.memory_space<vmem>>, vector<1x128xf32>
    %63 = vector.broadcast %62 : vector<1x128xf32> to vector<128x128xf32>
    %64 = arith.addf %61, %63 : vector<128x128xf32>
    %c0_60 = arith.constant 0 : index
    %c0_61 = arith.constant 0 : index
    %65 = vector.load %arg8[%c0_60, %c0_61] : memref<128x128xf32, #tpu.memory_space<vmem>>, vector<128x128xf32>
    tpu.vector_store %arg8[%c0_60, %c0_61], %64 {strides = array<i32>} : memref<128x128xf32, #tpu.memory_space<vmem>>, vector<128x128xf32>,
    return
  }
  func.func @transform_0(%arg0: i32) -> (i32, i32, i32) {
    %c0_i32 = arith.constant 0 : i32
    %c0_i32_0 = arith.constant 0 : i32
    %c0_i32_1 = arith.constant 0 : i32
    return %c0_i32, %arg0, %c0_i32_0 : i32, i32, i32
  }
  func.func @transform_1(%arg0: i32) -> (i32, i32) {
    %c0_i32 = arith.constant 0 : i32
    %c0_i32_0 = arith.constant 0 : i32
    %c0_i32_1 = arith.constant 0 : i32
    return %c0_i32, %c0_i32_0 : i32, i32
  }
  func.func @transform_2(%arg0: i32) -> (i32, i32) {
    %c0_i32 = arith.constant 0 : i32
    %c0_i32_0 = arith.constant 0 : i32
    %c0_i32_1 = arith.constant 0 : i32
    return %c0_i32, %c0_i32_0 : i32, i32
  }
  func.func @transform_3(%arg0: i32) -> (i32, i32) {
    %c0_i32 = arith.constant 0 : i32
    %c0_i32_0 = arith.constant 0 : i32
    %c0_i32_1 = arith.constant 0 : i32
    return %c0_i32, %c0_i32_0 : i32, i32
  }
  func.func @transform_4(%arg0: i32) -> (i32, i32) {
    %c0_i32 = arith.constant 0 : i32
    %c0_i32_0 = arith.constant 0 : i32
    %c0_i32_1 = arith.constant 0 : i32
    return %c0_i32, %c0_i32_0 : i32, i32
  }
  func.func @transform_5(%arg0: i32) -> (i32, i32) {
    %c0_i32 = arith.constant 0 : i32
    %c0_i32_0 = arith.constant 0 : i32
    %c0_i32_1 = arith.constant 0 : i32
    return %c0_i32, %c0_i32_0 : i32, i32
  }
  func.func @transform_6(%arg0: i32) -> (i32, i32) {
    %c0_i32 = arith.constant 0 : i32
    %c0_i32_0 = arith.constant 0 : i32
    %c0_i32_1 = arith.constant 0 : i32
    return %c0_i32, %c0_i32_0 : i32, i32
  }
  func.func @transform_7(%arg0: i32) -> (i32, i32) {
    %c0_i32 = arith.constant 0 : i32
    %c0_i32_0 = arith.constant 0 : i32
    return %arg0, %c0_i32 : i32, i32
  }
  func.func @transform_8(%arg0: i32) -> (i32, i32) {
    %c0_i32 = arith.constant 0 : i32
    %c0_i32_0 = arith.constant 0 : i32
    return %arg0, %c0_i32 : i32, i32
  }
}

</mosaic_0001>

<llo_original>
// kernel: tpu_custom_call.1
$region0: #{tpu_custom_call.1}
  #allocation0 [shape = 'u32[]', space=smem, size = 0x4, offset = 0x4, fixed_abs, tag = 'smem constant byte address 0x4 - core index']
  #allocation1 [shape = 'u32[144,128]{1,0:T(1,128)}', space=vmem, size = 0x12000, scoped, tag = 'internal scratch']
  #allocation14 [shape = 's32[]', space=sflag, size = 0x4, offset = 0, fixed_abs, tag = 'sflag constant byte address 0x0 - dummy sync flag']
  %s0 = inlined_call_operand.hbm [shape: f32[4,256,128], index: 0, kind: input, shape index: {}]
  %s1 = inlined_call_operand.hbm [shape: f32[128,128], index: 1, kind: input, shape index: {}]
  %s2 = inlined_call_operand.vmem [shape: f32[1,128], index: 2, kind: input, shape index: {}]
  %s3 = inlined_call_operand.hbm [shape: f32[128,1024], index: 3, kind: input, shape index: {}]
  %s4 = inlined_call_operand.hbm [shape: f32[128,1024], index: 4, kind: input, shape index: {}]
  %s5 = inlined_call_operand.hbm [shape: f32[1024,128], index: 5, kind: input, shape index: {}]
  %s6 = inlined_call_operand.vmem [shape: f32[1,128], index: 6, kind: input, shape index: {}]
  %s7 = inlined_call_operand.hbm [shape: f32[256,128], index: 7, kind: output, shape index: {0}]
  %s8 = inlined_call_operand.hbm [shape: f32[256,1024], index: 8, kind: output, shape index: {1}]
  %9 = xla_tuple %s7, %s8
  %s10 = sld [smem:[#allocation0]]
  $region89: #{tpu_custom_call.1} parent=0
    _
  %s12 = ssub.s32 1, %s10
  %s13 = scalar_select 0, %s12, %s10
  $region1: #{tpu_custom_call.1} parent=0
    #allocation2 [shape = 'u8[524288]{0}', space=vmem, size = 0x80000, scoped, tag = 'input window, operand 0']
    #allocation3 [shape = 's32[2]{0}', space=sflag, size = 0x8, scoped, tag = 'scoped memory for tpu_custom_call.1']
    #allocation4 [shape = 's32[2]{0}', space=sflag, size = 0x8, scoped, tag = 'scoped memory for tpu_custom_call.1']
    #allocation5 [shape = 'u8[65536]{0}', space=vmem, size = 0x10000, scoped, tag = 'input window, operand 1, single buffered']
    #allocation6 [shape = 's32[1]{0}', space=sflag, size = 0x4, scoped, tag = 'scoped memory for tpu_custom_call.1']
    #allocation7 [shape = 'u8[524288]{0}', space=vmem, size = 0x80000, scoped, tag = 'input window, operand 3, single buffered']
    #allocation8 [shape = 'u8[524288]{0}', space=vmem, size = 0x80000, scoped, tag = 'input window, operand 4, single buffered']
    #allocation9 [shape = 's32[1]{0}', space=sflag, size = 0x4, scoped, tag = 'scoped memory for tpu_custom_call.1']
    #allocation10 [shape = 'u8[524288]{0}', space=vmem, size = 0x80000, scoped, tag = 'input window, operand 5, single buffered']
    #allocation11 [shape = 'u8[131072]{0}', space=vmem, size = 0x20000, scoped, tag = 'output window, operand 0']
    #allocation12 [shape = 'u8[1048576]{0}', space=vmem, size = 0x100000, scoped, tag = 'output window, operand 1']
    #allocation13 [shape = 's32[2]{0}', space=sflag, size = 0x8, scoped, tag = 'scoped memory for tpu_custom_call.1']
    %14 = vsyncpa [#allocation3], 0
    %s15 = scalar_lea.sflag [#allocation3], 1
    %16 = vsyncpa %s15, 0
    %17 = vsyncpa [#allocation6], 0
    %18 = vsyncpa [#allocation9], 0
    %19 = vsyncpa [#allocation4], 0
    %s20 = scalar_lea.sflag [#allocation4], 1
    %21 = vsyncpa %s20, 0
    %22 = vsyncpa [#allocation13], 0
    %s23 = scalar_lea.sflag [#allocation13], 1
    %24 = vsyncpa %s23, 0
    loop: start=0, step=1, limit=4
    $region2: #{tpu_custom_call.1} parent=1 // loop_pre_header
      _
    $region3: #{tpu_custom_call.1} parent=1 // loop_header
      %s26 = sphi 0, %s30
      %p27 = scmp.ge.s32.totalorder %s26, 4
      %s36 = sphi 0, %s38
      %s39 = sphi 0, %s36
      %s40 = sphi 0, %s39
      %s56 = sphi 0, %s40
      %s60 = sphi 0, %s60
      %s62 = sphi 0, %s60
      %s63 = sphi 0, %s62
      %s77 = sphi 0, %s63
      %s81 = sphi 0, %s81
      %s83 = sphi 0, %s81
      %s84 = sphi 0, %s83
      %s98 = sphi 0, %s84
      %s102 = sphi 0, %s102
      %s104 = sphi 0, %s102
      %s105 = sphi 0, %s104
      %s119 = sphi 0, %s105
      %s123 = sphi 0, %s123
      %s125 = sphi 0, %s123
      %s126 = sphi 0, %s125
      %s140 = sphi 0, %s126
      %s144 = sphi 0, %s144
      %s146 = sphi 0, %s144
      %s147 = sphi 0, %s146
      %s161 = sphi 0, %s147
      %s165 = sphi 0, %s165
      %s167 = sphi 0, %s165
      %s168 = sphi 0, %s167
      %s182 = sphi 0, %s168
      %s188 = sphi 0, %s190
      %s191 = sphi 0, %s188
      %s192 = sphi 0, %s191
      %s208 = sphi 0, %s192
      %s214 = sphi 0, %s216
      %s217 = sphi 0, %s214
      %s218 = sphi 0, %s217
      %s234 = sphi 0, %s218
    $region4: #{tpu_custom_call.1} parent=1 // loop_header_branch
      %29 = sbr.rel (%p27) target = $region8
    $region5: #{tpu_custom_call.1} parent=1 // loop_body
      %s31 = ssub.s32 %s26, 1
      %s32 = ssub.s32 %s26, 2
      %s33 = sadd.s32 %s26, 1
      %s34 = ssub.s32 %s26, %s33
      %p35 = scmp.eq.s32.totalorder %s34, 0
      %s37 = sadd.s32 %s36, 1
      %s38 = scalar_select %p35, %s36, %s37
      %p41 = pneg %p35
      %p42 = scmp.eq.s32.totalorder %s26, 1
      %p43 = por %p41, %p42
      %p44 = scmp.ne.s32.totalorder %s36, %s39
      %p45 = scmp.eq.s32.totalorder %s26, 0
      %p46 = por %p44, %p45
      %p47 = scmp.ne.s32.totalorder %s36, %s39
      %p48 = scmp.eq.s32.totalorder %s31, 1
      %p49 = por %p47, %p48
      %p50 = scmp.ne.s32.totalorder %s39, %s40
      %p51 = scmp.eq.s32.totalorder %s31, 0
      %p52 = por %p50, %p51
      %p53 = scmp.ne.s32.totalorder %s39, %s40
      %p54 = scmp.eq.s32.totalorder %s32, 1
      %p55 = por %p53, %p54
      %p57 = scmp.ne.s32.totalorder %s40, %s56
      %p58 = scmp.eq.s32.totalorder %s32, 0
      %p59 = por %p57, %p58
      %s61 = sadd.s32 %s60, 1
      %p64 = scmp.eq.s32.totalorder %s26, 1
      %p65 = scmp.ne.s32.totalorder %s60, %s62
      %p66 = scmp.eq.s32.totalorder %s26, 0
      %p67 = por %p65, %p66
      %p68 = scmp.ne.s32.totalorder %s60, %s62
      %p69 = scmp.eq.s32.totalorder %s31, 1
      %p70 = por %p68, %p69
      %p71 = scmp.ne.s32.totalorder %s62, %s63
      %p72 = scmp.eq.s32.totalorder %s31, 0
      %p73 = por %p71, %p72
      %p74 = scmp.ne.s32.totalorder %s62, %s63
      %p75 = scmp.eq.s32.totalorder %s32, 1
      %p76 = por %p74, %p75
      %p78 = scmp.ne.s32.totalorder %s63, %s77
      %p79 = scmp.eq.s32.totalorder %s32, 0
      %p80 = por %p78, %p79
      %s82 = sadd.s32 %s81, 1
      %p85 = scmp.eq.s32.totalorder %s26, 1
      %p86 = scmp.ne.s32.totalorder %s81, %s83
      %p87 = scmp.eq.s32.totalorder %s26, 0
      %p88 = por %p86, %p87
      %p89 = scmp.ne.s32.totalorder %s81, %s83
      %p90 = scmp.eq.s32.totalorder %s31, 1
      %p91 = por %p89, %p90
      %p92 = scmp.ne.s32.totalorder %s83, %s84
      %p93 = scmp.eq.s32.totalorder %s31, 0
      %p94 = por %p92, %p93
      %p95 = scmp.ne.s32.totalorder %s83, %s84
      %p96 = scmp.eq.s32.totalorder %s32, 1
      %p97 = por %p95, %p96
      %p99 = scmp.ne.s32.totalorder %s84, %s98
      %p100 = scmp.eq.s32.totalorder %s32, 0
      %p101 = por %p99, %p100
      %s103 = sadd.s32 %s102, 1
      %p106 = scmp.eq.s32.totalorder %s26, 1
      %p107 = scmp.ne.s32.totalorder %s102, %s104
      %p108 = scmp.eq.s32.totalorder %s26, 0
      %p109 = por %p107, %p108
      %p110 = scmp.ne.s32.totalorder %s102, %s104
      %p111 = scmp.eq.s32.totalorder %s31, 1
      %p112 = por %p110, %p111
      %p113 = scmp.ne.s32.totalorder %s104, %s105
      %p114 = scmp.eq.s32.totalorder %s31, 0
      %p115 = por %p113, %p114
      %p116 = scmp.ne.s32.totalorder %s104, %s105
      %p117 = scmp.eq.s32.totalorder %s32, 1
      %p118 = por %p116, %p117
      %p120 = scmp.ne.s32.totalorder %s105, %s119
      %p121 = scmp.eq.s32.totalorder %s32, 0
      %p122 = por %p120, %p121
      %s124 = sadd.s32 %s123, 1
      %p127 = scmp.eq.s32.totalorder %s26, 1
      %p128 = scmp.ne.s32.totalorder %s123, %s125
      %p129 = scmp.eq.s32.totalorder %s26, 0
      %p130 = por %p128, %p129
      %p131 = scmp.ne.s32.totalorder %s123, %s125
      %p132 = scmp.eq.s32.totalorder %s31, 1
      %p133 = por %p131, %p132
      %p134 = scmp.ne.s32.totalorder %s125, %s126
      %p135 = scmp.eq.s32.totalorder %s31, 0
      %p136 = por %p134, %p135
      %p137 = scmp.ne.s32.totalorder %s125, %s126
      %p138 = scmp.eq.s32.totalorder %s32, 1
      %p139 = por %p137, %p138
      %p141 = scmp.ne.s32.totalorder %s126, %s140
      %p142 = scmp.eq.s32.totalorder %s32, 0
      %p143 = por %p141, %p142
      %s145 = sadd.s32 %s144, 1
      %p148 = scmp.eq.s32.totalorder %s26, 1
      %p149 = scmp.ne.s32.totalorder %s144, %s146
      %p150 = scmp.eq.s32.totalorder %s26, 0
      %p151 = por %p149, %p150
      %p152 = scmp.ne.s32.totalorder %s144, %s146
      %p153 = scmp.eq.s32.totalorder %s31, 1
      %p154 = por %p152, %p153
      %p155 = scmp.ne.s32.totalorder %s146, %s147
      %p156 = scmp.eq.s32.totalorder %s31, 0
      %p157 = por %p155, %p156
      %p158 = scmp.ne.s32.totalorder %s146, %s147
      %p159 = scmp.eq.s32.totalorder %s32, 1
      %p160 = por %p158, %p159
      %p162 = scmp.ne.s32.totalorder %s147, %s161
      %p163 = scmp.eq.s32.totalorder %s32, 0
      %p164 = por %p162, %p163
      %s166 = sadd.s32 %s165, 1
      %p169 = scmp.eq.s32.totalorder %s26, 1
      %p170 = scmp.ne.s32.totalorder %s165, %s167
      %p171 = scmp.eq.s32.totalorder %s26, 0
      %p172 = por %p170, %p171
      %p173 = scmp.ne.s32.totalorder %s165, %s167
      %p174 = scmp.eq.s32.totalorder %s31, 1
      %p175 = por %p173, %p174
      %p176 = scmp.ne.s32.totalorder %s167, %s168
      %p177 = scmp.eq.s32.totalorder %s31, 0
      %p178 = por %p176, %p177
      %p179 = scmp.ne.s32.totalorder %s167, %s168
      %p180 = scmp.eq.s32.totalorder %s32, 1
      %p181 = por %p179, %p180
      %p183 = scmp.ne.s32.totalorder %s168, %s182
      %p184 = scmp.eq.s32.totalorder %s32, 0
      %p185 = por %p183, %p184
      %s186 = ssub.s32 %s26, %s33
      %p187 = scmp.eq.s32.totalorder %s186, 0
      %s189 = sadd.s32 %s188, 1
      %s190 = scalar_select %p187, %s188, %s189
      %p193 = pneg %p187
      %p194 = scmp.eq.s32.totalorder %s26, 1
      %p195 = por %p193, %p194
      %p196 = scmp.ne.s32.totalorder %s188, %s191
      %p197 = scmp.eq.s32.totalorder %s26, 0
      %p198 = por %p196, %p197
      %p199 = scmp.ne.s32.totalorder %s188, %s191
      %p200 = scmp.eq.s32.totalorder %s31, 1
      %p201 = por %p199, %p200
      %p202 = scmp.ne.s32.totalorder %s191, %s192
      %p203 = scmp.eq.s32.totalorder %s31, 0
      %p204 = por %p202, %p203
      %p205 = scmp.ne.s32.totalorder %s191, %s192
      %p206 = scmp.eq.s32.totalorder %s32, 1
      %p207 = por %p205, %p206
      %p209 = scmp.ne.s32.totalorder %s192, %s208
      %p210 = scmp.eq.s32.totalorder %s32, 0
      %p211 = por %p209, %p210
      %s212 = ssub.s32 %s26, %s33
      %p213 = scmp.eq.s32.totalorder %s212, 0
      %s215 = sadd.s32 %s214, 1
      %s216 = scalar_select %p213, %s214, %s215
      %p219 = pneg %p213
      %p220 = scmp.eq.s32.totalorder %s26, 1
      %p221 = por %p219, %p220
      %p222 = scmp.ne.s32.totalorder %s214, %s217
      %p223 = scmp.eq.s32.totalorder %s26, 0
      %p224 = por %p222, %p223
      %p225 = scmp.ne.s32.totalorder %s214, %s217
      %p226 = scmp.eq.s32.totalorder %s31, 1
      %p227 = por %p225, %p226
      %p228 = scmp.ne.s32.totalorder %s217, %s218
      %p229 = scmp.eq.s32.totalorder %s31, 0
      %p230 = por %p228, %p229
      %p231 = scmp.ne.s32.totalorder %s217, %s218
      %p232 = scmp.eq.s32.totalorder %s32, 1
      %p233 = por %p231, %p232
      %p235 = scmp.ne.s32.totalorder %s218, %s234
      %p236 = scmp.eq.s32.totalorder %s32, 0
      %p237 = por %p235, %p236
      %p238 = scmp.le.s32.totalorder 1, %s26
      %p239 = scmp.lt.s32.totalorder %s26, 3
      %p240 = pnand %p238, %p239
      %p241 = pneg %p240
      // Predicated region
      $region9: #{tpu_custom_call.1} parent=5 // pred_check
        _
      $region10: #{tpu_custom_call.1} parent=5 // pred_check_branch
        %243 = sbr.rel (%p240) target = $region12
      $region11: #{tpu_custom_call.1} parent=5 // pred_region
        %s244 = ssub.s32 %s26, 1
        // Predicated region
        $region13: #{tpu_custom_call.1} parent=11 // pred_check
          %p245 = pneg %p73
        $region14: #{tpu_custom_call.1} parent=11 // pred_check_branch
          %247 = sbr.rel (%p245) target = $region16
        $region15: #{tpu_custom_call.1} parent=11 // pred_region
          %s249 = ssub.s32 2048, 2048
          %250 = vsyncadd [#allocation6], %s249
          %s251 = sshll.u32 [#allocation5], 4
          %s252 = int_to_ptr.vmem [resolvable:$true] %s251
          %257 = dma.hbm_to_vmem [thread:$0]  %s1, 2048, %s252, [#allocation6], 128, 128, 8
        $region16: #{tpu_custom_call.1} parent=11 // pred_fallthru
          _
        // Predicated region
        $region17: #{tpu_custom_call.1} parent=11 // pred_check
          %p258 = pneg %p94
        $region18: #{tpu_custom_call.1} parent=11 // pred_check_branch
          %260 = sbr.rel (%p258) target = $region20
        $region19: #{tpu_custom_call.1} parent=11 // pred_region
          _
        $region20: #{tpu_custom_call.1} parent=11 // pred_fallthru
          _
        // Predicated region
        $region21: #{tpu_custom_call.1} parent=11 // pred_check
          %p261 = pneg %p115
        $region22: #{tpu_custom_call.1} parent=11 // pred_check_branch
          %263 = sbr.rel (%p261) target = $region24
        $region23: #{tpu_custom_call.1} parent=11 // pred_region
          %s265 = ssub.s32 16384, 16384
          %266 = vsyncadd [#allocation6], %s265
          %s267 = sshll.u32 [#allocation7], 4
          %s268 = int_to_ptr.vmem [resolvable:$true] %s267
          %273 = dma.hbm_to_vmem [thread:$0]  %s3, 16384, %s268, [#allocation6], 1024, 1024, 64
        $region24: #{tpu_custom_call.1} parent=11 // pred_fallthru
          _
        // Predicated region
        $region25: #{tpu_custom_call.1} parent=11 // pred_check
          %p274 = pneg %p136
        $region26: #{tpu_custom_call.1} parent=11 // pred_check_branch
          %276 = sbr.rel (%p274) target = $region28
        $region27: #{tpu_custom_call.1} parent=11 // pred_region
          %s278 = ssub.s32 16384, 16384
          %279 = vsyncadd [#allocation9], %s278
          %s280 = sshll.u32 [#allocation8], 4
          %s281 = int_to_ptr.vmem [resolvable:$true] %s280
          %286 = dma.hbm_to_vmem [thread:$0]  %s4, 16384, %s281, [#allocation9], 1024, 1024, 64
        $region28: #{tpu_custom_call.1} parent=11 // pred_fallthru
          _
        // Predicated region
        $region29: #{tpu_custom_call.1} parent=11 // pred_check
          %p287 = pneg %p157
        $region30: #{tpu_custom_call.1} parent=11 // pred_check_branch
          %289 = sbr.rel (%p287) target = $region32
        $region31: #{tpu_custom_call.1} parent=11 // pred_region
          %s291 = ssub.s32 16384, 16384
          %292 = vsyncadd [#allocation9], %s291
          %s293 = sshll.u32 [#allocation10], 4
          %s294 = int_to_ptr.vmem [resolvable:$true] %s293
          %299 = dma.hbm_to_vmem [thread:$0]  %s5, 16384, %s294, [#allocation9], 128, 128, 8
        $region32: #{tpu_custom_call.1} parent=11 // pred_fallthru
          _
        // Predicated region
        $region33: #{tpu_custom_call.1} parent=11 // pred_check
          %p300 = pneg %p178
        $region34: #{tpu_custom_call.1} parent=11 // pred_check_branch
          %302 = sbr.rel (%p300) target = $region36
        $region35: #{tpu_custom_call.1} parent=11 // pred_region
          _
        $region36: #{tpu_custom_call.1} parent=11 // pred_fallthru
          _
      $region12: #{tpu_custom_call.1} parent=5 // pred_fallthru
        _
      %p303 = scmp.lt.s32.totalorder %s26, 2
      // Predicated region
      $region37: #{tpu_custom_call.1} parent=5 // pred_check
        %p304 = pneg %p303
      $region38: #{tpu_custom_call.1} parent=5 // pred_check_branch
        %306 = sbr.rel (%p304) target = $region40
      $region39: #{tpu_custom_call.1} parent=5 // pred_region
        // Predicated region
        $region41: #{tpu_custom_call.1} parent=39 // pred_check
          %p307 = pneg %p46
        $region42: #{tpu_custom_call.1} parent=39 // pred_check_branch
          %309 = sbr.rel (%p307) target = $region44
        $region43: #{tpu_custom_call.1} parent=39 // pred_region
          #allocation15 [shape = 'u32[6]{0}', space=smem, size = 0x18, scoped, tag = 'DMA stride descriptor']
          %s310 = sand.u32 %s36, 1
          %s311 = scalar_lea.sflag [#allocation3], %s310
          %s312 = sand.u32 %s36, 1
          %s313 = smul.addr %s312, 512
          %s314 = scalar_lea.vmem [#allocation2], %s313
          %s315 = smul.u32 16, %s26
          %s317 = ssub.s32 8192, 8192
          %318 = vsyncadd %s311, %s317
          %s319 = smul.addr %s315, 128
          %s320 = scalar_lea.hbm %s0, %s319
          %s322 = sshll.u32 1, 14
          %s323 = sxor.u32 4294967295, %s322
          %s325 = sld [smem:[#allocation0]]
          %s326 = sadd.s32 2, %s325
          %s328 = sshll.u32 7, 26
          %s329 = sxor.u32 4294967295, %s328
          %s330 = sand.u32 0, %s329
          %s331 = sshll.u32 %s326, 26
          %s332 = sor.u32 %s330, %s331
          %s333 = sshll.u32 %s314, 4
          %s334 = int_to_ptr.vmem [resolvable:$true] %s333
          %340 = sst [smem:[#allocation15]] 4096
          %s341 = scalar_lea.smem [#allocation15], 1
          %342 = sst [smem:[%s341]] 2048
          %s343 = scalar_lea.smem [#allocation15], 2
          %344 = sst [smem:[%s343]] 16
          %s345 = scalar_lea.smem [#allocation15], 3
          %346 = sst [smem:[%s345]] 128
          %s347 = scalar_lea.smem [#allocation15], 4
          %348 = sst [smem:[%s347]] 128
          %s349 = scalar_lea.smem [#allocation15], 5
          %350 = sst [smem:[%s349]] 8
          %352 = dma.general %s320, 8192, %s334, %s311, 131072, [#allocation15], %s332, 0
        $region44: #{tpu_custom_call.1} parent=39 // pred_fallthru
          _
      $region40: #{tpu_custom_call.1} parent=5 // pred_fallthru
        _
      %p353 = scmp.le.s32.totalorder 1, %s26
      %p354 = scmp.lt.s32.totalorder %s26, 3
      %p355 = pnand %p353, %p354
      %p356 = pneg %p355
      // Predicated region
      $region45: #{tpu_custom_call.1} parent=5 // pred_check
        _
      $region46: #{tpu_custom_call.1} parent=5 // pred_check_branch
        %358 = sbr.rel (%p355) target = $region48
      $region47: #{tpu_custom_call.1} parent=5 // pred_region
        %s359 = ssub.s32 %s26, 1
        %s360 = sand.u32 %s39, 1
        %s361 = scalar_lea.sflag [#allocation3], %s360
        %s362 = sand.u32 %s39, 1
        %s363 = smul.addr %s362, 512
        %s364 = scalar_lea.vmem [#allocation2], %s363
        // Predicated region
        $region49: #{tpu_custom_call.1} parent=47 // pred_check
          %p365 = pneg %p52
        $region50: #{tpu_custom_call.1} parent=47 // pred_check_branch
          %367 = sbr.rel (%p365) target = $region52
        $region51: #{tpu_custom_call.1} parent=47 // pred_region
          %368 = dma.done %s361, 8192
        $region52: #{tpu_custom_call.1} parent=47 // pred_fallthru
          _
        // Predicated region
        $region53: #{tpu_custom_call.1} parent=47 // pred_check
          %p369 = pneg %p73
        $region54: #{tpu_custom_call.1} parent=47 // pred_check_branch
          %371 = sbr.rel (%p369) target = $region56
        $region55: #{tpu_custom_call.1} parent=47 // pred_region
          %372 = dma.done [#allocation6], 2048
        $region56: #{tpu_custom_call.1} parent=47 // pred_fallthru
          _
        // Predicated region
        $region57: #{tpu_custom_call.1} parent=47 // pred_check
          %p373 = pneg %p115
        $region58: #{tpu_custom_call.1} parent=47 // pred_check_branch
          %375 = sbr.rel (%p373) target = $region60
        $region59: #{tpu_custom_call.1} parent=47 // pred_region
          %376 = dma.done [#allocation6], 16384
        $region60: #{tpu_custom_call.1} parent=47 // pred_fallthru
          _
        // Predicated region
        $region61: #{tpu_custom_call.1} parent=47 // pred_check
          %p377 = pneg %p136
        $region62: #{tpu_custom_call.1} parent=47 // pred_check_branch
          %379 = sbr.rel (%p377) target = $region64
        $region63: #{tpu_custom_call.1} parent=47 // pred_region
          %380 = dma.done [#allocation9], 16384
        $region64: #{tpu_custom_call.1} parent=47 // pred_fallthru
          _
        // Predicated region
        $region65: #{tpu_custom_call.1} parent=47 // pred_check
          %p381 = pneg %p157
        $region66: #{tpu_custom_call.1} parent=47 // pred_check_branch
          %383 = sbr.rel (%p381) target = $region68
        $region67: #{tpu_custom_call.1} parent=47 // pred_region
          %384 = dma.done [#allocation9], 16384
        $region68: #{tpu_custom_call.1} parent=47 // pred_fallthru
          _
        %s385 = sand.u32 %s39, 1
        %s386 = scalar_lea.sflag [#allocation3], %s385
        %s387 = sand.u32 %s39, 1
        %s388 = smul.addr %s387, 512
        %s389 = scalar_lea.vmem [#allocation2], %s388
        %p390 = pneg %p52
        %p391 = pneg %p49
        %p392 = pneg %p73
        %p393 = pneg %p70
        %p394 = pneg %p94
        %p395 = pneg %p91
        %p396 = pneg %p115
        %p397 = pneg %p112
        %p398 = pneg %p136
        %p399 = pneg %p133
        %p400 = pneg %p157
        %p401 = pneg %p154
        %p402 = pneg %p178
        %p403 = pneg %p175
        %p404 = pneg %p204
        %p405 = pneg %p201
        %s406 = sand.u32 %s191, 1
        %s407 = scalar_lea.sflag [#allocation4], %s406
        %s408 = sand.u32 %s191, 1
        %s409 = smul.addr %s408, 128
        %s410 = scalar_lea.vmem [#allocation11], %s409
        %p411 = pneg %p230
        %p412 = pneg %p227
        %s413 = sand.u32 %s217, 1
        %s414 = scalar_lea.sflag [#allocation13], %s413
        %s415 = sand.u32 %s217, 1
        %s416 = smul.addr %s415, 1024
        %s417 = scalar_lea.vmem [#allocation12], %s416
        %s418 = smul.u32 16, %s31
        %s419 = smul.u32 16, %s31
        %s420 = smul.u32 16, %s31
        %v421 = vld [vmem:[%s364] sm:$0xff]
        %v422 = vld [vmem:[%s364 + $0x8] sm:$0xff]
        %v423 = vld [vmem:[%s364 + $0x10] sm:$0xff]
        %v424 = vld [vmem:[%s364 + $0x18] sm:$0xff]
        %v425 = vld [vmem:[%s364 + $0x20] sm:$0xff]
        %v426 = vld [vmem:[%s364 + $0x28] sm:$0xff]
        %v427 = vld [vmem:[%s364 + $0x30] sm:$0xff]
        %v428 = vld [vmem:[%s364 + $0x38] sm:$0xff]
        %v429 = vld [vmem:[%s364 + $0x40] sm:$0xff]
        %v430 = vld [vmem:[%s364 + $0x48] sm:$0xff]
        %v431 = vld [vmem:[%s364 + $0x50] sm:$0xff]
        %v432 = vld [vmem:[%s364 + $0x58] sm:$0xff]
        %v433 = vld [vmem:[%s364 + $0x60] sm:$0xff]
        %v434 = vld [vmem:[%s364 + $0x68] sm:$0xff]
        %v435 = vld [vmem:[%s364 + $0x70] sm:$0xff]
        %v436 = vld [vmem:[%s364 + $0x78] sm:$0xff]
        %v437 = vld [vmem:[#allocation5] sm:$0xff]
        %v438 = vld [vmem:[#allocation5 + $0x8] sm:$0xff]
        %v439 = vld [vmem:[#allocation5 + $0x10] sm:$0xff]
        %v440 = vld [vmem:[#allocation5 + $0x18] sm:$0xff]
        %v441 = vld [vmem:[#allocation5 + $0x20] sm:$0xff]
        %v442 = vld [vmem:[#allocation5 + $0x28] sm:$0xff]
        %v443 = vld [vmem:[#allocation5 + $0x30] sm:$0xff]
        %v444 = vld [vmem:[#allocation5 + $0x38] sm:$0xff]
        %v445 = vld [vmem:[#allocation5 + $0x40] sm:$0xff]
        %v446 = vld [vmem:[#allocation5 + $0x48] sm:$0xff]
        %v447 = vld [vmem:[#allocation5 + $0x50] sm:$0xff]
        %v448 = vld [vmem:[#allocation5 + $0x58] sm:$0xff]
        %v449 = vld [vmem:[#allocation5 + $0x60] sm:$0xff]
        %v450 = vld [vmem:[#allocation5 + $0x68] sm:$0xff]
        %v451 = vld [vmem:[#allocation5 + $0x70] sm:$0xff]
        %v452 = vld [vmem:[#allocation5 + $0x78] sm:$0xff]
        %v453 = vld [vmem:[%s2] sm:$0x1]
        %v455 = vlaneseq
        %v456 = vshrl.u32 %v455, 7
        %v457 = vsub.s32 0, %v456
        %v458 = vrot.slane %v453, %v457
        %460 = vmatprep.subr.mxu0 0.0
        %461 = vmatpush1.msra.mxu0 %v452
        %462 = vmatprep.subr.mxu0 0.0
        %463 = vmatpush1.msra.mxu0 %v451
        %464 = vmatprep.subr.mxu0 0.0
        %465 = vmatpush1.msra.mxu0 %v450
        %466 = vmatprep.subr.mxu0 0.0
        %467 = vmatpush1.msra.mxu0 %v449
        %468 = vmatprep.subr.mxu0 0.0
        %469 = vmatpush1.msra.mxu0 %v448
        %470 = vmatprep.subr.mxu0 0.0
        %471 = vmatpush1.msra.mxu0 %v447
        %472 = vmatprep.subr.mxu0 0.0
        %473 = vmatpush1.msra.mxu0 %v446
        %474 = vmatprep.subr.mxu0 0.0
        %475 = vmatpush1.msra.mxu0 %v445
        %476 = vmatprep.subr.mxu0 0.0
        %477 = vmatpush1.msra.mxu0 %v444
        %478 = vmatprep.subr.mxu0 0.0
        %479 = vmatpush1.msra.mxu0 %v443
        %480 = vmatprep.subr.mxu0 0.0
        %481 = vmatpush1.msra.mxu0 %v442
        %482 = vmatprep.subr.mxu0 0.0
        %483 = vmatpush1.msra.mxu0 %v441
        %484 = vmatprep.subr.mxu0 0.0
        %485 = vmatpush1.msra.mxu0 %v440
        %486 = vmatprep.subr.mxu0 0.0
        %487 = vmatpush1.msra.mxu0 %v439
        %488 = vmatprep.subr.mxu0 0.0
        %489 = vmatpush1.msra.mxu0 %v438
        %490 = vmatprep.subr.mxu0 0.0
        %491 = vmatpush1.msra.mxu0 %v437
        %492 = vmatprep.subr.mxu0 0.0
        %493 = vmatpush2.msra.mxu0 0.0
        %494 = vmatprep.subr.mxu0 0.0
        %495 = vmatpush2.msra.mxu0 0.0
        %496 = vmatprep.subr.mxu0 0.0
        %497 = vmatpush2.msra.mxu0 0.0
        %498 = vmatprep.subr.mxu0 0.0
        %499 = vmatpush2.msra.mxu0 0.0
        %500 = vmatprep.subr.mxu0 0.0
        %501 = vmatpush2.msra.mxu0 0.0
        %502 = vmatprep.subr.mxu0 0.0
        %503 = vmatpush2.msra.mxu0 0.0
        %504 = vmatprep.subr.mxu0 0.0
        %505 = vmatpush2.msra.mxu0 0.0
        %506 = vmatprep.subr.mxu0 0.0
        %507 = vmatpush2.msra.mxu0 0.0
        %508 = vmatprep.subr.mxu0 0.0
        %509 = vmatpush2.msra.mxu0 0.0
        %510 = vmatprep.subr.mxu0 0.0
        %511 = vmatpush2.msra.mxu0 0.0
        %512 = vmatprep.subr.mxu0 0.0
        %513 = vmatpush2.msra.mxu0 0.0
        %514 = vmatprep.subr.mxu0 0.0
        %515 = vmatpush2.msra.mxu0 0.0
        %516 = vmatprep.subr.mxu0 0.0
        %517 = vmatpush2.msra.mxu0 0.0
        %518 = vmatprep.subr.mxu0 0.0
        %519 = vmatpush2.msra.mxu0 0.0
        %520 = vmatprep.subr.mxu0 0.0
        %521 = vmatpush2.msra.mxu0 0.0
        %522 = vmatprep.subr.mxu0 0.0
        %523 = vmatpush2.msra.mxu0 0.0
        %524 = vmatprep.mubr.f32.mxu0 0.0
        %525 = vmatmul.mubr.f32.gmra.mxu0 %v421
        %v526 = vpop.f32.mrf.mxu0
        %v527 = vadd.f32 %v458, %v526
        %v528 = vpop.f32.mrf.mxu0
        %529 = vmatprep.mubr.f32.mxu0 0.0
        %530 = vmatmul.mubr.f32.gmra.mxu0 %v422
        %v531 = vpop.f32.mrf.mxu0
        %v532 = vadd.f32 %v458, %v531
        %v533 = vpop.f32.mrf.mxu0
        %534 = vmatprep.mubr.f32.mxu0 0.0
        %535 = vmatmul.mubr.f32.gmra.mxu0 %v423
        %v536 = vpop.f32.mrf.mxu0
        %v537 = vadd.f32 %v458, %v536
        %v538 = vpop.f32.mrf.mxu0
        %539 = vmatprep.mubr.f32.mxu0 0.0
        %540 = vmatmul.mubr.f32.gmra.mxu0 %v424
        %v541 = vpop.f32.mrf.mxu0
        %v542 = vadd.f32 %v458, %v541
        %v543 = vpop.f32.mrf.mxu0
        %544 = vmatprep.mubr.f32.mxu0 0.0
        %545 = vmatmul.mubr.f32.gmra.mxu0 %v425
        %v546 = vpop.f32.mrf.mxu0
        %v547 = vadd.f32 %v458, %v546
        %v548 = vpop.f32.mrf.mxu0
        %549 = vmatprep.mubr.f32.mxu0 0.0
        %550 = vmatmul.mubr.f32.gmra.mxu0 %v426
        %v551 = vpop.f32.mrf.mxu0
        %v552 = vadd.f32 %v458, %v551
        %v553 = vpop.f32.mrf.mxu0
        %554 = vmatprep.mubr.f32.mxu0 0.0
        %555 = vmatmul.mubr.f32.gmra.mxu0 %v427
        %v556 = vpop.f32.mrf.mxu0
        %v557 = vadd.f32 %v458, %v556
        %v558 = vpop.f32.mrf.mxu0
        %559 = vmatprep.mubr.f32.mxu0 0.0
        %560 = vmatmul.mubr.f32.gmra.mxu0 %v428
        %v561 = vpop.f32.mrf.mxu0
        %v562 = vadd.f32 %v458, %v561
        %v563 = vpop.f32.mrf.mxu0
        %564 = vmatprep.mubr.f32.mxu0 0.0
        %565 = vmatmul.mubr.f32.gmra.mxu0 %v429
        %v566 = vpop.f32.mrf.mxu0
        %v567 = vadd.f32 %v458, %v566
        %v568 = vpop.f32.mrf.mxu0
        %569 = vmatprep.mubr.f32.mxu0 0.0
        %570 = vmatmul.mubr.f32.gmra.mxu0 %v430
        %v571 = vpop.f32.mrf.mxu0
        %v572 = vadd.f32 %v458, %v571
        %v573 = vpop.f32.mrf.mxu0
        %574 = vmatprep.mubr.f32.mxu0 0.0
        %575 = vmatmul.mubr.f32.gmra.mxu0 %v431
        %v576 = vpop.f32.mrf.mxu0
        %v577 = vadd.f32 %v458, %v576
        %v578 = vpop.f32.mrf.mxu0
        %579 = vmatprep.mubr.f32.mxu0 0.0
        %580 = vmatmul.mubr.f32.gmra.mxu0 %v432
        %v581 = vpop.f32.mrf.mxu0
        %v582 = vadd.f32 %v458, %v581
        %v583 = vpop.f32.mrf.mxu0
        %584 = vmatprep.mubr.f32.mxu0 0.0
        %585 = vmatmul.mubr.f32.gmra.mxu0 %v433
        %v586 = vpop.f32.mrf.mxu0
        %v587 = vadd.f32 %v458, %v586
        %v588 = vpop.f32.mrf.mxu0
        %589 = vmatprep.mubr.f32.mxu0 0.0
        %590 = vmatmul.mubr.f32.gmra.mxu0 %v434
        %v591 = vpop.f32.mrf.mxu0
        %v592 = vadd.f32 %v458, %v591
        %v593 = vpop.f32.mrf.mxu0
        %594 = vmatprep.mubr.f32.mxu0 0.0
        %595 = vmatmul.mubr.f32.gmra.mxu0 %v435
        %v596 = vpop.f32.mrf.mxu0
        %v597 = vadd.f32 %v458, %v596
        %v598 = vpop.f32.mrf.mxu0
        %599 = vmatprep.mubr.f32.mxu0 0.0
        %600 = vmatmul.mubr.f32.gmra.mxu0 %v436
        %v601 = vpop.f32.mrf.mxu0
        %v602 = vadd.f32 %v458, %v601
        %v603 = vpop.f32.mrf.mxu0
        %604 = vdwg.mxu0
        %v605 = vtanh.pop %v527
        %v606 = vtanh.pop %v532
        %v607 = vtanh.pop %v537
        %v608 = vtanh.pop %v542
        %v609 = vtanh.pop %v547
        %v610 = vtanh.pop %v552
        %v611 = vtanh.pop %v557
        %v612 = vtanh.pop %v562
        %v613 = vtanh.pop %v567
        %v614 = vtanh.pop %v572
        %v615 = vtanh.pop %v577
        %v616 = vtanh.pop %v582
        %v617 = vtanh.pop %v587
        %v618 = vtanh.pop %v592
        %v619 = vtanh.pop %v597
        %v620 = vtanh.pop %v602
        %v621 = vld [vmem:[#allocation7] sm:$0xff]
        %v622 = vld [vmem:[#allocation7 + $0x8] sm:$0xff]
        %v623 = vld [vmem:[#allocation7 + $0x10] sm:$0xff]
        %v624 = vld [vmem:[#allocation7 + $0x18] sm:$0xff]
        %v625 = vld [vmem:[#allocation7 + $0x20] sm:$0xff]
        %v626 = vld [vmem:[#allocation7 + $0x28] sm:$0xff]
        %v627 = vld [vmem:[#allocation7 + $0x30] sm:$0xff]
        %v628 = vld [vmem:[#allocation7 + $0x38] sm:$0xff]
        %v629 = vld [vmem:[#allocation7 + $0x40] sm:$0xff]
        %v630 = vld [vmem:[#allocation7 + $0x48] sm:$0xff]
        %v631 = vld [vmem:[#allocation7 + $0x50] sm:$0xff]
        %v632 = vld [vmem:[#allocation7 + $0x58] sm:$0xff]
        %v633 = vld [vmem:[#allocation7 + $0x60] sm:$0xff]
        %v634 = vld [vmem:[#allocation7 + $0x68] sm:$0xff]
        %v635 = vld [vmem:[#allocation7 + $0x70] sm:$0xff]
        %v636 = vld [vmem:[#allocation7 + $0x78] sm:$0xff]
        %v637 = vld [vmem:[#allocation7 + $0x80] sm:$0xff]
        %v638 = vld [vmem:[#allocation7 + $0x88] sm:$0xff]
        %v639 = vld [vmem:[#allocation7 + $0x90] sm:$0xff]
        %v640 = vld [vmem:[#allocation7 + $0x98] sm:$0xff]
        %v641 = vld [vmem:[#allocation7 + $0xa0] sm:$0xff]
        %v642 = vld [vmem:[#allocation7 + $0xa8] sm:$0xff]
        %v643 = vld [vmem:[#allocation7 + $0xb0] sm:$0xff]
        %v644 = vld [vmem:[#allocation7 + $0xb8] sm:$0xff]
        %v645 = vld [vmem:[#allocation7 + $0xc0] sm:$0xff]
        %v646 = vld [vmem:[#allocation7 + $0xc8] sm:$0xff]
        %v647 = vld [vmem:[#allocation7 + $0xd0] sm:$0xff]
        %v648 = vld [vmem:[#allocation7 + $0xd8] sm:$0xff]
        %v649 = vld [vmem:[#allocation7 + $0xe0] sm:$0xff]
        %v650 = vld [vmem:[#allocation7 + $0xe8] sm:$0xff]
        %v651 = vld [vmem:[#allocation7 + $0xf0] sm:$0xff]
        %v652 = vld [vmem:[#allocation7 + $0xf8] sm:$0xff]
        %v653 = vld [vmem:[#allocation7 + $0x100] sm:$0xff]
        %v654 = vld [vmem:[#allocation7 + $0x108] sm:$0xff]
        %v655 = vld [vmem:[#allocation7 + $0x110] sm:$0xff]
        %v656 = vld [vmem:[#allocation7 + $0x118] sm:$0xff]
        %v657 = vld [vmem:[#allocation7 + $0x120] sm:$0xff]
        %v658 = vld [vmem:[#allocation7 + $0x128] sm:$0xff]
        %v659 = vld [vmem:[#allocation7 + $0x130] sm:$0xff]
        %v660 = vld [vmem:[#allocation7 + $0x138] sm:$0xff]
        %v661 = vld [vmem:[#allocation7 + $0x140] sm:$0xff]
        %v662 = vld [vmem:[#allocation7 + $0x148] sm:$0xff]
        %v663 = vld [vmem:[#allocation7 + $0x150] sm:$0xff]
        %v664 = vld [vmem:[#allocation7 + $0x158] sm:$0xff]
        %v665 = vld [vmem:[#allocation7 + $0x160] sm:$0xff]
        %v666 = vld [vmem:[#allocation7 + $0x168] sm:$0xff]
        %v667 = vld [vmem:[#allocation7 + $0x170] sm:$0xff]
        %v668 = vld [vmem:[#allocation7 + $0x178] sm:$0xff]
        %v669 = vld [vmem:[#allocation7 + $0x180] sm:$0xff]
        %v670 = vld [vmem:[#allocation7 + $0x188] sm:$0xff]
        %v671 = vld [vmem:[#allocation7 + $0x190] sm:$0xff]
        %v672 = vld [vmem:[#allocation7 + $0x198] sm:$0xff]
        %v673 = vld [vmem:[#allocation7 + $0x1a0] sm:$0xff]
        %v674 = vld [vmem:[#allocation7 + $0x1a8] sm:$0xff]
        %v675 = vld [vmem:[#allocation7 + $0x1b0] sm:$0xff]
        %v676 = vld [vmem:[#allocation7 + $0x1b8] sm:$0xff]
        %v677 = vld [vmem:[#allocation7 + $0x1c0] sm:$0xff]
        %v678 = vld [vmem:[#allocation7 + $0x1c8] sm:$0xff]
        %v679 = vld [vmem:[#allocation7 + $0x1d0] sm:$0xff]
        %v680 = vld [vmem:[#allocation7 + $0x1d8] sm:$0xff]
        %v681 = vld [vmem:[#allocation7 + $0x1e0] sm:$0xff]
        %v682 = vld [vmem:[#allocation7 + $0x1e8] sm:$0xff]
        %v683 = vld [vmem:[#allocation7 + $0x1f0] sm:$0xff]
        %v684 = vld [vmem:[#allocation7 + $0x1f8] sm:$0xff]
        %v685 = vld [vmem:[#allocation7 + $0x200] sm:$0xff]
        %v686 = vld [vmem:[#allocation7 + $0x208] sm:$0xff]
        %v687 = vld [vmem:[#allocation7 + $0x210] sm:$0xff]
        %v688 = vld [vmem:[#allocation7 + $0x218] sm:$0xff]
        %v689 = vld [vmem:[#allocation7 + $0x220] sm:$0xff]
        %v690 = vld [vmem:[#allocation7 + $0x228] sm:$0xff]
        %v691 = vld [vmem:[#allocation7 + $0x230] sm:$0xff]
        %v692 = vld [vmem:[#allocation7 + $0x238] sm:$0xff]
        %v693 = vld [vmem:[#allocation7 + $0x240] sm:$0xff]
        %v694 = vld [vmem:[#allocation7 + $0x248] sm:$0xff]
        %v695 = vld [vmem:[#allocation7 + $0x250] sm:$0xff]
        %v696 = vld [vmem:[#allocation7 + $0x258] sm:$0xff]
        %v697 = vld [vmem:[#allocation7 + $0x260] sm:$0xff]
        %v698 = vld [vmem:[#allocation7 + $0x268] sm:$0xff]
        %v699 = vld [vmem:[#allocation7 + $0x270] sm:$0xff]
        %v700 = vld [vmem:[#allocation7 + $0x278] sm:$0xff]
        %v701 = vld [vmem:[#allocation7 + $0x280] sm:$0xff]
        %v702 = vld [vmem:[#allocation7 + $0x288] sm:$0xff]
        %v703 = vld [vmem:[#allocation7 + $0x290] sm:$0xff]
        %v704 = vld [vmem:[#allocation7 + $0x298] sm:$0xff]
        %v705 = vld [vmem:[#allocation7 + $0x2a0] sm:$0xff]
        %v706 = vld [vmem:[#allocation7 + $0x2a8] sm:$0xff]
        %v707 = vld [vmem:[#allocation7 + $0x2b0] sm:$0xff]
        %v708 = vld [vmem:[#allocation7 + $0x2b8] sm:$0xff]
        %v709 = vld [vmem:[#allocation7 + $0x2c0] sm:$0xff]
        %v710 = vld [vmem:[#allocation7 + $0x2c8] sm:$0xff]
        %v711 = vld [vmem:[#allocation7 + $0x2d0] sm:$0xff]
        %v712 = vld [vmem:[#allocation7 + $0x2d8] sm:$0xff]
        %v713 = vld [vmem:[#allocation7 + $0x2e0] sm:$0xff]
        %v714 = vld [vmem:[#allocation7 + $0x2e8] sm:$0xff]
        %v715 = vld [vmem:[#allocation7 + $0x2f0] sm:$0xff]
        %v716 = vld [vmem:[#allocation7 + $0x2f8] sm:$0xff]
        %v717 = vld [vmem:[#allocation7 + $0x300] sm:$0xff]
        %v718 = vld [vmem:[#allocation7 + $0x308] sm:$0xff]
        %v719 = vld [vmem:[#allocation7 + $0x310] sm:$0xff]
        %v720 = vld [vmem:[#allocation7 + $0x318] sm:$0xff]
        %v721 = vld [vmem:[#allocation7 + $0x320] sm:$0xff]
        %v722 = vld [vmem:[#allocation7 + $0x328] sm:$0xff]
        %v723 = vld [vmem:[#allocation7 + $0x330] sm:$0xff]
        %v724 = vld [vmem:[#allocation7 + $0x338] sm:$0xff]
        %v725 = vld [vmem:[#allocation7 + $0x340] sm:$0xff]
        %v726 = vld [vmem:[#allocation7 + $0x348] sm:$0xff]
        %v727 = vld [vmem:[#allocation7 + $0x350] sm:$0xff]
        %v728 = vld [vmem:[#allocation7 + $0x358] sm:$0xff]
        %v729 = vld [vmem:[#allocation7 + $0x360] sm:$0xff]
        %v730 = vld [vmem:[#allocation7 + $0x368] sm:$0xff]
        %v731 = vld [vmem:[#allocation7 + $0x370] sm:$0xff]
        %v732 = vld [vmem:[#allocation7 + $0x378] sm:$0xff]
        %v733 = vld [vmem:[#allocation7 + $0x380] sm:$0xff]
        %v734 = vld [vmem:[#allocation7 + $0x388] sm:$0xff]
        %v735 = vld [vmem:[#allocation7 + $0x390] sm:$0xff]
        %v736 = vld [vmem:[#allocation7 + $0x398] sm:$0xff]
        %v737 = vld [vmem:[#allocation7 + $0x3a0] sm:$0xff]
        %v738 = vld [vmem:[#allocation7 + $0x3a8] sm:$0xff]
        %v739 = vld [vmem:[#allocation7 + $0x3b0] sm:$0xff]
        %v740 = vld [vmem:[#allocation7 + $0x3b8] sm:$0xff]
        %v741 = vld [vmem:[#allocation7 + $0x3c0] sm:$0xff]
        %v742 = vld [vmem:[#allocation7 + $0x3c8] sm:$0xff]
        %v743 = vld [vmem:[#allocation7 + $0x3d0] sm:$0xff]
        %v744 = vld [vmem:[#allocation7 + $0x3d8] sm:$0xff]
        %v745 = vld [vmem:[#allocation7 + $0x3e0] sm:$0xff]
        %v746 = vld [vmem:[#allocation7 + $0x3e8] sm:$0xff]
        %v747 = vld [vmem:[#allocation7 + $0x3f0] sm:$0xff]
        %v748 = vld [vmem:[#allocation7 + $0x3f8] sm:$0xff]
        %749 = vmatprep.subr.mxu0 %v742
        %750 = vmatpush1.msra.mxu0 %v741
        %751 = vmatprep.subr.mxu0 %v734
        %752 = vmatpush1.msra.mxu0 %v733
        %753 = vmatprep.subr.mxu0 %v726
        %754 = vmatpush1.msra.mxu0 %v725
        %755 = vmatprep.subr.mxu0 %v718
        %756 = vmatpush1.msra.mxu0 %v717
        %757 = vmatprep.subr.mxu0 %v710
        %758 = vmatpush1.msra.mxu0 %v709
        %759 = vmatprep.subr.mxu0 %v702
        %760 = vmatpush1.msra.mxu0 %v701
        %761 = vmatprep.subr.mxu0 %v694
        %762 = vmatpush1.msra.mxu0 %v693
        %763 = vmatprep.subr.mxu0 %v686
        %764 = vmatpush1.msra.mxu0 %v685
        %765 = vmatprep.subr.mxu0 %v678
        %766 = vmatpush1.msra.mxu0 %v677
        %767 = vmatprep.subr.mxu0 %v670
        %768 = vmatpush1.msra.mxu0 %v669
        %769 = vmatprep.subr.mxu0 %v662
        %770 = vmatpush1.msra.mxu0 %v661
        %771 = vmatprep.subr.mxu0 %v654
        %772 = vmatpush1.msra.mxu0 %v653
        %773 = vmatprep.subr.mxu0 %v646
        %774 = vmatpush1.msra.mxu0 %v645
        %775 = vmatprep.subr.mxu0 %v638
        %776 = vmatpush1.msra.mxu0 %v637
        %777 = vmatprep.subr.mxu0 %v630
        %778 = vmatpush1.msra.mxu0 %v629
        %779 = vmatprep.subr.mxu0 %v622
        %780 = vmatpush1.msra.mxu0 %v621
        %781 = vmatprep.subr.mxu0 0.0
        %782 = vmatpush2.msra.mxu0 0.0
        %783 = vmatprep.subr.mxu0 0.0
        %784 = vmatpush2.msra.mxu0 0.0
        %785 = vmatprep.subr.mxu0 0.0
        %786 = vmatpush2.msra.mxu0 0.0
        %787 = vmatprep.subr.mxu0 0.0
        %788 = vmatpush2.msra.mxu0 0.0
        %789 = vmatprep.subr.mxu0 0.0
        %790 = vmatpush2.msra.mxu0 0.0
        %791 = vmatprep.subr.mxu0 0.0
        %792 = vmatpush2.msra.mxu0 0.0
        %793 = vmatprep.subr.mxu0 0.0
        %794 = vmatpush2.msra.mxu0 0.0
        %795 = vmatprep.subr.mxu0 0.0
        %796 = vmatpush2.msra.mxu0 0.0
        %797 = vmatprep.subr.mxu0 0.0
        %798 = vmatpush2.msra.mxu0 0.0
        %799 = vmatprep.subr.mxu0 0.0
        %800 = vmatpush2.msra.mxu0 0.0
        %801 = vmatprep.subr.mxu0 0.0
        %802 = vmatpush2.msra.mxu0 0.0
        %803 = vmatprep.subr.mxu0 0.0
        %804 = vmatpush2.msra.mxu0 0.0
        %805 = vmatprep.subr.mxu0 0.0
        %806 = vmatpush2.msra.mxu0 0.0
        %807 = vmatprep.subr.mxu0 0.0
        %808 = vmatpush2.msra.mxu0 0.0
        %809 = vmatprep.subr.mxu0 0.0
        %810 = vmatpush2.msra.mxu0 0.0
        %811 = vmatprep.subr.mxu0 0.0
        %812 = vmatpush2.msra.mxu0 0.0
        %813 = vmatprep.mubr.f32.mxu0 0.0
        %814 = vmatmul.mubr.f32.gmra.mxu0 %v605
        %v815 = vpop.f32.mrf.mxu0
        %v816 = vadd.f32 0.0, %v815
        %v817 = vpop.f32.mrf.mxu0
        %v818 = vadd.f32 0.0, %v817
        %819 = vmatprep.mubr.f32.mxu0 0.0
        %820 = vmatmul.mubr.f32.gmra.mxu0 %v606
        %v821 = vpop.f32.mrf.mxu0
        %v822 = vadd.f32 0.0, %v821
        %v823 = vpop.f32.mrf.mxu0
        %v824 = vadd.f32 0.0, %v823
        %825 = vmatprep.mubr.f32.mxu0 0.0
        %826 = vmatmul.mubr.f32.gmra.mxu0 %v607
        %v827 = vpop.f32.mrf.mxu0
        %v828 = vadd.f32 0.0, %v827
        %v829 = vpop.f32.mrf.mxu0
        %v830 = vadd.f32 0.0, %v829
        %831 = vmatprep.mubr.f32.mxu0 0.0
        %832 = vmatmul.mubr.f32.gmra.mxu0 %v608
        %v833 = vpop.f32.mrf.mxu0
        %v834 = vadd.f32 0.0, %v833
        %v835 = vpop.f32.mrf.mxu0
        %v836 = vadd.f32 0.0, %v835
        %837 = vmatprep.mubr.f32.mxu0 0.0
        %838 = vmatmul.mubr.f32.gmra.mxu0 %v609
        %v839 = vpop.f32.mrf.mxu0
        %v840 = vadd.f32 0.0, %v839
        %v841 = vpop.f32.mrf.mxu0
        %v842 = vadd.f32 0.0, %v841
        %843 = vmatprep.mubr.f32.mxu0 0.0
        %844 = vmatmul.mubr.f32.gmra.mxu0 %v610
        %v845 = vpop.f32.mrf.mxu0
        %v846 = vadd.f32 0.0, %v845
        %v847 = vpop.f32.mrf.mxu0
        %v848 = vadd.f32 0.0, %v847
        %849 = vmatprep.mubr.f32.mxu0 0.0
        %850 = vmatmul.mubr.f32.gmra.mxu0 %v611
        %v851 = vpop.f32.mrf.mxu0
        %v852 = vadd.f32 0.0, %v851
        %v853 = vpop.f32.mrf.mxu0
        %v854 = vadd.f32 0.0, %v853
        %855 = vmatprep.mubr.f32.mxu0 0.0
        %856 = vmatmul.mubr.f32.gmra.mxu0 %v612
        %v857 = vpop.f32.mrf.mxu0
        %v858 = vadd.f32 0.0, %v857
        %v859 = vpop.f32.mrf.mxu0
        %v860 = vadd.f32 0.0, %v859
        %861 = vmatprep.mubr.f32.mxu0 0.0
        %862 = vmatmul.mubr.f32.gmra.mxu0 %v613
        %v863 = vpop.f32.mrf.mxu0
        %v864 = vadd.f32 0.0, %v863
        %v865 = vpop.f32.mrf.mxu0
        %v866 = vadd.f32 0.0, %v865
        %867 = vmatprep.mubr.f32.mxu0 0.0
        %868 = vmatmul.mubr.f32.gmra.mxu0 %v614
        %v869 = vpop.f32.mrf.mxu0
        %v870 = vadd.f32 0.0, %v869
        %v871 = vpop.f32.mrf.mxu0
        %v872 = vadd.f32 0.0, %v871
        %873 = vmatprep.mubr.f32.mxu0 0.0
        %874 = vmatmul.mubr.f32.gmra.mxu0 %v615
        %v875 = vpop.f32.mrf.mxu0
        %v876 = vadd.f32 0.0, %v875
        %v877 = vpop.f32.mrf.mxu0
        %v878 = vadd.f32 0.0, %v877
        %879 = vmatprep.mubr.f32.mxu0 0.0
        %880 = vmatmul.mubr.f32.gmra.mxu0 %v616
        %v881 = vpop.f32.mrf.mxu0
        %v882 = vadd.f32 0.0, %v881
        %v883 = vpop.f32.mrf.mxu0
        %v884 = vadd.f32 0.0, %v883
        %885 = vmatprep.mubr.f32.mxu0 0.0
        %886 = vmatmul.mubr.f32.gmra.mxu0 %v617
        %v887 = vpop.f32.mrf.mxu0
        %v888 = vadd.f32 0.0, %v887
        %v889 = vpop.f32.mrf.mxu0
        %v890 = vadd.f32 0.0, %v889
        %891 = vmatprep.mubr.f32.mxu0 0.0
        %892 = vmatmul.mubr.f32.gmra.mxu0 %v618
        %v893 = vpop.f32.mrf.mxu0
        %v894 = vadd.f32 0.0, %v893
        %v895 = vpop.f32.mrf.mxu0
        %v896 = vadd.f32 0.0, %v895
        %897 = vmatprep.mubr.f32.mxu0 0.0
        %898 = vmatmul.mubr.f32.gmra.mxu0 %v619
        %v899 = vpop.f32.mrf.mxu0
        %v900 = vadd.f32 0.0, %v899
        %v901 = vpop.f32.mrf.mxu0
        %v902 = vadd.f32 0.0, %v901
        %903 = vmatprep.mubr.f32.mxu0 0.0
        %904 = vmatmul.mubr.f32.gmra.mxu0 %v620
        %v905 = vpop.f32.mrf.mxu0
        %v906 = vadd.f32 0.0, %v905
        %v907 = vpop.f32.mrf.mxu0
        %v908 = vadd.f32 0.0, %v907
        %909 = vdwg.mxu0
        %910 = vmatprep.subr.mxu0 %v744
        %911 = vmatpush1.msra.mxu0 %v743
        %912 = vmatprep.subr.mxu0 %v736
        %913 = vmatpush1.msra.mxu0 %v735
        %914 = vmatprep.subr.mxu0 %v728
        %915 = vmatpush1.msra.mxu0 %v727
        %916 = vmatprep.subr.mxu0 %v720
        %917 = vmatpush1.msra.mxu0 %v719
        %918 = vmatprep.subr.mxu0 %v712
        %919 = vmatpush1.msra.mxu0 %v711
        %920 = vmatprep.subr.mxu0 %v704
        %921 = vmatpush1.msra.mxu0 %v703
        %922 = vmatprep.subr.mxu0 %v696
        %923 = vmatpush1.msra.mxu0 %v695
        %924 = vmatprep.subr.mxu0 %v688
        %925 = vmatpush1.msra.mxu0 %v687
        %926 = vmatprep.subr.mxu0 %v680
        %927 = vmatpush1.msra.mxu0 %v679
        %928 = vmatprep.subr.mxu0 %v672
        %929 = vmatpush1.msra.mxu0 %v671
        %930 = vmatprep.subr.mxu0 %v664
        %931 = vmatpush1.msra.mxu0 %v663
        %932 = vmatprep.subr.mxu0 %v656
        %933 = vmatpush1.msra.mxu0 %v655
        %934 = vmatprep.subr.mxu0 %v648
        %935 = vmatpush1.msra.mxu0 %v647
        %936 = vmatprep.subr.mxu0 %v640
        %937 = vmatpush1.msra.mxu0 %v639
        %938 = vmatprep.subr.mxu0 %v632
        %939 = vmatpush1.msra.mxu0 %v631
        %940 = vmatprep.subr.mxu0 %v624
        %941 = vmatpush1.msra.mxu0 %v623
        %942 = vmatprep.subr.mxu0 0.0
        %943 = vmatpush2.msra.mxu0 0.0
        %944 = vmatprep.subr.mxu0 0.0
        %945 = vmatpush2.msra.mxu0 0.0
        %946 = vmatprep.subr.mxu0 0.0
        %947 = vmatpush2.msra.mxu0 0.0
        %948 = vmatprep.subr.mxu0 0.0
        %949 = vmatpush2.msra.mxu0 0.0
        %950 = vmatprep.subr.mxu0 0.0
        %951 = vmatpush2.msra.mxu0 0.0
        %952 = vmatprep.subr.mxu0 0.0
        %953 = vmatpush2.msra.mxu0 0.0
        %954 = vmatprep.subr.mxu0 0.0
        %955 = vmatpush2.msra.mxu0 0.0
        %956 = vmatprep.subr.mxu0 0.0
        %957 = vmatpush2.msra.mxu0 0.0
        %958 = vmatprep.subr.mxu0 0.0
        %959 = vmatpush2.msra.mxu0 0.0
        %960 = vmatprep.subr.mxu0 0.0
        %961 = vmatpush2.msra.mxu0 0.0
        %962 = vmatprep.subr.mxu0 0.0
        %963 = vmatpush2.msra.mxu0 0.0
        %964 = vmatprep.subr.mxu0 0.0
        %965 = vmatpush2.msra.mxu0 0.0
        %966 = vmatprep.subr.mxu0 0.0
        %967 = vmatpush2.msra.mxu0 0.0
        %968 = vmatprep.subr.mxu0 0.0
        %969 = vmatpush2.msra.mxu0 0.0
        %970 = vmatprep.subr.mxu0 0.0
        %971 = vmatpush2.msra.mxu0 0.0
        %972 = vmatprep.subr.mxu0 0.0
        %973 = vmatpush2.msra.mxu0 0.0
        %974 = vmatprep.mubr.f32.mxu0 0.0
        %975 = vmatmul.mubr.f32.gmra.mxu0 %v605
        %v976 = vpop.f32.mrf.mxu0
        %v977 = vadd.f32 0.0, %v976
        %v978 = vpop.f32.mrf.mxu0
        %v979 = vadd.f32 0.0, %v978
        %980 = vmatprep.mubr.f32.mxu0 0.0
        %981 = vmatmul.mubr.f32.gmra.mxu0 %v606
        %v982 = vpop.f32.mrf.mxu0
        %v983 = vadd.f32 0.0, %v982
        %v984 = vpop.f32.mrf.mxu0
        %v985 = vadd.f32 0.0, %v984
        %986 = vmatprep.mubr.f32.mxu0 0.0
        %987 = vmatmul.mubr.f32.gmra.mxu0 %v607
        %v988 = vpop.f32.mrf.mxu0
        %v989 = vadd.f32 0.0, %v988
        %v990 = vpop.f32.mrf.mxu0
        %v991 = vadd.f32 0.0, %v990
        %992 = vmatprep.mubr.f32.mxu0 0.0
        %993 = vmatmul.mubr.f32.gmra.mxu0 %v608
        %v994 = vpop.f32.mrf.mxu0
        %v995 = vadd.f32 0.0, %v994
        %v996 = vpop.f32.mrf.mxu0
        %v997 = vadd.f32 0.0, %v996
        %998 = vmatprep.mubr.f32.mxu0 0.0
        %999 = vmatmul.mubr.f32.gmra.mxu0 %v609
        %v1000 = vpop.f32.mrf.mxu0
        %v1001 = vadd.f32 0.0, %v1000
        %v1002 = vpop.f32.mrf.mxu0
        %v1003 = vadd.f32 0.0, %v1002
        %1004 = vmatprep.mubr.f32.mxu0 0.0
        %1005 = vmatmul.mubr.f32.gmra.mxu0 %v610
        %v1006 = vpop.f32.mrf.mxu0
        %v1007 = vadd.f32 0.0, %v1006
        %v1008 = vpop.f32.mrf.mxu0
        %v1009 = vadd.f32 0.0, %v1008
        %1010 = vmatprep.mubr.f32.mxu0 0.0
        %1011 = vmatmul.mubr.f32.gmra.mxu0 %v611
        %v1012 = vpop.f32.mrf.mxu0
        %v1013 = vadd.f32 0.0, %v1012
        %v1014 = vpop.f32.mrf.mxu0
        %v1015 = vadd.f32 0.0, %v1014
        %1016 = vmatprep.mubr.f32.mxu0 0.0
        %1017 = vmatmul.mubr.f32.gmra.mxu0 %v612
        %v1018 = vpop.f32.mrf.mxu0
        %v1019 = vadd.f32 0.0, %v1018
        %v1020 = vpop.f32.mrf.mxu0
        %v1021 = vadd.f32 0.0, %v1020
        %1022 = vmatprep.mubr.f32.mxu0 0.0
        %1023 = vmatmul.mubr.f32.gmra.mxu0 %v613
        %v1024 = vpop.f32.mrf.mxu0
        %v1025 = vadd.f32 0.0, %v1024
        %v1026 = vpop.f32.mrf.mxu0
        %v1027 = vadd.f32 0.0, %v1026
        %1028 = vmatprep.mubr.f32.mxu0 0.0
        %1029 = vmatmul.mubr.f32.gmra.mxu0 %v614
        %v1030 = vpop.f32.mrf.mxu0
        %v1031 = vadd.f32 0.0, %v1030
        %v1032 = vpop.f32.mrf.mxu0
        %v1033 = vadd.f32 0.0, %v1032
        %1034 = vmatprep.mubr.f32.mxu0 0.0
        %1035 = vmatmul.mubr.f32.gmra.mxu0 %v615
        %v1036 = vpop.f32.mrf.mxu0
        %v1037 = vadd.f32 0.0, %v1036
        %v1038 = vpop.f32.mrf.mxu0
        %v1039 = vadd.f32 0.0, %v1038
        %1040 = vmatprep.mubr.f32.mxu0 0.0
        %1041 = vmatmul.mubr.f32.gmra.mxu0 %v616
        %v1042 = vpop.f32.mrf.mxu0
        %v1043 = vadd.f32 0.0, %v1042
        %v1044 = vpop.f32.mrf.mxu0
        %v1045 = vadd.f32 0.0, %v1044
        %1046 = vmatprep.mubr.f32.mxu0 0.0
        %1047 = vmatmul.mubr.f32.gmra.mxu0 %v617
        %v1048 = vpop.f32.mrf.mxu0
        %v1049 = vadd.f32 0.0, %v1048
        %v1050 = vpop.f32.mrf.mxu0
        %v1051 = vadd.f32 0.0, %v1050
        %1052 = vmatprep.mubr.f32.mxu0 0.0
        %1053 = vmatmul.mubr.f32.gmra.mxu0 %v618
        %v1054 = vpop.f32.mrf.mxu0
        %v1055 = vadd.f32 0.0, %v1054
        %v1056 = vpop.f32.mrf.mxu0
        %v1057 = vadd.f32 0.0, %v1056
        %1058 = vmatprep.mubr.f32.mxu0 0.0
        %1059 = vmatmul.mubr.f32.gmra.mxu0 %v619
        %v1060 = vpop.f32.mrf.mxu0
        %v1061 = vadd.f32 0.0, %v1060
        %v1062 = vpop.f32.mrf.mxu0
        %v1063 = vadd.f32 0.0, %v1062
        %1064 = vmatprep.mubr.f32.mxu0 0.0
        %1065 = vmatmul.mubr.f32.gmra.mxu0 %v620
        %v1066 = vpop.f32.mrf.mxu0
        %v1067 = vadd.f32 0.0, %v1066
        %v1068 = vpop.f32.mrf.mxu0
        %v1069 = vadd.f32 0.0, %v1068
        %1070 = vdwg.mxu0
        %1071 = vmatprep.subr.mxu0 %v746
        %1072 = vmatpush1.msra.mxu0 %v745
        %1073 = vmatprep.subr.mxu0 %v738
        %1074 = vmatpush1.msra.mxu0 %v737
        %1075 = vmatprep.subr.mxu0 %v730
        %1076 = vmatpush1.msra.mxu0 %v729
        %1077 = vmatprep.subr.mxu0 %v722
        %1078 = vmatpush1.msra.mxu0 %v721
        %1079 = vmatprep.subr.mxu0 %v714
        %1080 = vmatpush1.msra.mxu0 %v713
        %1081 = vmatprep.subr.mxu0 %v706
        %1082 = vmatpush1.msra.mxu0 %v705
        %1083 = vmatprep.subr.mxu0 %v698
        %1084 = vmatpush1.msra.mxu0 %v697
        %1085 = vmatprep.subr.mxu0 %v690
        %1086 = vmatpush1.msra.mxu0 %v689
        %1087 = vmatprep.subr.mxu0 %v682
        %1088 = vmatpush1.msra.mxu0 %v681
        %1089 = vmatprep.subr.mxu0 %v674
        %1090 = vmatpush1.msra.mxu0 %v673
        %1091 = vmatprep.subr.mxu0 %v666
        %1092 = vmatpush1.msra.mxu0 %v665
        %1093 = vmatprep.subr.mxu0 %v658
        %1094 = vmatpush1.msra.mxu0 %v657
        %1095 = vmatprep.subr.mxu0 %v650
        %1096 = vmatpush1.msra.mxu0 %v649
        %1097 = vmatprep.subr.mxu0 %v642
        %1098 = vmatpush1.msra.mxu0 %v641
        %1099 = vmatprep.subr.mxu0 %v634
        %1100 = vmatpush1.msra.mxu0 %v633
        %1101 = vmatprep.subr.mxu0 %v626
        %1102 = vmatpush1.msra.mxu0 %v625
        %1103 = vmatprep.subr.mxu0 0.0
        %1104 = vmatpush2.msra.mxu0 0.0
        %1105 = vmatprep.subr.mxu0 0.0
        %1106 = vmatpush2.msra.mxu0 0.0
        %1107 = vmatprep.subr.mxu0 0.0
        %1108 = vmatpush2.msra.mxu0 0.0
        %1109 = vmatprep.subr.mxu0 0.0
        %1110 = vmatpush2.msra.mxu0 0.0
        %1111 = vmatprep.subr.mxu0 0.0
        %1112 = vmatpush2.msra.mxu0 0.0
        %1113 = vmatprep.subr.mxu0 0.0
        %1114 = vmatpush2.msra.mxu0 0.0
        %1115 = vmatprep.subr.mxu0 0.0
        %1116 = vmatpush2.msra.mxu0 0.0
        %1117 = vmatprep.subr.mxu0 0.0
        %1118 = vmatpush2.msra.mxu0 0.0
        %1119 = vmatprep.subr.mxu0 0.0
        %1120 = vmatpush2.msra.mxu0 0.0
        %1121 = vmatprep.subr.mxu0 0.0
        %1122 = vmatpush2.msra.mxu0 0.0
        %1123 = vmatprep.subr.mxu0 0.0
        %1124 = vmatpush2.msra.mxu0 0.0
        %1125 = vmatprep.subr.mxu0 0.0
        %1126 = vmatpush2.msra.mxu0 0.0
        %1127 = vmatprep.subr.mxu0 0.0
        %1128 = vmatpush2.msra.mxu0 0.0
        %1129 = vmatprep.subr.mxu0 0.0
        %1130 = vmatpush2.msra.mxu0 0.0
        %1131 = vmatprep.subr.mxu0 0.0
        %1132 = vmatpush2.msra.mxu0 0.0
        %1133 = vmatprep.subr.mxu0 0.0
        %1134 = vmatpush2.msra.mxu0 0.0
        %1135 = vmatprep.mubr.f32.mxu0 0.0
        %1136 = vmatmul.mubr.f32.gmra.mxu0 %v605
        %v1137 = vpop.f32.mrf.mxu0
        %v1138 = vadd.f32 0.0, %v1137
        %v1139 = vpop.f32.mrf.mxu0
        %v1140 = vadd.f32 0.0, %v1139
        %1141 = vmatprep.mubr.f32.mxu0 0.0
        %1142 = vmatmul.mubr.f32.gmra.mxu0 %v606
        %v1143 = vpop.f32.mrf.mxu0
        %v1144 = vadd.f32 0.0, %v1143
        %v1145 = vpop.f32.mrf.mxu0
        %v1146 = vadd.f32 0.0, %v1145
        %1147 = vmatprep.mubr.f32.mxu0 0.0
        %1148 = vmatmul.mubr.f32.gmra.mxu0 %v607
        %v1149 = vpop.f32.mrf.mxu0
        %v1150 = vadd.f32 0.0, %v1149
        %v1151 = vpop.f32.mrf.mxu0
        %v1152 = vadd.f32 0.0, %v1151
        %1153 = vmatprep.mubr.f32.mxu0 0.0
        %1154 = vmatmul.mubr.f32.gmra.mxu0 %v608
        %v1155 = vpop.f32.mrf.mxu0
        %v1156 = vadd.f32 0.0, %v1155
        %v1157 = vpop.f32.mrf.mxu0
        %v1158 = vadd.f32 0.0, %v1157
        %1159 = vmatprep.mubr.f32.mxu0 0.0
        %1160 = vmatmul.mubr.f32.gmra.mxu0 %v609
        %v1161 = vpop.f32.mrf.mxu0
        %v1162 = vadd.f32 0.0, %v1161
        %v1163 = vpop.f32.mrf.mxu0
        %v1164 = vadd.f32 0.0, %v1163
        %1165 = vmatprep.mubr.f32.mxu0 0.0
        %1166 = vmatmul.mubr.f32.gmra.mxu0 %v610
        %v1167 = vpop.f32.mrf.mxu0
        %v1168 = vadd.f32 0.0, %v1167
        %v1169 = vpop.f32.mrf.mxu0
        %v1170 = vadd.f32 0.0, %v1169
        %1171 = vmatprep.mubr.f32.mxu0 0.0
        %1172 = vmatmul.mubr.f32.gmra.mxu0 %v611
        %v1173 = vpop.f32.mrf.mxu0
        %v1174 = vadd.f32 0.0, %v1173
        %v1175 = vpop.f32.mrf.mxu0
        %v1176 = vadd.f32 0.0, %v1175
        %1177 = vmatprep.mubr.f32.mxu0 0.0
        %1178 = vmatmul.mubr.f32.gmra.mxu0 %v612
        %v1179 = vpop.f32.mrf.mxu0
        %v1180 = vadd.f32 0.0, %v1179
        %v1181 = vpop.f32.mrf.mxu0
        %v1182 = vadd.f32 0.0, %v1181
        %1183 = vmatprep.mubr.f32.mxu0 0.0
        %1184 = vmatmul.mubr.f32.gmra.mxu0 %v613
        %v1185 = vpop.f32.mrf.mxu0
        %v1186 = vadd.f32 0.0, %v1185
        %v1187 = vpop.f32.mrf.mxu0
        %v1188 = vadd.f32 0.0, %v1187
        %1189 = vmatprep.mubr.f32.mxu0 0.0
        %1190 = vmatmul.mubr.f32.gmra.mxu0 %v614
        %v1191 = vpop.f32.mrf.mxu0
        %v1192 = vadd.f32 0.0, %v1191
        %v1193 = vpop.f32.mrf.mxu0
        %v1194 = vadd.f32 0.0, %v1193
        %1195 = vmatprep.mubr.f32.mxu0 0.0
        %1196 = vmatmul.mubr.f32.gmra.mxu0 %v615
        %v1197 = vpop.f32.mrf.mxu0
        %v1198 = vadd.f32 0.0, %v1197
        %v1199 = vpop.f32.mrf.mxu0
        %v1200 = vadd.f32 0.0, %v1199
        %1201 = vmatprep.mubr.f32.mxu0 0.0
        %1202 = vmatmul.mubr.f32.gmra.mxu0 %v616
        %v1203 = vpop.f32.mrf.mxu0
        %v1204 = vadd.f32 0.0, %v1203
        %v1205 = vpop.f32.mrf.mxu0
        %v1206 = vadd.f32 0.0, %v1205
        %1207 = vmatprep.mubr.f32.mxu0 0.0
        %1208 = vmatmul.mubr.f32.gmra.mxu0 %v617
        %v1209 = vpop.f32.mrf.mxu0
        %v1210 = vadd.f32 0.0, %v1209
        %v1211 = vpop.f32.mrf.mxu0
        %v1212 = vadd.f32 0.0, %v1211
        %1213 = vmatprep.mubr.f32.mxu0 0.0
        %1214 = vmatmul.mubr.f32.gmra.mxu0 %v618
        %v1215 = vpop.f32.mrf.mxu0
        %v1216 = vadd.f32 0.0, %v1215
        %v1217 = vpop.f32.mrf.mxu0
        %v1218 = vadd.f32 0.0, %v1217
        %1219 = vmatprep.mubr.f32.mxu0 0.0
        %1220 = vmatmul.mubr.f32.gmra.mxu0 %v619
        %v1221 = vpop.f32.mrf.mxu0
        %v1222 = vadd.f32 0.0, %v1221
        %v1223 = vpop.f32.mrf.mxu0
        %v1224 = vadd.f32 0.0, %v1223
        %1225 = vmatprep.mubr.f32.mxu0 0.0
        %1226 = vmatmul.mubr.f32.gmra.mxu0 %v620
        %v1227 = vpop.f32.mrf.mxu0
        %v1228 = vadd.f32 0.0, %v1227
        %v1229 = vpop.f32.mrf.mxu0
        %v1230 = vadd.f32 0.0, %v1229
        %1231 = vdwg.mxu0
        %1232 = vmatprep.subr.mxu0 %v748
        %1233 = vmatpush1.msra.mxu0 %v747
        %1234 = vmatprep.subr.mxu0 %v740
        %1235 = vmatpush1.msra.mxu0 %v739
        %1236 = vmatprep.subr.mxu0 %v732
        %1237 = vmatpush1.msra.mxu0 %v731
        %1238 = vmatprep.subr.mxu0 %v724
        %1239 = vmatpush1.msra.mxu0 %v723
        %1240 = vmatprep.subr.mxu0 %v716
        %1241 = vmatpush1.msra.mxu0 %v715
        %1242 = vmatprep.subr.mxu0 %v708
        %1243 = vmatpush1.msra.mxu0 %v707
        %1244 = vmatprep.subr.mxu0 %v700
        %1245 = vmatpush1.msra.mxu0 %v699
        %1246 = vmatprep.subr.mxu0 %v692
        %1247 = vmatpush1.msra.mxu0 %v691
        %1248 = vmatprep.subr.mxu0 %v684
        %1249 = vmatpush1.msra.mxu0 %v683
        %1250 = vmatprep.subr.mxu0 %v676
        %1251 = vmatpush1.msra.mxu0 %v675
        %1252 = vmatprep.subr.mxu0 %v668
        %1253 = vmatpush1.msra.mxu0 %v667
        %1254 = vmatprep.subr.mxu0 %v660
        %1255 = vmatpush1.msra.mxu0 %v659
        %1256 = vmatprep.subr.mxu0 %v652
        %1257 = vmatpush1.msra.mxu0 %v651
        %1258 = vmatprep.subr.mxu0 %v644
        %1259 = vmatpush1.msra.mxu0 %v643
        %1260 = vmatprep.subr.mxu0 %v636
        %1261 = vmatpush1.msra.mxu0 %v635
        %1262 = vmatprep.subr.mxu0 %v628
        %1263 = vmatpush1.msra.mxu0 %v627
        %1264 = vmatprep.subr.mxu0 0.0
        %1265 = vmatpush2.msra.mxu0 0.0
        %1266 = vmatprep.subr.mxu0 0.0
        %1267 = vmatpush2.msra.mxu0 0.0
        %1268 = vmatprep.subr.mxu0 0.0
        %1269 = vmatpush2.msra.mxu0 0.0
        %1270 = vmatprep.subr.mxu0 0.0
        %1271 = vmatpush2.msra.mxu0 0.0
        %1272 = vmatprep.subr.mxu0 0.0
        %1273 = vmatpush2.msra.mxu0 0.0
        %1274 = vmatprep.subr.mxu0 0.0
        %1275 = vmatpush2.msra.mxu0 0.0
        %1276 = vmatprep.subr.mxu0 0.0
        %1277 = vmatpush2.msra.mxu0 0.0
        %1278 = vmatprep.subr.mxu0 0.0
        %1279 = vmatpush2.msra.mxu0 0.0
        %1280 = vmatprep.subr.mxu0 0.0
        %1281 = vmatpush2.msra.mxu0 0.0
        %1282 = vmatprep.subr.mxu0 0.0
        %1283 = vmatpush2.msra.mxu0 0.0
        %1284 = vmatprep.subr.mxu0 0.0
        %1285 = vmatpush2.msra.mxu0 0.0
        %1286 = vmatprep.subr.mxu0 0.0
        %1287 = vmatpush2.msra.mxu0 0.0
        %1288 = vmatprep.subr.mxu0 0.0
        %1289 = vmatpush2.msra.mxu0 0.0
        %1290 = vmatprep.subr.mxu0 0.0
        %1291 = vmatpush2.msra.mxu0 0.0
        %1292 = vmatprep.subr.mxu0 0.0
        %1293 = vmatpush2.msra.mxu0 0.0
        %1294 = vmatprep.subr.mxu0 0.0
        %1295 = vmatpush2.msra.mxu0 0.0
        %1296 = vmatprep.mubr.f32.mxu0 0.0
        %1297 = vmatmul.mubr.f32.gmra.mxu0 %v605
        %v1298 = vpop.f32.mrf.mxu0
        %v1299 = vadd.f32 0.0, %v1298
        %v1300 = vpop.f32.mrf.mxu0
        %v1301 = vadd.f32 0.0, %v1300
        %1302 = vmatprep.mubr.f32.mxu0 0.0
        %1303 = vmatmul.mubr.f32.gmra.mxu0 %v606
        %v1304 = vpop.f32.mrf.mxu0
        %v1305 = vadd.f32 0.0, %v1304
        %v1306 = vpop.f32.mrf.mxu0
        %v1307 = vadd.f32 0.0, %v1306
        %1308 = vmatprep.mubr.f32.mxu0 0.0
        %1309 = vmatmul.mubr.f32.gmra.mxu0 %v607
        %v1310 = vpop.f32.mrf.mxu0
        %v1311 = vadd.f32 0.0, %v1310
        %v1312 = vpop.f32.mrf.mxu0
        %v1313 = vadd.f32 0.0, %v1312
        %1314 = vmatprep.mubr.f32.mxu0 0.0
        %1315 = vmatmul.mubr.f32.gmra.mxu0 %v608
        %v1316 = vpop.f32.mrf.mxu0
        %v1317 = vadd.f32 0.0, %v1316
        %v1318 = vpop.f32.mrf.mxu0
        %v1319 = vadd.f32 0.0, %v1318
        %1320 = vmatprep.mubr.f32.mxu0 0.0
        %1321 = vmatmul.mubr.f32.gmra.mxu0 %v609
        %v1322 = vpop.f32.mrf.mxu0
        %v1323 = vadd.f32 0.0, %v1322
        %v1324 = vpop.f32.mrf.mxu0
        %v1325 = vadd.f32 0.0, %v1324
        %1326 = vmatprep.mubr.f32.mxu0 0.0
        %1327 = vmatmul.mubr.f32.gmra.mxu0 %v610
        %v1328 = vpop.f32.mrf.mxu0
        %v1329 = vadd.f32 0.0, %v1328
        %v1330 = vpop.f32.mrf.mxu0
        %v1331 = vadd.f32 0.0, %v1330
        %1332 = vmatprep.mubr.f32.mxu0 0.0
        %1333 = vmatmul.mubr.f32.gmra.mxu0 %v611
        %v1334 = vpop.f32.mrf.mxu0
        %v1335 = vadd.f32 0.0, %v1334
        %v1336 = vpop.f32.mrf.mxu0
        %v1337 = vadd.f32 0.0, %v1336
        %1338 = vmatprep.mubr.f32.mxu0 0.0
        %1339 = vmatmul.mubr.f32.gmra.mxu0 %v612
        %v1340 = vpop.f32.mrf.mxu0
        %v1341 = vadd.f32 0.0, %v1340
        %v1342 = vpop.f32.mrf.mxu0
        %v1343 = vadd.f32 0.0, %v1342
        %1344 = vmatprep.mubr.f32.mxu0 0.0
        %1345 = vmatmul.mubr.f32.gmra.mxu0 %v613
        %v1346 = vpop.f32.mrf.mxu0
        %v1347 = vadd.f32 0.0, %v1346
        %v1348 = vpop.f32.mrf.mxu0
        %v1349 = vadd.f32 0.0, %v1348
        %1350 = vmatprep.mubr.f32.mxu0 0.0
        %1351 = vmatmul.mubr.f32.gmra.mxu0 %v614
        %v1352 = vpop.f32.mrf.mxu0
        %v1353 = vadd.f32 0.0, %v1352
        %v1354 = vpop.f32.mrf.mxu0
        %v1355 = vadd.f32 0.0, %v1354
        %1356 = vmatprep.mubr.f32.mxu0 0.0
        %1357 = vmatmul.mubr.f32.gmra.mxu0 %v615
        %v1358 = vpop.f32.mrf.mxu0
        %v1359 = vadd.f32 0.0, %v1358
        %v1360 = vpop.f32.mrf.mxu0
        %v1361 = vadd.f32 0.0, %v1360
        %1362 = vmatprep.mubr.f32.mxu0 0.0
        %1363 = vmatmul.mubr.f32.gmra.mxu0 %v616
        %v1364 = vpop.f32.mrf.mxu0
        %v1365 = vadd.f32 0.0, %v1364
        %v1366 = vpop.f32.mrf.mxu0
        %v1367 = vadd.f32 0.0, %v1366
        %1368 = vmatprep.mubr.f32.mxu0 0.0
        %1369 = vmatmul.mubr.f32.gmra.mxu0 %v617
        %v1370 = vpop.f32.mrf.mxu0
        %v1371 = vadd.f32 0.0, %v1370
        %v1372 = vpop.f32.mrf.mxu0
        %v1373 = vadd.f32 0.0, %v1372
        %1374 = vmatprep.mubr.f32.mxu0 0.0
        %1375 = vmatmul.mubr.f32.gmra.mxu0 %v618
        %v1376 = vpop.f32.mrf.mxu0
        %v1377 = vadd.f32 0.0, %v1376
        %v1378 = vpop.f32.mrf.mxu0
        %v1379 = vadd.f32 0.0, %v1378
        %1380 = vmatprep.mubr.f32.mxu0 0.0
        %1381 = vmatmul.mubr.f32.gmra.mxu0 %v619
        %v1382 = vpop.f32.mrf.mxu0
        %v1383 = vadd.f32 0.0, %v1382
        %v1384 = vpop.f32.mrf.mxu0
        %v1385 = vadd.f32 0.0, %v1384
        %1386 = vmatprep.mubr.f32.mxu0 0.0
        %1387 = vmatmul.mubr.f32.gmra.mxu0 %v620
        %v1388 = vpop.f32.mrf.mxu0
        %v1389 = vadd.f32 0.0, %v1388
        %v1390 = vpop.f32.mrf.mxu0
        %v1391 = vadd.f32 0.0, %v1390
        %1392 = vdwg.mxu0
        %v1393 = vld [vmem:[#allocation8] sm:$0xff]
        %v1394 = vld [vmem:[#allocation8 + $0x8] sm:$0xff]
        %v1395 = vld [vmem:[#allocation8 + $0x10] sm:$0xff]
        %v1396 = vld [vmem:[#allocation8 + $0x18] sm:$0xff]
        %v1397 = vld [vmem:[#allocation8 + $0x20] sm:$0xff]
        %v1398 = vld [vmem:[#allocation8 + $0x28] sm:$0xff]
        %v1399 = vld [vmem:[#allocation8 + $0x30] sm:$0xff]
        %v1400 = vld [vmem:[#allocation8 + $0x38] sm:$0xff]
        %v1401 = vld [vmem:[#allocation8 + $0x40] sm:$0xff]
        %v1402 = vld [vmem:[#allocation8 + $0x48] sm:$0xff]
        %v1403 = vld [vmem:[#allocation8 + $0x50] sm:$0xff]
        %v1404 = vld [vmem:[#allocation8 + $0x58] sm:$0xff]
        %v1405 = vld [vmem:[#allocation8 + $0x60] sm:$0xff]
        %v1406 = vld [vmem:[#allocation8 + $0x68] sm:$0xff]
        %v1407 = vld [vmem:[#allocation8 + $0x70] sm:$0xff]
        %v1408 = vld [vmem:[#allocation8 + $0x78] sm:$0xff]
        %v1409 = vld [vmem:[#allocation8 + $0x80] sm:$0xff]
        %v1410 = vld [vmem:[#allocation8 + $0x88] sm:$0xff]
        %v1411 = vld [vmem:[#allocation8 + $0x90] sm:$0xff]
        %v1412 = vld [vmem:[#allocation8 + $0x98] sm:$0xff]
        %v1413 = vld [vmem:[#allocation8 + $0xa0] sm:$0xff]
        %v1414 = vld [vmem:[#allocation8 + $0xa8] sm:$0xff]
        %v1415 = vld [vmem:[#allocation8 + $0xb0] sm:$0xff]
        %v1416 = vld [vmem:[#allocation8 + $0xb8] sm:$0xff]
        %v1417 = vld [vmem:[#allocation8 + $0xc0] sm:$0xff]
        %v1418 = vld [vmem:[#allocation8 + $0xc8] sm:$0xff]
        %v1419 = vld [vmem:[#allocation8 + $0xd0] sm:$0xff]
        %v1420 = vld [vmem:[#allocation8 + $0xd8] sm:$0xff]
        %v1421 = vld [vmem:[#allocation8 + $0xe0] sm:$0xff]
        %v1422 = vld [vmem:[#allocation8 + $0xe8] sm:$0xff]
        %v1423 = vld [vmem:[#allocation8 + $0xf0] sm:$0xff]
        %v1424 = vld [vmem:[#allocation8 + $0xf8] sm:$0xff]
        %v1425 = vld [vmem:[#allocation8 + $0x100] sm:$0xff]
        %v1426 = vld [vmem:[#allocation8 + $0x108] sm:$0xff]
        %v1427 = vld [vmem:[#allocation8 + $0x110] sm:$0xff]
        %v1428 = vld [vmem:[#allocation8 + $0x118] sm:$0xff]
        %v1429 = vld [vmem:[#allocation8 + $0x120] sm:$0xff]
        %v1430 = vld [vmem:[#allocation8 + $0x128] sm:$0xff]
        %v1431 = vld [vmem:[#allocation8 + $0x130] sm:$0xff]
        %v1432 = vld [vmem:[#allocation8 + $0x138] sm:$0xff]
        %v1433 = vld [vmem:[#allocation8 + $0x140] sm:$0xff]
        %v1434 = vld [vmem:[#allocation8 + $0x148] sm:$0xff]
        %v1435 = vld [vmem:[#allocation8 + $0x150] sm:$0xff]
        %v1436 = vld [vmem:[#allocation8 + $0x158] sm:$0xff]
        %v1437 = vld [vmem:[#allocation8 + $0x160] sm:$0xff]
        %v1438 = vld [vmem:[#allocation8 + $0x168] sm:$0xff]
        %v1439 = vld [vmem:[#allocation8 + $0x170] sm:$0xff]
        %v1440 = vld [vmem:[#allocation8 + $0x178] sm:$0xff]
        %v1441 = vld [vmem:[#allocation8 + $0x180] sm:$0xff]
        %v1442 = vld [vmem:[#allocation8 + $0x188] sm:$0xff]
        %v1443 = vld [vmem:[#allocation8 + $0x190] sm:$0xff]
        %v1444 = vld [vmem:[#allocation8 + $0x198] sm:$0xff]
        %v1445 = vld [vmem:[#allocation8 + $0x1a0] sm:$0xff]
        %v1446 = vld [vmem:[#allocation8 + $0x1a8] sm:$0xff]
        %v1447 = vld [vmem:[#allocation8 + $0x1b0] sm:$0xff]
        %v1448 = vld [vmem:[#allocation8 + $0x1b8] sm:$0xff]
        %v1449 = vld [vmem:[#allocation8 + $0x1c0] sm:$0xff]
        %v1450 = vld [vmem:[#allocation8 + $0x1c8] sm:$0xff]
        %v1451 = vld [vmem:[#allocation8 + $0x1d0] sm:$0xff]
        %v1452 = vld [vmem:[#allocation8 + $0x1d8] sm:$0xff]
        %v1453 = vld [vmem:[#allocation8 + $0x1e0] sm:$0xff]
        %v1454 = vld [vmem:[#allocation8 + $0x1e8] sm:$0xff]
        %v1455 = vld [vmem:[#allocation8 + $0x1f0] sm:$0xff]
        %v1456 = vld [vmem:[#allocation8 + $0x1f8] sm:$0xff]
        %v1457 = vld [vmem:[#allocation8 + $0x200] sm:$0xff]
        %v1458 = vld [vmem:[#allocation8 + $0x208] sm:$0xff]
        %v1459 = vld [vmem:[#allocation8 + $0x210] sm:$0xff]
        %v1460 = vld [vmem:[#allocation8 + $0x218] sm:$0xff]
        %v1461 = vld [vmem:[#allocation8 + $0x220] sm:$0xff]
        %v1462 = vld [vmem:[#allocation8 + $0x228] sm:$0xff]
        %v1463 = vld [vmem:[#allocation8 + $0x230] sm:$0xff]
        %v1464 = vld [vmem:[#allocation8 + $0x238] sm:$0xff]
        %v1465 = vld [vmem:[#allocation8 + $0x240] sm:$0xff]
        %v1466 = vld [vmem:[#allocation8 + $0x248] sm:$0xff]
        %v1467 = vld [vmem:[#allocation8 + $0x250] sm:$0xff]
        %v1468 = vld [vmem:[#allocation8 + $0x258] sm:$0xff]
        %v1469 = vld [vmem:[#allocation8 + $0x260] sm:$0xff]
        %v1470 = vld [vmem:[#allocation8 + $0x268] sm:$0xff]
        %v1471 = vld [vmem:[#allocation8 + $0x270] sm:$0xff]
        %v1472 = vld [vmem:[#allocation8 + $0x278] sm:$0xff]
        %v1473 = vld [vmem:[#allocation8 + $0x280] sm:$0xff]
        %v1474 = vld [vmem:[#allocation8 + $0x288] sm:$0xff]
        %v1475 = vld [vmem:[#allocation8 + $0x290] sm:$0xff]
        %v1476 = vld [vmem:[#allocation8 + $0x298] sm:$0xff]
        %v1477 = vld [vmem:[#allocation8 + $0x2a0] sm:$0xff]
        %v1478 = vld [vmem:[#allocation8 + $0x2a8] sm:$0xff]
        %v1479 = vld [vmem:[#allocation8 + $0x2b0] sm:$0xff]
        %v1480 = vld [vmem:[#allocation8 + $0x2b8] sm:$0xff]
        %v1481 = vld [vmem:[#allocation8 + $0x2c0] sm:$0xff]
        %v1482 = vld [vmem:[#allocation8 + $0x2c8] sm:$0xff]
        %v1483 = vld [vmem:[#allocation8 + $0x2d0] sm:$0xff]
        %v1484 = vld [vmem:[#allocation8 + $0x2d8] sm:$0xff]
        %v1485 = vld [vmem:[#allocation8 + $0x2e0] sm:$0xff]
        %v1486 = vld [vmem:[#allocation8 + $0x2e8] sm:$0xff]
        %v1487 = vld [vmem:[#allocation8 + $0x2f0] sm:$0xff]
        %v1488 = vld [vmem:[#allocation8 + $0x2f8] sm:$0xff]
        %v1489 = vld [vmem:[#allocation8 + $0x300] sm:$0xff]
        %v1490 = vld [vmem:[#allocation8 + $0x308] sm:$0xff]
        %v1491 = vld [vmem:[#allocation8 + $0x310] sm:$0xff]
        %v1492 = vld [vmem:[#allocation8 + $0x318] sm:$0xff]
        %v1493 = vld [vmem:[#allocation8 + $0x320] sm:$0xff]
        %v1494 = vld [vmem:[#allocation8 + $0x328] sm:$0xff]
        %v1495 = vld [vmem:[#allocation8 + $0x330] sm:$0xff]
        %v1496 = vld [vmem:[#allocation8 + $0x338] sm:$0xff]
        %v1497 = vld [vmem:[#allocation8 + $0x340] sm:$0xff]
        %v1498 = vld [vmem:[#allocation8 + $0x348] sm:$0xff]
        %v1499 = vld [vmem:[#allocation8 + $0x350] sm:$0xff]
        %v1500 = vld [vmem:[#allocation8 + $0x358] sm:$0xff]
        %v1501 = vld [vmem:[#allocation8 + $0x360] sm:$0xff]
        %v1502 = vld [vmem:[#allocation8 + $0x368] sm:$0xff]
        %v1503 = vld [vmem:[#allocation8 + $0x370] sm:$0xff]
        %v1504 = vld [vmem:[#allocation8 + $0x378] sm:$0xff]
        %v1505 = vld [vmem:[#allocation8 + $0x380] sm:$0xff]
        %v1506 = vld [vmem:[#allocation8 + $0x388] sm:$0xff]
        %v1507 = vld [vmem:[#allocation8 + $0x390] sm:$0xff]
        %v1508 = vld [vmem:[#allocation8 + $0x398] sm:$0xff]
        %v1509 = vld [vmem:[#allocation8 + $0x3a0] sm:$0xff]
        %v1510 = vld [vmem:[#allocation8 + $0x3a8] sm:$0xff]
        %v1511 = vld [vmem:[#allocation8 + $0x3b0] sm:$0xff]
        %v1512 = vld [vmem:[#allocation8 + $0x3b8] sm:$0xff]
        %v1513 = vld [vmem:[#allocation8 + $0x3c0] sm:$0xff]
        %v1514 = vld [vmem:[#allocation8 + $0x3c8] sm:$0xff]
        %v1515 = vld [vmem:[#allocation8 + $0x3d0] sm:$0xff]
        %v1516 = vld [vmem:[#allocation8 + $0x3d8] sm:$0xff]
        %v1517 = vld [vmem:[#allocation8 + $0x3e0] sm:$0xff]
        %v1518 = vld [vmem:[#allocation8 + $0x3e8] sm:$0xff]
        %v1519 = vld [vmem:[#allocation8 + $0x3f0] sm:$0xff]
        %v1520 = vld [vmem:[#allocation8 + $0x3f8] sm:$0xff]
        %1521 = vmatprep.subr.mxu0 %v1514
        %1522 = vmatpush1.msra.mxu0 %v1513
        %1523 = vmatprep.subr.mxu0 %v1506
        %1524 = vmatpush1.msra.mxu0 %v1505
        %1525 = vmatprep.subr.mxu0 %v1498
        %1526 = vmatpush1.msra.mxu0 %v1497
        %1527 = vmatprep.subr.mxu0 %v1490
        %1528 = vmatpush1.msra.mxu0 %v1489
        %1529 = vmatprep.subr.mxu0 %v1482
        %1530 = vmatpush1.msra.mxu0 %v1481
        %1531 = vmatprep.subr.mxu0 %v1474
        %1532 = vmatpush1.msra.mxu0 %v1473
        %1533 = vmatprep.subr.mxu0 %v1466
        %1534 = vmatpush1.msra.mxu0 %v1465
        %1535 = vmatprep.subr.mxu0 %v1458
        %1536 = vmatpush1.msra.mxu0 %v1457
        %1537 = vmatprep.subr.mxu0 %v1450
        %1538 = vmatpush1.msra.mxu0 %v1449
        %1539 = vmatprep.subr.mxu0 %v1442
        %1540 = vmatpush1.msra.mxu0 %v1441
        %1541 = vmatprep.subr.mxu0 %v1434
        %1542 = vmatpush1.msra.mxu0 %v1433
        %1543 = vmatprep.subr.mxu0 %v1426
        %1544 = vmatpush1.msra.mxu0 %v1425
        %1545 = vmatprep.subr.mxu0 %v1418
        %1546 = vmatpush1.msra.mxu0 %v1417
        %1547 = vmatprep.subr.mxu0 %v1410
        %1548 = vmatpush1.msra.mxu0 %v1409
        %1549 = vmatprep.subr.mxu0 %v1402
        %1550 = vmatpush1.msra.mxu0 %v1401
        %1551 = vmatprep.subr.mxu0 %v1394
        %1552 = vmatpush1.msra.mxu0 %v1393
        %1553 = vmatprep.subr.mxu0 0.0
        %1554 = vmatpush2.msra.mxu0 0.0
        %1555 = vmatprep.subr.mxu0 0.0
        %1556 = vmatpush2.msra.mxu0 0.0
        %1557 = vmatprep.subr.mxu0 0.0
        %1558 = vmatpush2.msra.mxu0 0.0
        %1559 = vmatprep.subr.mxu0 0.0
        %1560 = vmatpush2.msra.mxu0 0.0
        %1561 = vmatprep.subr.mxu0 0.0
        %1562 = vmatpush2.msra.mxu0 0.0
        %1563 = vmatprep.subr.mxu0 0.0
        %1564 = vmatpush2.msra.mxu0 0.0
        %1565 = vmatprep.subr.mxu0 0.0
        %1566 = vmatpush2.msra.mxu0 0.0
        %1567 = vmatprep.subr.mxu0 0.0
        %1568 = vmatpush2.msra.mxu0 0.0
        %1569 = vmatprep.subr.mxu0 0.0
        %1570 = vmatpush2.msra.mxu0 0.0
        %1571 = vmatprep.subr.mxu0 0.0
        %1572 = vmatpush2.msra.mxu0 0.0
        %1573 = vmatprep.subr.mxu0 0.0
        %1574 = vmatpush2.msra.mxu0 0.0
        %1575 = vmatprep.subr.mxu0 0.0
        %1576 = vmatpush2.msra.mxu0 0.0
        %1577 = vmatprep.subr.mxu0 0.0
        %1578 = vmatpush2.msra.mxu0 0.0
        %1579 = vmatprep.subr.mxu0 0.0
        %1580 = vmatpush2.msra.mxu0 0.0
        %1581 = vmatprep.subr.mxu0 0.0
        %1582 = vmatpush2.msra.mxu0 0.0
        %1583 = vmatprep.subr.mxu0 0.0
        %1584 = vmatpush2.msra.mxu0 0.0
        %1585 = vmatprep.mubr.f32.mxu0 0.0
        %1586 = vmatmul.mubr.f32.gmra.mxu0 %v605
        %v1587 = vpop.f32.mrf.mxu0
        %v1588 = vadd.f32 0.0, %v1587
        %v1589 = vpop.f32.mrf.mxu0
        %v1590 = vadd.f32 0.0, %v1589
        %1591 = vmatprep.mubr.f32.mxu0 0.0
        %1592 = vmatmul.mubr.f32.gmra.mxu0 %v606
        %v1593 = vpop.f32.mrf.mxu0
        %v1594 = vadd.f32 0.0, %v1593
        %v1595 = vpop.f32.mrf.mxu0
        %v1596 = vadd.f32 0.0, %v1595
        %1597 = vmatprep.mubr.f32.mxu0 0.0
        %1598 = vmatmul.mubr.f32.gmra.mxu0 %v607
        %v1599 = vpop.f32.mrf.mxu0
        %v1600 = vadd.f32 0.0, %v1599
        %v1601 = vpop.f32.mrf.mxu0
        %v1602 = vadd.f32 0.0, %v1601
        %1603 = vmatprep.mubr.f32.mxu0 0.0
        %1604 = vmatmul.mubr.f32.gmra.mxu0 %v608
        %v1605 = vpop.f32.mrf.mxu0
        %v1606 = vadd.f32 0.0, %v1605
        %v1607 = vpop.f32.mrf.mxu0
        %v1608 = vadd.f32 0.0, %v1607
        %1609 = vmatprep.mubr.f32.mxu0 0.0
        %1610 = vmatmul.mubr.f32.gmra.mxu0 %v609
        %v1611 = vpop.f32.mrf.mxu0
        %v1612 = vadd.f32 0.0, %v1611
        %v1613 = vpop.f32.mrf.mxu0
        %v1614 = vadd.f32 0.0, %v1613
        %1615 = vmatprep.mubr.f32.mxu0 0.0
        %1616 = vmatmul.mubr.f32.gmra.mxu0 %v610
        %v1617 = vpop.f32.mrf.mxu0
        %v1618 = vadd.f32 0.0, %v1617
        %v1619 = vpop.f32.mrf.mxu0
        %v1620 = vadd.f32 0.0, %v1619
        %1621 = vmatprep.mubr.f32.mxu0 0.0
        %1622 = vmatmul.mubr.f32.gmra.mxu0 %v611
        %v1623 = vpop.f32.mrf.mxu0
        %v1624 = vadd.f32 0.0, %v1623
        %v1625 = vpop.f32.mrf.mxu0
        %v1626 = vadd.f32 0.0, %v1625
        %1627 = vmatprep.mubr.f32.mxu0 0.0
        %1628 = vmatmul.mubr.f32.gmra.mxu0 %v612
        %v1629 = vpop.f32.mrf.mxu0
        %v1630 = vadd.f32 0.0, %v1629
        %v1631 = vpop.f32.mrf.mxu0
        %v1632 = vadd.f32 0.0, %v1631
        %1633 = vmatprep.mubr.f32.mxu0 0.0
        %1634 = vmatmul.mubr.f32.gmra.mxu0 %v613
        %v1635 = vpop.f32.mrf.mxu0
        %v1636 = vadd.f32 0.0, %v1635
        %v1637 = vpop.f32.mrf.mxu0
        %v1638 = vadd.f32 0.0, %v1637
        %1639 = vmatprep.mubr.f32.mxu0 0.0
        %1640 = vmatmul.mubr.f32.gmra.mxu0 %v614
        %v1641 = vpop.f32.mrf.mxu0
        %v1642 = vadd.f32 0.0, %v1641
        %v1643 = vpop.f32.mrf.mxu0
        %v1644 = vadd.f32 0.0, %v1643
        %1645 = vmatprep.mubr.f32.mxu0 0.0
        %1646 = vmatmul.mubr.f32.gmra.mxu0 %v615
        %v1647 = vpop.f32.mrf.mxu0
        %v1648 = vadd.f32 0.0, %v1647
        %v1649 = vpop.f32.mrf.mxu0
        %v1650 = vadd.f32 0.0, %v1649
        %1651 = vmatprep.mubr.f32.mxu0 0.0
        %1652 = vmatmul.mubr.f32.gmra.mxu0 %v616
        %v1653 = vpop.f32.mrf.mxu0
        %v1654 = vadd.f32 0.0, %v1653
        %v1655 = vpop.f32.mrf.mxu0
        %v1656 = vadd.f32 0.0, %v1655
        %1657 = vmatprep.mubr.f32.mxu0 0.0
        %1658 = vmatmul.mubr.f32.gmra.mxu0 %v617
        %v1659 = vpop.f32.mrf.mxu0
        %v1660 = vadd.f32 0.0, %v1659
        %v1661 = vpop.f32.mrf.mxu0
        %v1662 = vadd.f32 0.0, %v1661
        %1663 = vmatprep.mubr.f32.mxu0 0.0
        %1664 = vmatmul.mubr.f32.gmra.mxu0 %v618
        %v1665 = vpop.f32.mrf.mxu0
        %v1666 = vadd.f32 0.0, %v1665
        %v1667 = vpop.f32.mrf.mxu0
        %v1668 = vadd.f32 0.0, %v1667
        %1669 = vmatprep.mubr.f32.mxu0 0.0
        %1670 = vmatmul.mubr.f32.gmra.mxu0 %v619
        %v1671 = vpop.f32.mrf.mxu0
        %v1672 = vadd.f32 0.0, %v1671
        %v1673 = vpop.f32.mrf.mxu0
        %v1674 = vadd.f32 0.0, %v1673
        %1675 = vmatprep.mubr.f32.mxu0 0.0
        %1676 = vmatmul.mubr.f32.gmra.mxu0 %v620
        %v1677 = vpop.f32.mrf.mxu0
        %v1678 = vadd.f32 0.0, %v1677
        %v1679 = vpop.f32.mrf.mxu0
        %v1680 = vadd.f32 0.0, %v1679
        %1681 = vdwg.mxu0
        %1682 = vmatprep.subr.mxu0 %v1516
        %1683 = vmatpush1.msra.mxu0 %v1515
        %1684 = vmatprep.subr.mxu0 %v1508
        %1685 = vmatpush1.msra.mxu0 %v1507
        %1686 = vmatprep.subr.mxu0 %v1500
        %1687 = vmatpush1.msra.mxu0 %v1499
        %1688 = vmatprep.subr.mxu0 %v1492
        %1689 = vmatpush1.msra.mxu0 %v1491
        %1690 = vmatprep.subr.mxu0 %v1484
        %1691 = vmatpush1.msra.mxu0 %v1483
        %1692 = vmatprep.subr.mxu0 %v1476
        %1693 = vmatpush1.msra.mxu0 %v1475
        %1694 = vmatprep.subr.mxu0 %v1468
        %1695 = vmatpush1.msra.mxu0 %v1467
        %1696 = vmatprep.subr.mxu0 %v1460
        %1697 = vmatpush1.msra.mxu0 %v1459
        %1698 = vmatprep.subr.mxu0 %v1452
        %1699 = vmatpush1.msra.mxu0 %v1451
        %1700 = vmatprep.subr.mxu0 %v1444
        %1701 = vmatpush1.msra.mxu0 %v1443
        %1702 = vmatprep.subr.mxu0 %v1436
        %1703 = vmatpush1.msra.mxu0 %v1435
        %1704 = vmatprep.subr.mxu0 %v1428
        %1705 = vmatpush1.msra.mxu0 %v1427
        %1706 = vmatprep.subr.mxu0 %v1420
        %1707 = vmatpush1.msra.mxu0 %v1419
        %1708 = vmatprep.subr.mxu0 %v1412
        %1709 = vmatpush1.msra.mxu0 %v1411
        %1710 = vmatprep.subr.mxu0 %v1404
        %1711 = vmatpush1.msra.mxu0 %v1403
        %1712 = vmatprep.subr.mxu0 %v1396
        %1713 = vmatpush1.msra.mxu0 %v1395
        %1714 = vmatprep.subr.mxu0 0.0
        %1715 = vmatpush2.msra.mxu0 0.0
        %1716 = vmatprep.subr.mxu0 0.0
        %1717 = vmatpush2.msra.mxu0 0.0
        %1718 = vmatprep.subr.mxu0 0.0
        %1719 = vmatpush2.msra.mxu0 0.0
        %1720 = vmatprep.subr.mxu0 0.0
        %1721 = vmatpush2.msra.mxu0 0.0
        %1722 = vmatprep.subr.mxu0 0.0
        %1723 = vmatpush2.msra.mxu0 0.0
        %1724 = vmatprep.subr.mxu0 0.0
        %1725 = vmatpush2.msra.mxu0 0.0
        %1726 = vmatprep.subr.mxu0 0.0
        %1727 = vmatpush2.msra.mxu0 0.0
        %1728 = vmatprep.subr.mxu0 0.0
        %1729 = vmatpush2.msra.mxu0 0.0
        %1730 = vmatprep.subr.mxu0 0.0
        %1731 = vmatpush2.msra.mxu0 0.0
        %1732 = vmatprep.subr.mxu0 0.0
        %1733 = vmatpush2.msra.mxu0 0.0
        %1734 = vmatprep.subr.mxu0 0.0
        %1735 = vmatpush2.msra.mxu0 0.0
        %1736 = vmatprep.subr.mxu0 0.0
        %1737 = vmatpush2.msra.mxu0 0.0
        %1738 = vmatprep.subr.mxu0 0.0
        %1739 = vmatpush2.msra.mxu0 0.0
        %1740 = vmatprep.subr.mxu0 0.0
        %1741 = vmatpush2.msra.mxu0 0.0
        %1742 = vmatprep.subr.mxu0 0.0
        %1743 = vmatpush2.msra.mxu0 0.0
        %1744 = vmatprep.subr.mxu0 0.0
        %1745 = vmatpush2.msra.mxu0 0.0
        %1746 = vmatprep.mubr.f32.mxu0 0.0
        %1747 = vmatmul.mubr.f32.gmra.mxu0 %v605
        %v1748 = vpop.f32.mrf.mxu0
        %v1749 = vadd.f32 0.0, %v1748
        %v1750 = vpop.f32.mrf.mxu0
        %v1751 = vadd.f32 0.0, %v1750
        %1752 = vmatprep.mubr.f32.mxu0 0.0
        %1753 = vmatmul.mubr.f32.gmra.mxu0 %v606
        %v1754 = vpop.f32.mrf.mxu0
        %v1755 = vadd.f32 0.0, %v1754
        %v1756 = vpop.f32.mrf.mxu0
        %v1757 = vadd.f32 0.0, %v1756
        %1758 = vmatprep.mubr.f32.mxu0 0.0
        %1759 = vmatmul.mubr.f32.gmra.mxu0 %v607
        %v1760 = vpop.f32.mrf.mxu0
        %v1761 = vadd.f32 0.0, %v1760
        %v1762 = vpop.f32.mrf.mxu0
        %v1763 = vadd.f32 0.0, %v1762
        %1764 = vmatprep.mubr.f32.mxu0 0.0
        %1765 = vmatmul.mubr.f32.gmra.mxu0 %v608
        %v1766 = vpop.f32.mrf.mxu0
        %v1767 = vadd.f32 0.0, %v1766
        %v1768 = vpop.f32.mrf.mxu0
        %v1769 = vadd.f32 0.0, %v1768
        %1770 = vmatprep.mubr.f32.mxu0 0.0
        %1771 = vmatmul.mubr.f32.gmra.mxu0 %v609
        %v1772 = vpop.f32.mrf.mxu0
        %v1773 = vadd.f32 0.0, %v1772
        %v1774 = vpop.f32.mrf.mxu0
        %v1775 = vadd.f32 0.0, %v1774
        %1776 = vmatprep.mubr.f32.mxu0 0.0
        %1777 = vmatmul.mubr.f32.gmra.mxu0 %v610
        %v1778 = vpop.f32.mrf.mxu0
        %v1779 = vadd.f32 0.0, %v1778
        %v1780 = vpop.f32.mrf.mxu0
        %v1781 = vadd.f32 0.0, %v1780
        %1782 = vmatprep.mubr.f32.mxu0 0.0
        %1783 = vmatmul.mubr.f32.gmra.mxu0 %v611
        %v1784 = vpop.f32.mrf.mxu0
        %v1785 = vadd.f32 0.0, %v1784
        %v1786 = vpop.f32.mrf.mxu0
        %v1787 = vadd.f32 0.0, %v1786
        %1788 = vmatprep.mubr.f32.mxu0 0.0
        %1789 = vmatmul.mubr.f32.gmra.mxu0 %v612
        %v1790 = vpop.f32.mrf.mxu0
        %v1791 = vadd.f32 0.0, %v1790
        %v1792 = vpop.f32.mrf.mxu0
        %v1793 = vadd.f32 0.0, %v1792
        %1794 = vmatprep.mubr.f32.mxu0 0.0
        %1795 = vmatmul.mubr.f32.gmra.mxu0 %v613
        %v1796 = vpop.f32.mrf.mxu0
        %v1797 = vadd.f32 0.0, %v1796
        %v1798 = vpop.f32.mrf.mxu0
        %v1799 = vadd.f32 0.0, %v1798
        %1800 = vmatprep.mubr.f32.mxu0 0.0
        %1801 = vmatmul.mubr.f32.gmra.mxu0 %v614
        %v1802 = vpop.f32.mrf.mxu0
        %v1803 = vadd.f32 0.0, %v1802
        %v1804 = vpop.f32.mrf.mxu0
        %v1805 = vadd.f32 0.0, %v1804
        %1806 = vmatprep.mubr.f32.mxu0 0.0
        %1807 = vmatmul.mubr.f32.gmra.mxu0 %v615
        %v1808 = vpop.f32.mrf.mxu0
        %v1809 = vadd.f32 0.0, %v1808
        %v1810 = vpop.f32.mrf.mxu0
        %v1811 = vadd.f32 0.0, %v1810
        %1812 = vmatprep.mubr.f32.mxu0 0.0
        %1813 = vmatmul.mubr.f32.gmra.mxu0 %v616
        %v1814 = vpop.f32.mrf.mxu0
        %v1815 = vadd.f32 0.0, %v1814
        %v1816 = vpop.f32.mrf.mxu0
        %v1817 = vadd.f32 0.0, %v1816
        %1818 = vmatprep.mubr.f32.mxu0 0.0
        %1819 = vmatmul.mubr.f32.gmra.mxu0 %v617
        %v1820 = vpop.f32.mrf.mxu0
        %v1821 = vadd.f32 0.0, %v1820
        %v1822 = vpop.f32.mrf.mxu0
        %v1823 = vadd.f32 0.0, %v1822
        %1824 = vmatprep.mubr.f32.mxu0 0.0
        %1825 = vmatmul.mubr.f32.gmra.mxu0 %v618
        %v1826 = vpop.f32.mrf.mxu0
        %v1827 = vadd.f32 0.0, %v1826
        %v1828 = vpop.f32.mrf.mxu0
        %v1829 = vadd.f32 0.0, %v1828
        %1830 = vmatprep.mubr.f32.mxu0 0.0
        %1831 = vmatmul.mubr.f32.gmra.mxu0 %v619
        %v1832 = vpop.f32.mrf.mxu0
        %v1833 = vadd.f32 0.0, %v1832
        %v1834 = vpop.f32.mrf.mxu0
        %v1835 = vadd.f32 0.0, %v1834
        %1836 = vmatprep.mubr.f32.mxu0 0.0
        %1837 = vmatmul.mubr.f32.gmra.mxu0 %v620
        %v1838 = vpop.f32.mrf.mxu0
        %v1839 = vadd.f32 0.0, %v1838
        %v1840 = vpop.f32.mrf.mxu0
        %v1841 = vadd.f32 0.0, %v1840
        %1842 = vdwg.mxu0
        %1843 = vmatprep.subr.mxu0 %v1518
        %1844 = vmatpush1.msra.mxu0 %v1517
        %1845 = vmatprep.subr.mxu0 %v1510
        %1846 = vmatpush1.msra.mxu0 %v1509
        %1847 = vmatprep.subr.mxu0 %v1502
        %1848 = vmatpush1.msra.mxu0 %v1501
        %1849 = vmatprep.subr.mxu0 %v1494
        %1850 = vmatpush1.msra.mxu0 %v1493
        %1851 = vmatprep.subr.mxu0 %v1486
        %1852 = vmatpush1.msra.mxu0 %v1485
        %1853 = vmatprep.subr.mxu0 %v1478
        %1854 = vmatpush1.msra.mxu0 %v1477
        %1855 = vmatprep.subr.mxu0 %v1470
        %1856 = vmatpush1.msra.mxu0 %v1469
        %1857 = vmatprep.subr.mxu0 %v1462
        %1858 = vmatpush1.msra.mxu0 %v1461
        %1859 = vmatprep.subr.mxu0 %v1454
        %1860 = vmatpush1.msra.mxu0 %v1453
        %1861 = vmatprep.subr.mxu0 %v1446
        %1862 = vmatpush1.msra.mxu0 %v1445
        %1863 = vmatprep.subr.mxu0 %v1438
        %1864 = vmatpush1.msra.mxu0 %v1437
        %1865 = vmatprep.subr.mxu0 %v1430
        %1866 = vmatpush1.msra.mxu0 %v1429
        %1867 = vmatprep.subr.mxu0 %v1422
        %1868 = vmatpush1.msra.mxu0 %v1421
        %1869 = vmatprep.subr.mxu0 %v1414
        %1870 = vmatpush1.msra.mxu0 %v1413
        %1871 = vmatprep.subr.mxu0 %v1406
        %1872 = vmatpush1.msra.mxu0 %v1405
        %1873 = vmatprep.subr.mxu0 %v1398
        %1874 = vmatpush1.msra.mxu0 %v1397
        %1875 = vmatprep.subr.mxu0 0.0
        %1876 = vmatpush2.msra.mxu0 0.0
        %1877 = vmatprep.subr.mxu0 0.0
        %1878 = vmatpush2.msra.mxu0 0.0
        %1879 = vmatprep.subr.mxu0 0.0
        %1880 = vmatpush2.msra.mxu0 0.0
        %1881 = vmatprep.subr.mxu0 0.0
        %1882 = vmatpush2.msra.mxu0 0.0
        %1883 = vmatprep.subr.mxu0 0.0
        %1884 = vmatpush2.msra.mxu0 0.0
        %1885 = vmatprep.subr.mxu0 0.0
        %1886 = vmatpush2.msra.mxu0 0.0
        %1887 = vmatprep.subr.mxu0 0.0
        %1888 = vmatpush2.msra.mxu0 0.0
        %1889 = vmatprep.subr.mxu0 0.0
        %1890 = vmatpush2.msra.mxu0 0.0
        %1891 = vmatprep.subr.mxu0 0.0
        %1892 = vmatpush2.msra.mxu0 0.0
        %1893 = vmatprep.subr.mxu0 0.0
        %1894 = vmatpush2.msra.mxu0 0.0
        %1895 = vmatprep.subr.mxu0 0.0
        %1896 = vmatpush2.msra.mxu0 0.0
        %1897 = vmatprep.subr.mxu0 0.0
        %1898 = vmatpush2.msra.mxu0 0.0
        %1899 = vmatprep.subr.mxu0 0.0
        %1900 = vmatpush2.msra.mxu0 0.0
        %1901 = vmatprep.subr.mxu0 0.0
        %1902 = vmatpush2.msra.mxu0 0.0
        %1903 = vmatprep.subr.mxu0 0.0
        %1904 = vmatpush2.msra.mxu0 0.0
        %1905 = vmatprep.subr.mxu0 0.0
        %1906 = vmatpush2.msra.mxu0 0.0
        %1907 = vmatprep.mubr.f32.mxu0 0.0
        %1908 = vmatmul.mubr.f32.gmra.mxu0 %v605
        %v1909 = vpop.f32.mrf.mxu0
        %v1910 = vadd.f32 0.0, %v1909
        %v1911 = vpop.f32.mrf.mxu0
        %v1912 = vadd.f32 0.0, %v1911
        %1913 = vmatprep.mubr.f32.mxu0 0.0
        %1914 = vmatmul.mubr.f32.gmra.mxu0 %v606
        %v1915 = vpop.f32.mrf.mxu0
        %v1916 = vadd.f32 0.0, %v1915
        %v1917 = vpop.f32.mrf.mxu0
        %v1918 = vadd.f32 0.0, %v1917
        %1919 = vmatprep.mubr.f32.mxu0 0.0
        %1920 = vmatmul.mubr.f32.gmra.mxu0 %v607
        %v1921 = vpop.f32.mrf.mxu0
        %v1922 = vadd.f32 0.0, %v1921
        %v1923 = vpop.f32.mrf.mxu0
        %v1924 = vadd.f32 0.0, %v1923
        %1925 = vmatprep.mubr.f32.mxu0 0.0
        %1926 = vmatmul.mubr.f32.gmra.mxu0 %v608
        %v1927 = vpop.f32.mrf.mxu0
        %v1928 = vadd.f32 0.0, %v1927
        %v1929 = vpop.f32.mrf.mxu0
        %v1930 = vadd.f32 0.0, %v1929
        %1931 = vmatprep.mubr.f32.mxu0 0.0
        %1932 = vmatmul.mubr.f32.gmra.mxu0 %v609
        %v1933 = vpop.f32.mrf.mxu0
        %v1934 = vadd.f32 0.0, %v1933
        %v1935 = vpop.f32.mrf.mxu0
        %v1936 = vadd.f32 0.0, %v1935
        %1937 = vmatprep.mubr.f32.mxu0 0.0
        %1938 = vmatmul.mubr.f32.gmra.mxu0 %v610
        %v1939 = vpop.f32.mrf.mxu0
        %v1940 = vadd.f32 0.0, %v1939
        %v1941 = vpop.f32.mrf.mxu0
        %v1942 = vadd.f32 0.0, %v1941
        %1943 = vmatprep.mubr.f32.mxu0 0.0
        %1944 = vmatmul.mubr.f32.gmra.mxu0 %v611
        %v1945 = vpop.f32.mrf.mxu0
        %v1946 = vadd.f32 0.0, %v1945
        %v1947 = vpop.f32.mrf.mxu0
        %v1948 = vadd.f32 0.0, %v1947
        %1949 = vmatprep.mubr.f32.mxu0 0.0
        %1950 = vmatmul.mubr.f32.gmra.mxu0 %v612
        %v1951 = vpop.f32.mrf.mxu0
        %v1952 = vadd.f32 0.0, %v1951
        %v1953 = vpop.f32.mrf.mxu0
        %v1954 = vadd.f32 0.0, %v1953
        %1955 = vmatprep.mubr.f32.mxu0 0.0
        %1956 = vmatmul.mubr.f32.gmra.mxu0 %v613
        %v1957 = vpop.f32.mrf.mxu0
        %v1958 = vadd.f32 0.0, %v1957
        %v1959 = vpop.f32.mrf.mxu0
        %v1960 = vadd.f32 0.0, %v1959
        %1961 = vmatprep.mubr.f32.mxu0 0.0
        %1962 = vmatmul.mubr.f32.gmra.mxu0 %v614
        %v1963 = vpop.f32.mrf.mxu0
        %v1964 = vadd.f32 0.0, %v1963
        %v1965 = vpop.f32.mrf.mxu0
        %v1966 = vadd.f32 0.0, %v1965
        %1967 = vmatprep.mubr.f32.mxu0 0.0
        %1968 = vmatmul.mubr.f32.gmra.mxu0 %v615
        %v1969 = vpop.f32.mrf.mxu0
        %v1970 = vadd.f32 0.0, %v1969
        %v1971 = vpop.f32.mrf.mxu0
        %v1972 = vadd.f32 0.0, %v1971
        %1973 = vmatprep.mubr.f32.mxu0 0.0
        %1974 = vmatmul.mubr.f32.gmra.mxu0 %v616
        %v1975 = vpop.f32.mrf.mxu0
        %v1976 = vadd.f32 0.0, %v1975
        %v1977 = vpop.f32.mrf.mxu0
        %v1978 = vadd.f32 0.0, %v1977
        %1979 = vmatprep.mubr.f32.mxu0 0.0
        %1980 = vmatmul.mubr.f32.gmra.mxu0 %v617
        %v1981 = vpop.f32.mrf.mxu0
        %v1982 = vadd.f32 0.0, %v1981
        %v1983 = vpop.f32.mrf.mxu0
        %v1984 = vadd.f32 0.0, %v1983
        %1985 = vmatprep.mubr.f32.mxu0 0.0
        %1986 = vmatmul.mubr.f32.gmra.mxu0 %v618
        %v1987 = vpop.f32.mrf.mxu0
        %v1988 = vadd.f32 0.0, %v1987
        %v1989 = vpop.f32.mrf.mxu0
        %v1990 = vadd.f32 0.0, %v1989
        %1991 = vmatprep.mubr.f32.mxu0 0.0
        %1992 = vmatmul.mubr.f32.gmra.mxu0 %v619
        %v1993 = vpop.f32.mrf.mxu0
        %v1994 = vadd.f32 0.0, %v1993
        %v1995 = vpop.f32.mrf.mxu0
        %v1996 = vadd.f32 0.0, %v1995
        %1997 = vmatprep.mubr.f32.mxu0 0.0
        %1998 = vmatmul.mubr.f32.gmra.mxu0 %v620
        %v1999 = vpop.f32.mrf.mxu0
        %v2000 = vadd.f32 0.0, %v1999
        %v2001 = vpop.f32.mrf.mxu0
        %v2002 = vadd.f32 0.0, %v2001
        %2003 = vdwg.mxu0
        %2004 = vmatprep.subr.mxu0 %v1520
        %2005 = vmatpush1.msra.mxu0 %v1519
        %2006 = vmatprep.subr.mxu0 %v1512
        %2007 = vmatpush1.msra.mxu0 %v1511
        %2008 = vmatprep.subr.mxu0 %v1504
        %2009 = vmatpush1.msra.mxu0 %v1503
        %2010 = vmatprep.subr.mxu0 %v1496
        %2011 = vmatpush1.msra.mxu0 %v1495
        %2012 = vmatprep.subr.mxu0 %v1488
        %2013 = vmatpush1.msra.mxu0 %v1487
        %2014 = vmatprep.subr.mxu0 %v1480
        %2015 = vmatpush1.msra.mxu0 %v1479
        %2016 = vmatprep.subr.mxu0 %v1472
        %2017 = vmatpush1.msra.mxu0 %v1471
        %2018 = vmatprep.subr.mxu0 %v1464
        %2019 = vmatpush1.msra.mxu0 %v1463
        %2020 = vmatprep.subr.mxu0 %v1456
        %2021 = vmatpush1.msra.mxu0 %v1455
        %2022 = vmatprep.subr.mxu0 %v1448
        %2023 = vmatpush1.msra.mxu0 %v1447
        %2024 = vmatprep.subr.mxu0 %v1440
        %2025 = vmatpush1.msra.mxu0 %v1439
        %2026 = vmatprep.subr.mxu0 %v1432
        %2027 = vmatpush1.msra.mxu0 %v1431
        %2028 = vmatprep.subr.mxu0 %v1424
        %2029 = vmatpush1.msra.mxu0 %v1423
        %2030 = vmatprep.subr.mxu0 %v1416
        %2031 = vmatpush1.msra.mxu0 %v1415
        %2032 = vmatprep.subr.mxu0 %v1408
        %2033 = vmatpush1.msra.mxu0 %v1407
        %2034 = vmatprep.subr.mxu0 %v1400
        %2035 = vmatpush1.msra.mxu0 %v1399
        %2036 = vmatprep.subr.mxu0 0.0
        %2037 = vmatpush2.msra.mxu0 0.0
        %2038 = vmatprep.subr.mxu0 0.0
        %2039 = vmatpush2.msra.mxu0 0.0
        %2040 = vmatprep.subr.mxu0 0.0
        %2041 = vmatpush2.msra.mxu0 0.0
        %2042 = vmatprep.subr.mxu0 0.0
        %2043 = vmatpush2.msra.mxu0 0.0
        %2044 = vmatprep.subr.mxu0 0.0
        %2045 = vmatpush2.msra.mxu0 0.0
        %2046 = vmatprep.subr.mxu0 0.0
        %2047 = vmatpush2.msra.mxu0 0.0
        %2048 = vmatprep.subr.mxu0 0.0
        %2049 = vmatpush2.msra.mxu0 0.0
        %2050 = vmatprep.subr.mxu0 0.0
        %2051 = vmatpush2.msra.mxu0 0.0
        %2052 = vmatprep.subr.mxu0 0.0
        %2053 = vmatpush2.msra.mxu0 0.0
        %2054 = vmatprep.subr.mxu0 0.0
        %2055 = vmatpush2.msra.mxu0 0.0
        %2056 = vmatprep.subr.mxu0 0.0
        %2057 = vmatpush2.msra.mxu0 0.0
        %2058 = vmatprep.subr.mxu0 0.0
        %2059 = vmatpush2.msra.mxu0 0.0
        %2060 = vmatprep.subr.mxu0 0.0
        %2061 = vmatpush2.msra.mxu0 0.0
        %2062 = vmatprep.subr.mxu0 0.0
        %2063 = vmatpush2.msra.mxu0 0.0
        %2064 = vmatprep.subr.mxu0 0.0
        %2065 = vmatpush2.msra.mxu0 0.0
        %2066 = vmatprep.subr.mxu0 0.0
        %2067 = vmatpush2.msra.mxu0 0.0
        %2068 = vmatprep.mubr.f32.mxu0 0.0
        %2069 = vmatmul.mubr.f32.gmra.mxu0 %v605
        %v2070 = vpop.f32.mrf.mxu0
        %v2071 = vadd.f32 0.0, %v2070
        %v2072 = vpop.f32.mrf.mxu0
        %v2073 = vadd.f32 0.0, %v2072
        %2074 = vmatprep.mubr.f32.mxu0 0.0
        %2075 = vmatmul.mubr.f32.gmra.mxu0 %v606
        %v2076 = vpop.f32.mrf.mxu0
        %v2077 = vadd.f32 0.0, %v2076
        %v2078 = vpop.f32.mrf.mxu0
        %v2079 = vadd.f32 0.0, %v2078
        %2080 = vmatprep.mubr.f32.mxu0 0.0
        %2081 = vmatmul.mubr.f32.gmra.mxu0 %v607
        %v2082 = vpop.f32.mrf.mxu0
        %v2083 = vadd.f32 0.0, %v2082
        %v2084 = vpop.f32.mrf.mxu0
        %v2085 = vadd.f32 0.0, %v2084
        %2086 = vmatprep.mubr.f32.mxu0 0.0
        %2087 = vmatmul.mubr.f32.gmra.mxu0 %v608
        %v2088 = vpop.f32.mrf.mxu0
        %v2089 = vadd.f32 0.0, %v2088
        %v2090 = vpop.f32.mrf.mxu0
        %v2091 = vadd.f32 0.0, %v2090
        %2092 = vmatprep.mubr.f32.mxu0 0.0
        %2093 = vmatmul.mubr.f32.gmra.mxu0 %v609
        %v2094 = vpop.f32.mrf.mxu0
        %v2095 = vadd.f32 0.0, %v2094
        %v2096 = vpop.f32.mrf.mxu0
        %v2097 = vadd.f32 0.0, %v2096
        %2098 = vmatprep.mubr.f32.mxu0 0.0
        %2099 = vmatmul.mubr.f32.gmra.mxu0 %v610
        %v2100 = vpop.f32.mrf.mxu0
        %v2101 = vadd.f32 0.0, %v2100
        %v2102 = vpop.f32.mrf.mxu0
        %v2103 = vadd.f32 0.0, %v2102
        %2104 = vmatprep.mubr.f32.mxu0 0.0
        %2105 = vmatmul.mubr.f32.gmra.mxu0 %v611
        %v2106 = vpop.f32.mrf.mxu0
        %v2107 = vadd.f32 0.0, %v2106
        %v2108 = vpop.f32.mrf.mxu0
        %v2109 = vadd.f32 0.0, %v2108
        %2110 = vmatprep.mubr.f32.mxu0 0.0
        %2111 = vmatmul.mubr.f32.gmra.mxu0 %v612
        %v2112 = vpop.f32.mrf.mxu0
        %v2113 = vadd.f32 0.0, %v2112
        %v2114 = vpop.f32.mrf.mxu0
        %v2115 = vadd.f32 0.0, %v2114
        %2116 = vmatprep.mubr.f32.mxu0 0.0
        %2117 = vmatmul.mubr.f32.gmra.mxu0 %v613
        %v2118 = vpop.f32.mrf.mxu0
        %v2119 = vadd.f32 0.0, %v2118
        %v2120 = vpop.f32.mrf.mxu0
        %v2121 = vadd.f32 0.0, %v2120
        %2122 = vmatprep.mubr.f32.mxu0 0.0
        %2123 = vmatmul.mubr.f32.gmra.mxu0 %v614
        %v2124 = vpop.f32.mrf.mxu0
        %v2125 = vadd.f32 0.0, %v2124
        %v2126 = vpop.f32.mrf.mxu0
        %v2127 = vadd.f32 0.0, %v2126
        %2128 = vmatprep.mubr.f32.mxu0 0.0
        %2129 = vmatmul.mubr.f32.gmra.mxu0 %v615
        %v2130 = vpop.f32.mrf.mxu0
        %v2131 = vadd.f32 0.0, %v2130
        %v2132 = vpop.f32.mrf.mxu0
        %v2133 = vadd.f32 0.0, %v2132
        %2134 = vmatprep.mubr.f32.mxu0 0.0
        %2135 = vmatmul.mubr.f32.gmra.mxu0 %v616
        %v2136 = vpop.f32.mrf.mxu0
        %v2137 = vadd.f32 0.0, %v2136
        %v2138 = vpop.f32.mrf.mxu0
        %v2139 = vadd.f32 0.0, %v2138
        %2140 = vmatprep.mubr.f32.mxu0 0.0
        %2141 = vmatmul.mubr.f32.gmra.mxu0 %v617
        %v2142 = vpop.f32.mrf.mxu0
        %v2143 = vadd.f32 0.0, %v2142
        %v2144 = vpop.f32.mrf.mxu0
        %v2145 = vadd.f32 0.0, %v2144
        %2146 = vmatprep.mubr.f32.mxu0 0.0
        %2147 = vmatmul.mubr.f32.gmra.mxu0 %v618
        %v2148 = vpop.f32.mrf.mxu0
        %v2149 = vadd.f32 0.0, %v2148
        %v2150 = vpop.f32.mrf.mxu0
        %v2151 = vadd.f32 0.0, %v2150
        %2152 = vmatprep.mubr.f32.mxu0 0.0
        %2153 = vmatmul.mubr.f32.gmra.mxu0 %v619
        %v2154 = vpop.f32.mrf.mxu0
        %v2155 = vadd.f32 0.0, %v2154
        %v2156 = vpop.f32.mrf.mxu0
        %v2157 = vadd.f32 0.0, %v2156
        %2158 = vmatprep.mubr.f32.mxu0 0.0
        %2159 = vmatmul.mubr.f32.gmra.mxu0 %v620
        %v2160 = vpop.f32.mrf.mxu0
        %v2161 = vadd.f32 0.0, %v2160
        %v2162 = vpop.f32.mrf.mxu0
        %v2163 = vadd.f32 0.0, %v2162
        %2164 = vdwg.mxu0
        %v2165 = vmul.f32 %v816, %v1588
        %v2166 = vmul.f32 %v818, %v1590
        %v2167 = vmul.f32 %v977, %v1749
        %v2168 = vmul.f32 %v979, %v1751
        %v2169 = vmul.f32 %v1138, %v1910
        %v2170 = vmul.f32 %v1140, %v1912
        %v2171 = vmul.f32 %v1299, %v2071
        %v2172 = vmul.f32 %v1301, %v2073
        %v2173 = vmul.f32 %v822, %v1594
        %v2174 = vmul.f32 %v824, %v1596
        %v2175 = vmul.f32 %v983, %v1755
        %v2176 = vmul.f32 %v985, %v1757
        %v2177 = vmul.f32 %v1144, %v1916
        %v2178 = vmul.f32 %v1146, %v1918
        %v2179 = vmul.f32 %v1305, %v2077
        %v2180 = vmul.f32 %v1307, %v2079
        %v2181 = vmul.f32 %v828, %v1600
        %v2182 = vmul.f32 %v830, %v1602
        %v2183 = vmul.f32 %v989, %v1761
        %v2184 = vmul.f32 %v991, %v1763
        %v2185 = vmul.f32 %v1150, %v1922
        %v2186 = vmul.f32 %v1152, %v1924
        %v2187 = vmul.f32 %v1311, %v2083
        %v2188 = vmul.f32 %v1313, %v2085
        %v2189 = vmul.f32 %v834, %v1606
        %v2190 = vmul.f32 %v836, %v1608
        %v2191 = vmul.f32 %v995, %v1767
        %v2192 = vmul.f32 %v997, %v1769
        %v2193 = vmul.f32 %v1156, %v1928
        %v2194 = vmul.f32 %v1158, %v1930
        %v2195 = vmul.f32 %v1317, %v2089
        %v2196 = vmul.f32 %v1319, %v2091
        %v2197 = vmul.f32 %v840, %v1612
        %v2198 = vmul.f32 %v842, %v1614
        %v2199 = vmul.f32 %v1001, %v1773
        %v2200 = vmul.f32 %v1003, %v1775
        %v2201 = vmul.f32 %v1162, %v1934
        %v2202 = vmul.f32 %v1164, %v1936
        %v2203 = vmul.f32 %v1323, %v2095
        %v2204 = vmul.f32 %v1325, %v2097
        %v2205 = vmul.f32 %v846, %v1618
        %v2206 = vmul.f32 %v848, %v1620
        %v2207 = vmul.f32 %v1007, %v1779
        %v2208 = vmul.f32 %v1009, %v1781
        %v2209 = vmul.f32 %v1168, %v1940
        %v2210 = vmul.f32 %v1170, %v1942
        %v2211 = vmul.f32 %v1329, %v2101
        %v2212 = vmul.f32 %v1331, %v2103
        %v2213 = vmul.f32 %v852, %v1624
        %v2214 = vmul.f32 %v854, %v1626
        %v2215 = vmul.f32 %v1013, %v1785
        %v2216 = vmul.f32 %v1015, %v1787
        %v2217 = vmul.f32 %v1174, %v1946
        %v2218 = vmul.f32 %v1176, %v1948
        %v2219 = vmul.f32 %v1335, %v2107
        %v2220 = vmul.f32 %v1337, %v2109
        %v2221 = vmul.f32 %v858, %v1630
        %v2222 = vmul.f32 %v860, %v1632
        %v2223 = vmul.f32 %v1019, %v1791
        %v2224 = vmul.f32 %v1021, %v1793
        %v2225 = vmul.f32 %v1180, %v1952
        %v2226 = vmul.f32 %v1182, %v1954
        %v2227 = vmul.f32 %v1341, %v2113
        %v2228 = vmul.f32 %v1343, %v2115
        %v2229 = vmul.f32 %v864, %v1636
        %v2230 = vmul.f32 %v866, %v1638
        %v2231 = vmul.f32 %v1025, %v1797
        %v2232 = vmul.f32 %v1027, %v1799
        %v2233 = vmul.f32 %v1186, %v1958
        %v2234 = vmul.f32 %v1188, %v1960
        %v2235 = vmul.f32 %v1347, %v2119
        %v2236 = vmul.f32 %v1349, %v2121
        %v2237 = vmul.f32 %v870, %v1642
        %v2238 = vmul.f32 %v872, %v1644
        %v2239 = vmul.f32 %v1031, %v1803
        %v2240 = vmul.f32 %v1033, %v1805
        %v2241 = vmul.f32 %v1192, %v1964
        %v2242 = vmul.f32 %v1194, %v1966
        %v2243 = vmul.f32 %v1353, %v2125
        %v2244 = vmul.f32 %v1355, %v2127
        %v2245 = vmul.f32 %v876, %v1648
        %v2246 = vmul.f32 %v878, %v1650
        %v2247 = vmul.f32 %v1037, %v1809
        %v2248 = vmul.f32 %v1039, %v1811
        %v2249 = vmul.f32 %v1198, %v1970
        %v2250 = vmul.f32 %v1200, %v1972
        %v2251 = vmul.f32 %v1359, %v2131
        %v2252 = vmul.f32 %v1361, %v2133
        %v2253 = vmul.f32 %v882, %v1654
        %v2254 = vmul.f32 %v884, %v1656
        %v2255 = vmul.f32 %v1043, %v1815
        %v2256 = vmul.f32 %v1045, %v1817
        %v2257 = vmul.f32 %v1204, %v1976
        %v2258 = vmul.f32 %v1206, %v1978
        %v2259 = vmul.f32 %v1365, %v2137
        %v2260 = vmul.f32 %v1367, %v2139
        %v2261 = vmul.f32 %v888, %v1660
        %v2262 = vmul.f32 %v890, %v1662
        %v2263 = vmul.f32 %v1049, %v1821
        %v2264 = vmul.f32 %v1051, %v1823
        %v2265 = vmul.f32 %v1210, %v1982
        %v2266 = vmul.f32 %v1212, %v1984
        %v2267 = vmul.f32 %v1371, %v2143
        %v2268 = vmul.f32 %v1373, %v2145
        %v2269 = vmul.f32 %v894, %v1666
        %v2270 = vmul.f32 %v896, %v1668
        %v2271 = vmul.f32 %v1055, %v1827
        %v2272 = vmul.f32 %v1057, %v1829
        %v2273 = vmul.f32 %v1216, %v1988
        %v2274 = vmul.f32 %v1218, %v1990
        %v2275 = vmul.f32 %v1377, %v2149
        %v2276 = vmul.f32 %v1379, %v2151
        %v2277 = vmul.f32 %v900, %v1672
        %v2278 = vmul.f32 %v902, %v1674
        %v2279 = vmul.f32 %v1061, %v1833
        %v2280 = vmul.f32 %v1063, %v1835
        %v2281 = vmul.f32 %v1222, %v1994
        %v2282 = vmul.f32 %v1224, %v1996
        %v2283 = vmul.f32 %v1383, %v2155
        %v2284 = vmul.f32 %v1385, %v2157
        %v2285 = vmul.f32 %v906, %v1678
        %v2286 = vmul.f32 %v908, %v1680
        %v2287 = vmul.f32 %v1067, %v1839
        %v2288 = vmul.f32 %v1069, %v1841
        %v2289 = vmul.f32 %v1228, %v2000
        %v2290 = vmul.f32 %v1230, %v2002
        %v2291 = vmul.f32 %v1389, %v2161
        %v2292 = vmul.f32 %v1391, %v2163
        %v2293 = vadd.f32 %v2165, 0.0
        %v2294 = vadd.f32 %v2166, 0.0
        %v2295 = vadd.f32 %v2167, 0.0
        %v2296 = vadd.f32 %v2168, 0.0
        %v2297 = vadd.f32 %v2169, 0.0
        %v2298 = vadd.f32 %v2170, 0.0
        %v2299 = vadd.f32 %v2171, 0.0
        %v2300 = vadd.f32 %v2172, 0.0
        %v2301 = vadd.f32 %v2173, 0.0
        %v2302 = vadd.f32 %v2174, 0.0
        %v2303 = vadd.f32 %v2175, 0.0
        %v2304 = vadd.f32 %v2176, 0.0
        %v2305 = vadd.f32 %v2177, 0.0
        %v2306 = vadd.f32 %v2178, 0.0
        %v2307 = vadd.f32 %v2179, 0.0
        %v2308 = vadd.f32 %v2180, 0.0
        %v2309 = vadd.f32 %v2181, 0.0
        %v2310 = vadd.f32 %v2182, 0.0
        %v2311 = vadd.f32 %v2183, 0.0
        %v2312 = vadd.f32 %v2184, 0.0
        %v2313 = vadd.f32 %v2185, 0.0
        %v2314 = vadd.f32 %v2186, 0.0
        %v2315 = vadd.f32 %v2187, 0.0
        %v2316 = vadd.f32 %v2188, 0.0
        %v2317 = vadd.f32 %v2189, 0.0
        %v2318 = vadd.f32 %v2190, 0.0
        %v2319 = vadd.f32 %v2191, 0.0
        %v2320 = vadd.f32 %v2192, 0.0
        %v2321 = vadd.f32 %v2193, 0.0
        %v2322 = vadd.f32 %v2194, 0.0
        %v2323 = vadd.f32 %v2195, 0.0
        %v2324 = vadd.f32 %v2196, 0.0
        %v2325 = vadd.f32 %v2197, 0.0
        %v2326 = vadd.f32 %v2198, 0.0
        %v2327 = vadd.f32 %v2199, 0.0
        %v2328 = vadd.f32 %v2200, 0.0
        %v2329 = vadd.f32 %v2201, 0.0
        %v2330 = vadd.f32 %v2202, 0.0
        %v2331 = vadd.f32 %v2203, 0.0
        %v2332 = vadd.f32 %v2204, 0.0
        %v2333 = vadd.f32 %v2205, 0.0
        %v2334 = vadd.f32 %v2206, 0.0
        %v2335 = vadd.f32 %v2207, 0.0
        %v2336 = vadd.f32 %v2208, 0.0
        %v2337 = vadd.f32 %v2209, 0.0
        %v2338 = vadd.f32 %v2210, 0.0
        %v2339 = vadd.f32 %v2211, 0.0
        %v2340 = vadd.f32 %v2212, 0.0
        %v2341 = vadd.f32 %v2213, 0.0
        %v2342 = vadd.f32 %v2214, 0.0
        %v2343 = vadd.f32 %v2215, 0.0
        %v2344 = vadd.f32 %v2216, 0.0
        %v2345 = vadd.f32 %v2217, 0.0
        %v2346 = vadd.f32 %v2218, 0.0
        %v2347 = vadd.f32 %v2219, 0.0
        %v2348 = vadd.f32 %v2220, 0.0
        %v2349 = vadd.f32 %v2221, 0.0
        %v2350 = vadd.f32 %v2222, 0.0
        %v2351 = vadd.f32 %v2223, 0.0
        %v2352 = vadd.f32 %v2224, 0.0
        %v2353 = vadd.f32 %v2225, 0.0
        %v2354 = vadd.f32 %v2226, 0.0
        %v2355 = vadd.f32 %v2227, 0.0
        %v2356 = vadd.f32 %v2228, 0.0
        %v2357 = vadd.f32 %v2229, 0.0
        %v2358 = vadd.f32 %v2230, 0.0
        %v2359 = vadd.f32 %v2231, 0.0
        %v2360 = vadd.f32 %v2232, 0.0
        %v2361 = vadd.f32 %v2233, 0.0
        %v2362 = vadd.f32 %v2234, 0.0
        %v2363 = vadd.f32 %v2235, 0.0
        %v2364 = vadd.f32 %v2236, 0.0
        %v2365 = vadd.f32 %v2237, 0.0
        %v2366 = vadd.f32 %v2238, 0.0
        %v2367 = vadd.f32 %v2239, 0.0
        %v2368 = vadd.f32 %v2240, 0.0
        %v2369 = vadd.f32 %v2241, 0.0
        %v2370 = vadd.f32 %v2242, 0.0
        %v2371 = vadd.f32 %v2243, 0.0
        %v2372 = vadd.f32 %v2244, 0.0
        %v2373 = vadd.f32 %v2245, 0.0
        %v2374 = vadd.f32 %v2246, 0.0
        %v2375 = vadd.f32 %v2247, 0.0
        %v2376 = vadd.f32 %v2248, 0.0
        %v2377 = vadd.f32 %v2249, 0.0
        %v2378 = vadd.f32 %v2250, 0.0
        %v2379 = vadd.f32 %v2251, 0.0
        %v2380 = vadd.f32 %v2252, 0.0
        %v2381 = vadd.f32 %v2253, 0.0
        %v2382 = vadd.f32 %v2254, 0.0
        %v2383 = vadd.f32 %v2255, 0.0
        %v2384 = vadd.f32 %v2256, 0.0
        %v2385 = vadd.f32 %v2257, 0.0
        %v2386 = vadd.f32 %v2258, 0.0
        %v2387 = vadd.f32 %v2259, 0.0
        %v2388 = vadd.f32 %v2260, 0.0
        %v2389 = vadd.f32 %v2261, 0.0
        %v2390 = vadd.f32 %v2262, 0.0
        %v2391 = vadd.f32 %v2263, 0.0
        %v2392 = vadd.f32 %v2264, 0.0
        %v2393 = vadd.f32 %v2265, 0.0
        %v2394 = vadd.f32 %v2266, 0.0
        %v2395 = vadd.f32 %v2267, 0.0
        %v2396 = vadd.f32 %v2268, 0.0
        %v2397 = vadd.f32 %v2269, 0.0
        %v2398 = vadd.f32 %v2270, 0.0
        %v2399 = vadd.f32 %v2271, 0.0
        %v2400 = vadd.f32 %v2272, 0.0
        %v2401 = vadd.f32 %v2273, 0.0
        %v2402 = vadd.f32 %v2274, 0.0
        %v2403 = vadd.f32 %v2275, 0.0
        %v2404 = vadd.f32 %v2276, 0.0
        %v2405 = vadd.f32 %v2277, 0.0
        %v2406 = vadd.f32 %v2278, 0.0
        %v2407 = vadd.f32 %v2279, 0.0
        %v2408 = vadd.f32 %v2280, 0.0
        %v2409 = vadd.f32 %v2281, 0.0
        %v2410 = vadd.f32 %v2282, 0.0
        %v2411 = vadd.f32 %v2283, 0.0
        %v2412 = vadd.f32 %v2284, 0.0
        %v2413 = vadd.f32 %v2285, 0.0
        %v2414 = vadd.f32 %v2286, 0.0
        %v2415 = vadd.f32 %v2287, 0.0
        %v2416 = vadd.f32 %v2288, 0.0
        %v2417 = vadd.f32 %v2289, 0.0
        %v2418 = vadd.f32 %v2290, 0.0
        %v2419 = vadd.f32 %v2291, 0.0
        %v2420 = vadd.f32 %v2292, 0.0
        %s2421 = scalar_lea.vmem %s364, 128 [#allocation2]
        %v2422 = vld [vmem:[%s2421] sm:$0xff]
        %v2423 = vld [vmem:[%s2421 + $0x8] sm:$0xff]
        %v2424 = vld [vmem:[%s2421 + $0x10] sm:$0xff]
        %v2425 = vld [vmem:[%s2421 + $0x18] sm:$0xff]
        %v2426 = vld [vmem:[%s2421 + $0x20] sm:$0xff]
        %v2427 = vld [vmem:[%s2421 + $0x28] sm:$0xff]
        %v2428 = vld [vmem:[%s2421 + $0x30] sm:$0xff]
        %v2429 = vld [vmem:[%s2421 + $0x38] sm:$0xff]
        %v2430 = vld [vmem:[%s2421 + $0x40] sm:$0xff]
        %v2431 = vld [vmem:[%s2421 + $0x48] sm:$0xff]
        %v2432 = vld [vmem:[%s2421 + $0x50] sm:$0xff]
        %v2433 = vld [vmem:[%s2421 + $0x58] sm:$0xff]
        %v2434 = vld [vmem:[%s2421 + $0x60] sm:$0xff]
        %v2435 = vld [vmem:[%s2421 + $0x68] sm:$0xff]
        %v2436 = vld [vmem:[%s2421 + $0x70] sm:$0xff]
        %v2437 = vld [vmem:[%s2421 + $0x78] sm:$0xff]
        %2438 = vmatprep.subr.mxu0 0.0
        %2439 = vmatpush1.msra.mxu0 %v452
        %2440 = vmatprep.subr.mxu0 0.0
        %2441 = vmatpush1.msra.mxu0 %v451
        %2442 = vmatprep.subr.mxu0 0.0
        %2443 = vmatpush1.msra.mxu0 %v450
        %2444 = vmatprep.subr.mxu0 0.0
        %2445 = vmatpush1.msra.mxu0 %v449
        %2446 = vmatprep.subr.mxu0 0.0
        %2447 = vmatpush1.msra.mxu0 %v448
        %2448 = vmatprep.subr.mxu0 0.0
        %2449 = vmatpush1.msra.mxu0 %v447
        %2450 = vmatprep.subr.mxu0 0.0
        %2451 = vmatpush1.msra.mxu0 %v446
        %2452 = vmatprep.subr.mxu0 0.0
        %2453 = vmatpush1.msra.mxu0 %v445
        %2454 = vmatprep.subr.mxu0 0.0
        %2455 = vmatpush1.msra.mxu0 %v444
        %2456 = vmatprep.subr.mxu0 0.0
        %2457 = vmatpush1.msra.mxu0 %v443
        %2458 = vmatprep.subr.mxu0 0.0
        %2459 = vmatpush1.msra.mxu0 %v442
        %2460 = vmatprep.subr.mxu0 0.0
        %2461 = vmatpush1.msra.mxu0 %v441
        %2462 = vmatprep.subr.mxu0 0.0
        %2463 = vmatpush1.msra.mxu0 %v440
        %2464 = vmatprep.subr.mxu0 0.0
        %2465 = vmatpush1.msra.mxu0 %v439
        %2466 = vmatprep.subr.mxu0 0.0
        %2467 = vmatpush1.msra.mxu0 %v438
        %2468 = vmatprep.subr.mxu0 0.0
        %2469 = vmatpush1.msra.mxu0 %v437
        %2470 = vmatprep.subr.mxu0 0.0
        %2471 = vmatpush2.msra.mxu0 0.0
        %2472 = vmatprep.subr.mxu0 0.0
        %2473 = vmatpush2.msra.mxu0 0.0
        %2474 = vmatprep.subr.mxu0 0.0
        %2475 = vmatpush2.msra.mxu0 0.0
        %2476 = vmatprep.subr.mxu0 0.0
        %2477 = vmatpush2.msra.mxu0 0.0
        %2478 = vmatprep.subr.mxu0 0.0
        %2479 = vmatpush2.msra.mxu0 0.0
        %2480 = vmatprep.subr.mxu0 0.0
        %2481 = vmatpush2.msra.mxu0 0.0
        %2482 = vmatprep.subr.mxu0 0.0
        %2483 = vmatpush2.msra.mxu0 0.0
        %2484 = vmatprep.subr.mxu0 0.0
        %2485 = vmatpush2.msra.mxu0 0.0
        %2486 = vmatprep.subr.mxu0 0.0
        %2487 = vmatpush2.msra.mxu0 0.0
        %2488 = vmatprep.subr.mxu0 0.0
        %2489 = vmatpush2.msra.mxu0 0.0
        %2490 = vmatprep.subr.mxu0 0.0
        %2491 = vmatpush2.msra.mxu0 0.0
        %2492 = vmatprep.subr.mxu0 0.0
        %2493 = vmatpush2.msra.mxu0 0.0
        %2494 = vmatprep.subr.mxu0 0.0
        %2495 = vmatpush2.msra.mxu0 0.0
        %2496 = vmatprep.subr.mxu0 0.0
        %2497 = vmatpush2.msra.mxu0 0.0
        %2498 = vmatprep.subr.mxu0 0.0
        %2499 = vmatpush2.msra.mxu0 0.0
        %2500 = vmatprep.subr.mxu0 0.0
        %2501 = vmatpush2.msra.mxu0 0.0
        %2502 = vmatprep.mubr.f32.mxu0 0.0
        %2503 = vmatmul.mubr.f32.gmra.mxu0 %v2422
        %v2504 = vpop.f32.mrf.mxu0
        %v2505 = vadd.f32 %v458, %v2504
        %v2506 = vpop.f32.mrf.mxu0
        %2507 = vmatprep.mubr.f32.mxu0 0.0
        %2508 = vmatmul.mubr.f32.gmra.mxu0 %v2423
        %v2509 = vpop.f32.mrf.mxu0
        %v2510 = vadd.f32 %v458, %v2509
        %v2511 = vpop.f32.mrf.mxu0
        %2512 = vmatprep.mubr.f32.mxu0 0.0
        %2513 = vmatmul.mubr.f32.gmra.mxu0 %v2424
        %v2514 = vpop.f32.mrf.mxu0
        %v2515 = vadd.f32 %v458, %v2514
        %v2516 = vpop.f32.mrf.mxu0
        %2517 = vmatprep.mubr.f32.mxu0 0.0
        %2518 = vmatmul.mubr.f32.gmra.mxu0 %v2425
        %v2519 = vpop.f32.mrf.mxu0
        %v2520 = vadd.f32 %v458, %v2519
        %v2521 = vpop.f32.mrf.mxu0
        %2522 = vmatprep.mubr.f32.mxu0 0.0
        %2523 = vmatmul.mubr.f32.gmra.mxu0 %v2426
        %v2524 = vpop.f32.mrf.mxu0
        %v2525 = vadd.f32 %v458, %v2524
        %v2526 = vpop.f32.mrf.mxu0
        %2527 = vmatprep.mubr.f32.mxu0 0.0
        %2528 = vmatmul.mubr.f32.gmra.mxu0 %v2427
        %v2529 = vpop.f32.mrf.mxu0
        %v2530 = vadd.f32 %v458, %v2529
        %v2531 = vpop.f32.mrf.mxu0
        %2532 = vmatprep.mubr.f32.mxu0 0.0
        %2533 = vmatmul.mubr.f32.gmra.mxu0 %v2428
        %v2534 = vpop.f32.mrf.mxu0
        %v2535 = vadd.f32 %v458, %v2534
        %v2536 = vpop.f32.mrf.mxu0
        %2537 = vmatprep.mubr.f32.mxu0 0.0
        %2538 = vmatmul.mubr.f32.gmra.mxu0 %v2429
        %v2539 = vpop.f32.mrf.mxu0
        %v2540 = vadd.f32 %v458, %v2539
        %v2541 = vpop.f32.mrf.mxu0
        %2542 = vmatprep.mubr.f32.mxu0 0.0
        %2543 = vmatmul.mubr.f32.gmra.mxu0 %v2430
        %v2544 = vpop.f32.mrf.mxu0
        %v2545 = vadd.f32 %v458, %v2544
        %v2546 = vpop.f32.mrf.mxu0
        %2547 = vmatprep.mubr.f32.mxu0 0.0
        %2548 = vmatmul.mubr.f32.gmra.mxu0 %v2431
        %v2549 = vpop.f32.mrf.mxu0
        %v2550 = vadd.f32 %v458, %v2549
        %v2551 = vpop.f32.mrf.mxu0
        %2552 = vmatprep.mubr.f32.mxu0 0.0
        %2553 = vmatmul.mubr.f32.gmra.mxu0 %v2432
        %v2554 = vpop.f32.mrf.mxu0
        %v2555 = vadd.f32 %v458, %v2554
        %v2556 = vpop.f32.mrf.mxu0
        %2557 = vmatprep.mubr.f32.mxu0 0.0
        %2558 = vmatmul.mubr.f32.gmra.mxu0 %v2433
        %v2559 = vpop.f32.mrf.mxu0
        %v2560 = vadd.f32 %v458, %v2559
        %v2561 = vpop.f32.mrf.mxu0
        %2562 = vmatprep.mubr.f32.mxu0 0.0
        %2563 = vmatmul.mubr.f32.gmra.mxu0 %v2434
        %v2564 = vpop.f32.mrf.mxu0
        %v2565 = vadd.f32 %v458, %v2564
        %v2566 = vpop.f32.mrf.mxu0
        %2567 = vmatprep.mubr.f32.mxu0 0.0
        %2568 = vmatmul.mubr.f32.gmra.mxu0 %v2435
        %v2569 = vpop.f32.mrf.mxu0
        %v2570 = vadd.f32 %v458, %v2569
        %v2571 = vpop.f32.mrf.mxu0
        %2572 = vmatprep.mubr.f32.mxu0 0.0
        %2573 = vmatmul.mubr.f32.gmra.mxu0 %v2436
        %v2574 = vpop.f32.mrf.mxu0
        %v2575 = vadd.f32 %v458, %v2574
        %v2576 = vpop.f32.mrf.mxu0
        %2577 = vmatprep.mubr.f32.mxu0 0.0
        %2578 = vmatmul.mubr.f32.gmra.mxu0 %v2437
        %v2579 = vpop.f32.mrf.mxu0
        %v2580 = vadd.f32 %v458, %v2579
        %v2581 = vpop.f32.mrf.mxu0
        %2582 = vdwg.mxu0
        %v2583 = vtanh.pop %v2505
        %v2584 = vtanh.pop %v2510
        %v2585 = vtanh.pop %v2515
        %v2586 = vtanh.pop %v2520
        %v2587 = vtanh.pop %v2525
        %v2588 = vtanh.pop %v2530
        %v2589 = vtanh.pop %v2535
        %v2590 = vtanh.pop %v2540
        %v2591 = vtanh.pop %v2545
        %v2592 = vtanh.pop %v2550
        %v2593 = vtanh.pop %v2555
        %v2594 = vtanh.pop %v2560
        %v2595 = vtanh.pop %v2565
        %v2596 = vtanh.pop %v2570
        %v2597 = vtanh.pop %v2575
        %v2598 = vtanh.pop %v2580
        %2599 = vmatprep.subr.mxu0 %v742
        %2600 = vmatpush1.msra.mxu0 %v741
        %2601 = vmatprep.subr.mxu0 %v734
        %2602 = vmatpush1.msra.mxu0 %v733
        %2603 = vmatprep.subr.mxu0 %v726
        %2604 = vmatpush1.msra.mxu0 %v725
        %2605 = vmatprep.subr.mxu0 %v718
        %2606 = vmatpush1.msra.mxu0 %v717
        %2607 = vmatprep.subr.mxu0 %v710
        %2608 = vmatpush1.msra.mxu0 %v709
        %2609 = vmatprep.subr.mxu0 %v702
        %2610 = vmatpush1.msra.mxu0 %v701
        %2611 = vmatprep.subr.mxu0 %v694
        %2612 = vmatpush1.msra.mxu0 %v693
        %2613 = vmatprep.subr.mxu0 %v686
        %2614 = vmatpush1.msra.mxu0 %v685
        %2615 = vmatprep.subr.mxu0 %v678
        %2616 = vmatpush1.msra.mxu0 %v677
        %2617 = vmatprep.subr.mxu0 %v670
        %2618 = vmatpush1.msra.mxu0 %v669
        %2619 = vmatprep.subr.mxu0 %v662
        %2620 = vmatpush1.msra.mxu0 %v661
        %2621 = vmatprep.subr.mxu0 %v654
        %2622 = vmatpush1.msra.mxu0 %v653
        %2623 = vmatprep.subr.mxu0 %v646
        %2624 = vmatpush1.msra.mxu0 %v645
        %2625 = vmatprep.subr.mxu0 %v638
        %2626 = vmatpush1.msra.mxu0 %v637
        %2627 = vmatprep.subr.mxu0 %v630
        %2628 = vmatpush1.msra.mxu0 %v629
        %2629 = vmatprep.subr.mxu0 %v622
        %2630 = vmatpush1.msra.mxu0 %v621
        %2631 = vmatprep.subr.mxu0 0.0
        %2632 = vmatpush2.msra.mxu0 0.0
        %2633 = vmatprep.subr.mxu0 0.0
        %2634 = vmatpush2.msra.mxu0 0.0
        %2635 = vmatprep.subr.mxu0 0.0
        %2636 = vmatpush2.msra.mxu0 0.0
        %2637 = vmatprep.subr.mxu0 0.0
        %2638 = vmatpush2.msra.mxu0 0.0
        %2639 = vmatprep.subr.mxu0 0.0
        %2640 = vmatpush2.msra.mxu0 0.0
        %2641 = vmatprep.subr.mxu0 0.0
        %2642 = vmatpush2.msra.mxu0 0.0
        %2643 = vmatprep.subr.mxu0 0.0
        %2644 = vmatpush2.msra.mxu0 0.0
        %2645 = vmatprep.subr.mxu0 0.0
        %2646 = vmatpush2.msra.mxu0 0.0
        %2647 = vmatprep.subr.mxu0 0.0
        %2648 = vmatpush2.msra.mxu0 0.0
        %2649 = vmatprep.subr.mxu0 0.0
        %2650 = vmatpush2.msra.mxu0 0.0
        %2651 = vmatprep.subr.mxu0 0.0
        %2652 = vmatpush2.msra.mxu0 0.0
        %2653 = vmatprep.subr.mxu0 0.0
        %2654 = vmatpush2.msra.mxu0 0.0
        %2655 = vmatprep.subr.mxu0 0.0
        %2656 = vmatpush2.msra.mxu0 0.0
        %2657 = vmatprep.subr.mxu0 0.0
        %2658 = vmatpush2.msra.mxu0 0.0
        %2659 = vmatprep.subr.mxu0 0.0
        %2660 = vmatpush2.msra.mxu0 0.0
        %2661 = vmatprep.subr.mxu0 0.0
        %2662 = vmatpush2.msra.mxu0 0.0
        %2663 = vmatprep.mubr.f32.mxu0 0.0
        %2664 = vmatmul.mubr.f32.gmra.mxu0 %v2583
        %v2665 = vpop.f32.mrf.mxu0
        %v2666 = vadd.f32 0.0, %v2665
        %v2667 = vpop.f32.mrf.mxu0
        %v2668 = vadd.f32 0.0, %v2667
        %2669 = vmatprep.mubr.f32.mxu0 0.0
        %2670 = vmatmul.mubr.f32.gmra.mxu0 %v2584
        %v2671 = vpop.f32.mrf.mxu0
        %v2672 = vadd.f32 0.0, %v2671
        %v2673 = vpop.f32.mrf.mxu0
        %v2674 = vadd.f32 0.0, %v2673
        %2675 = vmatprep.mubr.f32.mxu0 0.0
        %2676 = vmatmul.mubr.f32.gmra.mxu0 %v2585
        %v2677 = vpop.f32.mrf.mxu0
        %v2678 = vadd.f32 0.0, %v2677
        %v2679 = vpop.f32.mrf.mxu0
        %v2680 = vadd.f32 0.0, %v2679
        %2681 = vmatprep.mubr.f32.mxu0 0.0
        %2682 = vmatmul.mubr.f32.gmra.mxu0 %v2586
        %v2683 = vpop.f32.mrf.mxu0
        %v2684 = vadd.f32 0.0, %v2683
        %v2685 = vpop.f32.mrf.mxu0
        %v2686 = vadd.f32 0.0, %v2685
        %2687 = vmatprep.mubr.f32.mxu0 0.0
        %2688 = vmatmul.mubr.f32.gmra.mxu0 %v2587
        %v2689 = vpop.f32.mrf.mxu0
        %v2690 = vadd.f32 0.0, %v2689
        %v2691 = vpop.f32.mrf.mxu0
        %v2692 = vadd.f32 0.0, %v2691
        %2693 = vmatprep.mubr.f32.mxu0 0.0
        %2694 = vmatmul.mubr.f32.gmra.mxu0 %v2588
        %v2695 = vpop.f32.mrf.mxu0
        %v2696 = vadd.f32 0.0, %v2695
        %v2697 = vpop.f32.mrf.mxu0
        %v2698 = vadd.f32 0.0, %v2697
        %2699 = vmatprep.mubr.f32.mxu0 0.0
        %2700 = vmatmul.mubr.f32.gmra.mxu0 %v2589
        %v2701 = vpop.f32.mrf.mxu0
        %v2702 = vadd.f32 0.0, %v2701
        %v2703 = vpop.f32.mrf.mxu0
        %v2704 = vadd.f32 0.0, %v2703
        %2705 = vmatprep.mubr.f32.mxu0 0.0
        %2706 = vmatmul.mubr.f32.gmra.mxu0 %v2590
        %v2707 = vpop.f32.mrf.mxu0
        %v2708 = vadd.f32 0.0, %v2707
        %v2709 = vpop.f32.mrf.mxu0
        %v2710 = vadd.f32 0.0, %v2709
        %2711 = vmatprep.mubr.f32.mxu0 0.0
        %2712 = vmatmul.mubr.f32.gmra.mxu0 %v2591
        %v2713 = vpop.f32.mrf.mxu0
        %v2714 = vadd.f32 0.0, %v2713
        %v2715 = vpop.f32.mrf.mxu0
        %v2716 = vadd.f32 0.0, %v2715
        %2717 = vmatprep.mubr.f32.mxu0 0.0
        %2718 = vmatmul.mubr.f32.gmra.mxu0 %v2592
        %v2719 = vpop.f32.mrf.mxu0
        %v2720 = vadd.f32 0.0, %v2719
        %v2721 = vpop.f32.mrf.mxu0
        %v2722 = vadd.f32 0.0, %v2721
        %2723 = vmatprep.mubr.f32.mxu0 0.0
        %2724 = vmatmul.mubr.f32.gmra.mxu0 %v2593
        %v2725 = vpop.f32.mrf.mxu0
        %v2726 = vadd.f32 0.0, %v2725
        %v2727 = vpop.f32.mrf.mxu0
        %v2728 = vadd.f32 0.0, %v2727
        %2729 = vmatprep.mubr.f32.mxu0 0.0
        %2730 = vmatmul.mubr.f32.gmra.mxu0 %v2594
        %v2731 = vpop.f32.mrf.mxu0
        %v2732 = vadd.f32 0.0, %v2731
        %v2733 = vpop.f32.mrf.mxu0
        %v2734 = vadd.f32 0.0, %v2733
        %2735 = vmatprep.mubr.f32.mxu0 0.0
        %2736 = vmatmul.mubr.f32.gmra.mxu0 %v2595
        %v2737 = vpop.f32.mrf.mxu0
        %v2738 = vadd.f32 0.0, %v2737
        %v2739 = vpop.f32.mrf.mxu0
        %v2740 = vadd.f32 0.0, %v2739
        %2741 = vmatprep.mubr.f32.mxu0 0.0
        %2742 = vmatmul.mubr.f32.gmra.mxu0 %v2596
        %v2743 = vpop.f32.mrf.mxu0
        %v2744 = vadd.f32 0.0, %v2743
        %v2745 = vpop.f32.mrf.mxu0
        %v2746 = vadd.f32 0.0, %v2745
        %2747 = vmatprep.mubr.f32.mxu0 0.0
        %2748 = vmatmul.mubr.f32.gmra.mxu0 %v2597
        %v2749 = vpop.f32.mrf.mxu0
        %v2750 = vadd.f32 0.0, %v2749
        %v2751 = vpop.f32.mrf.mxu0
        %v2752 = vadd.f32 0.0, %v2751
        %2753 = vmatprep.mubr.f32.mxu0 0.0
        %2754 = vmatmul.mubr.f32.gmra.mxu0 %v2598
        %v2755 = vpop.f32.mrf.mxu0
        %v2756 = vadd.f32 0.0, %v2755
        %v2757 = vpop.f32.mrf.mxu0
        %v2758 = vadd.f32 0.0, %v2757
        %2759 = vdwg.mxu0
        %2760 = vmatprep.subr.mxu0 %v744
        %2761 = vmatpush1.msra.mxu0 %v743
        %2762 = vmatprep.subr.mxu0 %v736
        %2763 = vmatpush1.msra.mxu0 %v735
        %2764 = vmatprep.subr.mxu0 %v728
        %2765 = vmatpush1.msra.mxu0 %v727
        %2766 = vmatprep.subr.mxu0 %v720
        %2767 = vmatpush1.msra.mxu0 %v719
        %2768 = vmatprep.subr.mxu0 %v712
        %2769 = vmatpush1.msra.mxu0 %v711
        %2770 = vmatprep.subr.mxu0 %v704
        %2771 = vmatpush1.msra.mxu0 %v703
        %2772 = vmatprep.subr.mxu0 %v696
        %2773 = vmatpush1.msra.mxu0 %v695
        %2774 = vmatprep.subr.mxu0 %v688
        %2775 = vmatpush1.msra.mxu0 %v687
        %2776 = vmatprep.subr.mxu0 %v680
        %2777 = vmatpush1.msra.mxu0 %v679
        %2778 = vmatprep.subr.mxu0 %v672
        %2779 = vmatpush1.msra.mxu0 %v671
        %2780 = vmatprep.subr.mxu0 %v664
        %2781 = vmatpush1.msra.mxu0 %v663
        %2782 = vmatprep.subr.mxu0 %v656
        %2783 = vmatpush1.msra.mxu0 %v655
        %2784 = vmatprep.subr.mxu0 %v648
        %2785 = vmatpush1.msra.mxu0 %v647
        %2786 = vmatprep.subr.mxu0 %v640
        %2787 = vmatpush1.msra.mxu0 %v639
        %2788 = vmatprep.subr.mxu0 %v632
        %2789 = vmatpush1.msra.mxu0 %v631
        %2790 = vmatprep.subr.mxu0 %v624
        %2791 = vmatpush1.msra.mxu0 %v623
        %2792 = vmatprep.subr.mxu0 0.0
        %2793 = vmatpush2.msra.mxu0 0.0
        %2794 = vmatprep.subr.mxu0 0.0
        %2795 = vmatpush2.msra.mxu0 0.0
        %2796 = vmatprep.subr.mxu0 0.0
        %2797 = vmatpush2.msra.mxu0 0.0
        %2798 = vmatprep.subr.mxu0 0.0
        %2799 = vmatpush2.msra.mxu0 0.0
        %2800 = vmatprep.subr.mxu0 0.0
        %2801 = vmatpush2.msra.mxu0 0.0
        %2802 = vmatprep.subr.mxu0 0.0
        %2803 = vmatpush2.msra.mxu0 0.0
        %2804 = vmatprep.subr.mxu0 0.0
        %2805 = vmatpush2.msra.mxu0 0.0
        %2806 = vmatprep.subr.mxu0 0.0
        %2807 = vmatpush2.msra.mxu0 0.0
        %2808 = vmatprep.subr.mxu0 0.0
        %2809 = vmatpush2.msra.mxu0 0.0
        %2810 = vmatprep.subr.mxu0 0.0
        %2811 = vmatpush2.msra.mxu0 0.0
        %2812 = vmatprep.subr.mxu0 0.0
        %2813 = vmatpush2.msra.mxu0 0.0
        %2814 = vmatprep.subr.mxu0 0.0
        %2815 = vmatpush2.msra.mxu0 0.0
        %2816 = vmatprep.subr.mxu0 0.0
        %2817 = vmatpush2.msra.mxu0 0.0
        %2818 = vmatprep.subr.mxu0 0.0
        %2819 = vmatpush2.msra.mxu0 0.0
        %2820 = vmatprep.subr.mxu0 0.0
        %2821 = vmatpush2.msra.mxu0 0.0
        %2822 = vmatprep.subr.mxu0 0.0
        %2823 = vmatpush2.msra.mxu0 0.0
        %2824 = vmatprep.mubr.f32.mxu0 0.0
        %2825 = vmatmul.mubr.f32.gmra.mxu0 %v2583
        %v2826 = vpop.f32.mrf.mxu0
        %v2827 = vadd.f32 0.0, %v2826
        %v2828 = vpop.f32.mrf.mxu0
        %v2829 = vadd.f32 0.0, %v2828
        %2830 = vmatprep.mubr.f32.mxu0 0.0
        %2831 = vmatmul.mubr.f32.gmra.mxu0 %v2584
        %v2832 = vpop.f32.mrf.mxu0
        %v2833 = vadd.f32 0.0, %v2832
        %v2834 = vpop.f32.mrf.mxu0
        %v2835 = vadd.f32 0.0, %v2834
        %2836 = vmatprep.mubr.f32.mxu0 0.0
        %2837 = vmatmul.mubr.f32.gmra.mxu0 %v2585
        %v2838 = vpop.f32.mrf.mxu0
        %v2839 = vadd.f32 0.0, %v2838
        %v2840 = vpop.f32.mrf.mxu0
        %v2841 = vadd.f32 0.0, %v2840
        %2842 = vmatprep.mubr.f32.mxu0 0.0
        %2843 = vmatmul.mubr.f32.gmra.mxu0 %v2586
        %v2844 = vpop.f32.mrf.mxu0
        %v2845 = vadd.f32 0.0, %v2844
        %v2846 = vpop.f32.mrf.mxu0
        %v2847 = vadd.f32 0.0, %v2846
        %2848 = vmatprep.mubr.f32.mxu0 0.0
        %2849 = vmatmul.mubr.f32.gmra.mxu0 %v2587
        %v2850 = vpop.f32.mrf.mxu0
        %v2851 = vadd.f32 0.0, %v2850
        %v2852 = vpop.f32.mrf.mxu0
        %v2853 = vadd.f32 0.0, %v2852
        %2854 = vmatprep.mubr.f32.mxu0 0.0
        %2855 = vmatmul.mubr.f32.gmra.mxu0 %v2588
        %v2856 = vpop.f32.mrf.mxu0
        %v2857 = vadd.f32 0.0, %v2856
        %v2858 = vpop.f32.mrf.mxu0
        %v2859 = vadd.f32 0.0, %v2858
        %2860 = vmatprep.mubr.f32.mxu0 0.0
        %2861 = vmatmul.mubr.f32.gmra.mxu0 %v2589
        %v2862 = vpop.f32.mrf.mxu0
        %v2863 = vadd.f32 0.0, %v2862
        %v2864 = vpop.f32.mrf.mxu0
        %v2865 = vadd.f32 0.0, %v2864
        %2866 = vmatprep.mubr.f32.mxu0 0.0
        %2867 = vmatmul.mubr.f32.gmra.mxu0 %v2590
        %v2868 = vpop.f32.mrf.mxu0
        %v2869 = vadd.f32 0.0, %v2868
        %v2870 = vpop.f32.mrf.mxu0
        %v2871 = vadd.f32 0.0, %v2870
        %2872 = vmatprep.mubr.f32.mxu0 0.0
        %2873 = vmatmul.mubr.f32.gmra.mxu0 %v2591
        %v2874 = vpop.f32.mrf.mxu0
        %v2875 = vadd.f32 0.0, %v2874
        %v2876 = vpop.f32.mrf.mxu0
        %v2877 = vadd.f32 0.0, %v2876
        %2878 = vmatprep.mubr.f32.mxu0 0.0
        %2879 = vmatmul.mubr.f32.gmra.mxu0 %v2592
        %v2880 = vpop.f32.mrf.mxu0
        %v2881 = vadd.f32 0.0, %v2880
        %v2882 = vpop.f32.mrf.mxu0
        %v2883 = vadd.f32 0.0, %v2882
        %2884 = vmatprep.mubr.f32.mxu0 0.0
        %2885 = vmatmul.mubr.f32.gmra.mxu0 %v2593
        %v2886 = vpop.f32.mrf.mxu0
        %v2887 = vadd.f32 0.0, %v2886
        %v2888 = vpop.f32.mrf.mxu0
        %v2889 = vadd.f32 0.0, %v2888
        %2890 = vmatprep.mubr.f32.mxu0 0.0
        %2891 = vmatmul.mubr.f32.gmra.mxu0 %v2594
        %v2892 = vpop.f32.mrf.mxu0
        %v2893 = vadd.f32 0.0, %v2892
        %v2894 = vpop.f32.mrf.mxu0
        %v2895 = vadd.f32 0.0, %v2894
        %2896 = vmatprep.mubr.f32.mxu0 0.0
        %2897 = vmatmul.mubr.f32.gmra.mxu0 %v2595
        %v2898 = vpop.f32.mrf.mxu0
        %v2899 = vadd.f32 0.0, %v2898
        %v2900 = vpop.f32.mrf.mxu0
        %v2901 = vadd.f32 0.0, %v2900
        %2902 = vmatprep.mubr.f32.mxu0 0.0
        %2903 = vmatmul.mubr.f32.gmra.mxu0 %v2596
        %v2904 = vpop.f32.mrf.mxu0
        %v2905 = vadd.f32 0.0, %v2904
        %v2906 = vpop.f32.mrf.mxu0
        %v2907 = vadd.f32 0.0, %v2906
        %2908 = vmatprep.mubr.f32.mxu0 0.0
        %2909 = vmatmul.mubr.f32.gmra.mxu0 %v2597
        %v2910 = vpop.f32.mrf.mxu0
        %v2911 = vadd.f32 0.0, %v2910
        %v2912 = vpop.f32.mrf.mxu0
        %v2913 = vadd.f32 0.0, %v2912
        %2914 = vmatprep.mubr.f32.mxu0 0.0
        %2915 = vmatmul.mubr.f32.gmra.mxu0 %v2598
        %v2916 = vpop.f32.mrf.mxu0
        %v2917 = vadd.f32 0.0, %v2916
        %v2918 = vpop.f32.mrf.mxu0
        %v2919 = vadd.f32 0.0, %v2918
        %2920 = vdwg.mxu0
        %2921 = vmatprep.subr.mxu0 %v746
        %2922 = vmatpush1.msra.mxu0 %v745
        %2923 = vmatprep.subr.mxu0 %v738
        %2924 = vmatpush1.msra.mxu0 %v737
        %2925 = vmatprep.subr.mxu0 %v730
        %2926 = vmatpush1.msra.mxu0 %v729
        %2927 = vmatprep.subr.mxu0 %v722
        %2928 = vmatpush1.msra.mxu0 %v721
        %2929 = vmatprep.subr.mxu0 %v714
        %2930 = vmatpush1.msra.mxu0 %v713
        %2931 = vmatprep.subr.mxu0 %v706
        %2932 = vmatpush1.msra.mxu0 %v705
        %2933 = vmatprep.subr.mxu0 %v698
        %2934 = vmatpush1.msra.mxu0 %v697
        %2935 = vmatprep.subr.mxu0 %v690
        %2936 = vmatpush1.msra.mxu0 %v689
        %2937 = vmatprep.subr.mxu0 %v682
        %2938 = vmatpush1.msra.mxu0 %v681
        %2939 = vmatprep.subr.mxu0 %v674
        %2940 = vmatpush1.msra.mxu0 %v673
        %2941 = vmatprep.subr.mxu0 %v666
        %2942 = vmatpush1.msra.mxu0 %v665
        %2943 = vmatprep.subr.mxu0 %v658
        %2944 = vmatpush1.msra.mxu0 %v657
        %2945 = vmatprep.subr.mxu0 %v650
        %2946 = vmatpush1.msra.mxu0 %v649
        %2947 = vmatprep.subr.mxu0 %v642
        %2948 = vmatpush1.msra.mxu0 %v641
        %2949 = vmatprep.subr.mxu0 %v634
        %2950 = vmatpush1.msra.mxu0 %v633
        %2951 = vmatprep.subr.mxu0 %v626
        %2952 = vmatpush1.msra.mxu0 %v625
        %2953 = vmatprep.subr.mxu0 0.0
        %2954 = vmatpush2.msra.mxu0 0.0
        %2955 = vmatprep.subr.mxu0 0.0
        %2956 = vmatpush2.msra.mxu0 0.0
        %2957 = vmatprep.subr.mxu0 0.0
        %2958 = vmatpush2.msra.mxu0 0.0
        %2959 = vmatprep.subr.mxu0 0.0
        %2960 = vmatpush2.msra.mxu0 0.0
        %2961 = vmatprep.subr.mxu0 0.0
        %2962 = vmatpush2.msra.mxu0 0.0
        %2963 = vmatprep.subr.mxu0 0.0
        %2964 = vmatpush2.msra.mxu0 0.0
        %2965 = vmatprep.subr.mxu0 0.0
        %2966 = vmatpush2.msra.mxu0 0.0
        %2967 = vmatprep.subr.mxu0 0.0
        %2968 = vmatpush2.msra.mxu0 0.0
        %2969 = vmatprep.subr.mxu0 0.0
        %2970 = vmatpush2.msra.mxu0 0.0
        %2971 = vmatprep.subr.mxu0 0.0
        %2972 = vmatpush2.msra.mxu0 0.0
        %2973 = vmatprep.subr.mxu0 0.0
        %2974 = vmatpush2.msra.mxu0 0.0
        %2975 = vmatprep.subr.mxu0 0.0
        %2976 = vmatpush2.msra.mxu0 0.0
        %2977 = vmatprep.subr.mxu0 0.0
        %2978 = vmatpush2.msra.mxu0 0.0
        %2979 = vmatprep.subr.mxu0 0.0
        %2980 = vmatpush2.msra.mxu0 0.0
        %2981 = vmatprep.subr.mxu0 0.0
        %2982 = vmatpush2.msra.mxu0 0.0
        %2983 = vmatprep.subr.mxu0 0.0
        %2984 = vmatpush2.msra.mxu0 0.0
        %2985 = vmatprep.mubr.f32.mxu0 0.0
        %2986 = vmatmul.mubr.f32.gmra.mxu0 %v2583
        %v2987 = vpop.f32.mrf.mxu0
        %v2988 = vadd.f32 0.0, %v2987
        %v2989 = vpop.f32.mrf.mxu0
        %v2990 = vadd.f32 0.0, %v2989
        %2991 = vmatprep.mubr.f32.mxu0 0.0
        %2992 = vmatmul.mubr.f32.gmra.mxu0 %v2584
        %v2993 = vpop.f32.mrf.mxu0
        %v2994 = vadd.f32 0.0, %v2993
        %v2995 = vpop.f32.mrf.mxu0
        %v2996 = vadd.f32 0.0, %v2995
        %2997 = vmatprep.mubr.f32.mxu0 0.0
        %2998 = vmatmul.mubr.f32.gmra.mxu0 %v2585
        %v2999 = vpop.f32.mrf.mxu0
        %v3000 = vadd.f32 0.0, %v2999
        %v3001 = vpop.f32.mrf.mxu0
        %v3002 = vadd.f32 0.0, %v3001
        %3003 = vmatprep.mubr.f32.mxu0 0.0
        %3004 = vmatmul.mubr.f32.gmra.mxu0 %v2586
        %v3005 = vpop.f32.mrf.mxu0
        %v3006 = vadd.f32 0.0, %v3005
        %v3007 = vpop.f32.mrf.mxu0
        %v3008 = vadd.f32 0.0, %v3007
        %3009 = vmatprep.mubr.f32.mxu0 0.0
        %3010 = vmatmul.mubr.f32.gmra.mxu0 %v2587
        %v3011 = vpop.f32.mrf.mxu0
        %v3012 = vadd.f32 0.0, %v3011
        %v3013 = vpop.f32.mrf.mxu0
        %v3014 = vadd.f32 0.0, %v3013
        %3015 = vmatprep.mubr.f32.mxu0 0.0
        %3016 = vmatmul.mubr.f32.gmra.mxu0 %v2588
        %v3017 = vpop.f32.mrf.mxu0
        %v3018 = vadd.f32 0.0, %v3017
        %v3019 = vpop.f32.mrf.mxu0
        %v3020 = vadd.f32 0.0, %v3019
        %3021 = vmatprep.mubr.f32.mxu0 0.0
        %3022 = vmatmul.mubr.f32.gmra.mxu0 %v2589
        %v3023 = vpop.f32.mrf.mxu0
        %v3024 = vadd.f32 0.0, %v3023
        %v3025 = vpop.f32.mrf.mxu0
        %v3026 = vadd.f32 0.0, %v3025
        %3027 = vmatprep.mubr.f32.mxu0 0.0
        %3028 = vmatmul.mubr.f32.gmra.mxu0 %v2590
        %v3029 = vpop.f32.mrf.mxu0
        %v3030 = vadd.f32 0.0, %v3029
        %v3031 = vpop.f32.mrf.mxu0
        %v3032 = vadd.f32 0.0, %v3031
        %3033 = vmatprep.mubr.f32.mxu0 0.0
        %3034 = vmatmul.mubr.f32.gmra.mxu0 %v2591
        %v3035 = vpop.f32.mrf.mxu0
        %v3036 = vadd.f32 0.0, %v3035
        %v3037 = vpop.f32.mrf.mxu0
        %v3038 = vadd.f32 0.0, %v3037
        %3039 = vmatprep.mubr.f32.mxu0 0.0
        %3040 = vmatmul.mubr.f32.gmra.mxu0 %v2592
        %v3041 = vpop.f32.mrf.mxu0
        %v3042 = vadd.f32 0.0, %v3041
        %v3043 = vpop.f32.mrf.mxu0
        %v3044 = vadd.f32 0.0, %v3043
        %3045 = vmatprep.mubr.f32.mxu0 0.0
        %3046 = vmatmul.mubr.f32.gmra.mxu0 %v2593
        %v3047 = vpop.f32.mrf.mxu0
        %v3048 = vadd.f32 0.0, %v3047
        %v3049 = vpop.f32.mrf.mxu0
        %v3050 = vadd.f32 0.0, %v3049
        %3051 = vmatprep.mubr.f32.mxu0 0.0
        %3052 = vmatmul.mubr.f32.gmra.mxu0 %v2594
        %v3053 = vpop.f32.mrf.mxu0
        %v3054 = vadd.f32 0.0, %v3053
        %v3055 = vpop.f32.mrf.mxu0
        %v3056 = vadd.f32 0.0, %v3055
        %3057 = vmatprep.mubr.f32.mxu0 0.0
        %3058 = vmatmul.mubr.f32.gmra.mxu0 %v2595
        %v3059 = vpop.f32.mrf.mxu0
        %v3060 = vadd.f32 0.0, %v3059
        %v3061 = vpop.f32.mrf.mxu0
        %v3062 = vadd.f32 0.0, %v3061
        %3063 = vmatprep.mubr.f32.mxu0 0.0
        %3064 = vmatmul.mubr.f32.gmra.mxu0 %v2596
        %v3065 = vpop.f32.mrf.mxu0
        %v3066 = vadd.f32 0.0, %v3065
        %v3067 = vpop.f32.mrf.mxu0
        %v3068 = vadd.f32 0.0, %v3067
        %3069 = vmatprep.mubr.f32.mxu0 0.0
        %3070 = vmatmul.mubr.f32.gmra.mxu0 %v2597
        %v3071 = vpop.f32.mrf.mxu0
        %v3072 = vadd.f32 0.0, %v3071
        %v3073 = vpop.f32.mrf.mxu0
        %v3074 = vadd.f32 0.0, %v3073
        %3075 = vmatprep.mubr.f32.mxu0 0.0
        %3076 = vmatmul.mubr.f32.gmra.mxu0 %v2598
        %v3077 = vpop.f32.mrf.mxu0
        %v3078 = vadd.f32 0.0, %v3077
        %v3079 = vpop.f32.mrf.mxu0
        %v3080 = vadd.f32 0.0, %v3079
        %3081 = vdwg.mxu0
        %3082 = vmatprep.subr.mxu0 %v748
        %3083 = vmatpush1.msra.mxu0 %v747
        %3084 = vmatprep.subr.mxu0 %v740
        %3085 = vmatpush1.msra.mxu0 %v739
        %3086 = vmatprep.subr.mxu0 %v732
        %3087 = vmatpush1.msra.mxu0 %v731
        %3088 = vmatprep.subr.mxu0 %v724
        %3089 = vmatpush1.msra.mxu0 %v723
        %3090 = vmatprep.subr.mxu0 %v716
        %3091 = vmatpush1.msra.mxu0 %v715
        %3092 = vmatprep.subr.mxu0 %v708
        %3093 = vmatpush1.msra.mxu0 %v707
        %3094 = vmatprep.subr.mxu0 %v700
        %3095 = vmatpush1.msra.mxu0 %v699
        %3096 = vmatprep.subr.mxu0 %v692
        %3097 = vmatpush1.msra.mxu0 %v691
        %3098 = vmatprep.subr.mxu0 %v684
        %3099 = vmatpush1.msra.mxu0 %v683
        %3100 = vmatprep.subr.mxu0 %v676
        %3101 = vmatpush1.msra.mxu0 %v675
        %3102 = vmatprep.subr.mxu0 %v668
        %3103 = vmatpush1.msra.mxu0 %v667
        %3104 = vmatprep.subr.mxu0 %v660
        %3105 = vmatpush1.msra.mxu0 %v659
        %3106 = vmatprep.subr.mxu0 %v652
        %3107 = vmatpush1.msra.mxu0 %v651
        %3108 = vmatprep.subr.mxu0 %v644
        %3109 = vmatpush1.msra.mxu0 %v643
        %3110 = vmatprep.subr.mxu0 %v636
        %3111 = vmatpush1.msra.mxu0 %v635
        %3112 = vmatprep.subr.mxu0 %v628
        %3113 = vmatpush1.msra.mxu0 %v627
        %3114 = vmatprep.subr.mxu0 0.0
        %3115 = vmatpush2.msra.mxu0 0.0
        %3116 = vmatprep.subr.mxu0 0.0
        %3117 = vmatpush2.msra.mxu0 0.0
        %3118 = vmatprep.subr.mxu0 0.0
        %3119 = vmatpush2.msra.mxu0 0.0
        %3120 = vmatprep.subr.mxu0 0.0
        %3121 = vmatpush2.msra.mxu0 0.0
        %3122 = vmatprep.subr.mxu0 0.0
        %3123 = vmatpush2.msra.mxu0 0.0
        %3124 = vmatprep.subr.mxu0 0.0
        %3125 = vmatpush2.msra.mxu0 0.0
        %3126 = vmatprep.subr.mxu0 0.0
        %3127 = vmatpush2.msra.mxu0 0.0
        %3128 = vmatprep.subr.mxu0 0.0
        %3129 = vmatpush2.msra.mxu0 0.0
        %3130 = vmatprep.subr.mxu0 0.0
        %3131 = vmatpush2.msra.mxu0 0.0
        %3132 = vmatprep.subr.mxu0 0.0
        %3133 = vmatpush2.msra.mxu0 0.0
        %3134 = vmatprep.subr.mxu0 0.0
        %3135 = vmatpush2.msra.mxu0 0.0
        %3136 = vmatprep.subr.mxu0 0.0
        %3137 = vmatpush2.msra.mxu0 0.0
        %3138 = vmatprep.subr.mxu0 0.0
        %3139 = vmatpush2.msra.mxu0 0.0
        %3140 = vmatprep.subr.mxu0 0.0
        %3141 = vmatpush2.msra.mxu0 0.0
        %3142 = vmatprep.subr.mxu0 0.0
        %3143 = vmatpush2.msra.mxu0 0.0
        %3144 = vmatprep.subr.mxu0 0.0
        %3145 = vmatpush2.msra.mxu0 0.0
        %3146 = vmatprep.mubr.f32.mxu0 0.0
        %3147 = vmatmul.mubr.f32.gmra.mxu0 %v2583
        %v3148 = vpop.f32.mrf.mxu0
        %v3149 = vadd.f32 0.0, %v3148
        %v3150 = vpop.f32.mrf.mxu0
        %v3151 = vadd.f32 0.0, %v3150
        %3152 = vmatprep.mubr.f32.mxu0 0.0
        %3153 = vmatmul.mubr.f32.gmra.mxu0 %v2584
        %v3154 = vpop.f32.mrf.mxu0
        %v3155 = vadd.f32 0.0, %v3154
        %v3156 = vpop.f32.mrf.mxu0
        %v3157 = vadd.f32 0.0, %v3156
        %3158 = vmatprep.mubr.f32.mxu0 0.0
        %3159 = vmatmul.mubr.f32.gmra.mxu0 %v2585
        %v3160 = vpop.f32.mrf.mxu0
        %v3161 = vadd.f32 0.0, %v3160
        %v3162 = vpop.f32.mrf.mxu0
        %v3163 = vadd.f32 0.0, %v3162
        %3164 = vmatprep.mubr.f32.mxu0 0.0
        %3165 = vmatmul.mubr.f32.gmra.mxu0 %v2586
        %v3166 = vpop.f32.mrf.mxu0
        %v3167 = vadd.f32 0.0, %v3166
        %v3168 = vpop.f32.mrf.mxu0
        %v3169 = vadd.f32 0.0, %v3168
        %3170 = vmatprep.mubr.f32.mxu0 0.0
        %3171 = vmatmul.mubr.f32.gmra.mxu0 %v2587
        %v3172 = vpop.f32.mrf.mxu0
        %v3173 = vadd.f32 0.0, %v3172
        %v3174 = vpop.f32.mrf.mxu0
        %v3175 = vadd.f32 0.0, %v3174
        %3176 = vmatprep.mubr.f32.mxu0 0.0
        %3177 = vmatmul.mubr.f32.gmra.mxu0 %v2588
        %v3178 = vpop.f32.mrf.mxu0
        %v3179 = vadd.f32 0.0, %v3178
        %v3180 = vpop.f32.mrf.mxu0
        %v3181 = vadd.f32 0.0, %v3180
        %3182 = vmatprep.mubr.f32.mxu0 0.0
        %3183 = vmatmul.mubr.f32.gmra.mxu0 %v2589
        %v3184 = vpop.f32.mrf.mxu0
        %v3185 = vadd.f32 0.0, %v3184
        %v3186 = vpop.f32.mrf.mxu0
        %v3187 = vadd.f32 0.0, %v3186
        %3188 = vmatprep.mubr.f32.mxu0 0.0
        %3189 = vmatmul.mubr.f32.gmra.mxu0 %v2590
        %v3190 = vpop.f32.mrf.mxu0
        %v3191 = vadd.f32 0.0, %v3190
        %v3192 = vpop.f32.mrf.mxu0
        %v3193 = vadd.f32 0.0, %v3192
        %3194 = vmatprep.mubr.f32.mxu0 0.0
        %3195 = vmatmul.mubr.f32.gmra.mxu0 %v2591
        %v3196 = vpop.f32.mrf.mxu0
        %v3197 = vadd.f32 0.0, %v3196
        %v3198 = vpop.f32.mrf.mxu0
        %v3199 = vadd.f32 0.0, %v3198
        %3200 = vmatprep.mubr.f32.mxu0 0.0
        %3201 = vmatmul.mubr.f32.gmra.mxu0 %v2592
        %v3202 = vpop.f32.mrf.mxu0
        %v3203 = vadd.f32 0.0, %v3202
        %v3204 = vpop.f32.mrf.mxu0
        %v3205 = vadd.f32 0.0, %v3204
        %3206 = vmatprep.mubr.f32.mxu0 0.0
        %3207 = vmatmul.mubr.f32.gmra.mxu0 %v2593
        %v3208 = vpop.f32.mrf.mxu0
        %v3209 = vadd.f32 0.0, %v3208
        %v3210 = vpop.f32.mrf.mxu0
        %v3211 = vadd.f32 0.0, %v3210
        %3212 = vmatprep.mubr.f32.mxu0 0.0
        %3213 = vmatmul.mubr.f32.gmra.mxu0 %v2594
        %v3214 = vpop.f32.mrf.mxu0
        %v3215 = vadd.f32 0.0, %v3214
        %v3216 = vpop.f32.mrf.mxu0
        %v3217 = vadd.f32 0.0, %v3216
        %3218 = vmatprep.mubr.f32.mxu0 0.0
        %3219 = vmatmul.mubr.f32.gmra.mxu0 %v2595
        %v3220 = vpop.f32.mrf.mxu0
        %v3221 = vadd.f32 0.0, %v3220
        %v3222 = vpop.f32.mrf.mxu0
        %v3223 = vadd.f32 0.0, %v3222
        %3224 = vmatprep.mubr.f32.mxu0 0.0
        %3225 = vmatmul.mubr.f32.gmra.mxu0 %v2596
        %v3226 = vpop.f32.mrf.mxu0
        %v3227 = vadd.f32 0.0, %v3226
        %v3228 = vpop.f32.mrf.mxu0
        %v3229 = vadd.f32 0.0, %v3228
        %3230 = vmatprep.mubr.f32.mxu0 0.0
        %3231 = vmatmul.mubr.f32.gmra.mxu0 %v2597
        %v3232 = vpop.f32.mrf.mxu0
        %v3233 = vadd.f32 0.0, %v3232
        %v3234 = vpop.f32.mrf.mxu0
        %v3235 = vadd.f32 0.0, %v3234
        %3236 = vmatprep.mubr.f32.mxu0 0.0
        %3237 = vmatmul.mubr.f32.gmra.mxu0 %v2598
        %v3238 = vpop.f32.mrf.mxu0
        %v3239 = vadd.f32 0.0, %v3238
        %v3240 = vpop.f32.mrf.mxu0
        %v3241 = vadd.f32 0.0, %v3240
        %3242 = vdwg.mxu0
        %3243 = vmatprep.subr.mxu0 %v1514
        %3244 = vmatpush1.msra.mxu0 %v1513
        %3245 = vmatprep.subr.mxu0 %v1506
        %3246 = vmatpush1.msra.mxu0 %v1505
        %3247 = vmatprep.subr.mxu0 %v1498
        %3248 = vmatpush1.msra.mxu0 %v1497
        %3249 = vmatprep.subr.mxu0 %v1490
        %3250 = vmatpush1.msra.mxu0 %v1489
        %3251 = vmatprep.subr.mxu0 %v1482
        %3252 = vmatpush1.msra.mxu0 %v1481
        %3253 = vmatprep.subr.mxu0 %v1474
        %3254 = vmatpush1.msra.mxu0 %v1473
        %3255 = vmatprep.subr.mxu0 %v1466
        %3256 = vmatpush1.msra.mxu0 %v1465
        %3257 = vmatprep.subr.mxu0 %v1458
        %3258 = vmatpush1.msra.mxu0 %v1457
        %3259 = vmatprep.subr.mxu0 %v1450
        %3260 = vmatpush1.msra.mxu0 %v1449
        %3261 = vmatprep.subr.mxu0 %v1442
        %3262 = vmatpush1.msra.mxu0 %v1441
        %3263 = vmatprep.subr.mxu0 %v1434
        %3264 = vmatpush1.msra.mxu0 %v1433
        %3265 = vmatprep.subr.mxu0 %v1426
        %3266 = vmatpush1.msra.mxu0 %v1425
        %3267 = vmatprep.subr.mxu0 %v1418
        %3268 = vmatpush1.msra.mxu0 %v1417
        %3269 = vmatprep.subr.mxu0 %v1410
        %3270 = vmatpush1.msra.mxu0 %v1409
        %3271 = vmatprep.subr.mxu0 %v1402
        %3272 = vmatpush1.msra.mxu0 %v1401
        %3273 = vmatprep.subr.mxu0 %v1394
        %3274 = vmatpush1.msra.mxu0 %v1393
        %3275 = vmatprep.subr.mxu0 0.0
        %3276 = vmatpush2.msra.mxu0 0.0
        %3277 = vmatprep.subr.mxu0 0.0
        %3278 = vmatpush2.msra.mxu0 0.0
        %3279 = vmatprep.subr.mxu0 0.0
        %3280 = vmatpush2.msra.mxu0 0.0
        %3281 = vmatprep.subr.mxu0 0.0
        %3282 = vmatpush2.msra.mxu0 0.0
        %3283 = vmatprep.subr.mxu0 0.0
        %3284 = vmatpush2.msra.mxu0 0.0
        %3285 = vmatprep.subr.mxu0 0.0
        %3286 = vmatpush2.msra.mxu0 0.0
        %3287 = vmatprep.subr.mxu0 0.0
        %3288 = vmatpush2.msra.mxu0 0.0
        %3289 = vmatprep.subr.mxu0 0.0
        %3290 = vmatpush2.msra.mxu0 0.0
        %3291 = vmatprep.subr.mxu0 0.0
        %3292 = vmatpush2.msra.mxu0 0.0
        %3293 = vmatprep.subr.mxu0 0.0
        %3294 = vmatpush2.msra.mxu0 0.0
        %3295 = vmatprep.subr.mxu0 0.0
        %3296 = vmatpush2.msra.mxu0 0.0
        %3297 = vmatprep.subr.mxu0 0.0
        %3298 = vmatpush2.msra.mxu0 0.0
        %3299 = vmatprep.subr.mxu0 0.0
        %3300 = vmatpush2.msra.mxu0 0.0
        %3301 = vmatprep.subr.mxu0 0.0
        %3302 = vmatpush2.msra.mxu0 0.0
        %3303 = vmatprep.subr.mxu0 0.0
        %3304 = vmatpush2.msra.mxu0 0.0
        %3305 = vmatprep.subr.mxu0 0.0
        %3306 = vmatpush2.msra.mxu0 0.0
        %3307 = vmatprep.mubr.f32.mxu0 0.0
        %3308 = vmatmul.mubr.f32.gmra.mxu0 %v2583
        %v3309 = vpop.f32.mrf.mxu0
        %v3310 = vadd.f32 0.0, %v3309
        %v3311 = vpop.f32.mrf.mxu0
        %v3312 = vadd.f32 0.0, %v3311
        %3313 = vmatprep.mubr.f32.mxu0 0.0
        %3314 = vmatmul.mubr.f32.gmra.mxu0 %v2584
        %v3315 = vpop.f32.mrf.mxu0
        %v3316 = vadd.f32 0.0, %v3315
        %v3317 = vpop.f32.mrf.mxu0
        %v3318 = vadd.f32 0.0, %v3317
        %3319 = vmatprep.mubr.f32.mxu0 0.0
        %3320 = vmatmul.mubr.f32.gmra.mxu0 %v2585
        %v3321 = vpop.f32.mrf.mxu0
        %v3322 = vadd.f32 0.0, %v3321
        %v3323 = vpop.f32.mrf.mxu0
        %v3324 = vadd.f32 0.0, %v3323
        %3325 = vmatprep.mubr.f32.mxu0 0.0
        %3326 = vmatmul.mubr.f32.gmra.mxu0 %v2586
        %v3327 = vpop.f32.mrf.mxu0
        %v3328 = vadd.f32 0.0, %v3327
        %v3329 = vpop.f32.mrf.mxu0
        %v3330 = vadd.f32 0.0, %v3329
        %3331 = vmatprep.mubr.f32.mxu0 0.0
        %3332 = vmatmul.mubr.f32.gmra.mxu0 %v2587
        %v3333 = vpop.f32.mrf.mxu0
        %v3334 = vadd.f32 0.0, %v3333
        %v3335 = vpop.f32.mrf.mxu0
        %v3336 = vadd.f32 0.0, %v3335
        %3337 = vmatprep.mubr.f32.mxu0 0.0
        %3338 = vmatmul.mubr.f32.gmra.mxu0 %v2588
        %v3339 = vpop.f32.mrf.mxu0
        %v3340 = vadd.f32 0.0, %v3339
        %v3341 = vpop.f32.mrf.mxu0
        %v3342 = vadd.f32 0.0, %v3341
        %3343 = vmatprep.mubr.f32.mxu0 0.0
        %3344 = vmatmul.mubr.f32.gmra.mxu0 %v2589
        %v3345 = vpop.f32.mrf.mxu0
        %v3346 = vadd.f32 0.0, %v3345
        %v3347 = vpop.f32.mrf.mxu0
        %v3348 = vadd.f32 0.0, %v3347
        %3349 = vmatprep.mubr.f32.mxu0 0.0
        %3350 = vmatmul.mubr.f32.gmra.mxu0 %v2590
        %v3351 = vpop.f32.mrf.mxu0
        %v3352 = vadd.f32 0.0, %v3351
        %v3353 = vpop.f32.mrf.mxu0
        %v3354 = vadd.f32 0.0, %v3353
        %3355 = vmatprep.mubr.f32.mxu0 0.0
        %3356 = vmatmul.mubr.f32.gmra.mxu0 %v2591
        %v3357 = vpop.f32.mrf.mxu0
        %v3358 = vadd.f32 0.0, %v3357
        %v3359 = vpop.f32.mrf.mxu0
        %v3360 = vadd.f32 0.0, %v3359
        %3361 = vmatprep.mubr.f32.mxu0 0.0
        %3362 = vmatmul.mubr.f32.gmra.mxu0 %v2592
        %v3363 = vpop.f32.mrf.mxu0
        %v3364 = vadd.f32 0.0, %v3363
        %v3365 = vpop.f32.mrf.mxu0
        %v3366 = vadd.f32 0.0, %v3365
        %3367 = vmatprep.mubr.f32.mxu0 0.0
        %3368 = vmatmul.mubr.f32.gmra.mxu0 %v2593
        %v3369 = vpop.f32.mrf.mxu0
        %v3370 = vadd.f32 0.0, %v3369
        %v3371 = vpop.f32.mrf.mxu0
        %v3372 = vadd.f32 0.0, %v3371
        %3373 = vmatprep.mubr.f32.mxu0 0.0
        %3374 = vmatmul.mubr.f32.gmra.mxu0 %v2594
        %v3375 = vpop.f32.mrf.mxu0
        %v3376 = vadd.f32 0.0, %v3375
        %v3377 = vpop.f32.mrf.mxu0
        %v3378 = vadd.f32 0.0, %v3377
        %3379 = vmatprep.mubr.f32.mxu0 0.0
        %3380 = vmatmul.mubr.f32.gmra.mxu0 %v2595
        %v3381 = vpop.f32.mrf.mxu0
        %v3382 = vadd.f32 0.0, %v3381
        %v3383 = vpop.f32.mrf.mxu0
        %v3384 = vadd.f32 0.0, %v3383
        %3385 = vmatprep.mubr.f32.mxu0 0.0
        %3386 = vmatmul.mubr.f32.gmra.mxu0 %v2596
        %v3387 = vpop.f32.mrf.mxu0
        %v3388 = vadd.f32 0.0, %v3387
        %v3389 = vpop.f32.mrf.mxu0
        %v3390 = vadd.f32 0.0, %v3389
        %3391 = vmatprep.mubr.f32.mxu0 0.0
        %3392 = vmatmul.mubr.f32.gmra.mxu0 %v2597
        %v3393 = vpop.f32.mrf.mxu0
        %v3394 = vadd.f32 0.0, %v3393
        %v3395 = vpop.f32.mrf.mxu0
        %v3396 = vadd.f32 0.0, %v3395
        %3397 = vmatprep.mubr.f32.mxu0 0.0
        %3398 = vmatmul.mubr.f32.gmra.mxu0 %v2598
        %v3399 = vpop.f32.mrf.mxu0
        %v3400 = vadd.f32 0.0, %v3399
        %v3401 = vpop.f32.mrf.mxu0
        %v3402 = vadd.f32 0.0, %v3401
        %3403 = vdwg.mxu0
        %3404 = vmatprep.subr.mxu0 %v1516
        %3405 = vmatpush1.msra.mxu0 %v1515
        %3406 = vmatprep.subr.mxu0 %v1508
        %3407 = vmatpush1.msra.mxu0 %v1507
        %3408 = vmatprep.subr.mxu0 %v1500
        %3409 = vmatpush1.msra.mxu0 %v1499
        %3410 = vmatprep.subr.mxu0 %v1492
        %3411 = vmatpush1.msra.mxu0 %v1491
        %3412 = vmatprep.subr.mxu0 %v1484
        %3413 = vmatpush1.msra.mxu0 %v1483
        %3414 = vmatprep.subr.mxu0 %v1476
        %3415 = vmatpush1.msra.mxu0 %v1475
        %3416 = vmatprep.subr.mxu0 %v1468
        %3417 = vmatpush1.msra.mxu0 %v1467
        %3418 = vmatprep.subr.mxu0 %v1460
        %3419 = vmatpush1.msra.mxu0 %v1459
        %3420 = vmatprep.subr.mxu0 %v1452
        %3421 = vmatpush1.msra.mxu0 %v1451
        %3422 = vmatprep.subr.mxu0 %v1444
        %3423 = vmatpush1.msra.mxu0 %v1443
        %3424 = vmatprep.subr.mxu0 %v1436
        %3425 = vmatpush1.msra.mxu0 %v1435
        %3426 = vmatprep.subr.mxu0 %v1428
        %3427 = vmatpush1.msra.mxu0 %v1427
        %3428 = vmatprep.subr.mxu0 %v1420
        %3429 = vmatpush1.msra.mxu0 %v1419
        %3430 = vmatprep.subr.mxu0 %v1412
        %3431 = vmatpush1.msra.mxu0 %v1411
        %3432 = vmatprep.subr.mxu0 %v1404
        %3433 = vmatpush1.msra.mxu0 %v1403
        %3434 = vmatprep.subr.mxu0 %v1396
        %3435 = vmatpush1.msra.mxu0 %v1395
        %3436 = vmatprep.subr.mxu0 0.0
        %3437 = vmatpush2.msra.mxu0 0.0
        %3438 = vmatprep.subr.mxu0 0.0
        %3439 = vmatpush2.msra.mxu0 0.0
        %3440 = vmatprep.subr.mxu0 0.0
        %3441 = vmatpush2.msra.mxu0 0.0
        %3442 = vmatprep.subr.mxu0 0.0
        %3443 = vmatpush2.msra.mxu0 0.0
        %3444 = vmatprep.subr.mxu0 0.0
        %3445 = vmatpush2.msra.mxu0 0.0
        %3446 = vmatprep.subr.mxu0 0.0
        %3447 = vmatpush2.msra.mxu0 0.0
        %3448 = vmatprep.subr.mxu0 0.0
        %3449 = vmatpush2.msra.mxu0 0.0
        %3450 = vmatprep.subr.mxu0 0.0
        %3451 = vmatpush2.msra.mxu0 0.0
        %3452 = vmatprep.subr.mxu0 0.0
        %3453 = vmatpush2.msra.mxu0 0.0
        %3454 = vmatprep.subr.mxu0 0.0
        %3455 = vmatpush2.msra.mxu0 0.0
        %3456 = vmatprep.subr.mxu0 0.0
        %3457 = vmatpush2.msra.mxu0 0.0
        %3458 = vmatprep.subr.mxu0 0.0
        %3459 = vmatpush2.msra.mxu0 0.0
        %3460 = vmatprep.subr.mxu0 0.0
        %3461 = vmatpush2.msra.mxu0 0.0
        %3462 = vmatprep.subr.mxu0 0.0
        %3463 = vmatpush2.msra.mxu0 0.0
        %3464 = vmatprep.subr.mxu0 0.0
        %3465 = vmatpush2.msra.mxu0 0.0
        %3466 = vmatprep.subr.mxu0 0.0
        %3467 = vmatpush2.msra.mxu0 0.0
        %3468 = vmatprep.mubr.f32.mxu0 0.0
        %3469 = vmatmul.mubr.f32.gmra.mxu0 %v2583
        %v3470 = vpop.f32.mrf.mxu0
        %v3471 = vadd.f32 0.0, %v3470
        %v3472 = vpop.f32.mrf.mxu0
        %v3473 = vadd.f32 0.0, %v3472
        %3474 = vmatprep.mubr.f32.mxu0 0.0
        %3475 = vmatmul.mubr.f32.gmra.mxu0 %v2584
        %v3476 = vpop.f32.mrf.mxu0
        %v3477 = vadd.f32 0.0, %v3476
        %v3478 = vpop.f32.mrf.mxu0
        %v3479 = vadd.f32 0.0, %v3478
        %3480 = vmatprep.mubr.f32.mxu0 0.0
        %3481 = vmatmul.mubr.f32.gmra.mxu0 %v2585
        %v3482 = vpop.f32.mrf.mxu0
        %v3483 = vadd.f32 0.0, %v3482
        %v3484 = vpop.f32.mrf.mxu0
        %v3485 = vadd.f32 0.0, %v3484
        %3486 = vmatprep.mubr.f32.mxu0 0.0
        %3487 = vmatmul.mubr.f32.gmra.mxu0 %v2586
        %v3488 = vpop.f32.mrf.mxu0
        %v3489 = vadd.f32 0.0, %v3488
        %v3490 = vpop.f32.mrf.mxu0
        %v3491 = vadd.f32 0.0, %v3490
        %3492 = vmatprep.mubr.f32.mxu0 0.0
        %3493 = vmatmul.mubr.f32.gmra.mxu0 %v2587
        %v3494 = vpop.f32.mrf.mxu0
        %v3495 = vadd.f32 0.0, %v3494
        %v3496 = vpop.f32.mrf.mxu0
        %v3497 = vadd.f32 0.0, %v3496
        %3498 = vmatprep.mubr.f32.mxu0 0.0
        %3499 = vmatmul.mubr.f32.gmra.mxu0 %v2588
        %v3500 = vpop.f32.mrf.mxu0
        %v3501 = vadd.f32 0.0, %v3500
        %v3502 = vpop.f32.mrf.mxu0
        %v3503 = vadd.f32 0.0, %v3502
        %3504 = vmatprep.mubr.f32.mxu0 0.0
        %3505 = vmatmul.mubr.f32.gmra.mxu0 %v2589
        %v3506 = vpop.f32.mrf.mxu0
        %v3507 = vadd.f32 0.0, %v3506
        %v3508 = vpop.f32.mrf.mxu0
        %v3509 = vadd.f32 0.0, %v3508
        %3510 = vmatprep.mubr.f32.mxu0 0.0
        %3511 = vmatmul.mubr.f32.gmra.mxu0 %v2590
        %v3512 = vpop.f32.mrf.mxu0
        %v3513 = vadd.f32 0.0, %v3512
        %v3514 = vpop.f32.mrf.mxu0
        %v3515 = vadd.f32 0.0, %v3514
        %3516 = vmatprep.mubr.f32.mxu0 0.0
        %3517 = vmatmul.mubr.f32.gmra.mxu0 %v2591
        %v3518 = vpop.f32.mrf.mxu0
        %v3519 = vadd.f32 0.0, %v3518
        %v3520 = vpop.f32.mrf.mxu0
        %v3521 = vadd.f32 0.0, %v3520
        %3522 = vmatprep.mubr.f32.mxu0 0.0
        %3523 = vmatmul.mubr.f32.gmra.mxu0 %v2592
        %v3524 = vpop.f32.mrf.mxu0
        %v3525 = vadd.f32 0.0, %v3524
        %v3526 = vpop.f32.mrf.mxu0
        %v3527 = vadd.f32 0.0, %v3526
        %3528 = vmatprep.mubr.f32.mxu0 0.0
        %3529 = vmatmul.mubr.f32.gmra.mxu0 %v2593
        %v3530 = vpop.f32.mrf.mxu0
        %v3531 = vadd.f32 0.0, %v3530
        %v3532 = vpop.f32.mrf.mxu0
        %v3533 = vadd.f32 0.0, %v3532
        %3534 = vmatprep.mubr.f32.mxu0 0.0
        %3535 = vmatmul.mubr.f32.gmra.mxu0 %v2594
        %v3536 = vpop.f32.mrf.mxu0
        %v3537 = vadd.f32 0.0, %v3536
        %v3538 = vpop.f32.mrf.mxu0
        %v3539 = vadd.f32 0.0, %v3538
        %3540 = vmatprep.mubr.f32.mxu0 0.0
        %3541 = vmatmul.mubr.f32.gmra.mxu0 %v2595
        %v3542 = vpop.f32.mrf.mxu0
        %v3543 = vadd.f32 0.0, %v3542
        %v3544 = vpop.f32.mrf.mxu0
        %v3545 = vadd.f32 0.0, %v3544
        %3546 = vmatprep.mubr.f32.mxu0 0.0
        %3547 = vmatmul.mubr.f32.gmra.mxu0 %v2596
        %v3548 = vpop.f32.mrf.mxu0
        %v3549 = vadd.f32 0.0, %v3548
        %v3550 = vpop.f32.mrf.mxu0
        %v3551 = vadd.f32 0.0, %v3550
        %3552 = vmatprep.mubr.f32.mxu0 0.0
        %3553 = vmatmul.mubr.f32.gmra.mxu0 %v2597
        %v3554 = vpop.f32.mrf.mxu0
        %v3555 = vadd.f32 0.0, %v3554
        %v3556 = vpop.f32.mrf.mxu0
        %v3557 = vadd.f32 0.0, %v3556
        %3558 = vmatprep.mubr.f32.mxu0 0.0
        %3559 = vmatmul.mubr.f32.gmra.mxu0 %v2598
        %v3560 = vpop.f32.mrf.mxu0
        %v3561 = vadd.f32 0.0, %v3560
        %v3562 = vpop.f32.mrf.mxu0
        %v3563 = vadd.f32 0.0, %v3562
        %3564 = vdwg.mxu0
        %3565 = vmatprep.subr.mxu0 %v1518
        %3566 = vmatpush1.msra.mxu0 %v1517
        %3567 = vmatprep.subr.mxu0 %v1510
        %3568 = vmatpush1.msra.mxu0 %v1509
        %3569 = vmatprep.subr.mxu0 %v1502
        %3570 = vmatpush1.msra.mxu0 %v1501
        %3571 = vmatprep.subr.mxu0 %v1494
        %3572 = vmatpush1.msra.mxu0 %v1493
        %3573 = vmatprep.subr.mxu0 %v1486
        %3574 = vmatpush1.msra.mxu0 %v1485
        %3575 = vmatprep.subr.mxu0 %v1478
        %3576 = vmatpush1.msra.mxu0 %v1477
        %3577 = vmatprep.subr.mxu0 %v1470
        %3578 = vmatpush1.msra.mxu0 %v1469
        %3579 = vmatprep.subr.mxu0 %v1462
        %3580 = vmatpush1.msra.mxu0 %v1461
        %3581 = vmatprep.subr.mxu0 %v1454
        %3582 = vmatpush1.msra.mxu0 %v1453
        %3583 = vmatprep.subr.mxu0 %v1446
        %3584 = vmatpush1.msra.mxu0 %v1445
        %3585 = vmatprep.subr.mxu0 %v1438
        %3586 = vmatpush1.msra.mxu0 %v1437
        %3587 = vmatprep.subr.mxu0 %v1430
        %3588 = vmatpush1.msra.mxu0 %v1429
        %3589 = vmatprep.subr.mxu0 %v1422
        %3590 = vmatpush1.msra.mxu0 %v1421
        %3591 = vmatprep.subr.mxu0 %v1414
        %3592 = vmatpush1.msra.mxu0 %v1413
        %3593 = vmatprep.subr.mxu0 %v1406
        %3594 = vmatpush1.msra.mxu0 %v1405
        %3595 = vmatprep.subr.mxu0 %v1398
        %3596 = vmatpush1.msra.mxu0 %v1397
        %3597 = vmatprep.subr.mxu0 0.0
        %3598 = vmatpush2.msra.mxu0 0.0
        %3599 = vmatprep.subr.mxu0 0.0
        %3600 = vmatpush2.msra.mxu0 0.0
        %3601 = vmatprep.subr.mxu0 0.0
        %3602 = vmatpush2.msra.mxu0 0.0
        %3603 = vmatprep.subr.mxu0 0.0
        %3604 = vmatpush2.msra.mxu0 0.0
        %3605 = vmatprep.subr.mxu0 0.0
        %3606 = vmatpush2.msra.mxu0 0.0
        %3607 = vmatprep.subr.mxu0 0.0
        %3608 = vmatpush2.msra.mxu0 0.0
        %3609 = vmatprep.subr.mxu0 0.0
        %3610 = vmatpush2.msra.mxu0 0.0
        %3611 = vmatprep.subr.mxu0 0.0
        %3612 = vmatpush2.msra.mxu0 0.0
        %3613 = vmatprep.subr.mxu0 0.0
        %3614 = vmatpush2.msra.mxu0 0.0
        %3615 = vmatprep.subr.mxu0 0.0
        %3616 = vmatpush2.msra.mxu0 0.0
        %3617 = vmatprep.subr.mxu0 0.0
        %3618 = vmatpush2.msra.mxu0 0.0
        %3619 = vmatprep.subr.mxu0 0.0
        %3620 = vmatpush2.msra.mxu0 0.0
        %3621 = vmatprep.subr.mxu0 0.0
        %3622 = vmatpush2.msra.mxu0 0.0
        %3623 = vmatprep.subr.mxu0 0.0
        %3624 = vmatpush2.msra.mxu0 0.0
        %3625 = vmatprep.subr.mxu0 0.0
        %3626 = vmatpush2.msra.mxu0 0.0
        %3627 = vmatprep.subr.mxu0 0.0
        %3628 = vmatpush2.msra.mxu0 0.0
        %3629 = vmatprep.mubr.f32.mxu0 0.0
        %3630 = vmatmul.mubr.f32.gmra.mxu0 %v2583
        %v3631 = vpop.f32.mrf.mxu0
        %v3632 = vadd.f32 0.0, %v3631
        %v3633 = vpop.f32.mrf.mxu0
        %v3634 = vadd.f32 0.0, %v3633
        %3635 = vmatprep.mubr.f32.mxu0 0.0
        %3636 = vmatmul.mubr.f32.gmra.mxu0 %v2584
        %v3637 = vpop.f32.mrf.mxu0
        %v3638 = vadd.f32 0.0, %v3637
        %v3639 = vpop.f32.mrf.mxu0
        %v3640 = vadd.f32 0.0, %v3639
        %3641 = vmatprep.mubr.f32.mxu0 0.0
        %3642 = vmatmul.mubr.f32.gmra.mxu0 %v2585
        %v3643 = vpop.f32.mrf.mxu0
        %v3644 = vadd.f32 0.0, %v3643
        %v3645 = vpop.f32.mrf.mxu0
        %v3646 = vadd.f32 0.0, %v3645
        %3647 = vmatprep.mubr.f32.mxu0 0.0
        %3648 = vmatmul.mubr.f32.gmra.mxu0 %v2586
        %v3649 = vpop.f32.mrf.mxu0
        %v3650 = vadd.f32 0.0, %v3649
        %v3651 = vpop.f32.mrf.mxu0
        %v3652 = vadd.f32 0.0, %v3651
        %3653 = vmatprep.mubr.f32.mxu0 0.0
        %3654 = vmatmul.mubr.f32.gmra.mxu0 %v2587
        %v3655 = vpop.f32.mrf.mxu0
        %v3656 = vadd.f32 0.0, %v3655
        %v3657 = vpop.f32.mrf.mxu0
        %v3658 = vadd.f32 0.0, %v3657
        %3659 = vmatprep.mubr.f32.mxu0 0.0
        %3660 = vmatmul.mubr.f32.gmra.mxu0 %v2588
        %v3661 = vpop.f32.mrf.mxu0
        %v3662 = vadd.f32 0.0, %v3661
        %v3663 = vpop.f32.mrf.mxu0
        %v3664 = vadd.f32 0.0, %v3663
        %3665 = vmatprep.mubr.f32.mxu0 0.0
        %3666 = vmatmul.mubr.f32.gmra.mxu0 %v2589
        %v3667 = vpop.f32.mrf.mxu0
        %v3668 = vadd.f32 0.0, %v3667
        %v3669 = vpop.f32.mrf.mxu0
        %v3670 = vadd.f32 0.0, %v3669
        %3671 = vmatprep.mubr.f32.mxu0 0.0
        %3672 = vmatmul.mubr.f32.gmra.mxu0 %v2590
        %v3673 = vpop.f32.mrf.mxu0
        %v3674 = vadd.f32 0.0, %v3673
        %v3675 = vpop.f32.mrf.mxu0
        %v3676 = vadd.f32 0.0, %v3675
        %3677 = vmatprep.mubr.f32.mxu0 0.0
        %3678 = vmatmul.mubr.f32.gmra.mxu0 %v2591
        %v3679 = vpop.f32.mrf.mxu0
        %v3680 = vadd.f32 0.0, %v3679
        %v3681 = vpop.f32.mrf.mxu0
        %v3682 = vadd.f32 0.0, %v3681
        %3683 = vmatprep.mubr.f32.mxu0 0.0
        %3684 = vmatmul.mubr.f32.gmra.mxu0 %v2592
        %v3685 = vpop.f32.mrf.mxu0
        %v3686 = vadd.f32 0.0, %v3685
        %v3687 = vpop.f32.mrf.mxu0
        %v3688 = vadd.f32 0.0, %v3687
        %3689 = vmatprep.mubr.f32.mxu0 0.0
        %3690 = vmatmul.mubr.f32.gmra.mxu0 %v2593
        %v3691 = vpop.f32.mrf.mxu0
        %v3692 = vadd.f32 0.0, %v3691
        %v3693 = vpop.f32.mrf.mxu0
        %v3694 = vadd.f32 0.0, %v3693
        %3695 = vmatprep.mubr.f32.mxu0 0.0
        %3696 = vmatmul.mubr.f32.gmra.mxu0 %v2594
        %v3697 = vpop.f32.mrf.mxu0
        %v3698 = vadd.f32 0.0, %v3697
        %v3699 = vpop.f32.mrf.mxu0
        %v3700 = vadd.f32 0.0, %v3699
        %3701 = vmatprep.mubr.f32.mxu0 0.0
        %3702 = vmatmul.mubr.f32.gmra.mxu0 %v2595
        %v3703 = vpop.f32.mrf.mxu0
        %v3704 = vadd.f32 0.0, %v3703
        %v3705 = vpop.f32.mrf.mxu0
        %v3706 = vadd.f32 0.0, %v3705
        %3707 = vmatprep.mubr.f32.mxu0 0.0
        %3708 = vmatmul.mubr.f32.gmra.mxu0 %v2596
        %v3709 = vpop.f32.mrf.mxu0
        %v3710 = vadd.f32 0.0, %v3709
        %v3711 = vpop.f32.mrf.mxu0
        %v3712 = vadd.f32 0.0, %v3711
        %3713 = vmatprep.mubr.f32.mxu0 0.0
        %3714 = vmatmul.mubr.f32.gmra.mxu0 %v2597
        %v3715 = vpop.f32.mrf.mxu0
        %v3716 = vadd.f32 0.0, %v3715
        %v3717 = vpop.f32.mrf.mxu0
        %v3718 = vadd.f32 0.0, %v3717
        %3719 = vmatprep.mubr.f32.mxu0 0.0
        %3720 = vmatmul.mubr.f32.gmra.mxu0 %v2598
        %v3721 = vpop.f32.mrf.mxu0
        %v3722 = vadd.f32 0.0, %v3721
        %v3723 = vpop.f32.mrf.mxu0
        %v3724 = vadd.f32 0.0, %v3723
        %3725 = vdwg.mxu0
        %3726 = vmatprep.subr.mxu0 %v1520
        %3727 = vmatpush1.msra.mxu0 %v1519
        %3728 = vmatprep.subr.mxu0 %v1512
        %3729 = vmatpush1.msra.mxu0 %v1511
        %3730 = vmatprep.subr.mxu0 %v1504
        %3731 = vmatpush1.msra.mxu0 %v1503
        %3732 = vmatprep.subr.mxu0 %v1496
        %3733 = vmatpush1.msra.mxu0 %v1495
        %3734 = vmatprep.subr.mxu0 %v1488
        %3735 = vmatpush1.msra.mxu0 %v1487
        %3736 = vmatprep.subr.mxu0 %v1480
        %3737 = vmatpush1.msra.mxu0 %v1479
        %3738 = vmatprep.subr.mxu0 %v1472
        %3739 = vmatpush1.msra.mxu0 %v1471
        %3740 = vmatprep.subr.mxu0 %v1464
        %3741 = vmatpush1.msra.mxu0 %v1463
        %3742 = vmatprep.subr.mxu0 %v1456
        %3743 = vmatpush1.msra.mxu0 %v1455
        %3744 = vmatprep.subr.mxu0 %v1448
        %3745 = vmatpush1.msra.mxu0 %v1447
        %3746 = vmatprep.subr.mxu0 %v1440
        %3747 = vmatpush1.msra.mxu0 %v1439
        %3748 = vmatprep.subr.mxu0 %v1432
        %3749 = vmatpush1.msra.mxu0 %v1431
        %3750 = vmatprep.subr.mxu0 %v1424
        %3751 = vmatpush1.msra.mxu0 %v1423
        %3752 = vmatprep.subr.mxu0 %v1416
        %3753 = vmatpush1.msra.mxu0 %v1415
        %3754 = vmatprep.subr.mxu0 %v1408
        %3755 = vmatpush1.msra.mxu0 %v1407
        %3756 = vmatprep.subr.mxu0 %v1400
        %3757 = vmatpush1.msra.mxu0 %v1399
        %3758 = vmatprep.subr.mxu0 0.0
        %3759 = vmatpush2.msra.mxu0 0.0
        %3760 = vmatprep.subr.mxu0 0.0
        %3761 = vmatpush2.msra.mxu0 0.0
        %3762 = vmatprep.subr.mxu0 0.0
        %3763 = vmatpush2.msra.mxu0 0.0
        %3764 = vmatprep.subr.mxu0 0.0
        %3765 = vmatpush2.msra.mxu0 0.0
        %3766 = vmatprep.subr.mxu0 0.0
        %3767 = vmatpush2.msra.mxu0 0.0
        %3768 = vmatprep.subr.mxu0 0.0
        %3769 = vmatpush2.msra.mxu0 0.0
        %3770 = vmatprep.subr.mxu0 0.0
        %3771 = vmatpush2.msra.mxu0 0.0
        %3772 = vmatprep.subr.mxu0 0.0
        %3773 = vmatpush2.msra.mxu0 0.0
        %3774 = vmatprep.subr.mxu0 0.0
        %3775 = vmatpush2.msra.mxu0 0.0
        %3776 = vmatprep.subr.mxu0 0.0
        %3777 = vmatpush2.msra.mxu0 0.0
        %3778 = vmatprep.subr.mxu0 0.0
        %3779 = vmatpush2.msra.mxu0 0.0
        %3780 = vmatprep.subr.mxu0 0.0
        %3781 = vmatpush2.msra.mxu0 0.0
        %3782 = vmatprep.subr.mxu0 0.0
        %3783 = vmatpush2.msra.mxu0 0.0
        %3784 = vmatprep.subr.mxu0 0.0
        %3785 = vmatpush2.msra.mxu0 0.0
        %3786 = vmatprep.subr.mxu0 0.0
        %3787 = vmatpush2.msra.mxu0 0.0
        %3788 = vmatprep.subr.mxu0 0.0
        %3789 = vmatpush2.msra.mxu0 0.0
        %3790 = vmatprep.mubr.f32.mxu0 0.0
        %3791 = vmatmul.mubr.f32.gmra.mxu0 %v2583
        %v3792 = vpop.f32.mrf.mxu0
        %v3793 = vadd.f32 0.0, %v3792
        %v3794 = vpop.f32.mrf.mxu0
        %v3795 = vadd.f32 0.0, %v3794
        %3796 = vmatprep.mubr.f32.mxu0 0.0
        %3797 = vmatmul.mubr.f32.gmra.mxu0 %v2584
        %v3798 = vpop.f32.mrf.mxu0
        %v3799 = vadd.f32 0.0, %v3798
        %v3800 = vpop.f32.mrf.mxu0
        %v3801 = vadd.f32 0.0, %v3800
        %3802 = vmatprep.mubr.f32.mxu0 0.0
        %3803 = vmatmul.mubr.f32.gmra.mxu0 %v2585
        %v3804 = vpop.f32.mrf.mxu0
        %v3805 = vadd.f32 0.0, %v3804
        %v3806 = vpop.f32.mrf.mxu0
        %v3807 = vadd.f32 0.0, %v3806
        %3808 = vmatprep.mubr.f32.mxu0 0.0
        %3809 = vmatmul.mubr.f32.gmra.mxu0 %v2586
        %v3810 = vpop.f32.mrf.mxu0
        %v3811 = vadd.f32 0.0, %v3810
        %v3812 = vpop.f32.mrf.mxu0
        %v3813 = vadd.f32 0.0, %v3812
        %3814 = vmatprep.mubr.f32.mxu0 0.0
        %3815 = vmatmul.mubr.f32.gmra.mxu0 %v2587
        %v3816 = vpop.f32.mrf.mxu0
        %v3817 = vadd.f32 0.0, %v3816
        %v3818 = vpop.f32.mrf.mxu0
        %v3819 = vadd.f32 0.0, %v3818
        %3820 = vmatprep.mubr.f32.mxu0 0.0
        %3821 = vmatmul.mubr.f32.gmra.mxu0 %v2588
        %v3822 = vpop.f32.mrf.mxu0
        %v3823 = vadd.f32 0.0, %v3822
        %v3824 = vpop.f32.mrf.mxu0
        %v3825 = vadd.f32 0.0, %v3824
        %3826 = vmatprep.mubr.f32.mxu0 0.0
        %3827 = vmatmul.mubr.f32.gmra.mxu0 %v2589
        %v3828 = vpop.f32.mrf.mxu0
        %v3829 = vadd.f32 0.0, %v3828
        %v3830 = vpop.f32.mrf.mxu0
        %v3831 = vadd.f32 0.0, %v3830
        %3832 = vmatprep.mubr.f32.mxu0 0.0
        %3833 = vmatmul.mubr.f32.gmra.mxu0 %v2590
        %v3834 = vpop.f32.mrf.mxu0
        %v3835 = vadd.f32 0.0, %v3834
        %v3836 = vpop.f32.mrf.mxu0
        %v3837 = vadd.f32 0.0, %v3836
        %3838 = vmatprep.mubr.f32.mxu0 0.0
        %3839 = vmatmul.mubr.f32.gmra.mxu0 %v2591
        %v3840 = vpop.f32.mrf.mxu0
        %v3841 = vadd.f32 0.0, %v3840
        %v3842 = vpop.f32.mrf.mxu0
        %v3843 = vadd.f32 0.0, %v3842
        %3844 = vmatprep.mubr.f32.mxu0 0.0
        %3845 = vmatmul.mubr.f32.gmra.mxu0 %v2592
        %v3846 = vpop.f32.mrf.mxu0
        %v3847 = vadd.f32 0.0, %v3846
        %v3848 = vpop.f32.mrf.mxu0
        %v3849 = vadd.f32 0.0, %v3848
        %3850 = vmatprep.mubr.f32.mxu0 0.0
        %3851 = vmatmul.mubr.f32.gmra.mxu0 %v2593
        %v3852 = vpop.f32.mrf.mxu0
        %v3853 = vadd.f32 0.0, %v3852
        %v3854 = vpop.f32.mrf.mxu0
        %v3855 = vadd.f32 0.0, %v3854
        %3856 = vmatprep.mubr.f32.mxu0 0.0
        %3857 = vmatmul.mubr.f32.gmra.mxu0 %v2594
        %v3858 = vpop.f32.mrf.mxu0
        %v3859 = vadd.f32 0.0, %v3858
        %v3860 = vpop.f32.mrf.mxu0
        %v3861 = vadd.f32 0.0, %v3860
        %3862 = vmatprep.mubr.f32.mxu0 0.0
        %3863 = vmatmul.mubr.f32.gmra.mxu0 %v2595
        %v3864 = vpop.f32.mrf.mxu0
        %v3865 = vadd.f32 0.0, %v3864
        %v3866 = vpop.f32.mrf.mxu0
        %v3867 = vadd.f32 0.0, %v3866
        %3868 = vmatprep.mubr.f32.mxu0 0.0
        %3869 = vmatmul.mubr.f32.gmra.mxu0 %v2596
        %v3870 = vpop.f32.mrf.mxu0
        %v3871 = vadd.f32 0.0, %v3870
        %v3872 = vpop.f32.mrf.mxu0
        %v3873 = vadd.f32 0.0, %v3872
        %3874 = vmatprep.mubr.f32.mxu0 0.0
        %3875 = vmatmul.mubr.f32.gmra.mxu0 %v2597
        %v3876 = vpop.f32.mrf.mxu0
        %v3877 = vadd.f32 0.0, %v3876
        %v3878 = vpop.f32.mrf.mxu0
        %v3879 = vadd.f32 0.0, %v3878
        %3880 = vmatprep.mubr.f32.mxu0 0.0
        %3881 = vmatmul.mubr.f32.gmra.mxu0 %v2598
        %v3882 = vpop.f32.mrf.mxu0
        %v3883 = vadd.f32 0.0, %v3882
        %v3884 = vpop.f32.mrf.mxu0
        %v3885 = vadd.f32 0.0, %v3884
        %3886 = vdwg.mxu0
        %v3887 = vmul.f32 %v2666, %v3310
        %v3888 = vmul.f32 %v2668, %v3312
        %v3889 = vmul.f32 %v2827, %v3471
        %v3890 = vmul.f32 %v2829, %v3473
        %v3891 = vmul.f32 %v2988, %v3632
        %v3892 = vmul.f32 %v2990, %v3634
        %v3893 = vmul.f32 %v3149, %v3793
        %v3894 = vmul.f32 %v3151, %v3795
        %v3895 = vmul.f32 %v2672, %v3316
        %v3896 = vmul.f32 %v2674, %v3318
        %v3897 = vmul.f32 %v2833, %v3477
        %v3898 = vmul.f32 %v2835, %v3479
        %v3899 = vmul.f32 %v2994, %v3638
        %v3900 = vmul.f32 %v2996, %v3640
        %v3901 = vmul.f32 %v3155, %v3799
        %v3902 = vmul.f32 %v3157, %v3801
        %v3903 = vmul.f32 %v2678, %v3322
        %v3904 = vmul.f32 %v2680, %v3324
        %v3905 = vmul.f32 %v2839, %v3483
        %v3906 = vmul.f32 %v2841, %v3485
        %v3907 = vmul.f32 %v3000, %v3644
        %v3908 = vmul.f32 %v3002, %v3646
        %v3909 = vmul.f32 %v3161, %v3805
        %v3910 = vmul.f32 %v3163, %v3807
        %v3911 = vmul.f32 %v2684, %v3328
        %v3912 = vmul.f32 %v2686, %v3330
        %v3913 = vmul.f32 %v2845, %v3489
        %v3914 = vmul.f32 %v2847, %v3491
        %v3915 = vmul.f32 %v3006, %v3650
        %v3916 = vmul.f32 %v3008, %v3652
        %v3917 = vmul.f32 %v3167, %v3811
        %v3918 = vmul.f32 %v3169, %v3813
        %v3919 = vmul.f32 %v2690, %v3334
        %v3920 = vmul.f32 %v2692, %v3336
        %v3921 = vmul.f32 %v2851, %v3495
        %v3922 = vmul.f32 %v2853, %v3497
        %v3923 = vmul.f32 %v3012, %v3656
        %v3924 = vmul.f32 %v3014, %v3658
        %v3925 = vmul.f32 %v3173, %v3817
        %v3926 = vmul.f32 %v3175, %v3819
        %v3927 = vmul.f32 %v2696, %v3340
        %v3928 = vmul.f32 %v2698, %v3342
        %v3929 = vmul.f32 %v2857, %v3501
        %v3930 = vmul.f32 %v2859, %v3503
        %v3931 = vmul.f32 %v3018, %v3662
        %v3932 = vmul.f32 %v3020, %v3664
        %v3933 = vmul.f32 %v3179, %v3823
        %v3934 = vmul.f32 %v3181, %v3825
        %v3935 = vmul.f32 %v2702, %v3346
        %v3936 = vmul.f32 %v2704, %v3348
        %v3937 = vmul.f32 %v2863, %v3507
        %v3938 = vmul.f32 %v2865, %v3509
        %v3939 = vmul.f32 %v3024, %v3668
        %v3940 = vmul.f32 %v3026, %v3670
        %v3941 = vmul.f32 %v3185, %v3829
        %v3942 = vmul.f32 %v3187, %v3831
        %v3943 = vmul.f32 %v2708, %v3352
        %v3944 = vmul.f32 %v2710, %v3354
        %v3945 = vmul.f32 %v2869, %v3513
        %v3946 = vmul.f32 %v2871, %v3515
        %v3947 = vmul.f32 %v3030, %v3674
        %v3948 = vmul.f32 %v3032, %v3676
        %v3949 = vmul.f32 %v3191, %v3835
        %v3950 = vmul.f32 %v3193, %v3837
        %v3951 = vmul.f32 %v2714, %v3358
        %v3952 = vmul.f32 %v2716, %v3360
        %v3953 = vmul.f32 %v2875, %v3519
        %v3954 = vmul.f32 %v2877, %v3521
        %v3955 = vmul.f32 %v3036, %v3680
        %v3956 = vmul.f32 %v3038, %v3682
        %v3957 = vmul.f32 %v3197, %v3841
        %v3958 = vmul.f32 %v3199, %v3843
        %v3959 = vmul.f32 %v2720, %v3364
        %v3960 = vmul.f32 %v2722, %v3366
        %v3961 = vmul.f32 %v2881, %v3525
        %v3962 = vmul.f32 %v2883, %v3527
        %v3963 = vmul.f32 %v3042, %v3686
        %v3964 = vmul.f32 %v3044, %v3688
        %v3965 = vmul.f32 %v3203, %v3847
        %v3966 = vmul.f32 %v3205, %v3849
        %v3967 = vmul.f32 %v2726, %v3370
        %v3968 = vmul.f32 %v2728, %v3372
        %v3969 = vmul.f32 %v2887, %v3531
        %v3970 = vmul.f32 %v2889, %v3533
        %v3971 = vmul.f32 %v3048, %v3692
        %v3972 = vmul.f32 %v3050, %v3694
        %v3973 = vmul.f32 %v3209, %v3853
        %v3974 = vmul.f32 %v3211, %v3855
        %v3975 = vmul.f32 %v2732, %v3376
        %v3976 = vmul.f32 %v2734, %v3378
        %v3977 = vmul.f32 %v2893, %v3537
        %v3978 = vmul.f32 %v2895, %v3539
        %v3979 = vmul.f32 %v3054, %v3698
        %v3980 = vmul.f32 %v3056, %v3700
        %v3981 = vmul.f32 %v3215, %v3859
        %v3982 = vmul.f32 %v3217, %v3861
        %v3983 = vmul.f32 %v2738, %v3382
        %v3984 = vmul.f32 %v2740, %v3384
        %v3985 = vmul.f32 %v2899, %v3543
        %v3986 = vmul.f32 %v2901, %v3545
        %v3987 = vmul.f32 %v3060, %v3704
        %v3988 = vmul.f32 %v3062, %v3706
        %v3989 = vmul.f32 %v3221, %v3865
        %v3990 = vmul.f32 %v3223, %v3867
        %v3991 = vmul.f32 %v2744, %v3388
        %v3992 = vmul.f32 %v2746, %v3390
        %v3993 = vmul.f32 %v2905, %v3549
        %v3994 = vmul.f32 %v2907, %v3551
        %v3995 = vmul.f32 %v3066, %v3710
        %v3996 = vmul.f32 %v3068, %v3712
        %v3997 = vmul.f32 %v3227, %v3871
        %v3998 = vmul.f32 %v3229, %v3873
        %v3999 = vmul.f32 %v2750, %v3394
        %v4000 = vmul.f32 %v2752, %v3396
        %v4001 = vmul.f32 %v2911, %v3555
        %v4002 = vmul.f32 %v2913, %v3557
        %v4003 = vmul.f32 %v3072, %v3716
        %v4004 = vmul.f32 %v3074, %v3718
        %v4005 = vmul.f32 %v3233, %v3877
        %v4006 = vmul.f32 %v3235, %v3879
        %v4007 = vmul.f32 %v2756, %v3400
        %v4008 = vmul.f32 %v2758, %v3402
        %v4009 = vmul.f32 %v2917, %v3561
        %v4010 = vmul.f32 %v2919, %v3563
        %v4011 = vmul.f32 %v3078, %v3722
        %v4012 = vmul.f32 %v3080, %v3724
        %v4013 = vmul.f32 %v3239, %v3883
        %v4014 = vmul.f32 %v3241, %v3885
        %v4015 = vadd.f32 %v2293, %v3887
        %v4016 = vadd.f32 %v2294, %v3888
        %v4017 = vadd.f32 %v2295, %v3889
        %v4018 = vadd.f32 %v2296, %v3890
        %v4019 = vadd.f32 %v2297, %v3891
        %v4020 = vadd.f32 %v2298, %v3892
        %v4021 = vadd.f32 %v2299, %v3893
        %v4022 = vadd.f32 %v2300, %v3894
        %v4023 = vadd.f32 %v2301, %v3895
        %v4024 = vadd.f32 %v2302, %v3896
        %v4025 = vadd.f32 %v2303, %v3897
        %v4026 = vadd.f32 %v2304, %v3898
        %v4027 = vadd.f32 %v2305, %v3899
        %v4028 = vadd.f32 %v2306, %v3900
        %v4029 = vadd.f32 %v2307, %v3901
        %v4030 = vadd.f32 %v2308, %v3902
        %v4031 = vadd.f32 %v2309, %v3903
        %v4032 = vadd.f32 %v2310, %v3904
        %v4033 = vadd.f32 %v2311, %v3905
        %v4034 = vadd.f32 %v2312, %v3906
        %v4035 = vadd.f32 %v2313, %v3907
        %v4036 = vadd.f32 %v2314, %v3908
        %v4037 = vadd.f32 %v2315, %v3909
        %v4038 = vadd.f32 %v2316, %v3910
        %v4039 = vadd.f32 %v2317, %v3911
        %v4040 = vadd.f32 %v2318, %v3912
        %v4041 = vadd.f32 %v2319, %v3913
        %v4042 = vadd.f32 %v2320, %v3914
        %v4043 = vadd.f32 %v2321, %v3915
        %v4044 = vadd.f32 %v2322, %v3916
        %v4045 = vadd.f32 %v2323, %v3917
        %v4046 = vadd.f32 %v2324, %v3918
        %v4047 = vadd.f32 %v2325, %v3919
        %v4048 = vadd.f32 %v2326, %v3920
        %v4049 = vadd.f32 %v2327, %v3921
        %v4050 = vadd.f32 %v2328, %v3922
        %v4051 = vadd.f32 %v2329, %v3923
        %v4052 = vadd.f32 %v2330, %v3924
        %v4053 = vadd.f32 %v2331, %v3925
        %v4054 = vadd.f32 %v2332, %v3926
        %v4055 = vadd.f32 %v2333, %v3927
        %v4056 = vadd.f32 %v2334, %v3928
        %v4057 = vadd.f32 %v2335, %v3929
        %v4058 = vadd.f32 %v2336, %v3930
        %v4059 = vadd.f32 %v2337, %v3931
        %v4060 = vadd.f32 %v2338, %v3932
        %v4061 = vadd.f32 %v2339, %v3933
        %v4062 = vadd.f32 %v2340, %v3934
        %v4063 = vadd.f32 %v2341, %v3935
        %v4064 = vadd.f32 %v2342, %v3936
        %v4065 = vadd.f32 %v2343, %v3937
        %v4066 = vadd.f32 %v2344, %v3938
        %v4067 = vadd.f32 %v2345, %v3939
        %v4068 = vadd.f32 %v2346, %v3940
        %v4069 = vadd.f32 %v2347, %v3941
        %v4070 = vadd.f32 %v2348, %v3942
        %v4071 = vadd.f32 %v2349, %v3943
        %v4072 = vadd.f32 %v2350, %v3944
        %v4073 = vadd.f32 %v2351, %v3945
        %v4074 = vadd.f32 %v2352, %v3946
        %v4075 = vadd.f32 %v2353, %v3947
        %v4076 = vadd.f32 %v2354, %v3948
        %v4077 = vadd.f32 %v2355, %v3949
        %v4078 = vadd.f32 %v2356, %v3950
        %v4079 = vadd.f32 %v2357, %v3951
        %v4080 = vadd.f32 %v2358, %v3952
        %v4081 = vadd.f32 %v2359, %v3953
        %v4082 = vadd.f32 %v2360, %v3954
        %v4083 = vadd.f32 %v2361, %v3955
        %v4084 = vadd.f32 %v2362, %v3956
        %v4085 = vadd.f32 %v2363, %v3957
        %v4086 = vadd.f32 %v2364, %v3958
        %v4087 = vadd.f32 %v2365, %v3959
        %v4088 = vadd.f32 %v2366, %v3960
        %v4089 = vadd.f32 %v2367, %v3961
        %v4090 = vadd.f32 %v2368, %v3962
        %v4091 = vadd.f32 %v2369, %v3963
        %v4092 = vadd.f32 %v2370, %v3964
        %v4093 = vadd.f32 %v2371, %v3965
        %v4094 = vadd.f32 %v2372, %v3966
        %v4095 = vadd.f32 %v2373, %v3967
        %v4096 = vadd.f32 %v2374, %v3968
        %v4097 = vadd.f32 %v2375, %v3969
        %v4098 = vadd.f32 %v2376, %v3970
        %v4099 = vadd.f32 %v2377, %v3971
        %v4100 = vadd.f32 %v2378, %v3972
        %v4101 = vadd.f32 %v2379, %v3973
        %v4102 = vadd.f32 %v2380, %v3974
        %v4103 = vadd.f32 %v2381, %v3975
        %v4104 = vadd.f32 %v2382, %v3976
        %v4105 = vadd.f32 %v2383, %v3977
        %v4106 = vadd.f32 %v2384, %v3978
        %v4107 = vadd.f32 %v2385, %v3979
        %v4108 = vadd.f32 %v2386, %v3980
        %v4109 = vadd.f32 %v2387, %v3981
        %v4110 = vadd.f32 %v2388, %v3982
        %v4111 = vadd.f32 %v2389, %v3983
        %v4112 = vadd.f32 %v2390, %v3984
        %v4113 = vadd.f32 %v2391, %v3985
        %v4114 = vadd.f32 %v2392, %v3986
        %v4115 = vadd.f32 %v2393, %v3987
        %v4116 = vadd.f32 %v2394, %v3988
        %v4117 = vadd.f32 %v2395, %v3989
        %v4118 = vadd.f32 %v2396, %v3990
        %v4119 = vadd.f32 %v2397, %v3991
        %v4120 = vadd.f32 %v2398, %v3992
        %v4121 = vadd.f32 %v2399, %v3993
        %v4122 = vadd.f32 %v2400, %v3994
        %v4123 = vadd.f32 %v2401, %v3995
        %v4124 = vadd.f32 %v2402, %v3996
        %v4125 = vadd.f32 %v2403, %v3997
        %v4126 = vadd.f32 %v2404, %v3998
        %v4127 = vadd.f32 %v2405, %v3999
        %v4128 = vadd.f32 %v2406, %v4000
        %v4129 = vadd.f32 %v2407, %v4001
        %v4130 = vadd.f32 %v2408, %v4002
        %v4131 = vadd.f32 %v2409, %v4003
        %v4132 = vadd.f32 %v2410, %v4004
        %v4133 = vadd.f32 %v2411, %v4005
        %v4134 = vadd.f32 %v2412, %v4006
        %v4135 = vadd.f32 %v2413, %v4007
        %v4136 = vadd.f32 %v2414, %v4008
        %v4137 = vadd.f32 %v2415, %v4009
        %v4138 = vadd.f32 %v2416, %v4010
        %v4139 = vadd.f32 %v2417, %v4011
        %v4140 = vadd.f32 %v2418, %v4012
        %v4141 = vadd.f32 %v2419, %v4013
        %v4142 = vadd.f32 %v2420, %v4014
        %s4143 = scalar_lea.vmem %s364, 256 [#allocation2]
        %v4144 = vld [vmem:[%s4143] sm:$0xff]
        %v4145 = vld [vmem:[%s4143 + $0x8] sm:$0xff]
        %v4146 = vld [vmem:[%s4143 + $0x10] sm:$0xff]
        %v4147 = vld [vmem:[%s4143 + $0x18] sm:$0xff]
        %v4148 = vld [vmem:[%s4143 + $0x20] sm:$0xff]
        %v4149 = vld [vmem:[%s4143 + $0x28] sm:$0xff]
        %v4150 = vld [vmem:[%s4143 + $0x30] sm:$0xff]
        %v4151 = vld [vmem:[%s4143 + $0x38] sm:$0xff]
        %v4152 = vld [vmem:[%s4143 + $0x40] sm:$0xff]
        %v4153 = vld [vmem:[%s4143 + $0x48] sm:$0xff]
        %v4154 = vld [vmem:[%s4143 + $0x50] sm:$0xff]
        %v4155 = vld [vmem:[%s4143 + $0x58] sm:$0xff]
        %v4156 = vld [vmem:[%s4143 + $0x60] sm:$0xff]
        %v4157 = vld [vmem:[%s4143 + $0x68] sm:$0xff]
        %v4158 = vld [vmem:[%s4143 + $0x70] sm:$0xff]
        %v4159 = vld [vmem:[%s4143 + $0x78] sm:$0xff]
        %4160 = vmatprep.subr.mxu0 0.0
        %4161 = vmatpush1.msra.mxu0 %v452
        %4162 = vmatprep.subr.mxu0 0.0
        %4163 = vmatpush1.msra.mxu0 %v451
        %4164 = vmatprep.subr.mxu0 0.0
        %4165 = vmatpush1.msra.mxu0 %v450
        %4166 = vmatprep.subr.mxu0 0.0
        %4167 = vmatpush1.msra.mxu0 %v449
        %4168 = vmatprep.subr.mxu0 0.0
        %4169 = vmatpush1.msra.mxu0 %v448
        %4170 = vmatprep.subr.mxu0 0.0
        %4171 = vmatpush1.msra.mxu0 %v447
        %4172 = vmatprep.subr.mxu0 0.0
        %4173 = vmatpush1.msra.mxu0 %v446
        %4174 = vmatprep.subr.mxu0 0.0
        %4175 = vmatpush1.msra.mxu0 %v445
        %4176 = vmatprep.subr.mxu0 0.0
        %4177 = vmatpush1.msra.mxu0 %v444
        %4178 = vmatprep.subr.mxu0 0.0
        %4179 = vmatpush1.msra.mxu0 %v443
        %4180 = vmatprep.subr.mxu0 0.0
        %4181 = vmatpush1.msra.mxu0 %v442
        %4182 = vmatprep.subr.mxu0 0.0
        %4183 = vmatpush1.msra.mxu0 %v441
        %4184 = vmatprep.subr.mxu0 0.0
        %4185 = vmatpush1.msra.mxu0 %v440
        %4186 = vmatprep.subr.mxu0 0.0
        %4187 = vmatpush1.msra.mxu0 %v439
        %4188 = vmatprep.subr.mxu0 0.0
        %4189 = vmatpush1.msra.mxu0 %v438
        %4190 = vmatprep.subr.mxu0 0.0
        %4191 = vmatpush1.msra.mxu0 %v437
        %4192 = vmatprep.subr.mxu0 0.0
        %4193 = vmatpush2.msra.mxu0 0.0
        %4194 = vmatprep.subr.mxu0 0.0
        %4195 = vmatpush2.msra.mxu0 0.0
        %4196 = vmatprep.subr.mxu0 0.0
        %4197 = vmatpush2.msra.mxu0 0.0
        %4198 = vmatprep.subr.mxu0 0.0
        %4199 = vmatpush2.msra.mxu0 0.0
        %4200 = vmatprep.subr.mxu0 0.0
        %4201 = vmatpush2.msra.mxu0 0.0
        %4202 = vmatprep.subr.mxu0 0.0
        %4203 = vmatpush2.msra.mxu0 0.0
        %4204 = vmatprep.subr.mxu0 0.0
        %4205 = vmatpush2.msra.mxu0 0.0
        %4206 = vmatprep.subr.mxu0 0.0
        %4207 = vmatpush2.msra.mxu0 0.0
        %4208 = vmatprep.subr.mxu0 0.0
        %4209 = vmatpush2.msra.mxu0 0.0
        %4210 = vmatprep.subr.mxu0 0.0
        %4211 = vmatpush2.msra.mxu0 0.0
        %4212 = vmatprep.subr.mxu0 0.0
        %4213 = vmatpush2.msra.mxu0 0.0
        %4214 = vmatprep.subr.mxu0 0.0
        %4215 = vmatpush2.msra.mxu0 0.0
        %4216 = vmatprep.subr.mxu0 0.0
        %4217 = vmatpush2.msra.mxu0 0.0
        %4218 = vmatprep.subr.mxu0 0.0
        %4219 = vmatpush2.msra.mxu0 0.0
        %4220 = vmatprep.subr.mxu0 0.0
        %4221 = vmatpush2.msra.mxu0 0.0
        %4222 = vmatprep.subr.mxu0 0.0
        %4223 = vmatpush2.msra.mxu0 0.0
        %4224 = vmatprep.mubr.f32.mxu0 0.0
        %4225 = vmatmul.mubr.f32.gmra.mxu0 %v4144
        %v4226 = vpop.f32.mrf.mxu0
        %v4227 = vadd.f32 %v458, %v4226
        %v4228 = vpop.f32.mrf.mxu0
        %4229 = vmatprep.mubr.f32.mxu0 0.0
        %4230 = vmatmul.mubr.f32.gmra.mxu0 %v4145
        %v4231 = vpop.f32.mrf.mxu0
        %v4232 = vadd.f32 %v458, %v4231
        %v4233 = vpop.f32.mrf.mxu0
        %4234 = vmatprep.mubr.f32.mxu0 0.0
        %4235 = vmatmul.mubr.f32.gmra.mxu0 %v4146
        %v4236 = vpop.f32.mrf.mxu0
        %v4237 = vadd.f32 %v458, %v4236
        %v4238 = vpop.f32.mrf.mxu0
        %4239 = vmatprep.mubr.f32.mxu0 0.0
        %4240 = vmatmul.mubr.f32.gmra.mxu0 %v4147
        %v4241 = vpop.f32.mrf.mxu0
        %v4242 = vadd.f32 %v458, %v4241
        %v4243 = vpop.f32.mrf.mxu0
        %4244 = vmatprep.mubr.f32.mxu0 0.0
        %4245 = vmatmul.mubr.f32.gmra.mxu0 %v4148
        %v4246 = vpop.f32.mrf.mxu0
        %v4247 = vadd.f32 %v458, %v4246
        %v4248 = vpop.f32.mrf.mxu0
        %4249 = vmatprep.mubr.f32.mxu0 0.0
        %4250 = vmatmul.mubr.f32.gmra.mxu0 %v4149
        %v4251 = vpop.f32.mrf.mxu0
        %v4252 = vadd.f32 %v458, %v4251
        %v4253 = vpop.f32.mrf.mxu0
        %4254 = vmatprep.mubr.f32.mxu0 0.0
        %4255 = vmatmul.mubr.f32.gmra.mxu0 %v4150
        %v4256 = vpop.f32.mrf.mxu0
        %v4257 = vadd.f32 %v458, %v4256
        %v4258 = vpop.f32.mrf.mxu0
        %4259 = vmatprep.mubr.f32.mxu0 0.0
        %4260 = vmatmul.mubr.f32.gmra.mxu0 %v4151
        %v4261 = vpop.f32.mrf.mxu0
        %v4262 = vadd.f32 %v458, %v4261
        %v4263 = vpop.f32.mrf.mxu0
        %4264 = vmatprep.mubr.f32.mxu0 0.0
        %4265 = vmatmul.mubr.f32.gmra.mxu0 %v4152
        %v4266 = vpop.f32.mrf.mxu0
        %v4267 = vadd.f32 %v458, %v4266
        %v4268 = vpop.f32.mrf.mxu0
        %4269 = vmatprep.mubr.f32.mxu0 0.0
        %4270 = vmatmul.mubr.f32.gmra.mxu0 %v4153
        %v4271 = vpop.f32.mrf.mxu0
        %v4272 = vadd.f32 %v458, %v4271
        %v4273 = vpop.f32.mrf.mxu0
        %4274 = vmatprep.mubr.f32.mxu0 0.0
        %4275 = vmatmul.mubr.f32.gmra.mxu0 %v4154
        %v4276 = vpop.f32.mrf.mxu0
        %v4277 = vadd.f32 %v458, %v4276
        %v4278 = vpop.f32.mrf.mxu0
        %4279 = vmatprep.mubr.f32.mxu0 0.0
        %4280 = vmatmul.mubr.f32.gmra.mxu0 %v4155
        %v4281 = vpop.f32.mrf.mxu0
        %v4282 = vadd.f32 %v458, %v4281
        %v4283 = vpop.f32.mrf.mxu0
        %4284 = vmatprep.mubr.f32.mxu0 0.0
        %4285 = vmatmul.mubr.f32.gmra.mxu0 %v4156
        %v4286 = vpop.f32.mrf.mxu0
        %v4287 = vadd.f32 %v458, %v4286
        %v4288 = vpop.f32.mrf.mxu0
        %4289 = vmatprep.mubr.f32.mxu0 0.0
        %4290 = vmatmul.mubr.f32.gmra.mxu0 %v4157
        %v4291 = vpop.f32.mrf.mxu0
        %v4292 = vadd.f32 %v458, %v4291
        %v4293 = vpop.f32.mrf.mxu0
        %4294 = vmatprep.mubr.f32.mxu0 0.0
        %4295 = vmatmul.mubr.f32.gmra.mxu0 %v4158
        %v4296 = vpop.f32.mrf.mxu0
        %v4297 = vadd.f32 %v458, %v4296
        %v4298 = vpop.f32.mrf.mxu0
        %4299 = vmatprep.mubr.f32.mxu0 0.0
        %4300 = vmatmul.mubr.f32.gmra.mxu0 %v4159
        %v4301 = vpop.f32.mrf.mxu0
        %v4302 = vadd.f32 %v458, %v4301
        %v4303 = vpop.f32.mrf.mxu0
        %4304 = vdwg.mxu0
        %v4305 = vtanh.pop %v4227
        %v4306 = vtanh.pop %v4232
        %v4307 = vtanh.pop %v4237
        %v4308 = vtanh.pop %v4242
        %v4309 = vtanh.pop %v4247
        %v4310 = vtanh.pop %v4252
        %v4311 = vtanh.pop %v4257
        %v4312 = vtanh.pop %v4262
        %v4313 = vtanh.pop %v4267
        %v4314 = vtanh.pop %v4272
        %v4315 = vtanh.pop %v4277
        %v4316 = vtanh.pop %v4282
        %v4317 = vtanh.pop %v4287
        %v4318 = vtanh.pop %v4292
        %v4319 = vtanh.pop %v4297
        %v4320 = vtanh.pop %v4302
        %4321 = vmatprep.subr.mxu0 %v742
        %4322 = vmatpush1.msra.mxu0 %v741
        %4323 = vmatprep.subr.mxu0 %v734
        %4324 = vmatpush1.msra.mxu0 %v733
        %4325 = vmatprep.subr.mxu0 %v726
        %4326 = vmatpush1.msra.mxu0 %v725
        %4327 = vmatprep.subr.mxu0 %v718
        %4328 = vmatpush1.msra.mxu0 %v717
        %4329 = vmatprep.subr.mxu0 %v710
        %4330 = vmatpush1.msra.mxu0 %v709
        %4331 = vmatprep.subr.mxu0 %v702
        %4332 = vmatpush1.msra.mxu0 %v701
        %4333 = vmatprep.subr.mxu0 %v694
        %4334 = vmatpush1.msra.mxu0 %v693
        %4335 = vmatprep.subr.mxu0 %v686
        %4336 = vmatpush1.msra.mxu0 %v685
        %4337 = vmatprep.subr.mxu0 %v678
        %4338 = vmatpush1.msra.mxu0 %v677
        %4339 = vmatprep.subr.mxu0 %v670
        %4340 = vmatpush1.msra.mxu0 %v669
        %4341 = vmatprep.subr.mxu0 %v662
        %4342 = vmatpush1.msra.mxu0 %v661
        %4343 = vmatprep.subr.mxu0 %v654
        %4344 = vmatpush1.msra.mxu0 %v653
        %4345 = vmatprep.subr.mxu0 %v646
        %4346 = vmatpush1.msra.mxu0 %v645
        %4347 = vmatprep.subr.mxu0 %v638
        %4348 = vmatpush1.msra.mxu0 %v637
        %4349 = vmatprep.subr.mxu0 %v630
        %4350 = vmatpush1.msra.mxu0 %v629
        %4351 = vmatprep.subr.mxu0 %v622
        %4352 = vmatpush1.msra.mxu0 %v621
        %4353 = vmatprep.subr.mxu0 0.0
        %4354 = vmatpush2.msra.mxu0 0.0
        %4355 = vmatprep.subr.mxu0 0.0
        %4356 = vmatpush2.msra.mxu0 0.0
        %4357 = vmatprep.subr.mxu0 0.0
        %4358 = vmatpush2.msra.mxu0 0.0
        %4359 = vmatprep.subr.mxu0 0.0
        %4360 = vmatpush2.msra.mxu0 0.0
        %4361 = vmatprep.subr.mxu0 0.0
        %4362 = vmatpush2.msra.mxu0 0.0
        %4363 = vmatprep.subr.mxu0 0.0
        %4364 = vmatpush2.msra.mxu0 0.0
        %4365 = vmatprep.subr.mxu0 0.0
        %4366 = vmatpush2.msra.mxu0 0.0
        %4367 = vmatprep.subr.mxu0 0.0
        %4368 = vmatpush2.msra.mxu0 0.0
        %4369 = vmatprep.subr.mxu0 0.0
        %4370 = vmatpush2.msra.mxu0 0.0
        %4371 = vmatprep.subr.mxu0 0.0
        %4372 = vmatpush2.msra.mxu0 0.0
        %4373 = vmatprep.subr.mxu0 0.0
        %4374 = vmatpush2.msra.mxu0 0.0
        %4375 = vmatprep.subr.mxu0 0.0
        %4376 = vmatpush2.msra.mxu0 0.0
        %4377 = vmatprep.subr.mxu0 0.0
        %4378 = vmatpush2.msra.mxu0 0.0
        %4379 = vmatprep.subr.mxu0 0.0
        %4380 = vmatpush2.msra.mxu0 0.0
        %4381 = vmatprep.subr.mxu0 0.0
        %4382 = vmatpush2.msra.mxu0 0.0
        %4383 = vmatprep.subr.mxu0 0.0
        %4384 = vmatpush2.msra.mxu0 0.0
        %4385 = vmatprep.mubr.f32.mxu0 0.0
        %4386 = vmatmul.mubr.f32.gmra.mxu0 %v4305
        %v4387 = vpop.f32.mrf.mxu0
        %v4388 = vadd.f32 0.0, %v4387
        %v4389 = vpop.f32.mrf.mxu0
        %v4390 = vadd.f32 0.0, %v4389
        %4391 = vmatprep.mubr.f32.mxu0 0.0
        %4392 = vmatmul.mubr.f32.gmra.mxu0 %v4306
        %v4393 = vpop.f32.mrf.mxu0
        %v4394 = vadd.f32 0.0, %v4393
        %v4395 = vpop.f32.mrf.mxu0
        %v4396 = vadd.f32 0.0, %v4395
        %4397 = vmatprep.mubr.f32.mxu0 0.0
        %4398 = vmatmul.mubr.f32.gmra.mxu0 %v4307
        %v4399 = vpop.f32.mrf.mxu0
        %v4400 = vadd.f32 0.0, %v4399
        %v4401 = vpop.f32.mrf.mxu0
        %v4402 = vadd.f32 0.0, %v4401
        %4403 = vmatprep.mubr.f32.mxu0 0.0
        %4404 = vmatmul.mubr.f32.gmra.mxu0 %v4308
        %v4405 = vpop.f32.mrf.mxu0
        %v4406 = vadd.f32 0.0, %v4405
        %v4407 = vpop.f32.mrf.mxu0
        %v4408 = vadd.f32 0.0, %v4407
        %4409 = vmatprep.mubr.f32.mxu0 0.0
        %4410 = vmatmul.mubr.f32.gmra.mxu0 %v4309
        %v4411 = vpop.f32.mrf.mxu0
        %v4412 = vadd.f32 0.0, %v4411
        %v4413 = vpop.f32.mrf.mxu0
        %v4414 = vadd.f32 0.0, %v4413
        %4415 = vmatprep.mubr.f32.mxu0 0.0
        %4416 = vmatmul.mubr.f32.gmra.mxu0 %v4310
        %v4417 = vpop.f32.mrf.mxu0
        %v4418 = vadd.f32 0.0, %v4417
        %v4419 = vpop.f32.mrf.mxu0
        %v4420 = vadd.f32 0.0, %v4419
        %4421 = vmatprep.mubr.f32.mxu0 0.0
        %4422 = vmatmul.mubr.f32.gmra.mxu0 %v4311
        %v4423 = vpop.f32.mrf.mxu0
        %v4424 = vadd.f32 0.0, %v4423
        %v4425 = vpop.f32.mrf.mxu0
        %v4426 = vadd.f32 0.0, %v4425
        %4427 = vmatprep.mubr.f32.mxu0 0.0
        %4428 = vmatmul.mubr.f32.gmra.mxu0 %v4312
        %v4429 = vpop.f32.mrf.mxu0
        %v4430 = vadd.f32 0.0, %v4429
        %v4431 = vpop.f32.mrf.mxu0
        %v4432 = vadd.f32 0.0, %v4431
        %4433 = vmatprep.mubr.f32.mxu0 0.0
        %4434 = vmatmul.mubr.f32.gmra.mxu0 %v4313
        %v4435 = vpop.f32.mrf.mxu0
        %v4436 = vadd.f32 0.0, %v4435
        %v4437 = vpop.f32.mrf.mxu0
        %v4438 = vadd.f32 0.0, %v4437
        %4439 = vmatprep.mubr.f32.mxu0 0.0
        %4440 = vmatmul.mubr.f32.gmra.mxu0 %v4314
        %v4441 = vpop.f32.mrf.mxu0
        %v4442 = vadd.f32 0.0, %v4441
        %v4443 = vpop.f32.mrf.mxu0
        %v4444 = vadd.f32 0.0, %v4443
        %4445 = vmatprep.mubr.f32.mxu0 0.0
        %4446 = vmatmul.mubr.f32.gmra.mxu0 %v4315
        %v4447 = vpop.f32.mrf.mxu0
        %v4448 = vadd.f32 0.0, %v4447
        %v4449 = vpop.f32.mrf.mxu0
        %v4450 = vadd.f32 0.0, %v4449
        %4451 = vmatprep.mubr.f32.mxu0 0.0
        %4452 = vmatmul.mubr.f32.gmra.mxu0 %v4316
        %v4453 = vpop.f32.mrf.mxu0
        %v4454 = vadd.f32 0.0, %v4453
        %v4455 = vpop.f32.mrf.mxu0
        %v4456 = vadd.f32 0.0, %v4455
        %4457 = vmatprep.mubr.f32.mxu0 0.0
        %4458 = vmatmul.mubr.f32.gmra.mxu0 %v4317
        %v4459 = vpop.f32.mrf.mxu0
        %v4460 = vadd.f32 0.0, %v4459
        %v4461 = vpop.f32.mrf.mxu0
        %v4462 = vadd.f32 0.0, %v4461
        %4463 = vmatprep.mubr.f32.mxu0 0.0
        %4464 = vmatmul.mubr.f32.gmra.mxu0 %v4318
        %v4465 = vpop.f32.mrf.mxu0
        %v4466 = vadd.f32 0.0, %v4465
        %v4467 = vpop.f32.mrf.mxu0
        %v4468 = vadd.f32 0.0, %v4467
        %4469 = vmatprep.mubr.f32.mxu0 0.0
        %4470 = vmatmul.mubr.f32.gmra.mxu0 %v4319
        %v4471 = vpop.f32.mrf.mxu0
        %v4472 = vadd.f32 0.0, %v4471
        %v4473 = vpop.f32.mrf.mxu0
        %v4474 = vadd.f32 0.0, %v4473
        %4475 = vmatprep.mubr.f32.mxu0 0.0
        %4476 = vmatmul.mubr.f32.gmra.mxu0 %v4320
        %v4477 = vpop.f32.mrf.mxu0
        %v4478 = vadd.f32 0.0, %v4477
        %v4479 = vpop.f32.mrf.mxu0
        %v4480 = vadd.f32 0.0, %v4479
        %4481 = vdwg.mxu0
        %4482 = vmatprep.subr.mxu0 %v744
        %4483 = vmatpush1.msra.mxu0 %v743
        %4484 = vmatprep.subr.mxu0 %v736
        %4485 = vmatpush1.msra.mxu0 %v735
        %4486 = vmatprep.subr.mxu0 %v728
        %4487 = vmatpush1.msra.mxu0 %v727
        %4488 = vmatprep.subr.mxu0 %v720
        %4489 = vmatpush1.msra.mxu0 %v719
        %4490 = vmatprep.subr.mxu0 %v712
        %4491 = vmatpush1.msra.mxu0 %v711
        %4492 = vmatprep.subr.mxu0 %v704
        %4493 = vmatpush1.msra.mxu0 %v703
        %4494 = vmatprep.subr.mxu0 %v696
        %4495 = vmatpush1.msra.mxu0 %v695
        %4496 = vmatprep.subr.mxu0 %v688
        %4497 = vmatpush1.msra.mxu0 %v687
        %4498 = vmatprep.subr.mxu0 %v680
        %4499 = vmatpush1.msra.mxu0 %v679
        %4500 = vmatprep.subr.mxu0 %v672
        %4501 = vmatpush1.msra.mxu0 %v671
        %4502 = vmatprep.subr.mxu0 %v664
        %4503 = vmatpush1.msra.mxu0 %v663
        %4504 = vmatprep.subr.mxu0 %v656
        %4505 = vmatpush1.msra.mxu0 %v655
        %4506 = vmatprep.subr.mxu0 %v648
        %4507 = vmatpush1.msra.mxu0 %v647
        %4508 = vmatprep.subr.mxu0 %v640
        %4509 = vmatpush1.msra.mxu0 %v639
        %4510 = vmatprep.subr.mxu0 %v632
        %4511 = vmatpush1.msra.mxu0 %v631
        %4512 = vmatprep.subr.mxu0 %v624
        %4513 = vmatpush1.msra.mxu0 %v623
        %4514 = vmatprep.subr.mxu0 0.0
        %4515 = vmatpush2.msra.mxu0 0.0
        %4516 = vmatprep.subr.mxu0 0.0
        %4517 = vmatpush2.msra.mxu0 0.0
        %4518 = vmatprep.subr.mxu0 0.0
        %4519 = vmatpush2.msra.mxu0 0.0
        %4520 = vmatprep.subr.mxu0 0.0
        %4521 = vmatpush2.msra.mxu0 0.0
        %4522 = vmatprep.subr.mxu0 0.0
        %4523 = vmatpush2.msra.mxu0 0.0
        %4524 = vmatprep.subr.mxu0 0.0
        %4525 = vmatpush2.msra.mxu0 0.0
        %4526 = vmatprep.subr.mxu0 0.0
        %4527 = vmatpush2.msra.mxu0 0.0
        %4528 = vmatprep.subr.mxu0 0.0
        %4529 = vmatpush2.msra.mxu0 0.0
        %4530 = vmatprep.subr.mxu0 0.0
        %4531 = vmatpush2.msra.mxu0 0.0
        %4532 = vmatprep.subr.mxu0 0.0
        %4533 = vmatpush2.msra.mxu0 0.0
        %4534 = vmatprep.subr.mxu0 0.0
        %4535 = vmatpush2.msra.mxu0 0.0
        %4536 = vmatprep.subr.mxu0 0.0
        %4537 = vmatpush2.msra.mxu0 0.0
        %4538 = vmatprep.subr.mxu0 0.0
        %4539 = vmatpush2.msra.mxu0 0.0
        %4540 = vmatprep.subr.mxu0 0.0
        %4541 = vmatpush2.msra.mxu0 0.0
        %4542 = vmatprep.subr.mxu0 0.0
        %4543 = vmatpush2.msra.mxu0 0.0
        %4544 = vmatprep.subr.mxu0 0.0
        %4545 = vmatpush2.msra.mxu0 0.0
        %4546 = vmatprep.mubr.f32.mxu0 0.0
        %4547 = vmatmul.mubr.f32.gmra.mxu0 %v4305
        %v4548 = vpop.f32.mrf.mxu0
        %v4549 = vadd.f32 0.0, %v4548
        %v4550 = vpop.f32.mrf.mxu0
        %v4551 = vadd.f32 0.0, %v4550
        %4552 = vmatprep.mubr.f32.mxu0 0.0
        %4553 = vmatmul.mubr.f32.gmra.mxu0 %v4306
        %v4554 = vpop.f32.mrf.mxu0
        %v4555 = vadd.f32 0.0, %v4554
        %v4556 = vpop.f32.mrf.mxu0
        %v4557 = vadd.f32 0.0, %v4556
        %4558 = vmatprep.mubr.f32.mxu0 0.0
        %4559 = vmatmul.mubr.f32.gmra.mxu0 %v4307
        %v4560 = vpop.f32.mrf.mxu0
        %v4561 = vadd.f32 0.0, %v4560
        %v4562 = vpop.f32.mrf.mxu0
        %v4563 = vadd.f32 0.0, %v4562
        %4564 = vmatprep.mubr.f32.mxu0 0.0
        %4565 = vmatmul.mubr.f32.gmra.mxu0 %v4308
        %v4566 = vpop.f32.mrf.mxu0
        %v4567 = vadd.f32 0.0, %v4566
        %v4568 = vpop.f32.mrf.mxu0
        %v4569 = vadd.f32 0.0, %v4568
        %4570 = vmatprep.mubr.f32.mxu0 0.0
        %4571 = vmatmul.mubr.f32.gmra.mxu0 %v4309
        %v4572 = vpop.f32.mrf.mxu0
        %v4573 = vadd.f32 0.0, %v4572
        %v4574 = vpop.f32.mrf.mxu0
        %v4575 = vadd.f32 0.0, %v4574
        %4576 = vmatprep.mubr.f32.mxu0 0.0
        %4577 = vmatmul.mubr.f32.gmra.mxu0 %v4310
        %v4578 = vpop.f32.mrf.mxu0
        %v4579 = vadd.f32 0.0, %v4578
        %v4580 = vpop.f32.mrf.mxu0
        %v4581 = vadd.f32 0.0, %v4580
        %4582 = vmatprep.mubr.f32.mxu0 0.0
        %4583 = vmatmul.mubr.f32.gmra.mxu0 %v4311
        %v4584 = vpop.f32.mrf.mxu0
        %v4585 = vadd.f32 0.0, %v4584
        %v4586 = vpop.f32.mrf.mxu0
        %v4587 = vadd.f32 0.0, %v4586
        %4588 = vmatprep.mubr.f32.mxu0 0.0
        %4589 = vmatmul.mubr.f32.gmra.mxu0 %v4312
        %v4590 = vpop.f32.mrf.mxu0
        %v4591 = vadd.f32 0.0, %v4590
        %v4592 = vpop.f32.mrf.mxu0
        %v4593 = vadd.f32 0.0, %v4592
        %4594 = vmatprep.mubr.f32.mxu0 0.0
        %4595 = vmatmul.mubr.f32.gmra.mxu0 %v4313
        %v4596 = vpop.f32.mrf.mxu0
        %v4597 = vadd.f32 0.0, %v4596
        %v4598 = vpop.f32.mrf.mxu0
        %v4599 = vadd.f32 0.0, %v4598
        %4600 = vmatprep.mubr.f32.mxu0 0.0
        %4601 = vmatmul.mubr.f32.gmra.mxu0 %v4314
        %v4602 = vpop.f32.mrf.mxu0
        %v4603 = vadd.f32 0.0, %v4602
        %v4604 = vpop.f32.mrf.mxu0
        %v4605 = vadd.f32 0.0, %v4604
        %4606 = vmatprep.mubr.f32.mxu0 0.0
        %4607 = vmatmul.mubr.f32.gmra.mxu0 %v4315
        %v4608 = vpop.f32.mrf.mxu0
        %v4609 = vadd.f32 0.0, %v4608
        %v4610 = vpop.f32.mrf.mxu0
        %v4611 = vadd.f32 0.0, %v4610
        %4612 = vmatprep.mubr.f32.mxu0 0.0
        %4613 = vmatmul.mubr.f32.gmra.mxu0 %v4316
        %v4614 = vpop.f32.mrf.mxu0
        %v4615 = vadd.f32 0.0, %v4614
        %v4616 = vpop.f32.mrf.mxu0
        %v4617 = vadd.f32 0.0, %v4616
        %4618 = vmatprep.mubr.f32.mxu0 0.0
        %4619 = vmatmul.mubr.f32.gmra.mxu0 %v4317
        %v4620 = vpop.f32.mrf.mxu0
        %v4621 = vadd.f32 0.0, %v4620
        %v4622 = vpop.f32.mrf.mxu0
        %v4623 = vadd.f32 0.0, %v4622
        %4624 = vmatprep.mubr.f32.mxu0 0.0
        %4625 = vmatmul.mubr.f32.gmra.mxu0 %v4318
        %v4626 = vpop.f32.mrf.mxu0
        %v4627 = vadd.f32 0.0, %v4626
        %v4628 = vpop.f32.mrf.mxu0
        %v4629 = vadd.f32 0.0, %v4628
        %4630 = vmatprep.mubr.f32.mxu0 0.0
        %4631 = vmatmul.mubr.f32.gmra.mxu0 %v4319
        %v4632 = vpop.f32.mrf.mxu0
        %v4633 = vadd.f32 0.0, %v4632
        %v4634 = vpop.f32.mrf.mxu0
        %v4635 = vadd.f32 0.0, %v4634
        %4636 = vmatprep.mubr.f32.mxu0 0.0
        %4637 = vmatmul.mubr.f32.gmra.mxu0 %v4320
        %v4638 = vpop.f32.mrf.mxu0
        %v4639 = vadd.f32 0.0, %v4638
        %v4640 = vpop.f32.mrf.mxu0
        %v4641 = vadd.f32 0.0, %v4640
        %4642 = vdwg.mxu0
        %4643 = vmatprep.subr.mxu0 %v746
        %4644 = vmatpush1.msra.mxu0 %v745
        %4645 = vmatprep.subr.mxu0 %v738
        %4646 = vmatpush1.msra.mxu0 %v737
        %4647 = vmatprep.subr.mxu0 %v730
        %4648 = vmatpush1.msra.mxu0 %v729
        %4649 = vmatprep.subr.mxu0 %v722
        %4650 = vmatpush1.msra.mxu0 %v721
        %4651 = vmatprep.subr.mxu0 %v714
        %4652 = vmatpush1.msra.mxu0 %v713
        %4653 = vmatprep.subr.mxu0 %v706
        %4654 = vmatpush1.msra.mxu0 %v705
        %4655 = vmatprep.subr.mxu0 %v698
        %4656 = vmatpush1.msra.mxu0 %v697
        %4657 = vmatprep.subr.mxu0 %v690
        %4658 = vmatpush1.msra.mxu0 %v689
        %4659 = vmatprep.subr.mxu0 %v682
        %4660 = vmatpush1.msra.mxu0 %v681
        %4661 = vmatprep.subr.mxu0 %v674
        %4662 = vmatpush1.msra.mxu0 %v673
        %4663 = vmatprep.subr.mxu0 %v666
        %4664 = vmatpush1.msra.mxu0 %v665
        %4665 = vmatprep.subr.mxu0 %v658
        %4666 = vmatpush1.msra.mxu0 %v657
        %4667 = vmatprep.subr.mxu0 %v650
        %4668 = vmatpush1.msra.mxu0 %v649
        %4669 = vmatprep.subr.mxu0 %v642
        %4670 = vmatpush1.msra.mxu0 %v641
        %4671 = vmatprep.subr.mxu0 %v634
        %4672 = vmatpush1.msra.mxu0 %v633
        %4673 = vmatprep.subr.mxu0 %v626
        %4674 = vmatpush1.msra.mxu0 %v625
        %4675 = vmatprep.subr.mxu0 0.0
        %4676 = vmatpush2.msra.mxu0 0.0
        %4677 = vmatprep.subr.mxu0 0.0
        %4678 = vmatpush2.msra.mxu0 0.0
        %4679 = vmatprep.subr.mxu0 0.0
        %4680 = vmatpush2.msra.mxu0 0.0
        %4681 = vmatprep.subr.mxu0 0.0
        %4682 = vmatpush2.msra.mxu0 0.0
        %4683 = vmatprep.subr.mxu0 0.0
        %4684 = vmatpush2.msra.mxu0 0.0
        %4685 = vmatprep.subr.mxu0 0.0
        %4686 = vmatpush2.msra.mxu0 0.0
        %4687 = vmatprep.subr.mxu0 0.0
        %4688 = vmatpush2.msra.mxu0 0.0
        %4689 = vmatprep.subr.mxu0 0.0
        %4690 = vmatpush2.msra.mxu0 0.0
        %4691 = vmatprep.subr.mxu0 0.0
        %4692 = vmatpush2.msra.mxu0 0.0
        %4693 = vmatprep.subr.mxu0 0.0
        %4694 = vmatpush2.msra.mxu0 0.0
        %4695 = vmatprep.subr.mxu0 0.0
        %4696 = vmatpush2.msra.mxu0 0.0
        %4697 = vmatprep.subr.mxu0 0.0
        %4698 = vmatpush2.msra.mxu0 0.0
        %4699 = vmatprep.subr.mxu0 0.0
        %4700 = vmatpush2.msra.mxu0 0.0
        %4701 = vmatprep.subr.mxu0 0.0
        %4702 = vmatpush2.msra.mxu0 0.0
        %4703 = vmatprep.subr.mxu0 0.0
        %4704 = vmatpush2.msra.mxu0 0.0
        %4705 = vmatprep.subr.mxu0 0.0
        %4706 = vmatpush2.msra.mxu0 0.0
        %4707 = vmatprep.mubr.f32.mxu0 0.0
        %4708 = vmatmul.mubr.f32.gmra.mxu0 %v4305
        %v4709 = vpop.f32.mrf.mxu0
        %v4710 = vadd.f32 0.0, %v4709
        %v4711 = vpop.f32.mrf.mxu0
        %v4712 = vadd.f32 0.0, %v4711
        %4713 = vmatprep.mubr.f32.mxu0 0.0
        %4714 = vmatmul.mubr.f32.gmra.mxu0 %v4306
        %v4715 = vpop.f32.mrf.mxu0
        %v4716 = vadd.f32 0.0, %v4715
        %v4717 = vpop.f32.mrf.mxu0
        %v4718 = vadd.f32 0.0, %v4717
        %4719 = vmatprep.mubr.f32.mxu0 0.0
        %4720 = vmatmul.mubr.f32.gmra.mxu0 %v4307
        %v4721 = vpop.f32.mrf.mxu0
        %v4722 = vadd.f32 0.0, %v4721
        %v4723 = vpop.f32.mrf.mxu0
        %v4724 = vadd.f32 0.0, %v4723
        %4725 = vmatprep.mubr.f32.mxu0 0.0
        %4726 = vmatmul.mubr.f32.gmra.mxu0 %v4308
        %v4727 = vpop.f32.mrf.mxu0
        %v4728 = vadd.f32 0.0, %v4727
        %v4729 = vpop.f32.mrf.mxu0
        %v4730 = vadd.f32 0.0, %v4729
        %4731 = vmatprep.mubr.f32.mxu0 0.0
        %4732 = vmatmul.mubr.f32.gmra.mxu0 %v4309
        %v4733 = vpop.f32.mrf.mxu0
        %v4734 = vadd.f32 0.0, %v4733
        %v4735 = vpop.f32.mrf.mxu0
        %v4736 = vadd.f32 0.0, %v4735
        %4737 = vmatprep.mubr.f32.mxu0 0.0
        %4738 = vmatmul.mubr.f32.gmra.mxu0 %v4310
        %v4739 = vpop.f32.mrf.mxu0
        %v4740 = vadd.f32 0.0, %v4739
        %v4741 = vpop.f32.mrf.mxu0
        %v4742 = vadd.f32 0.0, %v4741
        %4743 = vmatprep.mubr.f32.mxu0 0.0
        %4744 = vmatmul.mubr.f32.gmra.mxu0 %v4311
        %v4745 = vpop.f32.mrf.mxu0
        %v4746 = vadd.f32 0.0, %v4745
        %v4747 = vpop.f32.mrf.mxu0
        %v4748 = vadd.f32 0.0, %v4747
        %4749 = vmatprep.mubr.f32.mxu0 0.0
        %4750 = vmatmul.mubr.f32.gmra.mxu0 %v4312
        %v4751 = vpop.f32.mrf.mxu0
        %v4752 = vadd.f32 0.0, %v4751
        %v4753 = vpop.f32.mrf.mxu0
        %v4754 = vadd.f32 0.0, %v4753
        %4755 = vmatprep.mubr.f32.mxu0 0.0
        %4756 = vmatmul.mubr.f32.gmra.mxu0 %v4313
        %v4757 = vpop.f32.mrf.mxu0
        %v4758 = vadd.f32 0.0, %v4757
        %v4759 = vpop.f32.mrf.mxu0
        %v4760 = vadd.f32 0.0, %v4759
        %4761 = vmatprep.mubr.f32.mxu0 0.0
        %4762 = vmatmul.mubr.f32.gmra.mxu0 %v4314
        %v4763 = vpop.f32.mrf.mxu0
        %v4764 = vadd.f32 0.0, %v4763
        %v4765 = vpop.f32.mrf.mxu0
        %v4766 = vadd.f32 0.0, %v4765
        %4767 = vmatprep.mubr.f32.mxu0 0.0
        %4768 = vmatmul.mubr.f32.gmra.mxu0 %v4315
        %v4769 = vpop.f32.mrf.mxu0
        %v4770 = vadd.f32 0.0, %v4769
        %v4771 = vpop.f32.mrf.mxu0
        %v4772 = vadd.f32 0.0, %v4771
        %4773 = vmatprep.mubr.f32.mxu0 0.0
        %4774 = vmatmul.mubr.f32.gmra.mxu0 %v4316
        %v4775 = vpop.f32.mrf.mxu0
        %v4776 = vadd.f32 0.0, %v4775
        %v4777 = vpop.f32.mrf.mxu0
        %v4778 = vadd.f32 0.0, %v4777
        %4779 = vmatprep.mubr.f32.mxu0 0.0
        %4780 = vmatmul.mubr.f32.gmra.mxu0 %v4317
        %v4781 = vpop.f32.mrf.mxu0
        %v4782 = vadd.f32 0.0, %v4781
        %v4783 = vpop.f32.mrf.mxu0
        %v4784 = vadd.f32 0.0, %v4783
        %4785 = vmatprep.mubr.f32.mxu0 0.0
        %4786 = vmatmul.mubr.f32.gmra.mxu0 %v4318
        %v4787 = vpop.f32.mrf.mxu0
        %v4788 = vadd.f32 0.0, %v4787
        %v4789 = vpop.f32.mrf.mxu0
        %v4790 = vadd.f32 0.0, %v4789
        %4791 = vmatprep.mubr.f32.mxu0 0.0
        %4792 = vmatmul.mubr.f32.gmra.mxu0 %v4319
        %v4793 = vpop.f32.mrf.mxu0
        %v4794 = vadd.f32 0.0, %v4793
        %v4795 = vpop.f32.mrf.mxu0
        %v4796 = vadd.f32 0.0, %v4795
        %4797 = vmatprep.mubr.f32.mxu0 0.0
        %4798 = vmatmul.mubr.f32.gmra.mxu0 %v4320
        %v4799 = vpop.f32.mrf.mxu0
        %v4800 = vadd.f32 0.0, %v4799
        %v4801 = vpop.f32.mrf.mxu0
        %v4802 = vadd.f32 0.0, %v4801
        %4803 = vdwg.mxu0
        %4804 = vmatprep.subr.mxu0 %v748
        %4805 = vmatpush1.msra.mxu0 %v747
        %4806 = vmatprep.subr.mxu0 %v740
        %4807 = vmatpush1.msra.mxu0 %v739
        %4808 = vmatprep.subr.mxu0 %v732
        %4809 = vmatpush1.msra.mxu0 %v731
        %4810 = vmatprep.subr.mxu0 %v724
        %4811 = vmatpush1.msra.mxu0 %v723
        %4812 = vmatprep.subr.mxu0 %v716
        %4813 = vmatpush1.msra.mxu0 %v715
        %4814 = vmatprep.subr.mxu0 %v708
        %4815 = vmatpush1.msra.mxu0 %v707
        %4816 = vmatprep.subr.mxu0 %v700
        %4817 = vmatpush1.msra.mxu0 %v699
        %4818 = vmatprep.subr.mxu0 %v692
        %4819 = vmatpush1.msra.mxu0 %v691
        %4820 = vmatprep.subr.mxu0 %v684
        %4821 = vmatpush1.msra.mxu0 %v683
        %4822 = vmatprep.subr.mxu0 %v676
        %4823 = vmatpush1.msra.mxu0 %v675
        %4824 = vmatprep.subr.mxu0 %v668
        %4825 = vmatpush1.msra.mxu0 %v667
        %4826 = vmatprep.subr.mxu0 %v660
        %4827 = vmatpush1.msra.mxu0 %v659
        %4828 = vmatprep.subr.mxu0 %v652
        %4829 = vmatpush1.msra.mxu0 %v651
        %4830 = vmatprep.subr.mxu0 %v644
        %4831 = vmatpush1.msra.mxu0 %v643
        %4832 = vmatprep.subr.mxu0 %v636
        %4833 = vmatpush1.msra.mxu0 %v635
        %4834 = vmatprep.subr.mxu0 %v628
        %4835 = vmatpush1.msra.mxu0 %v627
        %4836 = vmatprep.subr.mxu0 0.0
        %4837 = vmatpush2.msra.mxu0 0.0
        %4838 = vmatprep.subr.mxu0 0.0
        %4839 = vmatpush2.msra.mxu0 0.0
        %4840 = vmatprep.subr.mxu0 0.0
        %4841 = vmatpush2.msra.mxu0 0.0
        %4842 = vmatprep.subr.mxu0 0.0
        %4843 = vmatpush2.msra.mxu0 0.0
        %4844 = vmatprep.subr.mxu0 0.0
        %4845 = vmatpush2.msra.mxu0 0.0
        %4846 = vmatprep.subr.mxu0 0.0
        %4847 = vmatpush2.msra.mxu0 0.0
        %4848 = vmatprep.subr.mxu0 0.0
        %4849 = vmatpush2.msra.mxu0 0.0
        %4850 = vmatprep.subr.mxu0 0.0
        %4851 = vmatpush2.msra.mxu0 0.0
        %4852 = vmatprep.subr.mxu0 0.0
        %4853 = vmatpush2.msra.mxu0 0.0
        %4854 = vmatprep.subr.mxu0 0.0
        %4855 = vmatpush2.msra.mxu0 0.0
        %4856 = vmatprep.subr.mxu0 0.0
        %4857 = vmatpush2.msra.mxu0 0.0
        %4858 = vmatprep.subr.mxu0 0.0
        %4859 = vmatpush2.msra.mxu0 0.0
        %4860 = vmatprep.subr.mxu0 0.0
        %4861 = vmatpush2.msra.mxu0 0.0
        %4862 = vmatprep.subr.mxu0 0.0
        %4863 = vmatpush2.msra.mxu0 0.0
        %4864 = vmatprep.subr.mxu0 0.0
        %4865 = vmatpush2.msra.mxu0 0.0
        %4866 = vmatprep.subr.mxu0 0.0
        %4867 = vmatpush2.msra.mxu0 0.0
        %4868 = vmatprep.mubr.f32.mxu0 0.0
        %4869 = vmatmul.mubr.f32.gmra.mxu0 %v4305
        %v4870 = vpop.f32.mrf.mxu0
        %v4871 = vadd.f32 0.0, %v4870
        %v4872 = vpop.f32.mrf.mxu0
        %v4873 = vadd.f32 0.0, %v4872
        %4874 = vmatprep.mubr.f32.mxu0 0.0
        %4875 = vmatmul.mubr.f32.gmra.mxu0 %v4306
        %v4876 = vpop.f32.mrf.mxu0
        %v4877 = vadd.f32 0.0, %v4876
        %v4878 = vpop.f32.mrf.mxu0
        %v4879 = vadd.f32 0.0, %v4878
        %4880 = vmatprep.mubr.f32.mxu0 0.0
        %4881 = vmatmul.mubr.f32.gmra.mxu0 %v4307
        %v4882 = vpop.f32.mrf.mxu0
        %v4883 = vadd.f32 0.0, %v4882
        %v4884 = vpop.f32.mrf.mxu0
        %v4885 = vadd.f32 0.0, %v4884
        %4886 = vmatprep.mubr.f32.mxu0 0.0
        %4887 = vmatmul.mubr.f32.gmra.mxu0 %v4308
        %v4888 = vpop.f32.mrf.mxu0
        %v4889 = vadd.f32 0.0, %v4888
        %v4890 = vpop.f32.mrf.mxu0
        %v4891 = vadd.f32 0.0, %v4890
        %4892 = vmatprep.mubr.f32.mxu0 0.0
        %4893 = vmatmul.mubr.f32.gmra.mxu0 %v4309
        %v4894 = vpop.f32.mrf.mxu0
        %v4895 = vadd.f32 0.0, %v4894
        %v4896 = vpop.f32.mrf.mxu0
        %v4897 = vadd.f32 0.0, %v4896
        %4898 = vmatprep.mubr.f32.mxu0 0.0
        %4899 = vmatmul.mubr.f32.gmra.mxu0 %v4310
        %v4900 = vpop.f32.mrf.mxu0
        %v4901 = vadd.f32 0.0, %v4900
        %v4902 = vpop.f32.mrf.mxu0
        %v4903 = vadd.f32 0.0, %v4902
        %4904 = vmatprep.mubr.f32.mxu0 0.0
        %4905 = vmatmul.mubr.f32.gmra.mxu0 %v4311
        %v4906 = vpop.f32.mrf.mxu0
        %v4907 = vadd.f32 0.0, %v4906
        %v4908 = vpop.f32.mrf.mxu0
        %v4909 = vadd.f32 0.0, %v4908
        %4910 = vmatprep.mubr.f32.mxu0 0.0
        %4911 = vmatmul.mubr.f32.gmra.mxu0 %v4312
        %v4912 = vpop.f32.mrf.mxu0
        %v4913 = vadd.f32 0.0, %v4912
        %v4914 = vpop.f32.mrf.mxu0
        %v4915 = vadd.f32 0.0, %v4914
        %4916 = vmatprep.mubr.f32.mxu0 0.0
        %4917 = vmatmul.mubr.f32.gmra.mxu0 %v4313
        %v4918 = vpop.f32.mrf.mxu0
        %v4919 = vadd.f32 0.0, %v4918
        %v4920 = vpop.f32.mrf.mxu0
        %v4921 = vadd.f32 0.0, %v4920
        %4922 = vmatprep.mubr.f32.mxu0 0.0
        %4923 = vmatmul.mubr.f32.gmra.mxu0 %v4314
        %v4924 = vpop.f32.mrf.mxu0
        %v4925 = vadd.f32 0.0, %v4924
        %v4926 = vpop.f32.mrf.mxu0
        %v4927 = vadd.f32 0.0, %v4926
        %4928 = vmatprep.mubr.f32.mxu0 0.0
        %4929 = vmatmul.mubr.f32.gmra.mxu0 %v4315
        %v4930 = vpop.f32.mrf.mxu0
        %v4931 = vadd.f32 0.0, %v4930
        %v4932 = vpop.f32.mrf.mxu0
        %v4933 = vadd.f32 0.0, %v4932
        %4934 = vmatprep.mubr.f32.mxu0 0.0
        %4935 = vmatmul.mubr.f32.gmra.mxu0 %v4316
        %v4936 = vpop.f32.mrf.mxu0
        %v4937 = vadd.f32 0.0, %v4936
        %v4938 = vpop.f32.mrf.mxu0
        %v4939 = vadd.f32 0.0, %v4938
        %4940 = vmatprep.mubr.f32.mxu0 0.0
        %4941 = vmatmul.mubr.f32.gmra.mxu0 %v4317
        %v4942 = vpop.f32.mrf.mxu0
        %v4943 = vadd.f32 0.0, %v4942
        %v4944 = vpop.f32.mrf.mxu0
        %v4945 = vadd.f32 0.0, %v4944
        %4946 = vmatprep.mubr.f32.mxu0 0.0
        %4947 = vmatmul.mubr.f32.gmra.mxu0 %v4318
        %v4948 = vpop.f32.mrf.mxu0
        %v4949 = vadd.f32 0.0, %v4948
        %v4950 = vpop.f32.mrf.mxu0
        %v4951 = vadd.f32 0.0, %v4950
        %4952 = vmatprep.mubr.f32.mxu0 0.0
        %4953 = vmatmul.mubr.f32.gmra.mxu0 %v4319
        %v4954 = vpop.f32.mrf.mxu0
        %v4955 = vadd.f32 0.0, %v4954
        %v4956 = vpop.f32.mrf.mxu0
        %v4957 = vadd.f32 0.0, %v4956
        %4958 = vmatprep.mubr.f32.mxu0 0.0
        %4959 = vmatmul.mubr.f32.gmra.mxu0 %v4320
        %v4960 = vpop.f32.mrf.mxu0
        %v4961 = vadd.f32 0.0, %v4960
        %v4962 = vpop.f32.mrf.mxu0
        %v4963 = vadd.f32 0.0, %v4962
        %4964 = vdwg.mxu0
        %4965 = vmatprep.subr.mxu0 %v1514
        %4966 = vmatpush1.msra.mxu0 %v1513
        %4967 = vmatprep.subr.mxu0 %v1506
        %4968 = vmatpush1.msra.mxu0 %v1505
        %4969 = vmatprep.subr.mxu0 %v1498
        %4970 = vmatpush1.msra.mxu0 %v1497
        %4971 = vmatprep.subr.mxu0 %v1490
        %4972 = vmatpush1.msra.mxu0 %v1489
        %4973 = vmatprep.subr.mxu0 %v1482
        %4974 = vmatpush1.msra.mxu0 %v1481
        %4975 = vmatprep.subr.mxu0 %v1474
        %4976 = vmatpush1.msra.mxu0 %v1473
        %4977 = vmatprep.subr.mxu0 %v1466
        %4978 = vmatpush1.msra.mxu0 %v1465
        %4979 = vmatprep.subr.mxu0 %v1458
        %4980 = vmatpush1.msra.mxu0 %v1457
        %4981 = vmatprep.subr.mxu0 %v1450
        %4982 = vmatpush1.msra.mxu0 %v1449
        %4983 = vmatprep.subr.mxu0 %v1442
        %4984 = vmatpush1.msra.mxu0 %v1441
        %4985 = vmatprep.subr.mxu0 %v1434
        %4986 = vmatpush1.msra.mxu0 %v1433
        %4987 = vmatprep.subr.mxu0 %v1426
        %4988 = vmatpush1.msra.mxu0 %v1425
        %4989 = vmatprep.subr.mxu0 %v1418
        %4990 = vmatpush1.msra.mxu0 %v1417
        %4991 = vmatprep.subr.mxu0 %v1410
        %4992 = vmatpush1.msra.mxu0 %v1409
        %4993 = vmatprep.subr.mxu0 %v1402
        %4994 = vmatpush1.msra.mxu0 %v1401
        %4995 = vmatprep.subr.mxu0 %v1394
        %4996 = vmatpush1.msra.mxu0 %v1393
        %4997 = vmatprep.subr.mxu0 0.0
        %4998 = vmatpush2.msra.mxu0 0.0
        %4999 = vmatprep.subr.mxu0 0.0
        %5000 = vmatpush2.msra.mxu0 0.0
        %5001 = vmatprep.subr.mxu0 0.0
        %5002 = vmatpush2.msra.mxu0 0.0
        %5003 = vmatprep.subr.mxu0 0.0
        %5004 = vmatpush2.msra.mxu0 0.0
        %5005 = vmatprep.subr.mxu0 0.0
        %5006 = vmatpush2.msra.mxu0 0.0
        %5007 = vmatprep.subr.mxu0 0.0
        %5008 = vmatpush2.msra.mxu0 0.0
        %5009 = vmatprep.subr.mxu0 0.0
        %5010 = vmatpush2.msra.mxu0 0.0
        %5011 = vmatprep.subr.mxu0 0.0
        %5012 = vmatpush2.msra.mxu0 0.0
        %5013 = vmatprep.subr.mxu0 0.0
        %5014 = vmatpush2.msra.mxu0 0.0
        %5015 = vmatprep.subr.mxu0 0.0
        %5016 = vmatpush2.msra.mxu0 0.0
        %5017 = vmatprep.subr.mxu0 0.0
        %5018 = vmatpush2.msra.mxu0 0.0
        %5019 = vmatprep.subr.mxu0 0.0
        %5020 = vmatpush2.msra.mxu0 0.0
        %5021 = vmatprep.subr.mxu0 0.0
        %5022 = vmatpush2.msra.mxu0 0.0
        %5023 = vmatprep.subr.mxu0 0.0
        %5024 = vmatpush2.msra.mxu0 0.0
        %5025 = vmatprep.subr.mxu0 0.0
        %5026 = vmatpush2.msra.mxu0 0.0
        %5027 = vmatprep.subr.mxu0 0.0
        %5028 = vmatpush2.msra.mxu0 0.0
        %5029 = vmatprep.mubr.f32.mxu0 0.0
        %5030 = vmatmul.mubr.f32.gmra.mxu0 %v4305
        %v5031 = vpop.f32.mrf.mxu0
        %v5032 = vadd.f32 0.0, %v5031
        %v5033 = vpop.f32.mrf.mxu0
        %v5034 = vadd.f32 0.0, %v5033
        %5035 = vmatprep.mubr.f32.mxu0 0.0
        %5036 = vmatmul.mubr.f32.gmra.mxu0 %v4306
        %v5037 = vpop.f32.mrf.mxu0
        %v5038 = vadd.f32 0.0, %v5037
        %v5039 = vpop.f32.mrf.mxu0
        %v5040 = vadd.f32 0.0, %v5039
        %5041 = vmatprep.mubr.f32.mxu0 0.0
        %5042 = vmatmul.mubr.f32.gmra.mxu0 %v4307
        %v5043 = vpop.f32.mrf.mxu0
        %v5044 = vadd.f32 0.0, %v5043
        %v5045 = vpop.f32.mrf.mxu0
        %v5046 = vadd.f32 0.0, %v5045
        %5047 = vmatprep.mubr.f32.mxu0 0.0
        %5048 = vmatmul.mubr.f32.gmra.mxu0 %v4308
        %v5049 = vpop.f32.mrf.mxu0
        %v5050 = vadd.f32 0.0, %v5049
        %v5051 = vpop.f32.mrf.mxu0
        %v5052 = vadd.f32 0.0, %v5051
        %5053 = vmatprep.mubr.f32.mxu0 0.0
        %5054 = vmatmul.mubr.f32.gmra.mxu0 %v4309
        %v5055 = vpop.f32.mrf.mxu0
        %v5056 = vadd.f32 0.0, %v5055
        %v5057 = vpop.f32.mrf.mxu0
        %v5058 = vadd.f32 0.0, %v5057
        %5059 = vmatprep.mubr.f32.mxu0 0.0
        %5060 = vmatmul.mubr.f32.gmra.mxu0 %v4310
        %v5061 = vpop.f32.mrf.mxu0
        %v5062 = vadd.f32 0.0, %v5061
        %v5063 = vpop.f32.mrf.mxu0
        %v5064 = vadd.f32 0.0, %v5063
        %5065 = vmatprep.mubr.f32.mxu0 0.0
        %5066 = vmatmul.mubr.f32.gmra.mxu0 %v4311
        %v5067 = vpop.f32.mrf.mxu0
        %v5068 = vadd.f32 0.0, %v5067
        %v5069 = vpop.f32.mrf.mxu0
        %v5070 = vadd.f32 0.0, %v5069
        %5071 = vmatprep.mubr.f32.mxu0 0.0
        %5072 = vmatmul.mubr.f32.gmra.mxu0 %v4312
        %v5073 = vpop.f32.mrf.mxu0
        %v5074 = vadd.f32 0.0, %v5073
        %v5075 = vpop.f32.mrf.mxu0
        %v5076 = vadd.f32 0.0, %v5075
        %5077 = vmatprep.mubr.f32.mxu0 0.0
        %5078 = vmatmul.mubr.f32.gmra.mxu0 %v4313
        %v5079 = vpop.f32.mrf.mxu0
        %v5080 = vadd.f32 0.0, %v5079
        %v5081 = vpop.f32.mrf.mxu0
        %v5082 = vadd.f32 0.0, %v5081
        %5083 = vmatprep.mubr.f32.mxu0 0.0
        %5084 = vmatmul.mubr.f32.gmra.mxu0 %v4314
        %v5085 = vpop.f32.mrf.mxu0
        %v5086 = vadd.f32 0.0, %v5085
        %v5087 = vpop.f32.mrf.mxu0
        %v5088 = vadd.f32 0.0, %v5087
        %5089 = vmatprep.mubr.f32.mxu0 0.0
        %5090 = vmatmul.mubr.f32.gmra.mxu0 %v4315
        %v5091 = vpop.f32.mrf.mxu0
        %v5092 = vadd.f32 0.0, %v5091
        %v5093 = vpop.f32.mrf.mxu0
        %v5094 = vadd.f32 0.0, %v5093
        %5095 = vmatprep.mubr.f32.mxu0 0.0
        %5096 = vmatmul.mubr.f32.gmra.mxu0 %v4316
        %v5097 = vpop.f32.mrf.mxu0
        %v5098 = vadd.f32 0.0, %v5097
        %v5099 = vpop.f32.mrf.mxu0
        %v5100 = vadd.f32 0.0, %v5099
        %5101 = vmatprep.mubr.f32.mxu0 0.0
        %5102 = vmatmul.mubr.f32.gmra.mxu0 %v4317
        %v5103 = vpop.f32.mrf.mxu0
        %v5104 = vadd.f32 0.0, %v5103
        %v5105 = vpop.f32.mrf.mxu0
        %v5106 = vadd.f32 0.0, %v5105
        %5107 = vmatprep.mubr.f32.mxu0 0.0
        %5108 = vmatmul.mubr.f32.gmra.mxu0 %v4318
        %v5109 = vpop.f32.mrf.mxu0
        %v5110 = vadd.f32 0.0, %v5109
        %v5111 = vpop.f32.mrf.mxu0
        %v5112 = vadd.f32 0.0, %v5111
        %5113 = vmatprep.mubr.f32.mxu0 0.0
        %5114 = vmatmul.mubr.f32.gmra.mxu0 %v4319
        %v5115 = vpop.f32.mrf.mxu0
        %v5116 = vadd.f32 0.0, %v5115
        %v5117 = vpop.f32.mrf.mxu0
        %v5118 = vadd.f32 0.0, %v5117
        %5119 = vmatprep.mubr.f32.mxu0 0.0
        %5120 = vmatmul.mubr.f32.gmra.mxu0 %v4320
        %v5121 = vpop.f32.mrf.mxu0
        %v5122 = vadd.f32 0.0, %v5121
        %v5123 = vpop.f32.mrf.mxu0
        %v5124 = vadd.f32 0.0, %v5123
        %5125 = vdwg.mxu0
        %5126 = vmatprep.subr.mxu0 %v1516
        %5127 = vmatpush1.msra.mxu0 %v1515
        %5128 = vmatprep.subr.mxu0 %v1508
        %5129 = vmatpush1.msra.mxu0 %v1507
        %5130 = vmatprep.subr.mxu0 %v1500
        %5131 = vmatpush1.msra.mxu0 %v1499
        %5132 = vmatprep.subr.mxu0 %v1492
        %5133 = vmatpush1.msra.mxu0 %v1491
        %5134 = vmatprep.subr.mxu0 %v1484
        %5135 = vmatpush1.msra.mxu0 %v1483
        %5136 = vmatprep.subr.mxu0 %v1476
        %5137 = vmatpush1.msra.mxu0 %v1475
        %5138 = vmatprep.subr.mxu0 %v1468
        %5139 = vmatpush1.msra.mxu0 %v1467
        %5140 = vmatprep.subr.mxu0 %v1460
        %5141 = vmatpush1.msra.mxu0 %v1459
        %5142 = vmatprep.subr.mxu0 %v1452
        %5143 = vmatpush1.msra.mxu0 %v1451
        %5144 = vmatprep.subr.mxu0 %v1444
        %5145 = vmatpush1.msra.mxu0 %v1443
        %5146 = vmatprep.subr.mxu0 %v1436
        %5147 = vmatpush1.msra.mxu0 %v1435
        %5148 = vmatprep.subr.mxu0 %v1428
        %5149 = vmatpush1.msra.mxu0 %v1427
        %5150 = vmatprep.subr.mxu0 %v1420
        %5151 = vmatpush1.msra.mxu0 %v1419
        %5152 = vmatprep.subr.mxu0 %v1412
        %5153 = vmatpush1.msra.mxu0 %v1411
        %5154 = vmatprep.subr.mxu0 %v1404
        %5155 = vmatpush1.msra.mxu0 %v1403
        %5156 = vmatprep.subr.mxu0 %v1396
        %5157 = vmatpush1.msra.mxu0 %v1395
        %5158 = vmatprep.subr.mxu0 0.0
        %5159 = vmatpush2.msra.mxu0 0.0
        %5160 = vmatprep.subr.mxu0 0.0
        %5161 = vmatpush2.msra.mxu0 0.0
        %5162 = vmatprep.subr.mxu0 0.0
        %5163 = vmatpush2.msra.mxu0 0.0
        %5164 = vmatprep.subr.mxu0 0.0
        %5165 = vmatpush2.msra.mxu0 0.0
        %5166 = vmatprep.subr.mxu0 0.0
        %5167 = vmatpush2.msra.mxu0 0.0
        %5168 = vmatprep.subr.mxu0 0.0
        %5169 = vmatpush2.msra.mxu0 0.0
        %5170 = vmatprep.subr.mxu0 0.0
        %5171 = vmatpush2.msra.mxu0 0.0
        %5172 = vmatprep.subr.mxu0 0.0
        %5173 = vmatpush2.msra.mxu0 0.0
        %5174 = vmatprep.subr.mxu0 0.0
        %5175 = vmatpush2.msra.mxu0 0.0
        %5176 = vmatprep.subr.mxu0 0.0
        %5177 = vmatpush2.msra.mxu0 0.0
        %5178 = vmatprep.subr.mxu0 0.0
        %5179 = vmatpush2.msra.mxu0 0.0
        %5180 = vmatprep.subr.mxu0 0.0
        %5181 = vmatpush2.msra.mxu0 0.0
        %5182 = vmatprep.subr.mxu0 0.0
        %5183 = vmatpush2.msra.mxu0 0.0
        %5184 = vmatprep.subr.mxu0 0.0
        %5185 = vmatpush2.msra.mxu0 0.0
        %5186 = vmatprep.subr.mxu0 0.0
        %5187 = vmatpush2.msra.mxu0 0.0
        %5188 = vmatprep.subr.mxu0 0.0
        %5189 = vmatpush2.msra.mxu0 0.0
        %5190 = vmatprep.mubr.f32.mxu0 0.0
        %5191 = vmatmul.mubr.f32.gmra.mxu0 %v4305
        %v5192 = vpop.f32.mrf.mxu0
        %v5193 = vadd.f32 0.0, %v5192
        %v5194 = vpop.f32.mrf.mxu0
        %v5195 = vadd.f32 0.0, %v5194
        %5196 = vmatprep.mubr.f32.mxu0 0.0
        %5197 = vmatmul.mubr.f32.gmra.mxu0 %v4306
        %v5198 = vpop.f32.mrf.mxu0
        %v5199 = vadd.f32 0.0, %v5198
        %v5200 = vpop.f32.mrf.mxu0
        %v5201 = vadd.f32 0.0, %v5200
        %5202 = vmatprep.mubr.f32.mxu0 0.0
        %5203 = vmatmul.mubr.f32.gmra.mxu0 %v4307
        %v5204 = vpop.f32.mrf.mxu0
        %v5205 = vadd.f32 0.0, %v5204
        %v5206 = vpop.f32.mrf.mxu0
        %v5207 = vadd.f32 0.0, %v5206
        %5208 = vmatprep.mubr.f32.mxu0 0.0
        %5209 = vmatmul.mubr.f32.gmra.mxu0 %v4308
        %v5210 = vpop.f32.mrf.mxu0
        %v5211 = vadd.f32 0.0, %v5210
        %v5212 = vpop.f32.mrf.mxu0
        %v5213 = vadd.f32 0.0, %v5212
        %5214 = vmatprep.mubr.f32.mxu0 0.0
        %5215 = vmatmul.mubr.f32.gmra.mxu0 %v4309
        %v5216 = vpop.f32.mrf.mxu0
        %v5217 = vadd.f32 0.0, %v5216
        %v5218 = vpop.f32.mrf.mxu0
        %v5219 = vadd.f32 0.0, %v5218
        %5220 = vmatprep.mubr.f32.mxu0 0.0
        %5221 = vmatmul.mubr.f32.gmra.mxu0 %v4310
        %v5222 = vpop.f32.mrf.mxu0
        %v5223 = vadd.f32 0.0, %v5222
        %v5224 = vpop.f32.mrf.mxu0
        %v5225 = vadd.f32 0.0, %v5224
        %5226 = vmatprep.mubr.f32.mxu0 0.0
        %5227 = vmatmul.mubr.f32.gmra.mxu0 %v4311
        %v5228 = vpop.f32.mrf.mxu0
        %v5229 = vadd.f32 0.0, %v5228
        %v5230 = vpop.f32.mrf.mxu0
        %v5231 = vadd.f32 0.0, %v5230
        %5232 = vmatprep.mubr.f32.mxu0 0.0
        %5233 = vmatmul.mubr.f32.gmra.mxu0 %v4312
        %v5234 = vpop.f32.mrf.mxu0
        %v5235 = vadd.f32 0.0, %v5234
        %v5236 = vpop.f32.mrf.mxu0
        %v5237 = vadd.f32 0.0, %v5236
        %5238 = vmatprep.mubr.f32.mxu0 0.0
        %5239 = vmatmul.mubr.f32.gmra.mxu0 %v4313
        %v5240 = vpop.f32.mrf.mxu0
        %v5241 = vadd.f32 0.0, %v5240
        %v5242 = vpop.f32.mrf.mxu0
        %v5243 = vadd.f32 0.0, %v5242
        %5244 = vmatprep.mubr.f32.mxu0 0.0
        %5245 = vmatmul.mubr.f32.gmra.mxu0 %v4314
        %v5246 = vpop.f32.mrf.mxu0
        %v5247 = vadd.f32 0.0, %v5246
        %v5248 = vpop.f32.mrf.mxu0
        %v5249 = vadd.f32 0.0, %v5248
        %5250 = vmatprep.mubr.f32.mxu0 0.0
        %5251 = vmatmul.mubr.f32.gmra.mxu0 %v4315
        %v5252 = vpop.f32.mrf.mxu0
        %v5253 = vadd.f32 0.0, %v5252
        %v5254 = vpop.f32.mrf.mxu0
        %v5255 = vadd.f32 0.0, %v5254
        %5256 = vmatprep.mubr.f32.mxu0 0.0
        %5257 = vmatmul.mubr.f32.gmra.mxu0 %v4316
        %v5258 = vpop.f32.mrf.mxu0
        %v5259 = vadd.f32 0.0, %v5258
        %v5260 = vpop.f32.mrf.mxu0
        %v5261 = vadd.f32 0.0, %v5260
        %5262 = vmatprep.mubr.f32.mxu0 0.0
        %5263 = vmatmul.mubr.f32.gmra.mxu0 %v4317
        %v5264 = vpop.f32.mrf.mxu0
        %v5265 = vadd.f32 0.0, %v5264
        %v5266 = vpop.f32.mrf.mxu0
        %v5267 = vadd.f32 0.0, %v5266
        %5268 = vmatprep.mubr.f32.mxu0 0.0
        %5269 = vmatmul.mubr.f32.gmra.mxu0 %v4318
        %v5270 = vpop.f32.mrf.mxu0
        %v5271 = vadd.f32 0.0, %v5270
        %v5272 = vpop.f32.mrf.mxu0
        %v5273 = vadd.f32 0.0, %v5272
        %5274 = vmatprep.mubr.f32.mxu0 0.0
        %5275 = vmatmul.mubr.f32.gmra.mxu0 %v4319
        %v5276 = vpop.f32.mrf.mxu0
        %v5277 = vadd.f32 0.0, %v5276
        %v5278 = vpop.f32.mrf.mxu0
        %v5279 = vadd.f32 0.0, %v5278
        %5280 = vmatprep.mubr.f32.mxu0 0.0
        %5281 = vmatmul.mubr.f32.gmra.mxu0 %v4320
        %v5282 = vpop.f32.mrf.mxu0
        %v5283 = vadd.f32 0.0, %v5282
        %v5284 = vpop.f32.mrf.mxu0
        %v5285 = vadd.f32 0.0, %v5284
        %5286 = vdwg.mxu0
        %5287 = vmatprep.subr.mxu0 %v1518
        %5288 = vmatpush1.msra.mxu0 %v1517
        %5289 = vmatprep.subr.mxu0 %v1510
        %5290 = vmatpush1.msra.mxu0 %v1509
        %5291 = vmatprep.subr.mxu0 %v1502
        %5292 = vmatpush1.msra.mxu0 %v1501
        %5293 = vmatprep.subr.mxu0 %v1494
        %5294 = vmatpush1.msra.mxu0 %v1493
        %5295 = vmatprep.subr.mxu0 %v1486
        %5296 = vmatpush1.msra.mxu0 %v1485
        %5297 = vmatprep.subr.mxu0 %v1478
        %5298 = vmatpush1.msra.mxu0 %v1477
        %5299 = vmatprep.subr.mxu0 %v1470
        %5300 = vmatpush1.msra.mxu0 %v1469
        %5301 = vmatprep.subr.mxu0 %v1462
        %5302 = vmatpush1.msra.mxu0 %v1461
        %5303 = vmatprep.subr.mxu0 %v1454
        %5304 = vmatpush1.msra.mxu0 %v1453
        %5305 = vmatprep.subr.mxu0 %v1446
        %5306 = vmatpush1.msra.mxu0 %v1445
        %5307 = vmatprep.subr.mxu0 %v1438
        %5308 = vmatpush1.msra.mxu0 %v1437
        %5309 = vmatprep.subr.mxu0 %v1430
        %5310 = vmatpush1.msra.mxu0 %v1429
        %5311 = vmatprep.subr.mxu0 %v1422
        %5312 = vmatpush1.msra.mxu0 %v1421
        %5313 = vmatprep.subr.mxu0 %v1414
        %5314 = vmatpush1.msra.mxu0 %v1413
        %5315 = vmatprep.subr.mxu0 %v1406
        %5316 = vmatpush1.msra.mxu0 %v1405
        %5317 = vmatprep.subr.mxu0 %v1398
        %5318 = vmatpush1.msra.mxu0 %v1397
        %5319 = vmatprep.subr.mxu0 0.0
        %5320 = vmatpush2.msra.mxu0 0.0
        %5321 = vmatprep.subr.mxu0 0.0
        %5322 = vmatpush2.msra.mxu0 0.0
        %5323 = vmatprep.subr.mxu0 0.0
        %5324 = vmatpush2.msra.mxu0 0.0
        %5325 = vmatprep.subr.mxu0 0.0
        %5326 = vmatpush2.msra.mxu0 0.0
        %5327 = vmatprep.subr.mxu0 0.0
        %5328 = vmatpush2.msra.mxu0 0.0
        %5329 = vmatprep.subr.mxu0 0.0
        %5330 = vmatpush2.msra.mxu0 0.0
        %5331 = vmatprep.subr.mxu0 0.0
        %5332 = vmatpush2.msra.mxu0 0.0
        %5333 = vmatprep.subr.mxu0 0.0
        %5334 = vmatpush2.msra.mxu0 0.0
        %5335 = vmatprep.subr.mxu0 0.0
        %5336 = vmatpush2.msra.mxu0 0.0
        %5337 = vmatprep.subr.mxu0 0.0
        %5338 = vmatpush2.msra.mxu0 0.0
        %5339 = vmatprep.subr.mxu0 0.0
        %5340 = vmatpush2.msra.mxu0 0.0
        %5341 = vmatprep.subr.mxu0 0.0
        %5342 = vmatpush2.msra.mxu0 0.0
        %5343 = vmatprep.subr.mxu0 0.0
        %5344 = vmatpush2.msra.mxu0 0.0
        %5345 = vmatprep.subr.mxu0 0.0
        %5346 = vmatpush2.msra.mxu0 0.0
        %5347 = vmatprep.subr.mxu0 0.0
        %5348 = vmatpush2.msra.mxu0 0.0
        %5349 = vmatprep.subr.mxu0 0.0
        %5350 = vmatpush2.msra.mxu0 0.0
        %5351 = vmatprep.mubr.f32.mxu0 0.0
        %5352 = vmatmul.mubr.f32.gmra.mxu0 %v4305
        %v5353 = vpop.f32.mrf.mxu0
        %v5354 = vadd.f32 0.0, %v5353
        %v5355 = vpop.f32.mrf.mxu0
        %v5356 = vadd.f32 0.0, %v5355
        %5357 = vmatprep.mubr.f32.mxu0 0.0
        %5358 = vmatmul.mubr.f32.gmra.mxu0 %v4306
        %v5359 = vpop.f32.mrf.mxu0
        %v5360 = vadd.f32 0.0, %v5359
        %v5361 = vpop.f32.mrf.mxu0
        %v5362 = vadd.f32 0.0, %v5361
        %5363 = vmatprep.mubr.f32.mxu0 0.0
        %5364 = vmatmul.mubr.f32.gmra.mxu0 %v4307
        %v5365 = vpop.f32.mrf.mxu0
        %v5366 = vadd.f32 0.0, %v5365
        %v5367 = vpop.f32.mrf.mxu0
        %v5368 = vadd.f32 0.0, %v5367
        %5369 = vmatprep.mubr.f32.mxu0 0.0
        %5370 = vmatmul.mubr.f32.gmra.mxu0 %v4308
        %v5371 = vpop.f32.mrf.mxu0
        %v5372 = vadd.f32 0.0, %v5371
        %v5373 = vpop.f32.mrf.mxu0
        %v5374 = vadd.f32 0.0, %v5373
        %5375 = vmatprep.mubr.f32.mxu0 0.0
        %5376 = vmatmul.mubr.f32.gmra.mxu0 %v4309
        %v5377 = vpop.f32.mrf.mxu0
        %v5378 = vadd.f32 0.0, %v5377
        %v5379 = vpop.f32.mrf.mxu0
        %v5380 = vadd.f32 0.0, %v5379
        %5381 = vmatprep.mubr.f32.mxu0 0.0
        %5382 = vmatmul.mubr.f32.gmra.mxu0 %v4310
        %v5383 = vpop.f32.mrf.mxu0
        %v5384 = vadd.f32 0.0, %v5383
        %v5385 = vpop.f32.mrf.mxu0
        %v5386 = vadd.f32 0.0, %v5385
        %5387 = vmatprep.mubr.f32.mxu0 0.0
        %5388 = vmatmul.mubr.f32.gmra.mxu0 %v4311
        %v5389 = vpop.f32.mrf.mxu0
        %v5390 = vadd.f32 0.0, %v5389
        %v5391 = vpop.f32.mrf.mxu0
        %v5392 = vadd.f32 0.0, %v5391
        %5393 = vmatprep.mubr.f32.mxu0 0.0
        %5394 = vmatmul.mubr.f32.gmra.mxu0 %v4312
        %v5395 = vpop.f32.mrf.mxu0
        %v5396 = vadd.f32 0.0, %v5395
        %v5397 = vpop.f32.mrf.mxu0
        %v5398 = vadd.f32 0.0, %v5397
        %5399 = vmatprep.mubr.f32.mxu0 0.0
        %5400 = vmatmul.mubr.f32.gmra.mxu0 %v4313
        %v5401 = vpop.f32.mrf.mxu0
        %v5402 = vadd.f32 0.0, %v5401
        %v5403 = vpop.f32.mrf.mxu0
        %v5404 = vadd.f32 0.0, %v5403
        %5405 = vmatprep.mubr.f32.mxu0 0.0
        %5406 = vmatmul.mubr.f32.gmra.mxu0 %v4314
        %v5407 = vpop.f32.mrf.mxu0
        %v5408 = vadd.f32 0.0, %v5407
        %v5409 = vpop.f32.mrf.mxu0
        %v5410 = vadd.f32 0.0, %v5409
        %5411 = vmatprep.mubr.f32.mxu0 0.0
        %5412 = vmatmul.mubr.f32.gmra.mxu0 %v4315
        %v5413 = vpop.f32.mrf.mxu0
        %v5414 = vadd.f32 0.0, %v5413
        %v5415 = vpop.f32.mrf.mxu0
        %v5416 = vadd.f32 0.0, %v5415
        %5417 = vmatprep.mubr.f32.mxu0 0.0
        %5418 = vmatmul.mubr.f32.gmra.mxu0 %v4316
        %v5419 = vpop.f32.mrf.mxu0
        %v5420 = vadd.f32 0.0, %v5419
        %v5421 = vpop.f32.mrf.mxu0
        %v5422 = vadd.f32 0.0, %v5421
        %5423 = vmatprep.mubr.f32.mxu0 0.0
        %5424 = vmatmul.mubr.f32.gmra.mxu0 %v4317
        %v5425 = vpop.f32.mrf.mxu0
        %v5426 = vadd.f32 0.0, %v5425
        %v5427 = vpop.f32.mrf.mxu0
        %v5428 = vadd.f32 0.0, %v5427
        %5429 = vmatprep.mubr.f32.mxu0 0.0
        %5430 = vmatmul.mubr.f32.gmra.mxu0 %v4318
        %v5431 = vpop.f32.mrf.mxu0
        %v5432 = vadd.f32 0.0, %v5431
        %v5433 = vpop.f32.mrf.mxu0
        %v5434 = vadd.f32 0.0, %v5433
        %5435 = vmatprep.mubr.f32.mxu0 0.0
        %5436 = vmatmul.mubr.f32.gmra.mxu0 %v4319
        %v5437 = vpop.f32.mrf.mxu0
        %v5438 = vadd.f32 0.0, %v5437
        %v5439 = vpop.f32.mrf.mxu0
        %v5440 = vadd.f32 0.0, %v5439
        %5441 = vmatprep.mubr.f32.mxu0 0.0
        %5442 = vmatmul.mubr.f32.gmra.mxu0 %v4320
        %v5443 = vpop.f32.mrf.mxu0
        %v5444 = vadd.f32 0.0, %v5443
        %v5445 = vpop.f32.mrf.mxu0
        %v5446 = vadd.f32 0.0, %v5445
        %5447 = vdwg.mxu0
        %5448 = vmatprep.subr.mxu0 %v1520
        %5449 = vmatpush1.msra.mxu0 %v1519
        %5450 = vmatprep.subr.mxu0 %v1512
        %5451 = vmatpush1.msra.mxu0 %v1511
        %5452 = vmatprep.subr.mxu0 %v1504
        %5453 = vmatpush1.msra.mxu0 %v1503
        %5454 = vmatprep.subr.mxu0 %v1496
        %5455 = vmatpush1.msra.mxu0 %v1495
        %5456 = vmatprep.subr.mxu0 %v1488
        %5457 = vmatpush1.msra.mxu0 %v1487
        %5458 = vmatprep.subr.mxu0 %v1480
        %5459 = vmatpush1.msra.mxu0 %v1479
        %5460 = vmatprep.subr.mxu0 %v1472
        %5461 = vmatpush1.msra.mxu0 %v1471
        %5462 = vmatprep.subr.mxu0 %v1464
        %5463 = vmatpush1.msra.mxu0 %v1463
        %5464 = vmatprep.subr.mxu0 %v1456
        %5465 = vmatpush1.msra.mxu0 %v1455
        %5466 = vmatprep.subr.mxu0 %v1448
        %5467 = vmatpush1.msra.mxu0 %v1447
        %5468 = vmatprep.subr.mxu0 %v1440
        %5469 = vmatpush1.msra.mxu0 %v1439
        %5470 = vmatprep.subr.mxu0 %v1432
        %5471 = vmatpush1.msra.mxu0 %v1431
        %5472 = vmatprep.subr.mxu0 %v1424
        %5473 = vmatpush1.msra.mxu0 %v1423
        %5474 = vmatprep.subr.mxu0 %v1416
        %5475 = vmatpush1.msra.mxu0 %v1415
        %5476 = vmatprep.subr.mxu0 %v1408
        %5477 = vmatpush1.msra.mxu0 %v1407
        %5478 = vmatprep.subr.mxu0 %v1400
        %5479 = vmatpush1.msra.mxu0 %v1399
        %5480 = vmatprep.subr.mxu0 0.0
        %5481 = vmatpush2.msra.mxu0 0.0
        %5482 = vmatprep.subr.mxu0 0.0
        %5483 = vmatpush2.msra.mxu0 0.0
        %5484 = vmatprep.subr.mxu0 0.0
        %5485 = vmatpush2.msra.mxu0 0.0
        %5486 = vmatprep.subr.mxu0 0.0
        %5487 = vmatpush2.msra.mxu0 0.0
        %5488 = vmatprep.subr.mxu0 0.0
        %5489 = vmatpush2.msra.mxu0 0.0
        %5490 = vmatprep.subr.mxu0 0.0
        %5491 = vmatpush2.msra.mxu0 0.0
        %5492 = vmatprep.subr.mxu0 0.0
        %5493 = vmatpush2.msra.mxu0 0.0
        %5494 = vmatprep.subr.mxu0 0.0
        %5495 = vmatpush2.msra.mxu0 0.0
        %5496 = vmatprep.subr.mxu0 0.0
        %5497 = vmatpush2.msra.mxu0 0.0
        %5498 = vmatprep.subr.mxu0 0.0
        %5499 = vmatpush2.msra.mxu0 0.0
        %5500 = vmatprep.subr.mxu0 0.0
        %5501 = vmatpush2.msra.mxu0 0.0
        %5502 = vmatprep.subr.mxu0 0.0
        %5503 = vmatpush2.msra.mxu0 0.0
        %5504 = vmatprep.subr.mxu0 0.0
        %5505 = vmatpush2.msra.mxu0 0.0
        %5506 = vmatprep.subr.mxu0 0.0
        %5507 = vmatpush2.msra.mxu0 0.0
        %5508 = vmatprep.subr.mxu0 0.0
        %5509 = vmatpush2.msra.mxu0 0.0
        %5510 = vmatprep.subr.mxu0 0.0
        %5511 = vmatpush2.msra.mxu0 0.0
        %5512 = vmatprep.mubr.f32.mxu0 0.0
        %5513 = vmatmul.mubr.f32.gmra.mxu0 %v4305
        %v5514 = vpop.f32.mrf.mxu0
        %v5515 = vadd.f32 0.0, %v5514
        %v5516 = vpop.f32.mrf.mxu0
        %v5517 = vadd.f32 0.0, %v5516
        %5518 = vmatprep.mubr.f32.mxu0 0.0
        %5519 = vmatmul.mubr.f32.gmra.mxu0 %v4306
        %v5520 = vpop.f32.mrf.mxu0
        %v5521 = vadd.f32 0.0, %v5520
        %v5522 = vpop.f32.mrf.mxu0
        %v5523 = vadd.f32 0.0, %v5522
        %5524 = vmatprep.mubr.f32.mxu0 0.0
        %5525 = vmatmul.mubr.f32.gmra.mxu0 %v4307
        %v5526 = vpop.f32.mrf.mxu0
        %v5527 = vadd.f32 0.0, %v5526
        %v5528 = vpop.f32.mrf.mxu0
        %v5529 = vadd.f32 0.0, %v5528
        %5530 = vmatprep.mubr.f32.mxu0 0.0
        %5531 = vmatmul.mubr.f32.gmra.mxu0 %v4308
        %v5532 = vpop.f32.mrf.mxu0
        %v5533 = vadd.f32 0.0, %v5532
        %v5534 = vpop.f32.mrf.mxu0
        %v5535 = vadd.f32 0.0, %v5534
        %5536 = vmatprep.mubr.f32.mxu0 0.0
        %5537 = vmatmul.mubr.f32.gmra.mxu0 %v4309
        %v5538 = vpop.f32.mrf.mxu0
        %v5539 = vadd.f32 0.0, %v5538
        %v5540 = vpop.f32.mrf.mxu0
        %v5541 = vadd.f32 0.0, %v5540
        %5542 = vmatprep.mubr.f32.mxu0 0.0
        %5543 = vmatmul.mubr.f32.gmra.mxu0 %v4310
        %v5544 = vpop.f32.mrf.mxu0
        %v5545 = vadd.f32 0.0, %v5544
        %v5546 = vpop.f32.mrf.mxu0
        %v5547 = vadd.f32 0.0, %v5546
        %5548 = vmatprep.mubr.f32.mxu0 0.0
        %5549 = vmatmul.mubr.f32.gmra.mxu0 %v4311
        %v5550 = vpop.f32.mrf.mxu0
        %v5551 = vadd.f32 0.0, %v5550
        %v5552 = vpop.f32.mrf.mxu0
        %v5553 = vadd.f32 0.0, %v5552
        %5554 = vmatprep.mubr.f32.mxu0 0.0
        %5555 = vmatmul.mubr.f32.gmra.mxu0 %v4312
        %v5556 = vpop.f32.mrf.mxu0
        %v5557 = vadd.f32 0.0, %v5556
        %v5558 = vpop.f32.mrf.mxu0
        %v5559 = vadd.f32 0.0, %v5558
        %5560 = vmatprep.mubr.f32.mxu0 0.0
        %5561 = vmatmul.mubr.f32.gmra.mxu0 %v4313
        %v5562 = vpop.f32.mrf.mxu0
        %v5563 = vadd.f32 0.0, %v5562
        %v5564 = vpop.f32.mrf.mxu0
        %v5565 = vadd.f32 0.0, %v5564
        %5566 = vmatprep.mubr.f32.mxu0 0.0
        %5567 = vmatmul.mubr.f32.gmra.mxu0 %v4314
        %v5568 = vpop.f32.mrf.mxu0
        %v5569 = vadd.f32 0.0, %v5568
        %v5570 = vpop.f32.mrf.mxu0
        %v5571 = vadd.f32 0.0, %v5570
        %5572 = vmatprep.mubr.f32.mxu0 0.0
        %5573 = vmatmul.mubr.f32.gmra.mxu0 %v4315
        %v5574 = vpop.f32.mrf.mxu0
        %v5575 = vadd.f32 0.0, %v5574
        %v5576 = vpop.f32.mrf.mxu0
        %v5577 = vadd.f32 0.0, %v5576
        %5578 = vmatprep.mubr.f32.mxu0 0.0
        %5579 = vmatmul.mubr.f32.gmra.mxu0 %v4316
        %v5580 = vpop.f32.mrf.mxu0
        %v5581 = vadd.f32 0.0, %v5580
        %v5582 = vpop.f32.mrf.mxu0
        %v5583 = vadd.f32 0.0, %v5582
        %5584 = vmatprep.mubr.f32.mxu0 0.0
        %5585 = vmatmul.mubr.f32.gmra.mxu0 %v4317
        %v5586 = vpop.f32.mrf.mxu0
        %v5587 = vadd.f32 0.0, %v5586
        %v5588 = vpop.f32.mrf.mxu0
        %v5589 = vadd.f32 0.0, %v5588
        %5590 = vmatprep.mubr.f32.mxu0 0.0
        %5591 = vmatmul.mubr.f32.gmra.mxu0 %v4318
        %v5592 = vpop.f32.mrf.mxu0
        %v5593 = vadd.f32 0.0, %v5592
        %v5594 = vpop.f32.mrf.mxu0
        %v5595 = vadd.f32 0.0, %v5594
        %5596 = vmatprep.mubr.f32.mxu0 0.0
        %5597 = vmatmul.mubr.f32.gmra.mxu0 %v4319
        %v5598 = vpop.f32.mrf.mxu0
        %v5599 = vadd.f32 0.0, %v5598
        %v5600 = vpop.f32.mrf.mxu0
        %v5601 = vadd.f32 0.0, %v5600
        %5602 = vmatprep.mubr.f32.mxu0 0.0
        %5603 = vmatmul.mubr.f32.gmra.mxu0 %v4320
        %v5604 = vpop.f32.mrf.mxu0
        %v5605 = vadd.f32 0.0, %v5604
        %v5606 = vpop.f32.mrf.mxu0
        %v5607 = vadd.f32 0.0, %v5606
        %5608 = vdwg.mxu0
        %v5609 = vmul.f32 %v4388, %v5032
        %v5610 = vmul.f32 %v4390, %v5034
        %v5611 = vmul.f32 %v4549, %v5193
        %v5612 = vmul.f32 %v4551, %v5195
        %v5613 = vmul.f32 %v4710, %v5354
        %v5614 = vmul.f32 %v4712, %v5356
        %v5615 = vmul.f32 %v4871, %v5515
        %v5616 = vmul.f32 %v4873, %v5517
        %v5617 = vmul.f32 %v4394, %v5038
        %v5618 = vmul.f32 %v4396, %v5040
        %v5619 = vmul.f32 %v4555, %v5199
        %v5620 = vmul.f32 %v4557, %v5201
        %v5621 = vmul.f32 %v4716, %v5360
        %v5622 = vmul.f32 %v4718, %v5362
        %v5623 = vmul.f32 %v4877, %v5521
        %v5624 = vmul.f32 %v4879, %v5523
        %v5625 = vmul.f32 %v4400, %v5044
        %v5626 = vmul.f32 %v4402, %v5046
        %v5627 = vmul.f32 %v4561, %v5205
        %v5628 = vmul.f32 %v4563, %v5207
        %v5629 = vmul.f32 %v4722, %v5366
        %v5630 = vmul.f32 %v4724, %v5368
        %v5631 = vmul.f32 %v4883, %v5527
        %v5632 = vmul.f32 %v4885, %v5529
        %v5633 = vmul.f32 %v4406, %v5050
        %v5634 = vmul.f32 %v4408, %v5052
        %v5635 = vmul.f32 %v4567, %v5211
        %v5636 = vmul.f32 %v4569, %v5213
        %v5637 = vmul.f32 %v4728, %v5372
        %v5638 = vmul.f32 %v4730, %v5374
        %v5639 = vmul.f32 %v4889, %v5533
        %v5640 = vmul.f32 %v4891, %v5535
        %v5641 = vmul.f32 %v4412, %v5056
        %v5642 = vmul.f32 %v4414, %v5058
        %v5643 = vmul.f32 %v4573, %v5217
        %v5644 = vmul.f32 %v4575, %v5219
        %v5645 = vmul.f32 %v4734, %v5378
        %v5646 = vmul.f32 %v4736, %v5380
        %v5647 = vmul.f32 %v4895, %v5539
        %v5648 = vmul.f32 %v4897, %v5541
        %v5649 = vmul.f32 %v4418, %v5062
        %v5650 = vmul.f32 %v4420, %v5064
        %v5651 = vmul.f32 %v4579, %v5223
        %v5652 = vmul.f32 %v4581, %v5225
        %v5653 = vmul.f32 %v4740, %v5384
        %v5654 = vmul.f32 %v4742, %v5386
        %v5655 = vmul.f32 %v4901, %v5545
        %v5656 = vmul.f32 %v4903, %v5547
        %v5657 = vmul.f32 %v4424, %v5068
        %v5658 = vmul.f32 %v4426, %v5070
        %v5659 = vmul.f32 %v4585, %v5229
        %v5660 = vmul.f32 %v4587, %v5231
        %v5661 = vmul.f32 %v4746, %v5390
        %v5662 = vmul.f32 %v4748, %v5392
        %v5663 = vmul.f32 %v4907, %v5551
        %v5664 = vmul.f32 %v4909, %v5553
        %v5665 = vmul.f32 %v4430, %v5074
        %v5666 = vmul.f32 %v4432, %v5076
        %v5667 = vmul.f32 %v4591, %v5235
        %v5668 = vmul.f32 %v4593, %v5237
        %v5669 = vmul.f32 %v4752, %v5396
        %v5670 = vmul.f32 %v4754, %v5398
        %v5671 = vmul.f32 %v4913, %v5557
        %v5672 = vmul.f32 %v4915, %v5559
        %v5673 = vmul.f32 %v4436, %v5080
        %v5674 = vmul.f32 %v4438, %v5082
        %v5675 = vmul.f32 %v4597, %v5241
        %v5676 = vmul.f32 %v4599, %v5243
        %v5677 = vmul.f32 %v4758, %v5402
        %v5678 = vmul.f32 %v4760, %v5404
        %v5679 = vmul.f32 %v4919, %v5563
        %v5680 = vmul.f32 %v4921, %v5565
        %v5681 = vmul.f32 %v4442, %v5086
        %v5682 = vmul.f32 %v4444, %v5088
        %v5683 = vmul.f32 %v4603, %v5247
        %v5684 = vmul.f32 %v4605, %v5249
        %v5685 = vmul.f32 %v4764, %v5408
        %v5686 = vmul.f32 %v4766, %v5410
        %v5687 = vmul.f32 %v4925, %v5569
        %v5688 = vmul.f32 %v4927, %v5571
        %v5689 = vmul.f32 %v4448, %v5092
        %v5690 = vmul.f32 %v4450, %v5094
        %v5691 = vmul.f32 %v4609, %v5253
        %v5692 = vmul.f32 %v4611, %v5255
        %v5693 = vmul.f32 %v4770, %v5414
        %v5694 = vmul.f32 %v4772, %v5416
        %v5695 = vmul.f32 %v4931, %v5575
        %v5696 = vmul.f32 %v4933, %v5577
        %v5697 = vmul.f32 %v4454, %v5098
        %v5698 = vmul.f32 %v4456, %v5100
        %v5699 = vmul.f32 %v4615, %v5259
        %v5700 = vmul.f32 %v4617, %v5261
        %v5701 = vmul.f32 %v4776, %v5420
        %v5702 = vmul.f32 %v4778, %v5422
        %v5703 = vmul.f32 %v4937, %v5581
        %v5704 = vmul.f32 %v4939, %v5583
        %v5705 = vmul.f32 %v4460, %v5104
        %v5706 = vmul.f32 %v4462, %v5106
        %v5707 = vmul.f32 %v4621, %v5265
        %v5708 = vmul.f32 %v4623, %v5267
        %v5709 = vmul.f32 %v4782, %v5426
        %v5710 = vmul.f32 %v4784, %v5428
        %v5711 = vmul.f32 %v4943, %v5587
        %v5712 = vmul.f32 %v4945, %v5589
        %v5713 = vmul.f32 %v4466, %v5110
        %v5714 = vmul.f32 %v4468, %v5112
        %v5715 = vmul.f32 %v4627, %v5271
        %v5716 = vmul.f32 %v4629, %v5273
        %v5717 = vmul.f32 %v4788, %v5432
        %v5718 = vmul.f32 %v4790, %v5434
        %v5719 = vmul.f32 %v4949, %v5593
        %v5720 = vmul.f32 %v4951, %v5595
        %v5721 = vmul.f32 %v4472, %v5116
        %v5722 = vmul.f32 %v4474, %v5118
        %v5723 = vmul.f32 %v4633, %v5277
        %v5724 = vmul.f32 %v4635, %v5279
        %v5725 = vmul.f32 %v4794, %v5438
        %v5726 = vmul.f32 %v4796, %v5440
        %v5727 = vmul.f32 %v4955, %v5599
        %v5728 = vmul.f32 %v4957, %v5601
        %v5729 = vmul.f32 %v4478, %v5122
        %v5730 = vmul.f32 %v4480, %v5124
        %v5731 = vmul.f32 %v4639, %v5283
        %v5732 = vmul.f32 %v4641, %v5285
        %v5733 = vmul.f32 %v4800, %v5444
        %v5734 = vmul.f32 %v4802, %v5446
        %v5735 = vmul.f32 %v4961, %v5605
        %v5736 = vmul.f32 %v4963, %v5607
        %v5737 = vadd.f32 %v4015, %v5609
        %v5738 = vadd.f32 %v4016, %v5610
        %v5739 = vadd.f32 %v4017, %v5611
        %v5740 = vadd.f32 %v4018, %v5612
        %v5741 = vadd.f32 %v4019, %v5613
        %v5742 = vadd.f32 %v4020, %v5614
        %v5743 = vadd.f32 %v4021, %v5615
        %v5744 = vadd.f32 %v4022, %v5616
        %v5745 = vadd.f32 %v4023, %v5617
        %v5746 = vadd.f32 %v4024, %v5618
        %v5747 = vadd.f32 %v4025, %v5619
        %v5748 = vadd.f32 %v4026, %v5620
        %v5749 = vadd.f32 %v4027, %v5621
        %v5750 = vadd.f32 %v4028, %v5622
        %v5751 = vadd.f32 %v4029, %v5623
        %v5752 = vadd.f32 %v4030, %v5624
        %v5753 = vadd.f32 %v4031, %v5625
        %v5754 = vadd.f32 %v4032, %v5626
        %v5755 = vadd.f32 %v4033, %v5627
        %v5756 = vadd.f32 %v4034, %v5628
        %v5757 = vadd.f32 %v4035, %v5629
        %v5758 = vadd.f32 %v4036, %v5630
        %v5759 = vadd.f32 %v4037, %v5631
        %v5760 = vadd.f32 %v4038, %v5632
        %v5761 = vadd.f32 %v4039, %v5633
        %v5762 = vadd.f32 %v4040, %v5634
        %v5763 = vadd.f32 %v4041, %v5635
        %v5764 = vadd.f32 %v4042, %v5636
        %v5765 = vadd.f32 %v4043, %v5637
        %v5766 = vadd.f32 %v4044, %v5638
        %v5767 = vadd.f32 %v4045, %v5639
        %v5768 = vadd.f32 %v4046, %v5640
        %v5769 = vadd.f32 %v4047, %v5641
        %v5770 = vadd.f32 %v4048, %v5642
        %v5771 = vadd.f32 %v4049, %v5643
        %v5772 = vadd.f32 %v4050, %v5644
        %v5773 = vadd.f32 %v4051, %v5645
        %v5774 = vadd.f32 %v4052, %v5646
        %v5775 = vadd.f32 %v4053, %v5647
        %v5776 = vadd.f32 %v4054, %v5648
        %v5777 = vadd.f32 %v4055, %v5649
        %v5778 = vadd.f32 %v4056, %v5650
        %v5779 = vadd.f32 %v4057, %v5651
        %v5780 = vadd.f32 %v4058, %v5652
        %v5781 = vadd.f32 %v4059, %v5653
        %v5782 = vadd.f32 %v4060, %v5654
        %v5783 = vadd.f32 %v4061, %v5655
        %v5784 = vadd.f32 %v4062, %v5656
        %v5785 = vadd.f32 %v4063, %v5657
        %v5786 = vadd.f32 %v4064, %v5658
        %v5787 = vadd.f32 %v4065, %v5659
        %v5788 = vadd.f32 %v4066, %v5660
        %v5789 = vadd.f32 %v4067, %v5661
        %v5790 = vadd.f32 %v4068, %v5662
        %v5791 = vadd.f32 %v4069, %v5663
        %v5792 = vadd.f32 %v4070, %v5664
        %v5793 = vadd.f32 %v4071, %v5665
        %v5794 = vadd.f32 %v4072, %v5666
        %v5795 = vadd.f32 %v4073, %v5667
        %v5796 = vadd.f32 %v4074, %v5668
        %v5797 = vadd.f32 %v4075, %v5669
        %v5798 = vadd.f32 %v4076, %v5670
        %v5799 = vadd.f32 %v4077, %v5671
        %v5800 = vadd.f32 %v4078, %v5672
        %v5801 = vadd.f32 %v4079, %v5673
        %v5802 = vadd.f32 %v4080, %v5674
        %v5803 = vadd.f32 %v4081, %v5675
        %v5804 = vadd.f32 %v4082, %v5676
        %v5805 = vadd.f32 %v4083, %v5677
        %v5806 = vadd.f32 %v4084, %v5678
        %v5807 = vadd.f32 %v4085, %v5679
        %v5808 = vadd.f32 %v4086, %v5680
        %v5809 = vadd.f32 %v4087, %v5681
        %v5810 = vadd.f32 %v4088, %v5682
        %v5811 = vadd.f32 %v4089, %v5683
        %v5812 = vadd.f32 %v4090, %v5684
        %v5813 = vadd.f32 %v4091, %v5685
        %v5814 = vadd.f32 %v4092, %v5686
        %v5815 = vadd.f32 %v4093, %v5687
        %v5816 = vadd.f32 %v4094, %v5688
        %v5817 = vadd.f32 %v4095, %v5689
        %v5818 = vadd.f32 %v4096, %v5690
        %v5819 = vadd.f32 %v4097, %v5691
        %v5820 = vadd.f32 %v4098, %v5692
        %v5821 = vadd.f32 %v4099, %v5693
        %v5822 = vadd.f32 %v4100, %v5694
        %v5823 = vadd.f32 %v4101, %v5695
        %v5824 = vadd.f32 %v4102, %v5696
        %v5825 = vadd.f32 %v4103, %v5697
        %v5826 = vadd.f32 %v4104, %v5698
        %v5827 = vadd.f32 %v4105, %v5699
        %v5828 = vadd.f32 %v4106, %v5700
        %v5829 = vadd.f32 %v4107, %v5701
        %v5830 = vadd.f32 %v4108, %v5702
        %v5831 = vadd.f32 %v4109, %v5703
        %v5832 = vadd.f32 %v4110, %v5704
        %v5833 = vadd.f32 %v4111, %v5705
        %v5834 = vadd.f32 %v4112, %v5706
        %v5835 = vadd.f32 %v4113, %v5707
        %v5836 = vadd.f32 %v4114, %v5708
        %v5837 = vadd.f32 %v4115, %v5709
        %v5838 = vadd.f32 %v4116, %v5710
        %v5839 = vadd.f32 %v4117, %v5711
        %v5840 = vadd.f32 %v4118, %v5712
        %v5841 = vadd.f32 %v4119, %v5713
        %v5842 = vadd.f32 %v4120, %v5714
        %v5843 = vadd.f32 %v4121, %v5715
        %v5844 = vadd.f32 %v4122, %v5716
        %v5845 = vadd.f32 %v4123, %v5717
        %v5846 = vadd.f32 %v4124, %v5718
        %v5847 = vadd.f32 %v4125, %v5719
        %v5848 = vadd.f32 %v4126, %v5720
        %v5849 = vadd.f32 %v4127, %v5721
        %v5850 = vadd.f32 %v4128, %v5722
        %v5851 = vadd.f32 %v4129, %v5723
        %v5852 = vadd.f32 %v4130, %v5724
        %v5853 = vadd.f32 %v4131, %v5725
        %v5854 = vadd.f32 %v4132, %v5726
        %v5855 = vadd.f32 %v4133, %v5727
        %v5856 = vadd.f32 %v4134, %v5728
        %v5857 = vadd.f32 %v4135, %v5729
        %v5858 = vadd.f32 %v4136, %v5730
        %v5859 = vadd.f32 %v4137, %v5731
        %v5860 = vadd.f32 %v4138, %v5732
        %v5861 = vadd.f32 %v4139, %v5733
        %v5862 = vadd.f32 %v4140, %v5734
        %v5863 = vadd.f32 %v4141, %v5735
        %v5864 = vadd.f32 %v4142, %v5736
        %s5865 = scalar_lea.vmem %s364, 384 [#allocation2]
        %v5866 = vld [vmem:[%s5865] sm:$0xff]
        %v5867 = vld [vmem:[%s5865 + $0x8] sm:$0xff]
        %v5868 = vld [vmem:[%s5865 + $0x10] sm:$0xff]
        %v5869 = vld [vmem:[%s5865 + $0x18] sm:$0xff]
        %v5870 = vld [vmem:[%s5865 + $0x20] sm:$0xff]
        %v5871 = vld [vmem:[%s5865 + $0x28] sm:$0xff]
        %v5872 = vld [vmem:[%s5865 + $0x30] sm:$0xff]
        %v5873 = vld [vmem:[%s5865 + $0x38] sm:$0xff]
        %v5874 = vld [vmem:[%s5865 + $0x40] sm:$0xff]
        %v5875 = vld [vmem:[%s5865 + $0x48] sm:$0xff]
        %v5876 = vld [vmem:[%s5865 + $0x50] sm:$0xff]
        %v5877 = vld [vmem:[%s5865 + $0x58] sm:$0xff]
        %v5878 = vld [vmem:[%s5865 + $0x60] sm:$0xff]
        %v5879 = vld [vmem:[%s5865 + $0x68] sm:$0xff]
        %v5880 = vld [vmem:[%s5865 + $0x70] sm:$0xff]
        %v5881 = vld [vmem:[%s5865 + $0x78] sm:$0xff]
        %5882 = vmatprep.subr.mxu0 0.0
        %5883 = vmatpush1.msra.mxu0 %v452
        %5884 = vmatprep.subr.mxu0 0.0
        %5885 = vmatpush1.msra.mxu0 %v451
        %5886 = vmatprep.subr.mxu0 0.0
        %5887 = vmatpush1.msra.mxu0 %v450
        %5888 = vmatprep.subr.mxu0 0.0
        %5889 = vmatpush1.msra.mxu0 %v449
        %5890 = vmatprep.subr.mxu0 0.0
        %5891 = vmatpush1.msra.mxu0 %v448
        %5892 = vmatprep.subr.mxu0 0.0
        %5893 = vmatpush1.msra.mxu0 %v447
        %5894 = vmatprep.subr.mxu0 0.0
        %5895 = vmatpush1.msra.mxu0 %v446
        %5896 = vmatprep.subr.mxu0 0.0
        %5897 = vmatpush1.msra.mxu0 %v445
        %5898 = vmatprep.subr.mxu0 0.0
        %5899 = vmatpush1.msra.mxu0 %v444
        %5900 = vmatprep.subr.mxu0 0.0
        %5901 = vmatpush1.msra.mxu0 %v443
        %5902 = vmatprep.subr.mxu0 0.0
        %5903 = vmatpush1.msra.mxu0 %v442
        %5904 = vmatprep.subr.mxu0 0.0
        %5905 = vmatpush1.msra.mxu0 %v441
        %5906 = vmatprep.subr.mxu0 0.0
        %5907 = vmatpush1.msra.mxu0 %v440
        %5908 = vmatprep.subr.mxu0 0.0
        %5909 = vmatpush1.msra.mxu0 %v439
        %5910 = vmatprep.subr.mxu0 0.0
        %5911 = vmatpush1.msra.mxu0 %v438
        %5912 = vmatprep.subr.mxu0 0.0
        %5913 = vmatpush1.msra.mxu0 %v437
        %5914 = vmatprep.subr.mxu0 0.0
        %5915 = vmatpush2.msra.mxu0 0.0
        %5916 = vmatprep.subr.mxu0 0.0
        %5917 = vmatpush2.msra.mxu0 0.0
        %5918 = vmatprep.subr.mxu0 0.0
        %5919 = vmatpush2.msra.mxu0 0.0
        %5920 = vmatprep.subr.mxu0 0.0
        %5921 = vmatpush2.msra.mxu0 0.0
        %5922 = vmatprep.subr.mxu0 0.0
        %5923 = vmatpush2.msra.mxu0 0.0
        %5924 = vmatprep.subr.mxu0 0.0
        %5925 = vmatpush2.msra.mxu0 0.0
        %5926 = vmatprep.subr.mxu0 0.0
        %5927 = vmatpush2.msra.mxu0 0.0
        %5928 = vmatprep.subr.mxu0 0.0
        %5929 = vmatpush2.msra.mxu0 0.0
        %5930 = vmatprep.subr.mxu0 0.0
        %5931 = vmatpush2.msra.mxu0 0.0
        %5932 = vmatprep.subr.mxu0 0.0
        %5933 = vmatpush2.msra.mxu0 0.0
        %5934 = vmatprep.subr.mxu0 0.0
        %5935 = vmatpush2.msra.mxu0 0.0
        %5936 = vmatprep.subr.mxu0 0.0
        %5937 = vmatpush2.msra.mxu0 0.0
        %5938 = vmatprep.subr.mxu0 0.0
        %5939 = vmatpush2.msra.mxu0 0.0
        %5940 = vmatprep.subr.mxu0 0.0
        %5941 = vmatpush2.msra.mxu0 0.0
        %5942 = vmatprep.subr.mxu0 0.0
        %5943 = vmatpush2.msra.mxu0 0.0
        %5944 = vmatprep.subr.mxu0 0.0
        %5945 = vmatpush2.msra.mxu0 0.0
        %5946 = vmatprep.mubr.f32.mxu0 0.0
        %5947 = vmatmul.mubr.f32.gmra.mxu0 %v5866
        %v5948 = vpop.f32.mrf.mxu0
        %v5949 = vadd.f32 %v458, %v5948
        %v5950 = vpop.f32.mrf.mxu0
        %5951 = vmatprep.mubr.f32.mxu0 0.0
        %5952 = vmatmul.mubr.f32.gmra.mxu0 %v5867
        %v5953 = vpop.f32.mrf.mxu0
        %v5954 = vadd.f32 %v458, %v5953
        %v5955 = vpop.f32.mrf.mxu0
        %5956 = vmatprep.mubr.f32.mxu0 0.0
        %5957 = vmatmul.mubr.f32.gmra.mxu0 %v5868
        %v5958 = vpop.f32.mrf.mxu0
        %v5959 = vadd.f32 %v458, %v5958
        %v5960 = vpop.f32.mrf.mxu0
        %5961 = vmatprep.mubr.f32.mxu0 0.0
        %5962 = vmatmul.mubr.f32.gmra.mxu0 %v5869
        %v5963 = vpop.f32.mrf.mxu0
        %v5964 = vadd.f32 %v458, %v5963
        %v5965 = vpop.f32.mrf.mxu0
        %5966 = vmatprep.mubr.f32.mxu0 0.0
        %5967 = vmatmul.mubr.f32.gmra.mxu0 %v5870
        %v5968 = vpop.f32.mrf.mxu0
        %v5969 = vadd.f32 %v458, %v5968
        %v5970 = vpop.f32.mrf.mxu0
        %5971 = vmatprep.mubr.f32.mxu0 0.0
        %5972 = vmatmul.mubr.f32.gmra.mxu0 %v5871
        %v5973 = vpop.f32.mrf.mxu0
        %v5974 = vadd.f32 %v458, %v5973
        %v5975 = vpop.f32.mrf.mxu0
        %5976 = vmatprep.mubr.f32.mxu0 0.0
        %5977 = vmatmul.mubr.f32.gmra.mxu0 %v5872
        %v5978 = vpop.f32.mrf.mxu0
        %v5979 = vadd.f32 %v458, %v5978
        %v5980 = vpop.f32.mrf.mxu0
        %5981 = vmatprep.mubr.f32.mxu0 0.0
        %5982 = vmatmul.mubr.f32.gmra.mxu0 %v5873
        %v5983 = vpop.f32.mrf.mxu0
        %v5984 = vadd.f32 %v458, %v5983
        %v5985 = vpop.f32.mrf.mxu0
        %5986 = vmatprep.mubr.f32.mxu0 0.0
        %5987 = vmatmul.mubr.f32.gmra.mxu0 %v5874
        %v5988 = vpop.f32.mrf.mxu0
        %v5989 = vadd.f32 %v458, %v5988
        %v5990 = vpop.f32.mrf.mxu0
        %5991 = vmatprep.mubr.f32.mxu0 0.0
        %5992 = vmatmul.mubr.f32.gmra.mxu0 %v5875
        %v5993 = vpop.f32.mrf.mxu0
        %v5994 = vadd.f32 %v458, %v5993
        %v5995 = vpop.f32.mrf.mxu0
        %5996 = vmatprep.mubr.f32.mxu0 0.0
        %5997 = vmatmul.mubr.f32.gmra.mxu0 %v5876
        %v5998 = vpop.f32.mrf.mxu0
        %v5999 = vadd.f32 %v458, %v5998
        %v6000 = vpop.f32.mrf.mxu0
        %6001 = vmatprep.mubr.f32.mxu0 0.0
        %6002 = vmatmul.mubr.f32.gmra.mxu0 %v5877
        %v6003 = vpop.f32.mrf.mxu0
        %v6004 = vadd.f32 %v458, %v6003
        %v6005 = vpop.f32.mrf.mxu0
        %6006 = vmatprep.mubr.f32.mxu0 0.0
        %6007 = vmatmul.mubr.f32.gmra.mxu0 %v5878
        %v6008 = vpop.f32.mrf.mxu0
        %v6009 = vadd.f32 %v458, %v6008
        %v6010 = vpop.f32.mrf.mxu0
        %6011 = vmatprep.mubr.f32.mxu0 0.0
        %6012 = vmatmul.mubr.f32.gmra.mxu0 %v5879
        %v6013 = vpop.f32.mrf.mxu0
        %v6014 = vadd.f32 %v458, %v6013
        %v6015 = vpop.f32.mrf.mxu0
        %6016 = vmatprep.mubr.f32.mxu0 0.0
        %6017 = vmatmul.mubr.f32.gmra.mxu0 %v5880
        %v6018 = vpop.f32.mrf.mxu0
        %v6019 = vadd.f32 %v458, %v6018
        %v6020 = vpop.f32.mrf.mxu0
        %6021 = vmatprep.mubr.f32.mxu0 0.0
        %6022 = vmatmul.mubr.f32.gmra.mxu0 %v5881
        %v6023 = vpop.f32.mrf.mxu0
        %v6024 = vadd.f32 %v458, %v6023
        %v6025 = vpop.f32.mrf.mxu0
        %6026 = vdwg.mxu0
        %v6027 = vtanh.pop %v5949
        %v6028 = vtanh.pop %v5954
        %v6029 = vtanh.pop %v5959
        %v6030 = vtanh.pop %v5964
        %v6031 = vtanh.pop %v5969
        %v6032 = vtanh.pop %v5974
        %v6033 = vtanh.pop %v5979
        %v6034 = vtanh.pop %v5984
        %v6035 = vtanh.pop %v5989
        %v6036 = vtanh.pop %v5994
        %v6037 = vtanh.pop %v5999
        %v6038 = vtanh.pop %v6004
        %v6039 = vtanh.pop %v6009
        %v6040 = vtanh.pop %v6014
        %v6041 = vtanh.pop %v6019
        %v6042 = vtanh.pop %v6024
        %6043 = vmatprep.subr.mxu0 %v742
        %6044 = vmatpush1.msra.mxu0 %v741
        %6045 = vmatprep.subr.mxu0 %v734
        %6046 = vmatpush1.msra.mxu0 %v733
        %6047 = vmatprep.subr.mxu0 %v726
        %6048 = vmatpush1.msra.mxu0 %v725
        %6049 = vmatprep.subr.mxu0 %v718
        %6050 = vmatpush1.msra.mxu0 %v717
        %6051 = vmatprep.subr.mxu0 %v710
        %6052 = vmatpush1.msra.mxu0 %v709
        %6053 = vmatprep.subr.mxu0 %v702
        %6054 = vmatpush1.msra.mxu0 %v701
        %6055 = vmatprep.subr.mxu0 %v694
        %6056 = vmatpush1.msra.mxu0 %v693
        %6057 = vmatprep.subr.mxu0 %v686
        %6058 = vmatpush1.msra.mxu0 %v685
        %6059 = vmatprep.subr.mxu0 %v678
        %6060 = vmatpush1.msra.mxu0 %v677
        %6061 = vmatprep.subr.mxu0 %v670
        %6062 = vmatpush1.msra.mxu0 %v669
        %6063 = vmatprep.subr.mxu0 %v662
        %6064 = vmatpush1.msra.mxu0 %v661
        %6065 = vmatprep.subr.mxu0 %v654
        %6066 = vmatpush1.msra.mxu0 %v653
        %6067 = vmatprep.subr.mxu0 %v646
        %6068 = vmatpush1.msra.mxu0 %v645
        %6069 = vmatprep.subr.mxu0 %v638
        %6070 = vmatpush1.msra.mxu0 %v637
        %6071 = vmatprep.subr.mxu0 %v630
        %6072 = vmatpush1.msra.mxu0 %v629
        %6073 = vmatprep.subr.mxu0 %v622
        %6074 = vmatpush1.msra.mxu0 %v621
        %6075 = vmatprep.subr.mxu0 0.0
        %6076 = vmatpush2.msra.mxu0 0.0
        %6077 = vmatprep.subr.mxu0 0.0
        %6078 = vmatpush2.msra.mxu0 0.0
        %6079 = vmatprep.subr.mxu0 0.0
        %6080 = vmatpush2.msra.mxu0 0.0
        %6081 = vmatprep.subr.mxu0 0.0
        %6082 = vmatpush2.msra.mxu0 0.0
        %6083 = vmatprep.subr.mxu0 0.0
        %6084 = vmatpush2.msra.mxu0 0.0
        %6085 = vmatprep.subr.mxu0 0.0
        %6086 = vmatpush2.msra.mxu0 0.0
        %6087 = vmatprep.subr.mxu0 0.0
        %6088 = vmatpush2.msra.mxu0 0.0
        %6089 = vmatprep.subr.mxu0 0.0
        %6090 = vmatpush2.msra.mxu0 0.0
        %6091 = vmatprep.subr.mxu0 0.0
        %6092 = vmatpush2.msra.mxu0 0.0
        %6093 = vmatprep.subr.mxu0 0.0
        %6094 = vmatpush2.msra.mxu0 0.0
        %6095 = vmatprep.subr.mxu0 0.0
        %6096 = vmatpush2.msra.mxu0 0.0
        %6097 = vmatprep.subr.mxu0 0.0
        %6098 = vmatpush2.msra.mxu0 0.0
        %6099 = vmatprep.subr.mxu0 0.0
        %6100 = vmatpush2.msra.mxu0 0.0
        %6101 = vmatprep.subr.mxu0 0.0
        %6102 = vmatpush2.msra.mxu0 0.0
        %6103 = vmatprep.subr.mxu0 0.0
        %6104 = vmatpush2.msra.mxu0 0.0
        %6105 = vmatprep.subr.mxu0 0.0
        %6106 = vmatpush2.msra.mxu0 0.0
        %6107 = vmatprep.mubr.f32.mxu0 0.0
        %6108 = vmatmul.mubr.f32.gmra.mxu0 %v6027
        %v6109 = vpop.f32.mrf.mxu0
        %v6110 = vadd.f32 0.0, %v6109
        %v6111 = vpop.f32.mrf.mxu0
        %v6112 = vadd.f32 0.0, %v6111
        %6113 = vmatprep.mubr.f32.mxu0 0.0
        %6114 = vmatmul.mubr.f32.gmra.mxu0 %v6028
        %v6115 = vpop.f32.mrf.mxu0
        %v6116 = vadd.f32 0.0, %v6115
        %v6117 = vpop.f32.mrf.mxu0
        %v6118 = vadd.f32 0.0, %v6117
        %6119 = vmatprep.mubr.f32.mxu0 0.0
        %6120 = vmatmul.mubr.f32.gmra.mxu0 %v6029
        %v6121 = vpop.f32.mrf.mxu0
        %v6122 = vadd.f32 0.0, %v6121
        %v6123 = vpop.f32.mrf.mxu0
        %v6124 = vadd.f32 0.0, %v6123
        %6125 = vmatprep.mubr.f32.mxu0 0.0
        %6126 = vmatmul.mubr.f32.gmra.mxu0 %v6030
        %v6127 = vpop.f32.mrf.mxu0
        %v6128 = vadd.f32 0.0, %v6127
        %v6129 = vpop.f32.mrf.mxu0
        %v6130 = vadd.f32 0.0, %v6129
        %6131 = vmatprep.mubr.f32.mxu0 0.0
        %6132 = vmatmul.mubr.f32.gmra.mxu0 %v6031
        %v6133 = vpop.f32.mrf.mxu0
        %v6134 = vadd.f32 0.0, %v6133
        %v6135 = vpop.f32.mrf.mxu0
        %v6136 = vadd.f32 0.0, %v6135
        %6137 = vmatprep.mubr.f32.mxu0 0.0
        %6138 = vmatmul.mubr.f32.gmra.mxu0 %v6032
        %v6139 = vpop.f32.mrf.mxu0
        %v6140 = vadd.f32 0.0, %v6139
        %v6141 = vpop.f32.mrf.mxu0
        %v6142 = vadd.f32 0.0, %v6141
        %6143 = vmatprep.mubr.f32.mxu0 0.0
        %6144 = vmatmul.mubr.f32.gmra.mxu0 %v6033
        %v6145 = vpop.f32.mrf.mxu0
        %v6146 = vadd.f32 0.0, %v6145
        %v6147 = vpop.f32.mrf.mxu0
        %v6148 = vadd.f32 0.0, %v6147
        %6149 = vmatprep.mubr.f32.mxu0 0.0
        %6150 = vmatmul.mubr.f32.gmra.mxu0 %v6034
        %v6151 = vpop.f32.mrf.mxu0
        %v6152 = vadd.f32 0.0, %v6151
        %v6153 = vpop.f32.mrf.mxu0
        %v6154 = vadd.f32 0.0, %v6153
        %6155 = vmatprep.mubr.f32.mxu0 0.0
        %6156 = vmatmul.mubr.f32.gmra.mxu0 %v6035
        %v6157 = vpop.f32.mrf.mxu0
        %v6158 = vadd.f32 0.0, %v6157
        %v6159 = vpop.f32.mrf.mxu0
        %v6160 = vadd.f32 0.0, %v6159
        %6161 = vmatprep.mubr.f32.mxu0 0.0
        %6162 = vmatmul.mubr.f32.gmra.mxu0 %v6036
        %v6163 = vpop.f32.mrf.mxu0
        %v6164 = vadd.f32 0.0, %v6163
        %v6165 = vpop.f32.mrf.mxu0
        %v6166 = vadd.f32 0.0, %v6165
        %6167 = vmatprep.mubr.f32.mxu0 0.0
        %6168 = vmatmul.mubr.f32.gmra.mxu0 %v6037
        %v6169 = vpop.f32.mrf.mxu0
        %v6170 = vadd.f32 0.0, %v6169
        %v6171 = vpop.f32.mrf.mxu0
        %v6172 = vadd.f32 0.0, %v6171
        %6173 = vmatprep.mubr.f32.mxu0 0.0
        %6174 = vmatmul.mubr.f32.gmra.mxu0 %v6038
        %v6175 = vpop.f32.mrf.mxu0
        %v6176 = vadd.f32 0.0, %v6175
        %v6177 = vpop.f32.mrf.mxu0
        %v6178 = vadd.f32 0.0, %v6177
        %6179 = vmatprep.mubr.f32.mxu0 0.0
        %6180 = vmatmul.mubr.f32.gmra.mxu0 %v6039
        %v6181 = vpop.f32.mrf.mxu0
        %v6182 = vadd.f32 0.0, %v6181
        %v6183 = vpop.f32.mrf.mxu0
        %v6184 = vadd.f32 0.0, %v6183
        %6185 = vmatprep.mubr.f32.mxu0 0.0
        %6186 = vmatmul.mubr.f32.gmra.mxu0 %v6040
        %v6187 = vpop.f32.mrf.mxu0
        %v6188 = vadd.f32 0.0, %v6187
        %v6189 = vpop.f32.mrf.mxu0
        %v6190 = vadd.f32 0.0, %v6189
        %6191 = vmatprep.mubr.f32.mxu0 0.0
        %6192 = vmatmul.mubr.f32.gmra.mxu0 %v6041
        %v6193 = vpop.f32.mrf.mxu0
        %v6194 = vadd.f32 0.0, %v6193
        %v6195 = vpop.f32.mrf.mxu0
        %v6196 = vadd.f32 0.0, %v6195
        %6197 = vmatprep.mubr.f32.mxu0 0.0
        %6198 = vmatmul.mubr.f32.gmra.mxu0 %v6042
        %v6199 = vpop.f32.mrf.mxu0
        %v6200 = vadd.f32 0.0, %v6199
        %v6201 = vpop.f32.mrf.mxu0
        %v6202 = vadd.f32 0.0, %v6201
        %6203 = vdwg.mxu0
        %6204 = vmatprep.subr.mxu0 %v744
        %6205 = vmatpush1.msra.mxu0 %v743
        %6206 = vmatprep.subr.mxu0 %v736
        %6207 = vmatpush1.msra.mxu0 %v735
        %6208 = vmatprep.subr.mxu0 %v728
        %6209 = vmatpush1.msra.mxu0 %v727
        %6210 = vmatprep.subr.mxu0 %v720
        %6211 = vmatpush1.msra.mxu0 %v719
        %6212 = vmatprep.subr.mxu0 %v712
        %6213 = vmatpush1.msra.mxu0 %v711
        %6214 = vmatprep.subr.mxu0 %v704
        %6215 = vmatpush1.msra.mxu0 %v703
        %6216 = vmatprep.subr.mxu0 %v696
        %6217 = vmatpush1.msra.mxu0 %v695
        %6218 = vmatprep.subr.mxu0 %v688
        %6219 = vmatpush1.msra.mxu0 %v687
        %6220 = vmatprep.subr.mxu0 %v680
        %6221 = vmatpush1.msra.mxu0 %v679
        %6222 = vmatprep.subr.mxu0 %v672
        %6223 = vmatpush1.msra.mxu0 %v671
        %6224 = vmatprep.subr.mxu0 %v664
        %6225 = vmatpush1.msra.mxu0 %v663
        %6226 = vmatprep.subr.mxu0 %v656
        %6227 = vmatpush1.msra.mxu0 %v655
        %6228 = vmatprep.subr.mxu0 %v648
        %6229 = vmatpush1.msra.mxu0 %v647
        %6230 = vmatprep.subr.mxu0 %v640
        %6231 = vmatpush1.msra.mxu0 %v639
        %6232 = vmatprep.subr.mxu0 %v632
        %6233 = vmatpush1.msra.mxu0 %v631
        %6234 = vmatprep.subr.mxu0 %v624
        %6235 = vmatpush1.msra.mxu0 %v623
        %6236 = vmatprep.subr.mxu0 0.0
        %6237 = vmatpush2.msra.mxu0 0.0
        %6238 = vmatprep.subr.mxu0 0.0
        %6239 = vmatpush2.msra.mxu0 0.0
        %6240 = vmatprep.subr.mxu0 0.0
        %6241 = vmatpush2.msra.mxu0 0.0
        %6242 = vmatprep.subr.mxu0 0.0
        %6243 = vmatpush2.msra.mxu0 0.0
        %6244 = vmatprep.subr.mxu0 0.0
        %6245 = vmatpush2.msra.mxu0 0.0
        %6246 = vmatprep.subr.mxu0 0.0
        %6247 = vmatpush2.msra.mxu0 0.0
        %6248 = vmatprep.subr.mxu0 0.0
        %6249 = vmatpush2.msra.mxu0 0.0
        %6250 = vmatprep.subr.mxu0 0.0
        %6251 = vmatpush2.msra.mxu0 0.0
        %6252 = vmatprep.subr.mxu0 0.0
        %6253 = vmatpush2.msra.mxu0 0.0
        %6254 = vmatprep.subr.mxu0 0.0
        %6255 = vmatpush2.msra.mxu0 0.0
        %6256 = vmatprep.subr.mxu0 0.0
        %6257 = vmatpush2.msra.mxu0 0.0
        %6258 = vmatprep.subr.mxu0 0.0
        %6259 = vmatpush2.msra.mxu0 0.0
        %6260 = vmatprep.subr.mxu0 0.0
        %6261 = vmatpush2.msra.mxu0 0.0
        %6262 = vmatprep.subr.mxu0 0.0
        %6263 = vmatpush2.msra.mxu0 0.0
        %6264 = vmatprep.subr.mxu0 0.0
        %6265 = vmatpush2.msra.mxu0 0.0
        %6266 = vmatprep.subr.mxu0 0.0
        %6267 = vmatpush2.msra.mxu0 0.0
        %6268 = vmatprep.mubr.f32.mxu0 0.0
        %6269 = vmatmul.mubr.f32.gmra.mxu0 %v6027
        %v6270 = vpop.f32.mrf.mxu0
        %v6271 = vadd.f32 0.0, %v6270
        %v6272 = vpop.f32.mrf.mxu0
        %v6273 = vadd.f32 0.0, %v6272
        %6274 = vmatprep.mubr.f32.mxu0 0.0
        %6275 = vmatmul.mubr.f32.gmra.mxu0 %v6028
        %v6276 = vpop.f32.mrf.mxu0
        %v6277 = vadd.f32 0.0, %v6276
        %v6278 = vpop.f32.mrf.mxu0
        %v6279 = vadd.f32 0.0, %v6278
        %6280 = vmatprep.mubr.f32.mxu0 0.0
        %6281 = vmatmul.mubr.f32.gmra.mxu0 %v6029
        %v6282 = vpop.f32.mrf.mxu0
        %v6283 = vadd.f32 0.0, %v6282
        %v6284 = vpop.f32.mrf.mxu0
        %v6285 = vadd.f32 0.0, %v6284
        %6286 = vmatprep.mubr.f32.mxu0 0.0
        %6287 = vmatmul.mubr.f32.gmra.mxu0 %v6030
        %v6288 = vpop.f32.mrf.mxu0
        %v6289 = vadd.f32 0.0, %v6288
        %v6290 = vpop.f32.mrf.mxu0
        %v6291 = vadd.f32 0.0, %v6290
        %6292 = vmatprep.mubr.f32.mxu0 0.0
        %6293 = vmatmul.mubr.f32.gmra.mxu0 %v6031
        %v6294 = vpop.f32.mrf.mxu0
        %v6295 = vadd.f32 0.0, %v6294
        %v6296 = vpop.f32.mrf.mxu0
        %v6297 = vadd.f32 0.0, %v6296
        %6298 = vmatprep.mubr.f32.mxu0 0.0
        %6299 = vmatmul.mubr.f32.gmra.mxu0 %v6032
        %v6300 = vpop.f32.mrf.mxu0
        %v6301 = vadd.f32 0.0, %v6300
        %v6302 = vpop.f32.mrf.mxu0
        %v6303 = vadd.f32 0.0, %v6302
        %6304 = vmatprep.mubr.f32.mxu0 0.0
        %6305 = vmatmul.mubr.f32.gmra.mxu0 %v6033
        %v6306 = vpop.f32.mrf.mxu0
        %v6307 = vadd.f32 0.0, %v6306
        %v6308 = vpop.f32.mrf.mxu0
        %v6309 = vadd.f32 0.0, %v6308
        %6310 = vmatprep.mubr.f32.mxu0 0.0
        %6311 = vmatmul.mubr.f32.gmra.mxu0 %v6034
        %v6312 = vpop.f32.mrf.mxu0
        %v6313 = vadd.f32 0.0, %v6312
        %v6314 = vpop.f32.mrf.mxu0
        %v6315 = vadd.f32 0.0, %v6314
        %6316 = vmatprep.mubr.f32.mxu0 0.0
        %6317 = vmatmul.mubr.f32.gmra.mxu0 %v6035
        %v6318 = vpop.f32.mrf.mxu0
        %v6319 = vadd.f32 0.0, %v6318
        %v6320 = vpop.f32.mrf.mxu0
        %v6321 = vadd.f32 0.0, %v6320
        %6322 = vmatprep.mubr.f32.mxu0 0.0
        %6323 = vmatmul.mubr.f32.gmra.mxu0 %v6036
        %v6324 = vpop.f32.mrf.mxu0
        %v6325 = vadd.f32 0.0, %v6324
        %v6326 = vpop.f32.mrf.mxu0
        %v6327 = vadd.f32 0.0, %v6326
        %6328 = vmatprep.mubr.f32.mxu0 0.0
        %6329 = vmatmul.mubr.f32.gmra.mxu0 %v6037
        %v6330 = vpop.f32.mrf.mxu0
        %v6331 = vadd.f32 0.0, %v6330
        %v6332 = vpop.f32.mrf.mxu0
        %v6333 = vadd.f32 0.0, %v6332
        %6334 = vmatprep.mubr.f32.mxu0 0.0
        %6335 = vmatmul.mubr.f32.gmra.mxu0 %v6038
        %v6336 = vpop.f32.mrf.mxu0
        %v6337 = vadd.f32 0.0, %v6336
        %v6338 = vpop.f32.mrf.mxu0
        %v6339 = vadd.f32 0.0, %v6338
        %6340 = vmatprep.mubr.f32.mxu0 0.0
        %6341 = vmatmul.mubr.f32.gmra.mxu0 %v6039
        %v6342 = vpop.f32.mrf.mxu0
        %v6343 = vadd.f32 0.0, %v6342
        %v6344 = vpop.f32.mrf.mxu0
        %v6345 = vadd.f32 0.0, %v6344
        %6346 = vmatprep.mubr.f32.mxu0 0.0
        %6347 = vmatmul.mubr.f32.gmra.mxu0 %v6040
        %v6348 = vpop.f32.mrf.mxu0
        %v6349 = vadd.f32 0.0, %v6348
        %v6350 = vpop.f32.mrf.mxu0
        %v6351 = vadd.f32 0.0, %v6350
        %6352 = vmatprep.mubr.f32.mxu0 0.0
        %6353 = vmatmul.mubr.f32.gmra.mxu0 %v6041
        %v6354 = vpop.f32.mrf.mxu0
        %v6355 = vadd.f32 0.0, %v6354
        %v6356 = vpop.f32.mrf.mxu0
        %v6357 = vadd.f32 0.0, %v6356
        %6358 = vmatprep.mubr.f32.mxu0 0.0
        %6359 = vmatmul.mubr.f32.gmra.mxu0 %v6042
        %v6360 = vpop.f32.mrf.mxu0
        %v6361 = vadd.f32 0.0, %v6360
        %v6362 = vpop.f32.mrf.mxu0
        %v6363 = vadd.f32 0.0, %v6362
        %6364 = vdwg.mxu0
        %6365 = vmatprep.subr.mxu0 %v746
        %6366 = vmatpush1.msra.mxu0 %v745
        %6367 = vmatprep.subr.mxu0 %v738
        %6368 = vmatpush1.msra.mxu0 %v737
        %6369 = vmatprep.subr.mxu0 %v730
        %6370 = vmatpush1.msra.mxu0 %v729
        %6371 = vmatprep.subr.mxu0 %v722
        %6372 = vmatpush1.msra.mxu0 %v721
        %6373 = vmatprep.subr.mxu0 %v714
        %6374 = vmatpush1.msra.mxu0 %v713
        %6375 = vmatprep.subr.mxu0 %v706
        %6376 = vmatpush1.msra.mxu0 %v705
        %6377 = vmatprep.subr.mxu0 %v698
        %6378 = vmatpush1.msra.mxu0 %v697
        %6379 = vmatprep.subr.mxu0 %v690
        %6380 = vmatpush1.msra.mxu0 %v689
        %6381 = vmatprep.subr.mxu0 %v682
        %6382 = vmatpush1.msra.mxu0 %v681
        %6383 = vmatprep.subr.mxu0 %v674
        %6384 = vmatpush1.msra.mxu0 %v673
        %6385 = vmatprep.subr.mxu0 %v666
        %6386 = vmatpush1.msra.mxu0 %v665
        %6387 = vmatprep.subr.mxu0 %v658
        %6388 = vmatpush1.msra.mxu0 %v657
        %6389 = vmatprep.subr.mxu0 %v650
        %6390 = vmatpush1.msra.mxu0 %v649
        %6391 = vmatprep.subr.mxu0 %v642
        %6392 = vmatpush1.msra.mxu0 %v641
        %6393 = vmatprep.subr.mxu0 %v634
        %6394 = vmatpush1.msra.mxu0 %v633
        %6395 = vmatprep.subr.mxu0 %v626
        %6396 = vmatpush1.msra.mxu0 %v625
        %6397 = vmatprep.subr.mxu0 0.0
        %6398 = vmatpush2.msra.mxu0 0.0
        %6399 = vmatprep.subr.mxu0 0.0
        %6400 = vmatpush2.msra.mxu0 0.0
        %6401 = vmatprep.subr.mxu0 0.0
        %6402 = vmatpush2.msra.mxu0 0.0
        %6403 = vmatprep.subr.mxu0 0.0
        %6404 = vmatpush2.msra.mxu0 0.0
        %6405 = vmatprep.subr.mxu0 0.0
        %6406 = vmatpush2.msra.mxu0 0.0
        %6407 = vmatprep.subr.mxu0 0.0
        %6408 = vmatpush2.msra.mxu0 0.0
        %6409 = vmatprep.subr.mxu0 0.0
        %6410 = vmatpush2.msra.mxu0 0.0
        %6411 = vmatprep.subr.mxu0 0.0
        %6412 = vmatpush2.msra.mxu0 0.0
        %6413 = vmatprep.subr.mxu0 0.0
        %6414 = vmatpush2.msra.mxu0 0.0
        %6415 = vmatprep.subr.mxu0 0.0
        %6416 = vmatpush2.msra.mxu0 0.0
        %6417 = vmatprep.subr.mxu0 0.0
        %6418 = vmatpush2.msra.mxu0 0.0
        %6419 = vmatprep.subr.mxu0 0.0
        %6420 = vmatpush2.msra.mxu0 0.0
        %6421 = vmatprep.subr.mxu0 0.0
        %6422 = vmatpush2.msra.mxu0 0.0
        %6423 = vmatprep.subr.mxu0 0.0
        %6424 = vmatpush2.msra.mxu0 0.0
        %6425 = vmatprep.subr.mxu0 0.0
        %6426 = vmatpush2.msra.mxu0 0.0
        %6427 = vmatprep.subr.mxu0 0.0
        %6428 = vmatpush2.msra.mxu0 0.0
        %6429 = vmatprep.mubr.f32.mxu0 0.0
        %6430 = vmatmul.mubr.f32.gmra.mxu0 %v6027
        %v6431 = vpop.f32.mrf.mxu0
        %v6432 = vadd.f32 0.0, %v6431
        %v6433 = vpop.f32.mrf.mxu0
        %v6434 = vadd.f32 0.0, %v6433
        %6435 = vmatprep.mubr.f32.mxu0 0.0
        %6436 = vmatmul.mubr.f32.gmra.mxu0 %v6028
        %v6437 = vpop.f32.mrf.mxu0
        %v6438 = vadd.f32 0.0, %v6437
        %v6439 = vpop.f32.mrf.mxu0
        %v6440 = vadd.f32 0.0, %v6439
        %6441 = vmatprep.mubr.f32.mxu0 0.0
        %6442 = vmatmul.mubr.f32.gmra.mxu0 %v6029
        %v6443 = vpop.f32.mrf.mxu0
        %v6444 = vadd.f32 0.0, %v6443
        %v6445 = vpop.f32.mrf.mxu0
        %v6446 = vadd.f32 0.0, %v6445
        %6447 = vmatprep.mubr.f32.mxu0 0.0
        %6448 = vmatmul.mubr.f32.gmra.mxu0 %v6030
        %v6449 = vpop.f32.mrf.mxu0
        %v6450 = vadd.f32 0.0, %v6449
        %v6451 = vpop.f32.mrf.mxu0
        %v6452 = vadd.f32 0.0, %v6451
        %6453 = vmatprep.mubr.f32.mxu0 0.0
        %6454 = vmatmul.mubr.f32.gmra.mxu0 %v6031
        %v6455 = vpop.f32.mrf.mxu0
        %v6456 = vadd.f32 0.0, %v6455
        %v6457 = vpop.f32.mrf.mxu0
        %v6458 = vadd.f32 0.0, %v6457
        %6459 = vmatprep.mubr.f32.mxu0 0.0
        %6460 = vmatmul.mubr.f32.gmra.mxu0 %v6032
        %v6461 = vpop.f32.mrf.mxu0
        %v6462 = vadd.f32 0.0, %v6461
        %v6463 = vpop.f32.mrf.mxu0
        %v6464 = vadd.f32 0.0, %v6463
        %6465 = vmatprep.mubr.f32.mxu0 0.0
        %6466 = vmatmul.mubr.f32.gmra.mxu0 %v6033
        %v6467 = vpop.f32.mrf.mxu0
        %v6468 = vadd.f32 0.0, %v6467
        %v6469 = vpop.f32.mrf.mxu0
        %v6470 = vadd.f32 0.0, %v6469
        %6471 = vmatprep.mubr.f32.mxu0 0.0
        %6472 = vmatmul.mubr.f32.gmra.mxu0 %v6034
        %v6473 = vpop.f32.mrf.mxu0
        %v6474 = vadd.f32 0.0, %v6473
        %v6475 = vpop.f32.mrf.mxu0
        %v6476 = vadd.f32 0.0, %v6475
        %6477 = vmatprep.mubr.f32.mxu0 0.0
        %6478 = vmatmul.mubr.f32.gmra.mxu0 %v6035
        %v6479 = vpop.f32.mrf.mxu0
        %v6480 = vadd.f32 0.0, %v6479
        %v6481 = vpop.f32.mrf.mxu0
        %v6482 = vadd.f32 0.0, %v6481
        %6483 = vmatprep.mubr.f32.mxu0 0.0
        %6484 = vmatmul.mubr.f32.gmra.mxu0 %v6036
        %v6485 = vpop.f32.mrf.mxu0
        %v6486 = vadd.f32 0.0, %v6485
        %v6487 = vpop.f32.mrf.mxu0
        %v6488 = vadd.f32 0.0, %v6487
        %6489 = vmatprep.mubr.f32.mxu0 0.0
        %6490 = vmatmul.mubr.f32.gmra.mxu0 %v6037
        %v6491 = vpop.f32.mrf.mxu0
        %v6492 = vadd.f32 0.0, %v6491
        %v6493 = vpop.f32.mrf.mxu0
        %v6494 = vadd.f32 0.0, %v6493
        %6495 = vmatprep.mubr.f32.mxu0 0.0
        %6496 = vmatmul.mubr.f32.gmra.mxu0 %v6038
        %v6497 = vpop.f32.mrf.mxu0
        %v6498 = vadd.f32 0.0, %v6497
        %v6499 = vpop.f32.mrf.mxu0
        %v6500 = vadd.f32 0.0, %v6499
        %6501 = vmatprep.mubr.f32.mxu0 0.0
        %6502 = vmatmul.mubr.f32.gmra.mxu0 %v6039
        %v6503 = vpop.f32.mrf.mxu0
        %v6504 = vadd.f32 0.0, %v6503
        %v6505 = vpop.f32.mrf.mxu0
        %v6506 = vadd.f32 0.0, %v6505
        %6507 = vmatprep.mubr.f32.mxu0 0.0
        %6508 = vmatmul.mubr.f32.gmra.mxu0 %v6040
        %v6509 = vpop.f32.mrf.mxu0
        %v6510 = vadd.f32 0.0, %v6509
        %v6511 = vpop.f32.mrf.mxu0
        %v6512 = vadd.f32 0.0, %v6511
        %6513 = vmatprep.mubr.f32.mxu0 0.0
        %6514 = vmatmul.mubr.f32.gmra.mxu0 %v6041
        %v6515 = vpop.f32.mrf.mxu0
        %v6516 = vadd.f32 0.0, %v6515
        %v6517 = vpop.f32.mrf.mxu0
        %v6518 = vadd.f32 0.0, %v6517
        %6519 = vmatprep.mubr.f32.mxu0 0.0
        %6520 = vmatmul.mubr.f32.gmra.mxu0 %v6042
        %v6521 = vpop.f32.mrf.mxu0
        %v6522 = vadd.f32 0.0, %v6521
        %v6523 = vpop.f32.mrf.mxu0
        %v6524 = vadd.f32 0.0, %v6523
        %6525 = vdwg.mxu0
        %6526 = vmatprep.subr.mxu0 %v748
        %6527 = vmatpush1.msra.mxu0 %v747
        %6528 = vmatprep.subr.mxu0 %v740
        %6529 = vmatpush1.msra.mxu0 %v739
        %6530 = vmatprep.subr.mxu0 %v732
        %6531 = vmatpush1.msra.mxu0 %v731
        %6532 = vmatprep.subr.mxu0 %v724
        %6533 = vmatpush1.msra.mxu0 %v723
        %6534 = vmatprep.subr.mxu0 %v716
        %6535 = vmatpush1.msra.mxu0 %v715
        %6536 = vmatprep.subr.mxu0 %v708
        %6537 = vmatpush1.msra.mxu0 %v707
        %6538 = vmatprep.subr.mxu0 %v700
        %6539 = vmatpush1.msra.mxu0 %v699
        %6540 = vmatprep.subr.mxu0 %v692
        %6541 = vmatpush1.msra.mxu0 %v691
        %6542 = vmatprep.subr.mxu0 %v684
        %6543 = vmatpush1.msra.mxu0 %v683
        %6544 = vmatprep.subr.mxu0 %v676
        %6545 = vmatpush1.msra.mxu0 %v675
        %6546 = vmatprep.subr.mxu0 %v668
        %6547 = vmatpush1.msra.mxu0 %v667
        %6548 = vmatprep.subr.mxu0 %v660
        %6549 = vmatpush1.msra.mxu0 %v659
        %6550 = vmatprep.subr.mxu0 %v652
        %6551 = vmatpush1.msra.mxu0 %v651
        %6552 = vmatprep.subr.mxu0 %v644
        %6553 = vmatpush1.msra.mxu0 %v643
        %6554 = vmatprep.subr.mxu0 %v636
        %6555 = vmatpush1.msra.mxu0 %v635
        %6556 = vmatprep.subr.mxu0 %v628
        %6557 = vmatpush1.msra.mxu0 %v627
        %6558 = vmatprep.subr.mxu0 0.0
        %6559 = vmatpush2.msra.mxu0 0.0
        %6560 = vmatprep.subr.mxu0 0.0
        %6561 = vmatpush2.msra.mxu0 0.0
        %6562 = vmatprep.subr.mxu0 0.0
        %6563 = vmatpush2.msra.mxu0 0.0
        %6564 = vmatprep.subr.mxu0 0.0
        %6565 = vmatpush2.msra.mxu0 0.0
        %6566 = vmatprep.subr.mxu0 0.0
        %6567 = vmatpush2.msra.mxu0 0.0
        %6568 = vmatprep.subr.mxu0 0.0
        %6569 = vmatpush2.msra.mxu0 0.0
        %6570 = vmatprep.subr.mxu0 0.0
        %6571 = vmatpush2.msra.mxu0 0.0
        %6572 = vmatprep.subr.mxu0 0.0
        %6573 = vmatpush2.msra.mxu0 0.0
        %6574 = vmatprep.subr.mxu0 0.0
        %6575 = vmatpush2.msra.mxu0 0.0
        %6576 = vmatprep.subr.mxu0 0.0
        %6577 = vmatpush2.msra.mxu0 0.0
        %6578 = vmatprep.subr.mxu0 0.0
        %6579 = vmatpush2.msra.mxu0 0.0
        %6580 = vmatprep.subr.mxu0 0.0
        %6581 = vmatpush2.msra.mxu0 0.0
        %6582 = vmatprep.subr.mxu0 0.0
        %6583 = vmatpush2.msra.mxu0 0.0
        %6584 = vmatprep.subr.mxu0 0.0
        %6585 = vmatpush2.msra.mxu0 0.0
        %6586 = vmatprep.subr.mxu0 0.0
        %6587 = vmatpush2.msra.mxu0 0.0
        %6588 = vmatprep.subr.mxu0 0.0
        %6589 = vmatpush2.msra.mxu0 0.0
        %6590 = vmatprep.mubr.f32.mxu0 0.0
        %6591 = vmatmul.mubr.f32.gmra.mxu0 %v6027
        %v6592 = vpop.f32.mrf.mxu0
        %v6593 = vadd.f32 0.0, %v6592
        %v6594 = vpop.f32.mrf.mxu0
        %v6595 = vadd.f32 0.0, %v6594
        %6596 = vmatprep.mubr.f32.mxu0 0.0
        %6597 = vmatmul.mubr.f32.gmra.mxu0 %v6028
        %v6598 = vpop.f32.mrf.mxu0
        %v6599 = vadd.f32 0.0, %v6598
        %v6600 = vpop.f32.mrf.mxu0
        %v6601 = vadd.f32 0.0, %v6600
        %6602 = vmatprep.mubr.f32.mxu0 0.0
        %6603 = vmatmul.mubr.f32.gmra.mxu0 %v6029
        %v6604 = vpop.f32.mrf.mxu0
        %v6605 = vadd.f32 0.0, %v6604
        %v6606 = vpop.f32.mrf.mxu0
        %v6607 = vadd.f32 0.0, %v6606
        %6608 = vmatprep.mubr.f32.mxu0 0.0
        %6609 = vmatmul.mubr.f32.gmra.mxu0 %v6030
        %v6610 = vpop.f32.mrf.mxu0
        %v6611 = vadd.f32 0.0, %v6610
        %v6612 = vpop.f32.mrf.mxu0
        %v6613 = vadd.f32 0.0, %v6612
        %6614 = vmatprep.mubr.f32.mxu0 0.0
        %6615 = vmatmul.mubr.f32.gmra.mxu0 %v6031
        %v6616 = vpop.f32.mrf.mxu0
        %v6617 = vadd.f32 0.0, %v6616
        %v6618 = vpop.f32.mrf.mxu0
        %v6619 = vadd.f32 0.0, %v6618
        %6620 = vmatprep.mubr.f32.mxu0 0.0
        %6621 = vmatmul.mubr.f32.gmra.mxu0 %v6032
        %v6622 = vpop.f32.mrf.mxu0
        %v6623 = vadd.f32 0.0, %v6622
        %v6624 = vpop.f32.mrf.mxu0
        %v6625 = vadd.f32 0.0, %v6624
        %6626 = vmatprep.mubr.f32.mxu0 0.0
        %6627 = vmatmul.mubr.f32.gmra.mxu0 %v6033
        %v6628 = vpop.f32.mrf.mxu0
        %v6629 = vadd.f32 0.0, %v6628
        %v6630 = vpop.f32.mrf.mxu0
        %v6631 = vadd.f32 0.0, %v6630
        %6632 = vmatprep.mubr.f32.mxu0 0.0
        %6633 = vmatmul.mubr.f32.gmra.mxu0 %v6034
        %v6634 = vpop.f32.mrf.mxu0
        %v6635 = vadd.f32 0.0, %v6634
        %v6636 = vpop.f32.mrf.mxu0
        %v6637 = vadd.f32 0.0, %v6636
        %6638 = vmatprep.mubr.f32.mxu0 0.0
        %6639 = vmatmul.mubr.f32.gmra.mxu0 %v6035
        %v6640 = vpop.f32.mrf.mxu0
        %v6641 = vadd.f32 0.0, %v6640
        %v6642 = vpop.f32.mrf.mxu0
        %v6643 = vadd.f32 0.0, %v6642
        %6644 = vmatprep.mubr.f32.mxu0 0.0
        %6645 = vmatmul.mubr.f32.gmra.mxu0 %v6036
        %v6646 = vpop.f32.mrf.mxu0
        %v6647 = vadd.f32 0.0, %v6646
        %v6648 = vpop.f32.mrf.mxu0
        %v6649 = vadd.f32 0.0, %v6648
        %6650 = vmatprep.mubr.f32.mxu0 0.0
        %6651 = vmatmul.mubr.f32.gmra.mxu0 %v6037
        %v6652 = vpop.f32.mrf.mxu0
        %v6653 = vadd.f32 0.0, %v6652
        %v6654 = vpop.f32.mrf.mxu0
        %v6655 = vadd.f32 0.0, %v6654
        %6656 = vmatprep.mubr.f32.mxu0 0.0
        %6657 = vmatmul.mubr.f32.gmra.mxu0 %v6038
        %v6658 = vpop.f32.mrf.mxu0
        %v6659 = vadd.f32 0.0, %v6658
        %v6660 = vpop.f32.mrf.mxu0
        %v6661 = vadd.f32 0.0, %v6660
        %6662 = vmatprep.mubr.f32.mxu0 0.0
        %6663 = vmatmul.mubr.f32.gmra.mxu0 %v6039
        %v6664 = vpop.f32.mrf.mxu0
        %v6665 = vadd.f32 0.0, %v6664
        %v6666 = vpop.f32.mrf.mxu0
        %v6667 = vadd.f32 0.0, %v6666
        %6668 = vmatprep.mubr.f32.mxu0 0.0
        %6669 = vmatmul.mubr.f32.gmra.mxu0 %v6040
        %v6670 = vpop.f32.mrf.mxu0
        %v6671 = vadd.f32 0.0, %v6670
        %v6672 = vpop.f32.mrf.mxu0
        %v6673 = vadd.f32 0.0, %v6672
        %6674 = vmatprep.mubr.f32.mxu0 0.0
        %6675 = vmatmul.mubr.f32.gmra.mxu0 %v6041
        %v6676 = vpop.f32.mrf.mxu0
        %v6677 = vadd.f32 0.0, %v6676
        %v6678 = vpop.f32.mrf.mxu0
        %v6679 = vadd.f32 0.0, %v6678
        %6680 = vmatprep.mubr.f32.mxu0 0.0
        %6681 = vmatmul.mubr.f32.gmra.mxu0 %v6042
        %v6682 = vpop.f32.mrf.mxu0
        %v6683 = vadd.f32 0.0, %v6682
        %v6684 = vpop.f32.mrf.mxu0
        %v6685 = vadd.f32 0.0, %v6684
        %6686 = vdwg.mxu0
        %6687 = vmatprep.subr.mxu0 %v1514
        %6688 = vmatpush1.msra.mxu0 %v1513
        %6689 = vmatprep.subr.mxu0 %v1506
        %6690 = vmatpush1.msra.mxu0 %v1505
        %6691 = vmatprep.subr.mxu0 %v1498
        %6692 = vmatpush1.msra.mxu0 %v1497
        %6693 = vmatprep.subr.mxu0 %v1490
        %6694 = vmatpush1.msra.mxu0 %v1489
        %6695 = vmatprep.subr.mxu0 %v1482
        %6696 = vmatpush1.msra.mxu0 %v1481
        %6697 = vmatprep.subr.mxu0 %v1474
        %6698 = vmatpush1.msra.mxu0 %v1473
        %6699 = vmatprep.subr.mxu0 %v1466
        %6700 = vmatpush1.msra.mxu0 %v1465
        %6701 = vmatprep.subr.mxu0 %v1458
        %6702 = vmatpush1.msra.mxu0 %v1457
        %6703 = vmatprep.subr.mxu0 %v1450
        %6704 = vmatpush1.msra.mxu0 %v1449
        %6705 = vmatprep.subr.mxu0 %v1442
        %6706 = vmatpush1.msra.mxu0 %v1441
        %6707 = vmatprep.subr.mxu0 %v1434
        %6708 = vmatpush1.msra.mxu0 %v1433
        %6709 = vmatprep.subr.mxu0 %v1426
        %6710 = vmatpush1.msra.mxu0 %v1425
        %6711 = vmatprep.subr.mxu0 %v1418
        %6712 = vmatpush1.msra.mxu0 %v1417
        %6713 = vmatprep.subr.mxu0 %v1410
        %6714 = vmatpush1.msra.mxu0 %v1409
        %6715 = vmatprep.subr.mxu0 %v1402
        %6716 = vmatpush1.msra.mxu0 %v1401
        %6717 = vmatprep.subr.mxu0 %v1394
        %6718 = vmatpush1.msra.mxu0 %v1393
        %6719 = vmatprep.subr.mxu0 0.0
        %6720 = vmatpush2.msra.mxu0 0.0
        %6721 = vmatprep.subr.mxu0 0.0
        %6722 = vmatpush2.msra.mxu0 0.0
        %6723 = vmatprep.subr.mxu0 0.0
        %6724 = vmatpush2.msra.mxu0 0.0
        %6725 = vmatprep.subr.mxu0 0.0
        %6726 = vmatpush2.msra.mxu0 0.0
        %6727 = vmatprep.subr.mxu0 0.0
        %6728 = vmatpush2.msra.mxu0 0.0
        %6729 = vmatprep.subr.mxu0 0.0
        %6730 = vmatpush2.msra.mxu0 0.0
        %6731 = vmatprep.subr.mxu0 0.0
        %6732 = vmatpush2.msra.mxu0 0.0
        %6733 = vmatprep.subr.mxu0 0.0
        %6734 = vmatpush2.msra.mxu0 0.0
        %6735 = vmatprep.subr.mxu0 0.0
        %6736 = vmatpush2.msra.mxu0 0.0
        %6737 = vmatprep.subr.mxu0 0.0
        %6738 = vmatpush2.msra.mxu0 0.0
        %6739 = vmatprep.subr.mxu0 0.0
        %6740 = vmatpush2.msra.mxu0 0.0
        %6741 = vmatprep.subr.mxu0 0.0
        %6742 = vmatpush2.msra.mxu0 0.0
        %6743 = vmatprep.subr.mxu0 0.0
        %6744 = vmatpush2.msra.mxu0 0.0
        %6745 = vmatprep.subr.mxu0 0.0
        %6746 = vmatpush2.msra.mxu0 0.0
        %6747 = vmatprep.subr.mxu0 0.0
        %6748 = vmatpush2.msra.mxu0 0.0
        %6749 = vmatprep.subr.mxu0 0.0
        %6750 = vmatpush2.msra.mxu0 0.0
        %6751 = vmatprep.mubr.f32.mxu0 0.0
        %6752 = vmatmul.mubr.f32.gmra.mxu0 %v6027
        %v6753 = vpop.f32.mrf.mxu0
        %v6754 = vadd.f32 0.0, %v6753
        %v6755 = vpop.f32.mrf.mxu0
        %v6756 = vadd.f32 0.0, %v6755
        %6757 = vmatprep.mubr.f32.mxu0 0.0
        %6758 = vmatmul.mubr.f32.gmra.mxu0 %v6028
        %v6759 = vpop.f32.mrf.mxu0
        %v6760 = vadd.f32 0.0, %v6759
        %v6761 = vpop.f32.mrf.mxu0
        %v6762 = vadd.f32 0.0, %v6761
        %6763 = vmatprep.mubr.f32.mxu0 0.0
        %6764 = vmatmul.mubr.f32.gmra.mxu0 %v6029
        %v6765 = vpop.f32.mrf.mxu0
        %v6766 = vadd.f32 0.0, %v6765
        %v6767 = vpop.f32.mrf.mxu0
        %v6768 = vadd.f32 0.0, %v6767
        %6769 = vmatprep.mubr.f32.mxu0 0.0
        %6770 = vmatmul.mubr.f32.gmra.mxu0 %v6030
        %v6771 = vpop.f32.mrf.mxu0
        %v6772 = vadd.f32 0.0, %v6771
        %v6773 = vpop.f32.mrf.mxu0
        %v6774 = vadd.f32 0.0, %v6773
        %6775 = vmatprep.mubr.f32.mxu0 0.0
        %6776 = vmatmul.mubr.f32.gmra.mxu0 %v6031
        %v6777 = vpop.f32.mrf.mxu0
        %v6778 = vadd.f32 0.0, %v6777
        %v6779 = vpop.f32.mrf.mxu0
        %v6780 = vadd.f32 0.0, %v6779
        %6781 = vmatprep.mubr.f32.mxu0 0.0
        %6782 = vmatmul.mubr.f32.gmra.mxu0 %v6032
        %v6783 = vpop.f32.mrf.mxu0
        %v6784 = vadd.f32 0.0, %v6783
        %v6785 = vpop.f32.mrf.mxu0
        %v6786 = vadd.f32 0.0, %v6785
        %6787 = vmatprep.mubr.f32.mxu0 0.0
        %6788 = vmatmul.mubr.f32.gmra.mxu0 %v6033
        %v6789 = vpop.f32.mrf.mxu0
        %v6790 = vadd.f32 0.0, %v6789
        %v6791 = vpop.f32.mrf.mxu0
        %v6792 = vadd.f32 0.0, %v6791
        %6793 = vmatprep.mubr.f32.mxu0 0.0
        %6794 = vmatmul.mubr.f32.gmra.mxu0 %v6034
        %v6795 = vpop.f32.mrf.mxu0
        %v6796 = vadd.f32 0.0, %v6795
        %v6797 = vpop.f32.mrf.mxu0
        %v6798 = vadd.f32 0.0, %v6797
        %6799 = vmatprep.mubr.f32.mxu0 0.0
        %6800 = vmatmul.mubr.f32.gmra.mxu0 %v6035
        %v6801 = vpop.f32.mrf.mxu0
        %v6802 = vadd.f32 0.0, %v6801
        %v6803 = vpop.f32.mrf.mxu0
        %v6804 = vadd.f32 0.0, %v6803
        %6805 = vmatprep.mubr.f32.mxu0 0.0
        %6806 = vmatmul.mubr.f32.gmra.mxu0 %v6036
        %v6807 = vpop.f32.mrf.mxu0
        %v6808 = vadd.f32 0.0, %v6807
        %v6809 = vpop.f32.mrf.mxu0
        %v6810 = vadd.f32 0.0, %v6809
        %6811 = vmatprep.mubr.f32.mxu0 0.0
        %6812 = vmatmul.mubr.f32.gmra.mxu0 %v6037
        %v6813 = vpop.f32.mrf.mxu0
        %v6814 = vadd.f32 0.0, %v6813
        %v6815 = vpop.f32.mrf.mxu0
        %v6816 = vadd.f32 0.0, %v6815
        %6817 = vmatprep.mubr.f32.mxu0 0.0
        %6818 = vmatmul.mubr.f32.gmra.mxu0 %v6038
        %v6819 = vpop.f32.mrf.mxu0
        %v6820 = vadd.f32 0.0, %v6819
        %v6821 = vpop.f32.mrf.mxu0
        %v6822 = vadd.f32 0.0, %v6821
        %6823 = vmatprep.mubr.f32.mxu0 0.0
        %6824 = vmatmul.mubr.f32.gmra.mxu0 %v6039
        %v6825 = vpop.f32.mrf.mxu0
        %v6826 = vadd.f32 0.0, %v6825
        %v6827 = vpop.f32.mrf.mxu0
        %v6828 = vadd.f32 0.0, %v6827
        %6829 = vmatprep.mubr.f32.mxu0 0.0
        %6830 = vmatmul.mubr.f32.gmra.mxu0 %v6040
        %v6831 = vpop.f32.mrf.mxu0
        %v6832 = vadd.f32 0.0, %v6831
        %v6833 = vpop.f32.mrf.mxu0
        %v6834 = vadd.f32 0.0, %v6833
        %6835 = vmatprep.mubr.f32.mxu0 0.0
        %6836 = vmatmul.mubr.f32.gmra.mxu0 %v6041
        %v6837 = vpop.f32.mrf.mxu0
        %v6838 = vadd.f32 0.0, %v6837
        %v6839 = vpop.f32.mrf.mxu0
        %v6840 = vadd.f32 0.0, %v6839
        %6841 = vmatprep.mubr.f32.mxu0 0.0
        %6842 = vmatmul.mubr.f32.gmra.mxu0 %v6042
        %v6843 = vpop.f32.mrf.mxu0
        %v6844 = vadd.f32 0.0, %v6843
        %v6845 = vpop.f32.mrf.mxu0
        %v6846 = vadd.f32 0.0, %v6845
        %6847 = vdwg.mxu0
        %6848 = vmatprep.subr.mxu0 %v1516
        %6849 = vmatpush1.msra.mxu0 %v1515
        %6850 = vmatprep.subr.mxu0 %v1508
        %6851 = vmatpush1.msra.mxu0 %v1507
        %6852 = vmatprep.subr.mxu0 %v1500
        %6853 = vmatpush1.msra.mxu0 %v1499
        %6854 = vmatprep.subr.mxu0 %v1492
        %6855 = vmatpush1.msra.mxu0 %v1491
        %6856 = vmatprep.subr.mxu0 %v1484
        %6857 = vmatpush1.msra.mxu0 %v1483
        %6858 = vmatprep.subr.mxu0 %v1476
        %6859 = vmatpush1.msra.mxu0 %v1475
        %6860 = vmatprep.subr.mxu0 %v1468
        %6861 = vmatpush1.msra.mxu0 %v1467
        %6862 = vmatprep.subr.mxu0 %v1460
        %6863 = vmatpush1.msra.mxu0 %v1459
        %6864 = vmatprep.subr.mxu0 %v1452
        %6865 = vmatpush1.msra.mxu0 %v1451
        %6866 = vmatprep.subr.mxu0 %v1444
        %6867 = vmatpush1.msra.mxu0 %v1443
        %6868 = vmatprep.subr.mxu0 %v1436
        %6869 = vmatpush1.msra.mxu0 %v1435
        %6870 = vmatprep.subr.mxu0 %v1428
        %6871 = vmatpush1.msra.mxu0 %v1427
        %6872 = vmatprep.subr.mxu0 %v1420
        %6873 = vmatpush1.msra.mxu0 %v1419
        %6874 = vmatprep.subr.mxu0 %v1412
        %6875 = vmatpush1.msra.mxu0 %v1411
        %6876 = vmatprep.subr.mxu0 %v1404
        %6877 = vmatpush1.msra.mxu0 %v1403
        %6878 = vmatprep.subr.mxu0 %v1396
        %6879 = vmatpush1.msra.mxu0 %v1395
        %6880 = vmatprep.subr.mxu0 0.0
        %6881 = vmatpush2.msra.mxu0 0.0
        %6882 = vmatprep.subr.mxu0 0.0
        %6883 = vmatpush2.msra.mxu0 0.0
        %6884 = vmatprep.subr.mxu0 0.0
        %6885 = vmatpush2.msra.mxu0 0.0
        %6886 = vmatprep.subr.mxu0 0.0
        %6887 = vmatpush2.msra.mxu0 0.0
        %6888 = vmatprep.subr.mxu0 0.0
        %6889 = vmatpush2.msra.mxu0 0.0
        %6890 = vmatprep.subr.mxu0 0.0
        %6891 = vmatpush2.msra.mxu0 0.0
        %6892 = vmatprep.subr.mxu0 0.0
        %6893 = vmatpush2.msra.mxu0 0.0
        %6894 = vmatprep.subr.mxu0 0.0
        %6895 = vmatpush2.msra.mxu0 0.0
        %6896 = vmatprep.subr.mxu0 0.0
        %6897 = vmatpush2.msra.mxu0 0.0
        %6898 = vmatprep.subr.mxu0 0.0
        %6899 = vmatpush2.msra.mxu0 0.0
        %6900 = vmatprep.subr.mxu0 0.0
        %6901 = vmatpush2.msra.mxu0 0.0
        %6902 = vmatprep.subr.mxu0 0.0
        %6903 = vmatpush2.msra.mxu0 0.0
        %6904 = vmatprep.subr.mxu0 0.0
        %6905 = vmatpush2.msra.mxu0 0.0
        %6906 = vmatprep.subr.mxu0 0.0
        %6907 = vmatpush2.msra.mxu0 0.0
        %6908 = vmatprep.subr.mxu0 0.0
        %6909 = vmatpush2.msra.mxu0 0.0
        %6910 = vmatprep.subr.mxu0 0.0
        %6911 = vmatpush2.msra.mxu0 0.0
        %6912 = vmatprep.mubr.f32.mxu0 0.0
        %6913 = vmatmul.mubr.f32.gmra.mxu0 %v6027
        %v6914 = vpop.f32.mrf.mxu0
        %v6915 = vadd.f32 0.0, %v6914
        %v6916 = vpop.f32.mrf.mxu0
        %v6917 = vadd.f32 0.0, %v6916
        %6918 = vmatprep.mubr.f32.mxu0 0.0
        %6919 = vmatmul.mubr.f32.gmra.mxu0 %v6028
        %v6920 = vpop.f32.mrf.mxu0
        %v6921 = vadd.f32 0.0, %v6920
        %v6922 = vpop.f32.mrf.mxu0
        %v6923 = vadd.f32 0.0, %v6922
        %6924 = vmatprep.mubr.f32.mxu0 0.0
        %6925 = vmatmul.mubr.f32.gmra.mxu0 %v6029
        %v6926 = vpop.f32.mrf.mxu0
        %v6927 = vadd.f32 0.0, %v6926
        %v6928 = vpop.f32.mrf.mxu0
        %v6929 = vadd.f32 0.0, %v6928
        %6930 = vmatprep.mubr.f32.mxu0 0.0
        %6931 = vmatmul.mubr.f32.gmra.mxu0 %v6030
        %v6932 = vpop.f32.mrf.mxu0
        %v6933 = vadd.f32 0.0, %v6932
        %v6934 = vpop.f32.mrf.mxu0
        %v6935 = vadd.f32 0.0, %v6934
        %6936 = vmatprep.mubr.f32.mxu0 0.0
        %6937 = vmatmul.mubr.f32.gmra.mxu0 %v6031
        %v6938 = vpop.f32.mrf.mxu0
        %v6939 = vadd.f32 0.0, %v6938
        %v6940 = vpop.f32.mrf.mxu0
        %v6941 = vadd.f32 0.0, %v6940
        %6942 = vmatprep.mubr.f32.mxu0 0.0
        %6943 = vmatmul.mubr.f32.gmra.mxu0 %v6032
        %v6944 = vpop.f32.mrf.mxu0
        %v6945 = vadd.f32 0.0, %v6944
        %v6946 = vpop.f32.mrf.mxu0
        %v6947 = vadd.f32 0.0, %v6946
        %6948 = vmatprep.mubr.f32.mxu0 0.0
        %6949 = vmatmul.mubr.f32.gmra.mxu0 %v6033
        %v6950 = vpop.f32.mrf.mxu0
        %v6951 = vadd.f32 0.0, %v6950
        %v6952 = vpop.f32.mrf.mxu0
        %v6953 = vadd.f32 0.0, %v6952
        %6954 = vmatprep.mubr.f32.mxu0 0.0
        %6955 = vmatmul.mubr.f32.gmra.mxu0 %v6034
        %v6956 = vpop.f32.mrf.mxu0
        %v6957 = vadd.f32 0.0, %v6956
        %v6958 = vpop.f32.mrf.mxu0
        %v6959 = vadd.f32 0.0, %v6958
        %6960 = vmatprep.mubr.f32.mxu0 0.0
        %6961 = vmatmul.mubr.f32.gmra.mxu0 %v6035
        %v6962 = vpop.f32.mrf.mxu0
        %v6963 = vadd.f32 0.0, %v6962
        %v6964 = vpop.f32.mrf.mxu0
        %v6965 = vadd.f32 0.0, %v6964
        %6966 = vmatprep.mubr.f32.mxu0 0.0
        %6967 = vmatmul.mubr.f32.gmra.mxu0 %v6036
        %v6968 = vpop.f32.mrf.mxu0
        %v6969 = vadd.f32 0.0, %v6968
        %v6970 = vpop.f32.mrf.mxu0
        %v6971 = vadd.f32 0.0, %v6970
        %6972 = vmatprep.mubr.f32.mxu0 0.0
        %6973 = vmatmul.mubr.f32.gmra.mxu0 %v6037
        %v6974 = vpop.f32.mrf.mxu0
        %v6975 = vadd.f32 0.0, %v6974
        %v6976 = vpop.f32.mrf.mxu0
        %v6977 = vadd.f32 0.0, %v6976
        %6978 = vmatprep.mubr.f32.mxu0 0.0
        %6979 = vmatmul.mubr.f32.gmra.mxu0 %v6038
        %v6980 = vpop.f32.mrf.mxu0
        %v6981 = vadd.f32 0.0, %v6980
        %v6982 = vpop.f32.mrf.mxu0
        %v6983 = vadd.f32 0.0, %v6982
        %6984 = vmatprep.mubr.f32.mxu0 0.0
        %6985 = vmatmul.mubr.f32.gmra.mxu0 %v6039
        %v6986 = vpop.f32.mrf.mxu0
        %v6987 = vadd.f32 0.0, %v6986
        %v6988 = vpop.f32.mrf.mxu0
        %v6989 = vadd.f32 0.0, %v6988
        %6990 = vmatprep.mubr.f32.mxu0 0.0
        %6991 = vmatmul.mubr.f32.gmra.mxu0 %v6040
        %v6992 = vpop.f32.mrf.mxu0
        %v6993 = vadd.f32 0.0, %v6992
        %v6994 = vpop.f32.mrf.mxu0
        %v6995 = vadd.f32 0.0, %v6994
        %6996 = vmatprep.mubr.f32.mxu0 0.0
        %6997 = vmatmul.mubr.f32.gmra.mxu0 %v6041
        %v6998 = vpop.f32.mrf.mxu0
        %v6999 = vadd.f32 0.0, %v6998
        %v7000 = vpop.f32.mrf.mxu0
        %v7001 = vadd.f32 0.0, %v7000
        %7002 = vmatprep.mubr.f32.mxu0 0.0
        %7003 = vmatmul.mubr.f32.gmra.mxu0 %v6042
        %v7004 = vpop.f32.mrf.mxu0
        %v7005 = vadd.f32 0.0, %v7004
        %v7006 = vpop.f32.mrf.mxu0
        %v7007 = vadd.f32 0.0, %v7006
        %7008 = vdwg.mxu0
        %7009 = vmatprep.subr.mxu0 %v1518
        %7010 = vmatpush1.msra.mxu0 %v1517
        %7011 = vmatprep.subr.mxu0 %v1510
        %7012 = vmatpush1.msra.mxu0 %v1509
        %7013 = vmatprep.subr.mxu0 %v1502
        %7014 = vmatpush1.msra.mxu0 %v1501
        %7015 = vmatprep.subr.mxu0 %v1494
        %7016 = vmatpush1.msra.mxu0 %v1493
        %7017 = vmatprep.subr.mxu0 %v1486
        %7018 = vmatpush1.msra.mxu0 %v1485
        %7019 = vmatprep.subr.mxu0 %v1478
        %7020 = vmatpush1.msra.mxu0 %v1477
        %7021 = vmatprep.subr.mxu0 %v1470
        %7022 = vmatpush1.msra.mxu0 %v1469
        %7023 = vmatprep.subr.mxu0 %v1462
        %7024 = vmatpush1.msra.mxu0 %v1461
        %7025 = vmatprep.subr.mxu0 %v1454
        %7026 = vmatpush1.msra.mxu0 %v1453
        %7027 = vmatprep.subr.mxu0 %v1446
        %7028 = vmatpush1.msra.mxu0 %v1445
        %7029 = vmatprep.subr.mxu0 %v1438
        %7030 = vmatpush1.msra.mxu0 %v1437
        %7031 = vmatprep.subr.mxu0 %v1430
        %7032 = vmatpush1.msra.mxu0 %v1429
        %7033 = vmatprep.subr.mxu0 %v1422
        %7034 = vmatpush1.msra.mxu0 %v1421
        %7035 = vmatprep.subr.mxu0 %v1414
        %7036 = vmatpush1.msra.mxu0 %v1413
        %7037 = vmatprep.subr.mxu0 %v1406
        %7038 = vmatpush1.msra.mxu0 %v1405
        %7039 = vmatprep.subr.mxu0 %v1398
        %7040 = vmatpush1.msra.mxu0 %v1397
        %7041 = vmatprep.subr.mxu0 0.0
        %7042 = vmatpush2.msra.mxu0 0.0
        %7043 = vmatprep.subr.mxu0 0.0
        %7044 = vmatpush2.msra.mxu0 0.0
        %7045 = vmatprep.subr.mxu0 0.0
        %7046 = vmatpush2.msra.mxu0 0.0
        %7047 = vmatprep.subr.mxu0 0.0
        %7048 = vmatpush2.msra.mxu0 0.0
        %7049 = vmatprep.subr.mxu0 0.0
        %7050 = vmatpush2.msra.mxu0 0.0
        %7051 = vmatprep.subr.mxu0 0.0
        %7052 = vmatpush2.msra.mxu0 0.0
        %7053 = vmatprep.subr.mxu0 0.0
        %7054 = vmatpush2.msra.mxu0 0.0
        %7055 = vmatprep.subr.mxu0 0.0
        %7056 = vmatpush2.msra.mxu0 0.0
        %7057 = vmatprep.subr.mxu0 0.0
        %7058 = vmatpush2.msra.mxu0 0.0
        %7059 = vmatprep.subr.mxu0 0.0
        %7060 = vmatpush2.msra.mxu0 0.0
        %7061 = vmatprep.subr.mxu0 0.0
        %7062 = vmatpush2.msra.mxu0 0.0
        %7063 = vmatprep.subr.mxu0 0.0
        %7064 = vmatpush2.msra.mxu0 0.0
        %7065 = vmatprep.subr.mxu0 0.0
        %7066 = vmatpush2.msra.mxu0 0.0
        %7067 = vmatprep.subr.mxu0 0.0
        %7068 = vmatpush2.msra.mxu0 0.0
        %7069 = vmatprep.subr.mxu0 0.0
        %7070 = vmatpush2.msra.mxu0 0.0
        %7071 = vmatprep.subr.mxu0 0.0
        %7072 = vmatpush2.msra.mxu0 0.0
        %7073 = vmatprep.mubr.f32.mxu0 0.0
        %7074 = vmatmul.mubr.f32.gmra.mxu0 %v6027
        %v7075 = vpop.f32.mrf.mxu0
        %v7076 = vadd.f32 0.0, %v7075
        %v7077 = vpop.f32.mrf.mxu0
        %v7078 = vadd.f32 0.0, %v7077
        %7079 = vmatprep.mubr.f32.mxu0 0.0
        %7080 = vmatmul.mubr.f32.gmra.mxu0 %v6028
        %v7081 = vpop.f32.mrf.mxu0
        %v7082 = vadd.f32 0.0, %v7081
        %v7083 = vpop.f32.mrf.mxu0
        %v7084 = vadd.f32 0.0, %v7083
        %7085 = vmatprep.mubr.f32.mxu0 0.0
        %7086 = vmatmul.mubr.f32.gmra.mxu0 %v6029
        %v7087 = vpop.f32.mrf.mxu0
        %v7088 = vadd.f32 0.0, %v7087
        %v7089 = vpop.f32.mrf.mxu0
        %v7090 = vadd.f32 0.0, %v7089
        %7091 = vmatprep.mubr.f32.mxu0 0.0
        %7092 = vmatmul.mubr.f32.gmra.mxu0 %v6030
        %v7093 = vpop.f32.mrf.mxu0
        %v7094 = vadd.f32 0.0, %v7093
        %v7095 = vpop.f32.mrf.mxu0
        %v7096 = vadd.f32 0.0, %v7095
        %7097 = vmatprep.mubr.f32.mxu0 0.0
        %7098 = vmatmul.mubr.f32.gmra.mxu0 %v6031
        %v7099 = vpop.f32.mrf.mxu0
        %v7100 = vadd.f32 0.0, %v7099
        %v7101 = vpop.f32.mrf.mxu0
        %v7102 = vadd.f32 0.0, %v7101
        %7103 = vmatprep.mubr.f32.mxu0 0.0
        %7104 = vmatmul.mubr.f32.gmra.mxu0 %v6032
        %v7105 = vpop.f32.mrf.mxu0
        %v7106 = vadd.f32 0.0, %v7105
        %v7107 = vpop.f32.mrf.mxu0
        %v7108 = vadd.f32 0.0, %v7107
        %7109 = vmatprep.mubr.f32.mxu0 0.0
        %7110 = vmatmul.mubr.f32.gmra.mxu0 %v6033
        %v7111 = vpop.f32.mrf.mxu0
        %v7112 = vadd.f32 0.0, %v7111
        %v7113 = vpop.f32.mrf.mxu0
        %v7114 = vadd.f32 0.0, %v7113
        %7115 = vmatprep.mubr.f32.mxu0 0.0
        %7116 = vmatmul.mubr.f32.gmra.mxu0 %v6034
        %v7117 = vpop.f32.mrf.mxu0
        %v7118 = vadd.f32 0.0, %v7117
        %v7119 = vpop.f32.mrf.mxu0
        %v7120 = vadd.f32 0.0, %v7119
        %7121 = vmatprep.mubr.f32.mxu0 0.0
        %7122 = vmatmul.mubr.f32.gmra.mxu0 %v6035
        %v7123 = vpop.f32.mrf.mxu0
        %v7124 = vadd.f32 0.0, %v7123
        %v7125 = vpop.f32.mrf.mxu0
        %v7126 = vadd.f32 0.0, %v7125
        %7127 = vmatprep.mubr.f32.mxu0 0.0
        %7128 = vmatmul.mubr.f32.gmra.mxu0 %v6036
        %v7129 = vpop.f32.mrf.mxu0
        %v7130 = vadd.f32 0.0, %v7129
        %v7131 = vpop.f32.mrf.mxu0
        %v7132 = vadd.f32 0.0, %v7131
        %7133 = vmatprep.mubr.f32.mxu0 0.0
        %7134 = vmatmul.mubr.f32.gmra.mxu0 %v6037
        %v7135 = vpop.f32.mrf.mxu0
        %v7136 = vadd.f32 0.0, %v7135
        %v7137 = vpop.f32.mrf.mxu0
        %v7138 = vadd.f32 0.0, %v7137
        %7139 = vmatprep.mubr.f32.mxu0 0.0
        %7140 = vmatmul.mubr.f32.gmra.mxu0 %v6038
        %v7141 = vpop.f32.mrf.mxu0
        %v7142 = vadd.f32 0.0, %v7141
        %v7143 = vpop.f32.mrf.mxu0
        %v7144 = vadd.f32 0.0, %v7143
        %7145 = vmatprep.mubr.f32.mxu0 0.0
        %7146 = vmatmul.mubr.f32.gmra.mxu0 %v6039
        %v7147 = vpop.f32.mrf.mxu0
        %v7148 = vadd.f32 0.0, %v7147
        %v7149 = vpop.f32.mrf.mxu0
        %v7150 = vadd.f32 0.0, %v7149
        %7151 = vmatprep.mubr.f32.mxu0 0.0
        %7152 = vmatmul.mubr.f32.gmra.mxu0 %v6040
        %v7153 = vpop.f32.mrf.mxu0
        %v7154 = vadd.f32 0.0, %v7153
        %v7155 = vpop.f32.mrf.mxu0
        %v7156 = vadd.f32 0.0, %v7155
        %7157 = vmatprep.mubr.f32.mxu0 0.0
        %7158 = vmatmul.mubr.f32.gmra.mxu0 %v6041
        %v7159 = vpop.f32.mrf.mxu0
        %v7160 = vadd.f32 0.0, %v7159
        %v7161 = vpop.f32.mrf.mxu0
        %v7162 = vadd.f32 0.0, %v7161
        %7163 = vmatprep.mubr.f32.mxu0 0.0
        %7164 = vmatmul.mubr.f32.gmra.mxu0 %v6042
        %v7165 = vpop.f32.mrf.mxu0
        %v7166 = vadd.f32 0.0, %v7165
        %v7167 = vpop.f32.mrf.mxu0
        %v7168 = vadd.f32 0.0, %v7167
        %7169 = vdwg.mxu0
        %7170 = vmatprep.subr.mxu0 %v1520
        %7171 = vmatpush1.msra.mxu0 %v1519
        %7172 = vmatprep.subr.mxu0 %v1512
        %7173 = vmatpush1.msra.mxu0 %v1511
        %7174 = vmatprep.subr.mxu0 %v1504
        %7175 = vmatpush1.msra.mxu0 %v1503
        %7176 = vmatprep.subr.mxu0 %v1496
        %7177 = vmatpush1.msra.mxu0 %v1495
        %7178 = vmatprep.subr.mxu0 %v1488
        %7179 = vmatpush1.msra.mxu0 %v1487
        %7180 = vmatprep.subr.mxu0 %v1480
        %7181 = vmatpush1.msra.mxu0 %v1479
        %7182 = vmatprep.subr.mxu0 %v1472
        %7183 = vmatpush1.msra.mxu0 %v1471
        %7184 = vmatprep.subr.mxu0 %v1464
        %7185 = vmatpush1.msra.mxu0 %v1463
        %7186 = vmatprep.subr.mxu0 %v1456
        %7187 = vmatpush1.msra.mxu0 %v1455
        %7188 = vmatprep.subr.mxu0 %v1448
        %7189 = vmatpush1.msra.mxu0 %v1447
        %7190 = vmatprep.subr.mxu0 %v1440
        %7191 = vmatpush1.msra.mxu0 %v1439
        %7192 = vmatprep.subr.mxu0 %v1432
        %7193 = vmatpush1.msra.mxu0 %v1431
        %7194 = vmatprep.subr.mxu0 %v1424
        %7195 = vmatpush1.msra.mxu0 %v1423
        %7196 = vmatprep.subr.mxu0 %v1416
        %7197 = vmatpush1.msra.mxu0 %v1415
        %7198 = vmatprep.subr.mxu0 %v1408
        %7199 = vmatpush1.msra.mxu0 %v1407
        %7200 = vmatprep.subr.mxu0 %v1400
        %7201 = vmatpush1.msra.mxu0 %v1399
        %7202 = vmatprep.subr.mxu0 0.0
        %7203 = vmatpush2.msra.mxu0 0.0
        %7204 = vmatprep.subr.mxu0 0.0
        %7205 = vmatpush2.msra.mxu0 0.0
        %7206 = vmatprep.subr.mxu0 0.0
        %7207 = vmatpush2.msra.mxu0 0.0
        %7208 = vmatprep.subr.mxu0 0.0
        %7209 = vmatpush2.msra.mxu0 0.0
        %7210 = vmatprep.subr.mxu0 0.0
        %7211 = vmatpush2.msra.mxu0 0.0
        %7212 = vmatprep.subr.mxu0 0.0
        %7213 = vmatpush2.msra.mxu0 0.0
        %7214 = vmatprep.subr.mxu0 0.0
        %7215 = vmatpush2.msra.mxu0 0.0
        %7216 = vmatprep.subr.mxu0 0.0
        %7217 = vmatpush2.msra.mxu0 0.0
        %7218 = vmatprep.subr.mxu0 0.0
        %7219 = vmatpush2.msra.mxu0 0.0
        %7220 = vmatprep.subr.mxu0 0.0
        %7221 = vmatpush2.msra.mxu0 0.0
        %7222 = vmatprep.subr.mxu0 0.0
        %7223 = vmatpush2.msra.mxu0 0.0
        %7224 = vmatprep.subr.mxu0 0.0
        %7225 = vmatpush2.msra.mxu0 0.0
        %7226 = vmatprep.subr.mxu0 0.0
        %7227 = vmatpush2.msra.mxu0 0.0
        %7228 = vmatprep.subr.mxu0 0.0
        %7229 = vmatpush2.msra.mxu0 0.0
        %7230 = vmatprep.subr.mxu0 0.0
        %7231 = vmatpush2.msra.mxu0 0.0
        %7232 = vmatprep.subr.mxu0 0.0
        %7233 = vmatpush2.msra.mxu0 0.0
        %7234 = vmatprep.mubr.f32.mxu0 0.0
        %7235 = vmatmul.mubr.f32.gmra.mxu0 %v6027
        %v7236 = vpop.f32.mrf.mxu0
        %v7237 = vadd.f32 0.0, %v7236
        %v7238 = vpop.f32.mrf.mxu0
        %v7239 = vadd.f32 0.0, %v7238
        %7240 = vmatprep.mubr.f32.mxu0 0.0
        %7241 = vmatmul.mubr.f32.gmra.mxu0 %v6028
        %v7242 = vpop.f32.mrf.mxu0
        %v7243 = vadd.f32 0.0, %v7242
        %v7244 = vpop.f32.mrf.mxu0
        %v7245 = vadd.f32 0.0, %v7244
        %7246 = vmatprep.mubr.f32.mxu0 0.0
        %7247 = vmatmul.mubr.f32.gmra.mxu0 %v6029
        %v7248 = vpop.f32.mrf.mxu0
        %v7249 = vadd.f32 0.0, %v7248
        %v7250 = vpop.f32.mrf.mxu0
        %v7251 = vadd.f32 0.0, %v7250
        %7252 = vmatprep.mubr.f32.mxu0 0.0
        %7253 = vmatmul.mubr.f32.gmra.mxu0 %v6030
        %v7254 = vpop.f32.mrf.mxu0
        %v7255 = vadd.f32 0.0, %v7254
        %v7256 = vpop.f32.mrf.mxu0
        %v7257 = vadd.f32 0.0, %v7256
        %7258 = vmatprep.mubr.f32.mxu0 0.0
        %7259 = vmatmul.mubr.f32.gmra.mxu0 %v6031
        %v7260 = vpop.f32.mrf.mxu0
        %v7261 = vadd.f32 0.0, %v7260
        %v7262 = vpop.f32.mrf.mxu0
        %v7263 = vadd.f32 0.0, %v7262
        %7264 = vmatprep.mubr.f32.mxu0 0.0
        %7265 = vmatmul.mubr.f32.gmra.mxu0 %v6032
        %v7266 = vpop.f32.mrf.mxu0
        %v7267 = vadd.f32 0.0, %v7266
        %v7268 = vpop.f32.mrf.mxu0
        %v7269 = vadd.f32 0.0, %v7268
        %7270 = vmatprep.mubr.f32.mxu0 0.0
        %7271 = vmatmul.mubr.f32.gmra.mxu0 %v6033
        %v7272 = vpop.f32.mrf.mxu0
        %v7273 = vadd.f32 0.0, %v7272
        %v7274 = vpop.f32.mrf.mxu0
        %v7275 = vadd.f32 0.0, %v7274
        %7276 = vmatprep.mubr.f32.mxu0 0.0
        %7277 = vmatmul.mubr.f32.gmra.mxu0 %v6034
        %v7278 = vpop.f32.mrf.mxu0
        %v7279 = vadd.f32 0.0, %v7278
        %v7280 = vpop.f32.mrf.mxu0
        %v7281 = vadd.f32 0.0, %v7280
        %7282 = vmatprep.mubr.f32.mxu0 0.0
        %7283 = vmatmul.mubr.f32.gmra.mxu0 %v6035
        %v7284 = vpop.f32.mrf.mxu0
        %v7285 = vadd.f32 0.0, %v7284
        %v7286 = vpop.f32.mrf.mxu0
        %v7287 = vadd.f32 0.0, %v7286
        %7288 = vmatprep.mubr.f32.mxu0 0.0
        %7289 = vmatmul.mubr.f32.gmra.mxu0 %v6036
        %v7290 = vpop.f32.mrf.mxu0
        %v7291 = vadd.f32 0.0, %v7290
        %v7292 = vpop.f32.mrf.mxu0
        %v7293 = vadd.f32 0.0, %v7292
        %7294 = vmatprep.mubr.f32.mxu0 0.0
        %7295 = vmatmul.mubr.f32.gmra.mxu0 %v6037
        %v7296 = vpop.f32.mrf.mxu0
        %v7297 = vadd.f32 0.0, %v7296
        %v7298 = vpop.f32.mrf.mxu0
        %v7299 = vadd.f32 0.0, %v7298
        %7300 = vmatprep.mubr.f32.mxu0 0.0
        %7301 = vmatmul.mubr.f32.gmra.mxu0 %v6038
        %v7302 = vpop.f32.mrf.mxu0
        %v7303 = vadd.f32 0.0, %v7302
        %v7304 = vpop.f32.mrf.mxu0
        %v7305 = vadd.f32 0.0, %v7304
        %7306 = vmatprep.mubr.f32.mxu0 0.0
        %7307 = vmatmul.mubr.f32.gmra.mxu0 %v6039
        %v7308 = vpop.f32.mrf.mxu0
        %v7309 = vadd.f32 0.0, %v7308
        %v7310 = vpop.f32.mrf.mxu0
        %v7311 = vadd.f32 0.0, %v7310
        %7312 = vmatprep.mubr.f32.mxu0 0.0
        %7313 = vmatmul.mubr.f32.gmra.mxu0 %v6040
        %v7314 = vpop.f32.mrf.mxu0
        %v7315 = vadd.f32 0.0, %v7314
        %v7316 = vpop.f32.mrf.mxu0
        %v7317 = vadd.f32 0.0, %v7316
        %7318 = vmatprep.mubr.f32.mxu0 0.0
        %7319 = vmatmul.mubr.f32.gmra.mxu0 %v6041
        %v7320 = vpop.f32.mrf.mxu0
        %v7321 = vadd.f32 0.0, %v7320
        %v7322 = vpop.f32.mrf.mxu0
        %v7323 = vadd.f32 0.0, %v7322
        %7324 = vmatprep.mubr.f32.mxu0 0.0
        %7325 = vmatmul.mubr.f32.gmra.mxu0 %v6042
        %v7326 = vpop.f32.mrf.mxu0
        %v7327 = vadd.f32 0.0, %v7326
        %v7328 = vpop.f32.mrf.mxu0
        %v7329 = vadd.f32 0.0, %v7328
        %7330 = vdwg.mxu0
        %v7331 = vmul.f32 %v6110, %v6754
        %v7332 = vmul.f32 %v6112, %v6756
        %v7333 = vmul.f32 %v6271, %v6915
        %v7334 = vmul.f32 %v6273, %v6917
        %v7335 = vmul.f32 %v6432, %v7076
        %v7336 = vmul.f32 %v6434, %v7078
        %v7337 = vmul.f32 %v6593, %v7237
        %v7338 = vmul.f32 %v6595, %v7239
        %v7339 = vmul.f32 %v6116, %v6760
        %v7340 = vmul.f32 %v6118, %v6762
        %v7341 = vmul.f32 %v6277, %v6921
        %v7342 = vmul.f32 %v6279, %v6923
        %v7343 = vmul.f32 %v6438, %v7082
        %v7344 = vmul.f32 %v6440, %v7084
        %v7345 = vmul.f32 %v6599, %v7243
        %v7346 = vmul.f32 %v6601, %v7245
        %v7347 = vmul.f32 %v6122, %v6766
        %v7348 = vmul.f32 %v6124, %v6768
        %v7349 = vmul.f32 %v6283, %v6927
        %v7350 = vmul.f32 %v6285, %v6929
        %v7351 = vmul.f32 %v6444, %v7088
        %v7352 = vmul.f32 %v6446, %v7090
        %v7353 = vmul.f32 %v6605, %v7249
        %v7354 = vmul.f32 %v6607, %v7251
        %v7355 = vmul.f32 %v6128, %v6772
        %v7356 = vmul.f32 %v6130, %v6774
        %v7357 = vmul.f32 %v6289, %v6933
        %v7358 = vmul.f32 %v6291, %v6935
        %v7359 = vmul.f32 %v6450, %v7094
        %v7360 = vmul.f32 %v6452, %v7096
        %v7361 = vmul.f32 %v6611, %v7255
        %v7362 = vmul.f32 %v6613, %v7257
        %v7363 = vmul.f32 %v6134, %v6778
        %v7364 = vmul.f32 %v6136, %v6780
        %v7365 = vmul.f32 %v6295, %v6939
        %v7366 = vmul.f32 %v6297, %v6941
        %v7367 = vmul.f32 %v6456, %v7100
        %v7368 = vmul.f32 %v6458, %v7102
        %v7369 = vmul.f32 %v6617, %v7261
        %v7370 = vmul.f32 %v6619, %v7263
        %v7371 = vmul.f32 %v6140, %v6784
        %v7372 = vmul.f32 %v6142, %v6786
        %v7373 = vmul.f32 %v6301, %v6945
        %v7374 = vmul.f32 %v6303, %v6947
        %v7375 = vmul.f32 %v6462, %v7106
        %v7376 = vmul.f32 %v6464, %v7108
        %v7377 = vmul.f32 %v6623, %v7267
        %v7378 = vmul.f32 %v6625, %v7269
        %v7379 = vmul.f32 %v6146, %v6790
        %v7380 = vmul.f32 %v6148, %v6792
        %v7381 = vmul.f32 %v6307, %v6951
        %v7382 = vmul.f32 %v6309, %v6953
        %v7383 = vmul.f32 %v6468, %v7112
        %v7384 = vmul.f32 %v6470, %v7114
        %v7385 = vmul.f32 %v6629, %v7273
        %v7386 = vmul.f32 %v6631, %v7275
        %v7387 = vmul.f32 %v6152, %v6796
        %v7388 = vmul.f32 %v6154, %v6798
        %v7389 = vmul.f32 %v6313, %v6957
        %v7390 = vmul.f32 %v6315, %v6959
        %v7391 = vmul.f32 %v6474, %v7118
        %v7392 = vmul.f32 %v6476, %v7120
        %v7393 = vmul.f32 %v6635, %v7279
        %v7394 = vmul.f32 %v6637, %v7281
        %v7395 = vmul.f32 %v6158, %v6802
        %v7396 = vmul.f32 %v6160, %v6804
        %v7397 = vmul.f32 %v6319, %v6963
        %v7398 = vmul.f32 %v6321, %v6965
        %v7399 = vmul.f32 %v6480, %v7124
        %v7400 = vmul.f32 %v6482, %v7126
        %v7401 = vmul.f32 %v6641, %v7285
        %v7402 = vmul.f32 %v6643, %v7287
        %v7403 = vmul.f32 %v6164, %v6808
        %v7404 = vmul.f32 %v6166, %v6810
        %v7405 = vmul.f32 %v6325, %v6969
        %v7406 = vmul.f32 %v6327, %v6971
        %v7407 = vmul.f32 %v6486, %v7130
        %v7408 = vmul.f32 %v6488, %v7132
        %v7409 = vmul.f32 %v6647, %v7291
        %v7410 = vmul.f32 %v6649, %v7293
        %v7411 = vmul.f32 %v6170, %v6814
        %v7412 = vmul.f32 %v6172, %v6816
        %v7413 = vmul.f32 %v6331, %v6975
        %v7414 = vmul.f32 %v6333, %v6977
        %v7415 = vmul.f32 %v6492, %v7136
        %v7416 = vmul.f32 %v6494, %v7138
        %v7417 = vmul.f32 %v6653, %v7297
        %v7418 = vmul.f32 %v6655, %v7299
        %v7419 = vmul.f32 %v6176, %v6820
        %v7420 = vmul.f32 %v6178, %v6822
        %v7421 = vmul.f32 %v6337, %v6981
        %v7422 = vmul.f32 %v6339, %v6983
        %v7423 = vmul.f32 %v6498, %v7142
        %v7424 = vmul.f32 %v6500, %v7144
        %v7425 = vmul.f32 %v6659, %v7303
        %v7426 = vmul.f32 %v6661, %v7305
        %v7427 = vmul.f32 %v6182, %v6826
        %v7428 = vmul.f32 %v6184, %v6828
        %v7429 = vmul.f32 %v6343, %v6987
        %v7430 = vmul.f32 %v6345, %v6989
        %v7431 = vmul.f32 %v6504, %v7148
        %v7432 = vmul.f32 %v6506, %v7150
        %v7433 = vmul.f32 %v6665, %v7309
        %v7434 = vmul.f32 %v6667, %v7311
        %v7435 = vmul.f32 %v6188, %v6832
        %v7436 = vmul.f32 %v6190, %v6834
        %v7437 = vmul.f32 %v6349, %v6993
        %v7438 = vmul.f32 %v6351, %v6995
        %v7439 = vmul.f32 %v6510, %v7154
        %v7440 = vmul.f32 %v6512, %v7156
        %v7441 = vmul.f32 %v6671, %v7315
        %v7442 = vmul.f32 %v6673, %v7317
        %v7443 = vmul.f32 %v6194, %v6838
        %v7444 = vmul.f32 %v6196, %v6840
        %v7445 = vmul.f32 %v6355, %v6999
        %v7446 = vmul.f32 %v6357, %v7001
        %v7447 = vmul.f32 %v6516, %v7160
        %v7448 = vmul.f32 %v6518, %v7162
        %v7449 = vmul.f32 %v6677, %v7321
        %v7450 = vmul.f32 %v6679, %v7323
        %v7451 = vmul.f32 %v6200, %v6844
        %v7452 = vmul.f32 %v6202, %v6846
        %v7453 = vmul.f32 %v6361, %v7005
        %v7454 = vmul.f32 %v6363, %v7007
        %v7455 = vmul.f32 %v6522, %v7166
        %v7456 = vmul.f32 %v6524, %v7168
        %v7457 = vmul.f32 %v6683, %v7327
        %v7458 = vmul.f32 %v6685, %v7329
        %v7459 = vadd.f32 %v5737, %v7331
        %v7460 = vadd.f32 %v5738, %v7332
        %v7461 = vadd.f32 %v5739, %v7333
        %v7462 = vadd.f32 %v5740, %v7334
        %v7463 = vadd.f32 %v5741, %v7335
        %v7464 = vadd.f32 %v5742, %v7336
        %v7465 = vadd.f32 %v5743, %v7337
        %v7466 = vadd.f32 %v5744, %v7338
        %v7467 = vadd.f32 %v5745, %v7339
        %v7468 = vadd.f32 %v5746, %v7340
        %v7469 = vadd.f32 %v5747, %v7341
        %v7470 = vadd.f32 %v5748, %v7342
        %v7471 = vadd.f32 %v5749, %v7343
        %v7472 = vadd.f32 %v5750, %v7344
        %v7473 = vadd.f32 %v5751, %v7345
        %v7474 = vadd.f32 %v5752, %v7346
        %v7475 = vadd.f32 %v5753, %v7347
        %v7476 = vadd.f32 %v5754, %v7348
        %v7477 = vadd.f32 %v5755, %v7349
        %v7478 = vadd.f32 %v5756, %v7350
        %v7479 = vadd.f32 %v5757, %v7351
        %v7480 = vadd.f32 %v5758, %v7352
        %v7481 = vadd.f32 %v5759, %v7353
        %v7482 = vadd.f32 %v5760, %v7354
        %v7483 = vadd.f32 %v5761, %v7355
        %v7484 = vadd.f32 %v5762, %v7356
        %v7485 = vadd.f32 %v5763, %v7357
        %v7486 = vadd.f32 %v5764, %v7358
        %v7487 = vadd.f32 %v5765, %v7359
        %v7488 = vadd.f32 %v5766, %v7360
        %v7489 = vadd.f32 %v5767, %v7361
        %v7490 = vadd.f32 %v5768, %v7362
        %v7491 = vadd.f32 %v5769, %v7363
        %v7492 = vadd.f32 %v5770, %v7364
        %v7493 = vadd.f32 %v5771, %v7365
        %v7494 = vadd.f32 %v5772, %v7366
        %v7495 = vadd.f32 %v5773, %v7367
        %v7496 = vadd.f32 %v5774, %v7368
        %v7497 = vadd.f32 %v5775, %v7369
        %v7498 = vadd.f32 %v5776, %v7370
        %v7499 = vadd.f32 %v5777, %v7371
        %v7500 = vadd.f32 %v5778, %v7372
        %v7501 = vadd.f32 %v5779, %v7373
        %v7502 = vadd.f32 %v5780, %v7374
        %v7503 = vadd.f32 %v5781, %v7375
        %v7504 = vadd.f32 %v5782, %v7376
        %v7505 = vadd.f32 %v5783, %v7377
        %v7506 = vadd.f32 %v5784, %v7378
        %v7507 = vadd.f32 %v5785, %v7379
        %v7508 = vadd.f32 %v5786, %v7380
        %v7509 = vadd.f32 %v5787, %v7381
        %v7510 = vadd.f32 %v5788, %v7382
        %v7511 = vadd.f32 %v5789, %v7383
        %v7512 = vadd.f32 %v5790, %v7384
        %v7513 = vadd.f32 %v5791, %v7385
        %v7514 = vadd.f32 %v5792, %v7386
        %v7515 = vadd.f32 %v5793, %v7387
        %v7516 = vadd.f32 %v5794, %v7388
        %v7517 = vadd.f32 %v5795, %v7389
        %v7518 = vadd.f32 %v5796, %v7390
        %v7519 = vadd.f32 %v5797, %v7391
        %v7520 = vadd.f32 %v5798, %v7392
        %v7521 = vadd.f32 %v5799, %v7393
        %v7522 = vadd.f32 %v5800, %v7394
        %v7523 = vadd.f32 %v5801, %v7395
        %v7524 = vadd.f32 %v5802, %v7396
        %v7525 = vadd.f32 %v5803, %v7397
        %v7526 = vadd.f32 %v5804, %v7398
        %v7527 = vadd.f32 %v5805, %v7399
        %v7528 = vadd.f32 %v5806, %v7400
        %v7529 = vadd.f32 %v5807, %v7401
        %v7530 = vadd.f32 %v5808, %v7402
        %v7531 = vadd.f32 %v5809, %v7403
        %v7532 = vadd.f32 %v5810, %v7404
        %v7533 = vadd.f32 %v5811, %v7405
        %v7534 = vadd.f32 %v5812, %v7406
        %v7535 = vadd.f32 %v5813, %v7407
        %v7536 = vadd.f32 %v5814, %v7408
        %v7537 = vadd.f32 %v5815, %v7409
        %v7538 = vadd.f32 %v5816, %v7410
        %v7539 = vadd.f32 %v5817, %v7411
        %v7540 = vadd.f32 %v5818, %v7412
        %v7541 = vadd.f32 %v5819, %v7413
        %v7542 = vadd.f32 %v5820, %v7414
        %v7543 = vadd.f32 %v5821, %v7415
        %v7544 = vadd.f32 %v5822, %v7416
        %v7545 = vadd.f32 %v5823, %v7417
        %v7546 = vadd.f32 %v5824, %v7418
        %v7547 = vadd.f32 %v5825, %v7419
        %v7548 = vadd.f32 %v5826, %v7420
        %v7549 = vadd.f32 %v5827, %v7421
        %v7550 = vadd.f32 %v5828, %v7422
        %v7551 = vadd.f32 %v5829, %v7423
        %v7552 = vadd.f32 %v5830, %v7424
        %v7553 = vadd.f32 %v5831, %v7425
        %v7554 = vadd.f32 %v5832, %v7426
        %v7555 = vadd.f32 %v5833, %v7427
        %v7556 = vadd.f32 %v5834, %v7428
        %v7557 = vadd.f32 %v5835, %v7429
        %v7558 = vadd.f32 %v5836, %v7430
        %v7559 = vadd.f32 %v5837, %v7431
        %v7560 = vadd.f32 %v5838, %v7432
        %v7561 = vadd.f32 %v5839, %v7433
        %v7562 = vadd.f32 %v5840, %v7434
        %v7563 = vadd.f32 %v5841, %v7435
        %v7564 = vadd.f32 %v5842, %v7436
        %v7565 = vadd.f32 %v5843, %v7437
        %v7566 = vadd.f32 %v5844, %v7438
        %v7567 = vadd.f32 %v5845, %v7439
        %v7568 = vadd.f32 %v5846, %v7440
        %v7569 = vadd.f32 %v5847, %v7441
        %v7570 = vadd.f32 %v5848, %v7442
        %v7571 = vadd.f32 %v5849, %v7443
        %v7572 = vadd.f32 %v5850, %v7444
        %v7573 = vadd.f32 %v5851, %v7445
        %v7574 = vadd.f32 %v5852, %v7446
        %v7575 = vadd.f32 %v5853, %v7447
        %v7576 = vadd.f32 %v5854, %v7448
        %v7577 = vadd.f32 %v5855, %v7449
        %v7578 = vadd.f32 %v5856, %v7450
        %v7579 = vadd.f32 %v5857, %v7451
        %v7580 = vadd.f32 %v5858, %v7452
        %v7581 = vadd.f32 %v5859, %v7453
        %v7582 = vadd.f32 %v5860, %v7454
        %v7583 = vadd.f32 %v5861, %v7455
        %v7584 = vadd.f32 %v5862, %v7456
        %v7585 = vadd.f32 %v5863, %v7457
        %v7586 = vadd.f32 %v5864, %v7458
        %v7587 = vmul.f32 %v7459, 0.25
        %v7588 = vmul.f32 %v7460, 0.25
        %v7589 = vmul.f32 %v7461, 0.25
        %v7590 = vmul.f32 %v7462, 0.25
        %v7591 = vmul.f32 %v7463, 0.25
        %v7592 = vmul.f32 %v7464, 0.25
        %v7593 = vmul.f32 %v7465, 0.25
        %v7594 = vmul.f32 %v7466, 0.25
        %v7595 = vmul.f32 %v7467, 0.25
        %v7596 = vmul.f32 %v7468, 0.25
        %v7597 = vmul.f32 %v7469, 0.25
        %v7598 = vmul.f32 %v7470, 0.25
        %v7599 = vmul.f32 %v7471, 0.25
        %v7600 = vmul.f32 %v7472, 0.25
        %v7601 = vmul.f32 %v7473, 0.25
        %v7602 = vmul.f32 %v7474, 0.25
        %v7603 = vmul.f32 %v7475, 0.25
        %v7604 = vmul.f32 %v7476, 0.25
        %v7605 = vmul.f32 %v7477, 0.25
        %v7606 = vmul.f32 %v7478, 0.25
        %v7607 = vmul.f32 %v7479, 0.25
        %v7608 = vmul.f32 %v7480, 0.25
        %v7609 = vmul.f32 %v7481, 0.25
        %v7610 = vmul.f32 %v7482, 0.25
        %v7611 = vmul.f32 %v7483, 0.25
        %v7612 = vmul.f32 %v7484, 0.25
        %v7613 = vmul.f32 %v7485, 0.25
        %v7614 = vmul.f32 %v7486, 0.25
        %v7615 = vmul.f32 %v7487, 0.25
        %v7616 = vmul.f32 %v7488, 0.25
        %v7617 = vmul.f32 %v7489, 0.25
        %v7618 = vmul.f32 %v7490, 0.25
        %v7619 = vmul.f32 %v7491, 0.25
        %v7620 = vmul.f32 %v7492, 0.25
        %v7621 = vmul.f32 %v7493, 0.25
        %v7622 = vmul.f32 %v7494, 0.25
        %v7623 = vmul.f32 %v7495, 0.25
        %v7624 = vmul.f32 %v7496, 0.25
        %v7625 = vmul.f32 %v7497, 0.25
        %v7626 = vmul.f32 %v7498, 0.25
        %v7627 = vmul.f32 %v7499, 0.25
        %v7628 = vmul.f32 %v7500, 0.25
        %v7629 = vmul.f32 %v7501, 0.25
        %v7630 = vmul.f32 %v7502, 0.25
        %v7631 = vmul.f32 %v7503, 0.25
        %v7632 = vmul.f32 %v7504, 0.25
        %v7633 = vmul.f32 %v7505, 0.25
        %v7634 = vmul.f32 %v7506, 0.25
        %v7635 = vmul.f32 %v7507, 0.25
        %v7636 = vmul.f32 %v7508, 0.25
        %v7637 = vmul.f32 %v7509, 0.25
        %v7638 = vmul.f32 %v7510, 0.25
        %v7639 = vmul.f32 %v7511, 0.25
        %v7640 = vmul.f32 %v7512, 0.25
        %v7641 = vmul.f32 %v7513, 0.25
        %v7642 = vmul.f32 %v7514, 0.25
        %v7643 = vmul.f32 %v7515, 0.25
        %v7644 = vmul.f32 %v7516, 0.25
        %v7645 = vmul.f32 %v7517, 0.25
        %v7646 = vmul.f32 %v7518, 0.25
        %v7647 = vmul.f32 %v7519, 0.25
        %v7648 = vmul.f32 %v7520, 0.25
        %v7649 = vmul.f32 %v7521, 0.25
        %v7650 = vmul.f32 %v7522, 0.25
        %v7651 = vmul.f32 %v7523, 0.25
        %v7652 = vmul.f32 %v7524, 0.25
        %v7653 = vmul.f32 %v7525, 0.25
        %v7654 = vmul.f32 %v7526, 0.25
        %v7655 = vmul.f32 %v7527, 0.25
        %v7656 = vmul.f32 %v7528, 0.25
        %v7657 = vmul.f32 %v7529, 0.25
        %v7658 = vmul.f32 %v7530, 0.25
        %v7659 = vmul.f32 %v7531, 0.25
        %v7660 = vmul.f32 %v7532, 0.25
        %v7661 = vmul.f32 %v7533, 0.25
        %v7662 = vmul.f32 %v7534, 0.25
        %v7663 = vmul.f32 %v7535, 0.25
        %v7664 = vmul.f32 %v7536, 0.25
        %v7665 = vmul.f32 %v7537, 0.25
        %v7666 = vmul.f32 %v7538, 0.25
        %v7667 = vmul.f32 %v7539, 0.25
        %v7668 = vmul.f32 %v7540, 0.25
        %v7669 = vmul.f32 %v7541, 0.25
        %v7670 = vmul.f32 %v7542, 0.25
        %v7671 = vmul.f32 %v7543, 0.25
        %v7672 = vmul.f32 %v7544, 0.25
        %v7673 = vmul.f32 %v7545, 0.25
        %v7674 = vmul.f32 %v7546, 0.25
        %v7675 = vmul.f32 %v7547, 0.25
        %v7676 = vmul.f32 %v7548, 0.25
        %v7677 = vmul.f32 %v7549, 0.25
        %v7678 = vmul.f32 %v7550, 0.25
        %v7679 = vmul.f32 %v7551, 0.25
        %v7680 = vmul.f32 %v7552, 0.25
        %v7681 = vmul.f32 %v7553, 0.25
        %v7682 = vmul.f32 %v7554, 0.25
        %v7683 = vmul.f32 %v7555, 0.25
        %v7684 = vmul.f32 %v7556, 0.25
        %v7685 = vmul.f32 %v7557, 0.25
        %v7686 = vmul.f32 %v7558, 0.25
        %v7687 = vmul.f32 %v7559, 0.25
        %v7688 = vmul.f32 %v7560, 0.25
        %v7689 = vmul.f32 %v7561, 0.25
        %v7690 = vmul.f32 %v7562, 0.25
        %v7691 = vmul.f32 %v7563, 0.25
        %v7692 = vmul.f32 %v7564, 0.25
        %v7693 = vmul.f32 %v7565, 0.25
        %v7694 = vmul.f32 %v7566, 0.25
        %v7695 = vmul.f32 %v7567, 0.25
        %v7696 = vmul.f32 %v7568, 0.25
        %v7697 = vmul.f32 %v7569, 0.25
        %v7698 = vmul.f32 %v7570, 0.25
        %v7699 = vmul.f32 %v7571, 0.25
        %v7700 = vmul.f32 %v7572, 0.25
        %v7701 = vmul.f32 %v7573, 0.25
        %v7702 = vmul.f32 %v7574, 0.25
        %v7703 = vmul.f32 %v7575, 0.25
        %v7704 = vmul.f32 %v7576, 0.25
        %v7705 = vmul.f32 %v7577, 0.25
        %v7706 = vmul.f32 %v7578, 0.25
        %v7707 = vmul.f32 %v7579, 0.25
        %v7708 = vmul.f32 %v7580, 0.25
        %v7709 = vmul.f32 %v7581, 0.25
        %v7710 = vmul.f32 %v7582, 0.25
        %v7711 = vmul.f32 %v7583, 0.25
        %v7712 = vmul.f32 %v7584, 0.25
        %v7713 = vmul.f32 %v7585, 0.25
        %v7714 = vmul.f32 %v7586, 0.25
        %7715 = vst [vmem:[%s417] sm:$0xff] %v7587
        %7716 = vst [vmem:[%s417 + $0x8] sm:$0xff] %v7588
        %7717 = vst [vmem:[%s417 + $0x10] sm:$0xff] %v7589
        %7718 = vst [vmem:[%s417 + $0x18] sm:$0xff] %v7590
        %7719 = vst [vmem:[%s417 + $0x20] sm:$0xff] %v7591
        %7720 = vst [vmem:[%s417 + $0x28] sm:$0xff] %v7592
        %7721 = vst [vmem:[%s417 + $0x30] sm:$0xff] %v7593
        %7722 = vst [vmem:[%s417 + $0x38] sm:$0xff] %v7594
        %7723 = vst [vmem:[%s417 + $0x40] sm:$0xff] %v7595
        %7724 = vst [vmem:[%s417 + $0x48] sm:$0xff] %v7596
        %7725 = vst [vmem:[%s417 + $0x50] sm:$0xff] %v7597
        %7726 = vst [vmem:[%s417 + $0x58] sm:$0xff] %v7598
        %7727 = vst [vmem:[%s417 + $0x60] sm:$0xff] %v7599
        %7728 = vst [vmem:[%s417 + $0x68] sm:$0xff] %v7600
        %7729 = vst [vmem:[%s417 + $0x70] sm:$0xff] %v7601
        %7730 = vst [vmem:[%s417 + $0x78] sm:$0xff] %v7602
        %7731 = vst [vmem:[%s417 + $0x80] sm:$0xff] %v7603
        %7732 = vst [vmem:[%s417 + $0x88] sm:$0xff] %v7604
        %7733 = vst [vmem:[%s417 + $0x90] sm:$0xff] %v7605
        %7734 = vst [vmem:[%s417 + $0x98] sm:$0xff] %v7606
        %7735 = vst [vmem:[%s417 + $0xa0] sm:$0xff] %v7607
        %7736 = vst [vmem:[%s417 + $0xa8] sm:$0xff] %v7608
        %7737 = vst [vmem:[%s417 + $0xb0] sm:$0xff] %v7609
        %7738 = vst [vmem:[%s417 + $0xb8] sm:$0xff] %v7610
        %7739 = vst [vmem:[%s417 + $0xc0] sm:$0xff] %v7611
        %7740 = vst [vmem:[%s417 + $0xc8] sm:$0xff] %v7612
        %7741 = vst [vmem:[%s417 + $0xd0] sm:$0xff] %v7613
        %7742 = vst [vmem:[%s417 + $0xd8] sm:$0xff] %v7614
        %7743 = vst [vmem:[%s417 + $0xe0] sm:$0xff] %v7615
        %7744 = vst [vmem:[%s417 + $0xe8] sm:$0xff] %v7616
        %7745 = vst [vmem:[%s417 + $0xf0] sm:$0xff] %v7617
        %7746 = vst [vmem:[%s417 + $0xf8] sm:$0xff] %v7618
        %7747 = vst [vmem:[%s417 + $0x100] sm:$0xff] %v7619
        %7748 = vst [vmem:[%s417 + $0x108] sm:$0xff] %v7620
        %7749 = vst [vmem:[%s417 + $0x110] sm:$0xff] %v7621
        %7750 = vst [vmem:[%s417 + $0x118] sm:$0xff] %v7622
        %7751 = vst [vmem:[%s417 + $0x120] sm:$0xff] %v7623
        %7752 = vst [vmem:[%s417 + $0x128] sm:$0xff] %v7624
        %7753 = vst [vmem:[%s417 + $0x130] sm:$0xff] %v7625
        %7754 = vst [vmem:[%s417 + $0x138] sm:$0xff] %v7626
        %7755 = vst [vmem:[%s417 + $0x140] sm:$0xff] %v7627
        %7756 = vst [vmem:[%s417 + $0x148] sm:$0xff] %v7628
        %7757 = vst [vmem:[%s417 + $0x150] sm:$0xff] %v7629
        %7758 = vst [vmem:[%s417 + $0x158] sm:$0xff] %v7630
        %7759 = vst [vmem:[%s417 + $0x160] sm:$0xff] %v7631
        %7760 = vst [vmem:[%s417 + $0x168] sm:$0xff] %v7632
        %7761 = vst [vmem:[%s417 + $0x170] sm:$0xff] %v7633
        %7762 = vst [vmem:[%s417 + $0x178] sm:$0xff] %v7634
        %7763 = vst [vmem:[%s417 + $0x180] sm:$0xff] %v7635
        %7764 = vst [vmem:[%s417 + $0x188] sm:$0xff] %v7636
        %7765 = vst [vmem:[%s417 + $0x190] sm:$0xff] %v7637
        %7766 = vst [vmem:[%s417 + $0x198] sm:$0xff] %v7638
        %7767 = vst [vmem:[%s417 + $0x1a0] sm:$0xff] %v7639
        %7768 = vst [vmem:[%s417 + $0x1a8] sm:$0xff] %v7640
        %7769 = vst [vmem:[%s417 + $0x1b0] sm:$0xff] %v7641
        %7770 = vst [vmem:[%s417 + $0x1b8] sm:$0xff] %v7642
        %7771 = vst [vmem:[%s417 + $0x1c0] sm:$0xff] %v7643
        %7772 = vst [vmem:[%s417 + $0x1c8] sm:$0xff] %v7644
        %7773 = vst [vmem:[%s417 + $0x1d0] sm:$0xff] %v7645
        %7774 = vst [vmem:[%s417 + $0x1d8] sm:$0xff] %v7646
        %7775 = vst [vmem:[%s417 + $0x1e0] sm:$0xff] %v7647
        %7776 = vst [vmem:[%s417 + $0x1e8] sm:$0xff] %v7648
        %7777 = vst [vmem:[%s417 + $0x1f0] sm:$0xff] %v7649
        %7778 = vst [vmem:[%s417 + $0x1f8] sm:$0xff] %v7650
        %7779 = vst [vmem:[%s417 + $0x200] sm:$0xff] %v7651
        %7780 = vst [vmem:[%s417 + $0x208] sm:$0xff] %v7652
        %7781 = vst [vmem:[%s417 + $0x210] sm:$0xff] %v7653
        %7782 = vst [vmem:[%s417 + $0x218] sm:$0xff] %v7654
        %7783 = vst [vmem:[%s417 + $0x220] sm:$0xff] %v7655
        %7784 = vst [vmem:[%s417 + $0x228] sm:$0xff] %v7656
        %7785 = vst [vmem:[%s417 + $0x230] sm:$0xff] %v7657
        %7786 = vst [vmem:[%s417 + $0x238] sm:$0xff] %v7658
        %7787 = vst [vmem:[%s417 + $0x240] sm:$0xff] %v7659
        %7788 = vst [vmem:[%s417 + $0x248] sm:$0xff] %v7660
        %7789 = vst [vmem:[%s417 + $0x250] sm:$0xff] %v7661
        %7790 = vst [vmem:[%s417 + $0x258] sm:$0xff] %v7662
        %7791 = vst [vmem:[%s417 + $0x260] sm:$0xff] %v7663
        %7792 = vst [vmem:[%s417 + $0x268] sm:$0xff] %v7664
        %7793 = vst [vmem:[%s417 + $0x270] sm:$0xff] %v7665
        %7794 = vst [vmem:[%s417 + $0x278] sm:$0xff] %v7666
        %7795 = vst [vmem:[%s417 + $0x280] sm:$0xff] %v7667
        %7796 = vst [vmem:[%s417 + $0x288] sm:$0xff] %v7668
        %7797 = vst [vmem:[%s417 + $0x290] sm:$0xff] %v7669
        %7798 = vst [vmem:[%s417 + $0x298] sm:$0xff] %v7670
        %7799 = vst [vmem:[%s417 + $0x2a0] sm:$0xff] %v7671
        %7800 = vst [vmem:[%s417 + $0x2a8] sm:$0xff] %v7672
        %7801 = vst [vmem:[%s417 + $0x2b0] sm:$0xff] %v7673
        %7802 = vst [vmem:[%s417 + $0x2b8] sm:$0xff] %v7674
        %7803 = vst [vmem:[%s417 + $0x2c0] sm:$0xff] %v7675
        %7804 = vst [vmem:[%s417 + $0x2c8] sm:$0xff] %v7676
        %7805 = vst [vmem:[%s417 + $0x2d0] sm:$0xff] %v7677
        %7806 = vst [vmem:[%s417 + $0x2d8] sm:$0xff] %v7678
        %7807 = vst [vmem:[%s417 + $0x2e0] sm:$0xff] %v7679
        %7808 = vst [vmem:[%s417 + $0x2e8] sm:$0xff] %v7680
        %7809 = vst [vmem:[%s417 + $0x2f0] sm:$0xff] %v7681
        %7810 = vst [vmem:[%s417 + $0x2f8] sm:$0xff] %v7682
        %7811 = vst [vmem:[%s417 + $0x300] sm:$0xff] %v7683
        %7812 = vst [vmem:[%s417 + $0x308] sm:$0xff] %v7684
        %7813 = vst [vmem:[%s417 + $0x310] sm:$0xff] %v7685
        %7814 = vst [vmem:[%s417 + $0x318] sm:$0xff] %v7686
        %7815 = vst [vmem:[%s417 + $0x320] sm:$0xff] %v7687
        %7816 = vst [vmem:[%s417 + $0x328] sm:$0xff] %v7688
        %7817 = vst [vmem:[%s417 + $0x330] sm:$0xff] %v7689
        %7818 = vst [vmem:[%s417 + $0x338] sm:$0xff] %v7690
        %7819 = vst [vmem:[%s417 + $0x340] sm:$0xff] %v7691
        %7820 = vst [vmem:[%s417 + $0x348] sm:$0xff] %v7692
        %7821 = vst [vmem:[%s417 + $0x350] sm:$0xff] %v7693
        %7822 = vst [vmem:[%s417 + $0x358] sm:$0xff] %v7694
        %7823 = vst [vmem:[%s417 + $0x360] sm:$0xff] %v7695
        %7824 = vst [vmem:[%s417 + $0x368] sm:$0xff] %v7696
        %7825 = vst [vmem:[%s417 + $0x370] sm:$0xff] %v7697
        %7826 = vst [vmem:[%s417 + $0x378] sm:$0xff] %v7698
        %7827 = vst [vmem:[%s417 + $0x380] sm:$0xff] %v7699
        %7828 = vst [vmem:[%s417 + $0x388] sm:$0xff] %v7700
        %7829 = vst [vmem:[%s417 + $0x390] sm:$0xff] %v7701
        %7830 = vst [vmem:[%s417 + $0x398] sm:$0xff] %v7702
        %7831 = vst [vmem:[%s417 + $0x3a0] sm:$0xff] %v7703
        %7832 = vst [vmem:[%s417 + $0x3a8] sm:$0xff] %v7704
        %7833 = vst [vmem:[%s417 + $0x3b0] sm:$0xff] %v7705
        %7834 = vst [vmem:[%s417 + $0x3b8] sm:$0xff] %v7706
        %7835 = vst [vmem:[%s417 + $0x3c0] sm:$0xff] %v7707
        %7836 = vst [vmem:[%s417 + $0x3c8] sm:$0xff] %v7708
        %7837 = vst [vmem:[%s417 + $0x3d0] sm:$0xff] %v7709
        %7838 = vst [vmem:[%s417 + $0x3d8] sm:$0xff] %v7710
        %7839 = vst [vmem:[%s417 + $0x3e0] sm:$0xff] %v7711
        %7840 = vst [vmem:[%s417 + $0x3e8] sm:$0xff] %v7712
        %7841 = vst [vmem:[%s417 + $0x3f0] sm:$0xff] %v7713
        %7842 = vst [vmem:[%s417 + $0x3f8] sm:$0xff] %v7714
        %v7843 = vld [vmem:[#allocation10] sm:$0xff]
        %v7844 = vld [vmem:[#allocation10 + $0x8] sm:$0xff]
        %v7845 = vld [vmem:[#allocation10 + $0x10] sm:$0xff]
        %v7846 = vld [vmem:[#allocation10 + $0x18] sm:$0xff]
        %v7847 = vld [vmem:[#allocation10 + $0x20] sm:$0xff]
        %v7848 = vld [vmem:[#allocation10 + $0x28] sm:$0xff]
        %v7849 = vld [vmem:[#allocation10 + $0x30] sm:$0xff]
        %v7850 = vld [vmem:[#allocation10 + $0x38] sm:$0xff]
        %v7851 = vld [vmem:[#allocation10 + $0x40] sm:$0xff]
        %v7852 = vld [vmem:[#allocation10 + $0x48] sm:$0xff]
        %v7853 = vld [vmem:[#allocation10 + $0x50] sm:$0xff]
        %v7854 = vld [vmem:[#allocation10 + $0x58] sm:$0xff]
        %v7855 = vld [vmem:[#allocation10 + $0x60] sm:$0xff]
        %v7856 = vld [vmem:[#allocation10 + $0x68] sm:$0xff]
        %v7857 = vld [vmem:[#allocation10 + $0x70] sm:$0xff]
        %v7858 = vld [vmem:[#allocation10 + $0x78] sm:$0xff]
        %v7859 = vld [vmem:[#allocation10 + $0x80] sm:$0xff]
        %v7860 = vld [vmem:[#allocation10 + $0x88] sm:$0xff]
        %v7861 = vld [vmem:[#allocation10 + $0x90] sm:$0xff]
        %v7862 = vld [vmem:[#allocation10 + $0x98] sm:$0xff]
        %v7863 = vld [vmem:[#allocation10 + $0xa0] sm:$0xff]
        %v7864 = vld [vmem:[#allocation10 + $0xa8] sm:$0xff]
        %v7865 = vld [vmem:[#allocation10 + $0xb0] sm:$0xff]
        %v7866 = vld [vmem:[#allocation10 + $0xb8] sm:$0xff]
        %v7867 = vld [vmem:[#allocation10 + $0xc0] sm:$0xff]
        %v7868 = vld [vmem:[#allocation10 + $0xc8] sm:$0xff]
        %v7869 = vld [vmem:[#allocation10 + $0xd0] sm:$0xff]
        %v7870 = vld [vmem:[#allocation10 + $0xd8] sm:$0xff]
        %v7871 = vld [vmem:[#allocation10 + $0xe0] sm:$0xff]
        %v7872 = vld [vmem:[#allocation10 + $0xe8] sm:$0xff]
        %v7873 = vld [vmem:[#allocation10 + $0xf0] sm:$0xff]
        %v7874 = vld [vmem:[#allocation10 + $0xf8] sm:$0xff]
        %v7875 = vld [vmem:[#allocation10 + $0x100] sm:$0xff]
        %v7876 = vld [vmem:[#allocation10 + $0x108] sm:$0xff]
        %v7877 = vld [vmem:[#allocation10 + $0x110] sm:$0xff]
        %v7878 = vld [vmem:[#allocation10 + $0x118] sm:$0xff]
        %v7879 = vld [vmem:[#allocation10 + $0x120] sm:$0xff]
        %v7880 = vld [vmem:[#allocation10 + $0x128] sm:$0xff]
        %v7881 = vld [vmem:[#allocation10 + $0x130] sm:$0xff]
        %v7882 = vld [vmem:[#allocation10 + $0x138] sm:$0xff]
        %v7883 = vld [vmem:[#allocation10 + $0x140] sm:$0xff]
        %v7884 = vld [vmem:[#allocation10 + $0x148] sm:$0xff]
        %v7885 = vld [vmem:[#allocation10 + $0x150] sm:$0xff]
        %v7886 = vld [vmem:[#allocation10 + $0x158] sm:$0xff]
        %v7887 = vld [vmem:[#allocation10 + $0x160] sm:$0xff]
        %v7888 = vld [vmem:[#allocation10 + $0x168] sm:$0xff]
        %v7889 = vld [vmem:[#allocation10 + $0x170] sm:$0xff]
        %v7890 = vld [vmem:[#allocation10 + $0x178] sm:$0xff]
        %v7891 = vld [vmem:[#allocation10 + $0x180] sm:$0xff]
        %v7892 = vld [vmem:[#allocation10 + $0x188] sm:$0xff]
        %v7893 = vld [vmem:[#allocation10 + $0x190] sm:$0xff]
        %v7894 = vld [vmem:[#allocation10 + $0x198] sm:$0xff]
        %v7895 = vld [vmem:[#allocation10 + $0x1a0] sm:$0xff]
        %v7896 = vld [vmem:[#allocation10 + $0x1a8] sm:$0xff]
        %v7897 = vld [vmem:[#allocation10 + $0x1b0] sm:$0xff]
        %v7898 = vld [vmem:[#allocation10 + $0x1b8] sm:$0xff]
        %v7899 = vld [vmem:[#allocation10 + $0x1c0] sm:$0xff]
        %v7900 = vld [vmem:[#allocation10 + $0x1c8] sm:$0xff]
        %v7901 = vld [vmem:[#allocation10 + $0x1d0] sm:$0xff]
        %v7902 = vld [vmem:[#allocation10 + $0x1d8] sm:$0xff]
        %v7903 = vld [vmem:[#allocation10 + $0x1e0] sm:$0xff]
        %v7904 = vld [vmem:[#allocation10 + $0x1e8] sm:$0xff]
        %v7905 = vld [vmem:[#allocation10 + $0x1f0] sm:$0xff]
        %v7906 = vld [vmem:[#allocation10 + $0x1f8] sm:$0xff]
        %v7907 = vld [vmem:[#allocation10 + $0x200] sm:$0xff]
        %v7908 = vld [vmem:[#allocation10 + $0x208] sm:$0xff]
        %v7909 = vld [vmem:[#allocation10 + $0x210] sm:$0xff]
        %v7910 = vld [vmem:[#allocation10 + $0x218] sm:$0xff]
        %v7911 = vld [vmem:[#allocation10 + $0x220] sm:$0xff]
        %v7912 = vld [vmem:[#allocation10 + $0x228] sm:$0xff]
        %v7913 = vld [vmem:[#allocation10 + $0x230] sm:$0xff]
        %v7914 = vld [vmem:[#allocation10 + $0x238] sm:$0xff]
        %v7915 = vld [vmem:[#allocation10 + $0x240] sm:$0xff]
        %v7916 = vld [vmem:[#allocation10 + $0x248] sm:$0xff]
        %v7917 = vld [vmem:[#allocation10 + $0x250] sm:$0xff]
        %v7918 = vld [vmem:[#allocation10 + $0x258] sm:$0xff]
        %v7919 = vld [vmem:[#allocation10 + $0x260] sm:$0xff]
        %v7920 = vld [vmem:[#allocation10 + $0x268] sm:$0xff]
        %v7921 = vld [vmem:[#allocation10 + $0x270] sm:$0xff]
        %v7922 = vld [vmem:[#allocation10 + $0x278] sm:$0xff]
        %v7923 = vld [vmem:[#allocation10 + $0x280] sm:$0xff]
        %v7924 = vld [vmem:[#allocation10 + $0x288] sm:$0xff]
        %v7925 = vld [vmem:[#allocation10 + $0x290] sm:$0xff]
        %v7926 = vld [vmem:[#allocation10 + $0x298] sm:$0xff]
        %v7927 = vld [vmem:[#allocation10 + $0x2a0] sm:$0xff]
        %v7928 = vld [vmem:[#allocation10 + $0x2a8] sm:$0xff]
        %v7929 = vld [vmem:[#allocation10 + $0x2b0] sm:$0xff]
        %v7930 = vld [vmem:[#allocation10 + $0x2b8] sm:$0xff]
        %v7931 = vld [vmem:[#allocation10 + $0x2c0] sm:$0xff]
        %v7932 = vld [vmem:[#allocation10 + $0x2c8] sm:$0xff]
        %v7933 = vld [vmem:[#allocation10 + $0x2d0] sm:$0xff]
        %v7934 = vld [vmem:[#allocation10 + $0x2d8] sm:$0xff]
        %v7935 = vld [vmem:[#allocation10 + $0x2e0] sm:$0xff]
        %v7936 = vld [vmem:[#allocation10 + $0x2e8] sm:$0xff]
        %v7937 = vld [vmem:[#allocation10 + $0x2f0] sm:$0xff]
        %v7938 = vld [vmem:[#allocation10 + $0x2f8] sm:$0xff]
        %v7939 = vld [vmem:[#allocation10 + $0x300] sm:$0xff]
        %v7940 = vld [vmem:[#allocation10 + $0x308] sm:$0xff]
        %v7941 = vld [vmem:[#allocation10 + $0x310] sm:$0xff]
        %v7942 = vld [vmem:[#allocation10 + $0x318] sm:$0xff]
        %v7943 = vld [vmem:[#allocation10 + $0x320] sm:$0xff]
        %v7944 = vld [vmem:[#allocation10 + $0x328] sm:$0xff]
        %v7945 = vld [vmem:[#allocation10 + $0x330] sm:$0xff]
        %v7946 = vld [vmem:[#allocation10 + $0x338] sm:$0xff]
        %v7947 = vld [vmem:[#allocation10 + $0x340] sm:$0xff]
        %v7948 = vld [vmem:[#allocation10 + $0x348] sm:$0xff]
        %v7949 = vld [vmem:[#allocation10 + $0x350] sm:$0xff]
        %v7950 = vld [vmem:[#allocation10 + $0x358] sm:$0xff]
        %v7951 = vld [vmem:[#allocation10 + $0x360] sm:$0xff]
        %v7952 = vld [vmem:[#allocation10 + $0x368] sm:$0xff]
        %v7953 = vld [vmem:[#allocation10 + $0x370] sm:$0xff]
        %v7954 = vld [vmem:[#allocation10 + $0x378] sm:$0xff]
        %v7955 = vld [vmem:[#allocation10 + $0x380] sm:$0xff]
        %v7956 = vld [vmem:[#allocation10 + $0x388] sm:$0xff]
        %v7957 = vld [vmem:[#allocation10 + $0x390] sm:$0xff]
        %v7958 = vld [vmem:[#allocation10 + $0x398] sm:$0xff]
        %v7959 = vld [vmem:[#allocation10 + $0x3a0] sm:$0xff]
        %v7960 = vld [vmem:[#allocation10 + $0x3a8] sm:$0xff]
        %v7961 = vld [vmem:[#allocation10 + $0x3b0] sm:$0xff]
        %v7962 = vld [vmem:[#allocation10 + $0x3b8] sm:$0xff]
        %v7963 = vld [vmem:[#allocation10 + $0x3c0] sm:$0xff]
        %v7964 = vld [vmem:[#allocation10 + $0x3c8] sm:$0xff]
        %v7965 = vld [vmem:[#allocation10 + $0x3d0] sm:$0xff]
        %v7966 = vld [vmem:[#allocation10 + $0x3d8] sm:$0xff]
        %v7967 = vld [vmem:[#allocation10 + $0x3e0] sm:$0xff]
        %v7968 = vld [vmem:[#allocation10 + $0x3e8] sm:$0xff]
        %v7969 = vld [vmem:[#allocation10 + $0x3f0] sm:$0xff]
        %v7970 = vld [vmem:[#allocation10 + $0x3f8] sm:$0xff]
        %v7971 = vld [vmem:[%s6] sm:$0x1]
        %v7973 = vlaneseq
        %v7974 = vshrl.u32 %v7973, 7
        %v7975 = vsub.s32 0, %v7974
        %v7976 = vrot.slane %v7971, %v7975
        %7978 = vmatprep.subr.mxu0 0.0
        %7979 = vmatpush1.msra.mxu0 %v7858
        %7980 = vmatprep.subr.mxu0 0.0
        %7981 = vmatpush1.msra.mxu0 %v7857
        %7982 = vmatprep.subr.mxu0 0.0
        %7983 = vmatpush1.msra.mxu0 %v7856
        %7984 = vmatprep.subr.mxu0 0.0
        %7985 = vmatpush1.msra.mxu0 %v7855
        %7986 = vmatprep.subr.mxu0 0.0
        %7987 = vmatpush1.msra.mxu0 %v7854
        %7988 = vmatprep.subr.mxu0 0.0
        %7989 = vmatpush1.msra.mxu0 %v7853
        %7990 = vmatprep.subr.mxu0 0.0
        %7991 = vmatpush1.msra.mxu0 %v7852
        %7992 = vmatprep.subr.mxu0 0.0
        %7993 = vmatpush1.msra.mxu0 %v7851
        %7994 = vmatprep.subr.mxu0 0.0
        %7995 = vmatpush1.msra.mxu0 %v7850
        %7996 = vmatprep.subr.mxu0 0.0
        %7997 = vmatpush1.msra.mxu0 %v7849
        %7998 = vmatprep.subr.mxu0 0.0
        %7999 = vmatpush1.msra.mxu0 %v7848
        %8000 = vmatprep.subr.mxu0 0.0
        %8001 = vmatpush1.msra.mxu0 %v7847
        %8002 = vmatprep.subr.mxu0 0.0
        %8003 = vmatpush1.msra.mxu0 %v7846
        %8004 = vmatprep.subr.mxu0 0.0
        %8005 = vmatpush1.msra.mxu0 %v7845
        %8006 = vmatprep.subr.mxu0 0.0
        %8007 = vmatpush1.msra.mxu0 %v7844
        %8008 = vmatprep.subr.mxu0 0.0
        %8009 = vmatpush1.msra.mxu0 %v7843
        %8010 = vmatprep.subr.mxu0 0.0
        %8011 = vmatpush2.msra.mxu0 %v7874
        %8012 = vmatprep.subr.mxu0 0.0
        %8013 = vmatpush2.msra.mxu0 %v7873
        %8014 = vmatprep.subr.mxu0 0.0
        %8015 = vmatpush2.msra.mxu0 %v7872
        %8016 = vmatprep.subr.mxu0 0.0
        %8017 = vmatpush2.msra.mxu0 %v7871
        %8018 = vmatprep.subr.mxu0 0.0
        %8019 = vmatpush2.msra.mxu0 %v7870
        %8020 = vmatprep.subr.mxu0 0.0
        %8021 = vmatpush2.msra.mxu0 %v7869
        %8022 = vmatprep.subr.mxu0 0.0
        %8023 = vmatpush2.msra.mxu0 %v7868
        %8024 = vmatprep.subr.mxu0 0.0
        %8025 = vmatpush2.msra.mxu0 %v7867
        %8026 = vmatprep.subr.mxu0 0.0
        %8027 = vmatpush2.msra.mxu0 %v7866
        %8028 = vmatprep.subr.mxu0 0.0
        %8029 = vmatpush2.msra.mxu0 %v7865
        %8030 = vmatprep.subr.mxu0 0.0
        %8031 = vmatpush2.msra.mxu0 %v7864
        %8032 = vmatprep.subr.mxu0 0.0
        %8033 = vmatpush2.msra.mxu0 %v7863
        %8034 = vmatprep.subr.mxu0 0.0
        %8035 = vmatpush2.msra.mxu0 %v7862
        %8036 = vmatprep.subr.mxu0 0.0
        %8037 = vmatpush2.msra.mxu0 %v7861
        %8038 = vmatprep.subr.mxu0 0.0
        %8039 = vmatpush2.msra.mxu0 %v7860
        %8040 = vmatprep.subr.mxu0 0.0
        %8041 = vmatpush2.msra.mxu0 %v7859
        %8042 = vmatprep.mubr.f32.mxu0 %v7588
        %8043 = vmatmul.mubr.f32.gmra.mxu0 %v7587
        %v8044 = vpop.f32.mrf.mxu0
        %v8045 = vadd.f32 %v7976, %v8044
        %v8046 = vpop.f32.mrf.mxu0
        %8047 = vmatprep.mubr.f32.mxu0 %v7596
        %8048 = vmatmul.mubr.f32.gmra.mxu0 %v7595
        %v8049 = vpop.f32.mrf.mxu0
        %v8050 = vadd.f32 %v7976, %v8049
        %v8051 = vpop.f32.mrf.mxu0
        %8052 = vmatprep.mubr.f32.mxu0 %v7604
        %8053 = vmatmul.mubr.f32.gmra.mxu0 %v7603
        %v8054 = vpop.f32.mrf.mxu0
        %v8055 = vadd.f32 %v7976, %v8054
        %v8056 = vpop.f32.mrf.mxu0
        %8057 = vmatprep.mubr.f32.mxu0 %v7612
        %8058 = vmatmul.mubr.f32.gmra.mxu0 %v7611
        %v8059 = vpop.f32.mrf.mxu0
        %v8060 = vadd.f32 %v7976, %v8059
        %v8061 = vpop.f32.mrf.mxu0
        %8062 = vmatprep.mubr.f32.mxu0 %v7620
        %8063 = vmatmul.mubr.f32.gmra.mxu0 %v7619
        %v8064 = vpop.f32.mrf.mxu0
        %v8065 = vadd.f32 %v7976, %v8064
        %v8066 = vpop.f32.mrf.mxu0
        %8067 = vmatprep.mubr.f32.mxu0 %v7628
        %8068 = vmatmul.mubr.f32.gmra.mxu0 %v7627
        %v8069 = vpop.f32.mrf.mxu0
        %v8070 = vadd.f32 %v7976, %v8069
        %v8071 = vpop.f32.mrf.mxu0
        %8072 = vmatprep.mubr.f32.mxu0 %v7636
        %8073 = vmatmul.mubr.f32.gmra.mxu0 %v7635
        %v8074 = vpop.f32.mrf.mxu0
        %v8075 = vadd.f32 %v7976, %v8074
        %v8076 = vpop.f32.mrf.mxu0
        %8077 = vmatprep.mubr.f32.mxu0 %v7644
        %8078 = vmatmul.mubr.f32.gmra.mxu0 %v7643
        %v8079 = vpop.f32.mrf.mxu0
        %v8080 = vadd.f32 %v7976, %v8079
        %v8081 = vpop.f32.mrf.mxu0
        %8082 = vmatprep.mubr.f32.mxu0 %v7652
        %8083 = vmatmul.mubr.f32.gmra.mxu0 %v7651
        %v8084 = vpop.f32.mrf.mxu0
        %v8085 = vadd.f32 %v7976, %v8084
        %v8086 = vpop.f32.mrf.mxu0
        %8087 = vmatprep.mubr.f32.mxu0 %v7660
        %8088 = vmatmul.mubr.f32.gmra.mxu0 %v7659
        %v8089 = vpop.f32.mrf.mxu0
        %v8090 = vadd.f32 %v7976, %v8089
        %v8091 = vpop.f32.mrf.mxu0
        %8092 = vmatprep.mubr.f32.mxu0 %v7668
        %8093 = vmatmul.mubr.f32.gmra.mxu0 %v7667
        %v8094 = vpop.f32.mrf.mxu0
        %v8095 = vadd.f32 %v7976, %v8094
        %v8096 = vpop.f32.mrf.mxu0
        %8097 = vmatprep.mubr.f32.mxu0 %v7676
        %8098 = vmatmul.mubr.f32.gmra.mxu0 %v7675
        %v8099 = vpop.f32.mrf.mxu0
        %v8100 = vadd.f32 %v7976, %v8099
        %v8101 = vpop.f32.mrf.mxu0
        %8102 = vmatprep.mubr.f32.mxu0 %v7684
        %8103 = vmatmul.mubr.f32.gmra.mxu0 %v7683
        %v8104 = vpop.f32.mrf.mxu0
        %v8105 = vadd.f32 %v7976, %v8104
        %v8106 = vpop.f32.mrf.mxu0
        %8107 = vmatprep.mubr.f32.mxu0 %v7692
        %8108 = vmatmul.mubr.f32.gmra.mxu0 %v7691
        %v8109 = vpop.f32.mrf.mxu0
        %v8110 = vadd.f32 %v7976, %v8109
        %v8111 = vpop.f32.mrf.mxu0
        %8112 = vmatprep.mubr.f32.mxu0 %v7700
        %8113 = vmatmul.mubr.f32.gmra.mxu0 %v7699
        %v8114 = vpop.f32.mrf.mxu0
        %v8115 = vadd.f32 %v7976, %v8114
        %v8116 = vpop.f32.mrf.mxu0
        %8117 = vmatprep.mubr.f32.mxu0 %v7708
        %8118 = vmatmul.mubr.f32.gmra.mxu0 %v7707
        %v8119 = vpop.f32.mrf.mxu0
        %v8120 = vadd.f32 %v7976, %v8119
        %v8121 = vpop.f32.mrf.mxu0
        %8122 = vdwg.mxu0
        %8123 = vmatprep.subr.mxu0 0.0
        %8124 = vmatpush1.msra.mxu0 %v7890
        %8125 = vmatprep.subr.mxu0 0.0
        %8126 = vmatpush1.msra.mxu0 %v7889
        %8127 = vmatprep.subr.mxu0 0.0
        %8128 = vmatpush1.msra.mxu0 %v7888
        %8129 = vmatprep.subr.mxu0 0.0
        %8130 = vmatpush1.msra.mxu0 %v7887
        %8131 = vmatprep.subr.mxu0 0.0
        %8132 = vmatpush1.msra.mxu0 %v7886
        %8133 = vmatprep.subr.mxu0 0.0
        %8134 = vmatpush1.msra.mxu0 %v7885
        %8135 = vmatprep.subr.mxu0 0.0
        %8136 = vmatpush1.msra.mxu0 %v7884
        %8137 = vmatprep.subr.mxu0 0.0
        %8138 = vmatpush1.msra.mxu0 %v7883
        %8139 = vmatprep.subr.mxu0 0.0
        %8140 = vmatpush1.msra.mxu0 %v7882
        %8141 = vmatprep.subr.mxu0 0.0
        %8142 = vmatpush1.msra.mxu0 %v7881
        %8143 = vmatprep.subr.mxu0 0.0
        %8144 = vmatpush1.msra.mxu0 %v7880
        %8145 = vmatprep.subr.mxu0 0.0
        %8146 = vmatpush1.msra.mxu0 %v7879
        %8147 = vmatprep.subr.mxu0 0.0
        %8148 = vmatpush1.msra.mxu0 %v7878
        %8149 = vmatprep.subr.mxu0 0.0
        %8150 = vmatpush1.msra.mxu0 %v7877
        %8151 = vmatprep.subr.mxu0 0.0
        %8152 = vmatpush1.msra.mxu0 %v7876
        %8153 = vmatprep.subr.mxu0 0.0
        %8154 = vmatpush1.msra.mxu0 %v7875
        %8155 = vmatprep.subr.mxu0 0.0
        %8156 = vmatpush2.msra.mxu0 %v7906
        %8157 = vmatprep.subr.mxu0 0.0
        %8158 = vmatpush2.msra.mxu0 %v7905
        %8159 = vmatprep.subr.mxu0 0.0
        %8160 = vmatpush2.msra.mxu0 %v7904
        %8161 = vmatprep.subr.mxu0 0.0
        %8162 = vmatpush2.msra.mxu0 %v7903
        %8163 = vmatprep.subr.mxu0 0.0
        %8164 = vmatpush2.msra.mxu0 %v7902
        %8165 = vmatprep.subr.mxu0 0.0
        %8166 = vmatpush2.msra.mxu0 %v7901
        %8167 = vmatprep.subr.mxu0 0.0
        %8168 = vmatpush2.msra.mxu0 %v7900
        %8169 = vmatprep.subr.mxu0 0.0
        %8170 = vmatpush2.msra.mxu0 %v7899
        %8171 = vmatprep.subr.mxu0 0.0
        %8172 = vmatpush2.msra.mxu0 %v7898
        %8173 = vmatprep.subr.mxu0 0.0
        %8174 = vmatpush2.msra.mxu0 %v7897
        %8175 = vmatprep.subr.mxu0 0.0
        %8176 = vmatpush2.msra.mxu0 %v7896
        %8177 = vmatprep.subr.mxu0 0.0
        %8178 = vmatpush2.msra.mxu0 %v7895
        %8179 = vmatprep.subr.mxu0 0.0
        %8180 = vmatpush2.msra.mxu0 %v7894
        %8181 = vmatprep.subr.mxu0 0.0
        %8182 = vmatpush2.msra.mxu0 %v7893
        %8183 = vmatprep.subr.mxu0 0.0
        %8184 = vmatpush2.msra.mxu0 %v7892
        %8185 = vmatprep.subr.mxu0 0.0
        %8186 = vmatpush2.msra.mxu0 %v7891
        %8187 = vmatprep.mubr.f32.mxu0 %v7590
        %8188 = vmatmul.mubr.f32.gmra.mxu0 %v7589
        %v8189 = vpop.f32.mrf.mxu0
        %v8190 = vadd.f32 %v8045, %v8189
        %v8191 = vpop.f32.mrf.mxu0
        %8192 = vmatprep.mubr.f32.mxu0 %v7598
        %8193 = vmatmul.mubr.f32.gmra.mxu0 %v7597
        %v8194 = vpop.f32.mrf.mxu0
        %v8195 = vadd.f32 %v8050, %v8194
        %v8196 = vpop.f32.mrf.mxu0
        %8197 = vmatprep.mubr.f32.mxu0 %v7606
        %8198 = vmatmul.mubr.f32.gmra.mxu0 %v7605
        %v8199 = vpop.f32.mrf.mxu0
        %v8200 = vadd.f32 %v8055, %v8199
        %v8201 = vpop.f32.mrf.mxu0
        %8202 = vmatprep.mubr.f32.mxu0 %v7614
        %8203 = vmatmul.mubr.f32.gmra.mxu0 %v7613
        %v8204 = vpop.f32.mrf.mxu0
        %v8205 = vadd.f32 %v8060, %v8204
        %v8206 = vpop.f32.mrf.mxu0
        %8207 = vmatprep.mubr.f32.mxu0 %v7622
        %8208 = vmatmul.mubr.f32.gmra.mxu0 %v7621
        %v8209 = vpop.f32.mrf.mxu0
        %v8210 = vadd.f32 %v8065, %v8209
        %v8211 = vpop.f32.mrf.mxu0
        %8212 = vmatprep.mubr.f32.mxu0 %v7630
        %8213 = vmatmul.mubr.f32.gmra.mxu0 %v7629
        %v8214 = vpop.f32.mrf.mxu0
        %v8215 = vadd.f32 %v8070, %v8214
        %v8216 = vpop.f32.mrf.mxu0
        %8217 = vmatprep.mubr.f32.mxu0 %v7638
        %8218 = vmatmul.mubr.f32.gmra.mxu0 %v7637
        %v8219 = vpop.f32.mrf.mxu0
        %v8220 = vadd.f32 %v8075, %v8219
        %v8221 = vpop.f32.mrf.mxu0
        %8222 = vmatprep.mubr.f32.mxu0 %v7646
        %8223 = vmatmul.mubr.f32.gmra.mxu0 %v7645
        %v8224 = vpop.f32.mrf.mxu0
        %v8225 = vadd.f32 %v8080, %v8224
        %v8226 = vpop.f32.mrf.mxu0
        %8227 = vmatprep.mubr.f32.mxu0 %v7654
        %8228 = vmatmul.mubr.f32.gmra.mxu0 %v7653
        %v8229 = vpop.f32.mrf.mxu0
        %v8230 = vadd.f32 %v8085, %v8229
        %v8231 = vpop.f32.mrf.mxu0
        %8232 = vmatprep.mubr.f32.mxu0 %v7662
        %8233 = vmatmul.mubr.f32.gmra.mxu0 %v7661
        %v8234 = vpop.f32.mrf.mxu0
        %v8235 = vadd.f32 %v8090, %v8234
        %v8236 = vpop.f32.mrf.mxu0
        %8237 = vmatprep.mubr.f32.mxu0 %v7670
        %8238 = vmatmul.mubr.f32.gmra.mxu0 %v7669
        %v8239 = vpop.f32.mrf.mxu0
        %v8240 = vadd.f32 %v8095, %v8239
        %v8241 = vpop.f32.mrf.mxu0
        %8242 = vmatprep.mubr.f32.mxu0 %v7678
        %8243 = vmatmul.mubr.f32.gmra.mxu0 %v7677
        %v8244 = vpop.f32.mrf.mxu0
        %v8245 = vadd.f32 %v8100, %v8244
        %v8246 = vpop.f32.mrf.mxu0
        %8247 = vmatprep.mubr.f32.mxu0 %v7686
        %8248 = vmatmul.mubr.f32.gmra.mxu0 %v7685
        %v8249 = vpop.f32.mrf.mxu0
        %v8250 = vadd.f32 %v8105, %v8249
        %v8251 = vpop.f32.mrf.mxu0
        %8252 = vmatprep.mubr.f32.mxu0 %v7694
        %8253 = vmatmul.mubr.f32.gmra.mxu0 %v7693
        %v8254 = vpop.f32.mrf.mxu0
        %v8255 = vadd.f32 %v8110, %v8254
        %v8256 = vpop.f32.mrf.mxu0
        %8257 = vmatprep.mubr.f32.mxu0 %v7702
        %8258 = vmatmul.mubr.f32.gmra.mxu0 %v7701
        %v8259 = vpop.f32.mrf.mxu0
        %v8260 = vadd.f32 %v8115, %v8259
        %v8261 = vpop.f32.mrf.mxu0
        %8262 = vmatprep.mubr.f32.mxu0 %v7710
        %8263 = vmatmul.mubr.f32.gmra.mxu0 %v7709
        %v8264 = vpop.f32.mrf.mxu0
        %v8265 = vadd.f32 %v8120, %v8264
        %v8266 = vpop.f32.mrf.mxu0
        %8267 = vdwg.mxu0
        %8268 = vmatprep.subr.mxu0 0.0
        %8269 = vmatpush1.msra.mxu0 %v7922
        %8270 = vmatprep.subr.mxu0 0.0
        %8271 = vmatpush1.msra.mxu0 %v7921
        %8272 = vmatprep.subr.mxu0 0.0
        %8273 = vmatpush1.msra.mxu0 %v7920
        %8274 = vmatprep.subr.mxu0 0.0
        %8275 = vmatpush1.msra.mxu0 %v7919
        %8276 = vmatprep.subr.mxu0 0.0
        %8277 = vmatpush1.msra.mxu0 %v7918
        %8278 = vmatprep.subr.mxu0 0.0
        %8279 = vmatpush1.msra.mxu0 %v7917
        %8280 = vmatprep.subr.mxu0 0.0
        %8281 = vmatpush1.msra.mxu0 %v7916
        %8282 = vmatprep.subr.mxu0 0.0
        %8283 = vmatpush1.msra.mxu0 %v7915
        %8284 = vmatprep.subr.mxu0 0.0
        %8285 = vmatpush1.msra.mxu0 %v7914
        %8286 = vmatprep.subr.mxu0 0.0
        %8287 = vmatpush1.msra.mxu0 %v7913
        %8288 = vmatprep.subr.mxu0 0.0
        %8289 = vmatpush1.msra.mxu0 %v7912
        %8290 = vmatprep.subr.mxu0 0.0
        %8291 = vmatpush1.msra.mxu0 %v7911
        %8292 = vmatprep.subr.mxu0 0.0
        %8293 = vmatpush1.msra.mxu0 %v7910
        %8294 = vmatprep.subr.mxu0 0.0
        %8295 = vmatpush1.msra.mxu0 %v7909
        %8296 = vmatprep.subr.mxu0 0.0
        %8297 = vmatpush1.msra.mxu0 %v7908
        %8298 = vmatprep.subr.mxu0 0.0
        %8299 = vmatpush1.msra.mxu0 %v7907
        %8300 = vmatprep.subr.mxu0 0.0
        %8301 = vmatpush2.msra.mxu0 %v7938
        %8302 = vmatprep.subr.mxu0 0.0
        %8303 = vmatpush2.msra.mxu0 %v7937
        %8304 = vmatprep.subr.mxu0 0.0
        %8305 = vmatpush2.msra.mxu0 %v7936
        %8306 = vmatprep.subr.mxu0 0.0
        %8307 = vmatpush2.msra.mxu0 %v7935
        %8308 = vmatprep.subr.mxu0 0.0
        %8309 = vmatpush2.msra.mxu0 %v7934
        %8310 = vmatprep.subr.mxu0 0.0
        %8311 = vmatpush2.msra.mxu0 %v7933
        %8312 = vmatprep.subr.mxu0 0.0
        %8313 = vmatpush2.msra.mxu0 %v7932
        %8314 = vmatprep.subr.mxu0 0.0
        %8315 = vmatpush2.msra.mxu0 %v7931
        %8316 = vmatprep.subr.mxu0 0.0
        %8317 = vmatpush2.msra.mxu0 %v7930
        %8318 = vmatprep.subr.mxu0 0.0
        %8319 = vmatpush2.msra.mxu0 %v7929
        %8320 = vmatprep.subr.mxu0 0.0
        %8321 = vmatpush2.msra.mxu0 %v7928
        %8322 = vmatprep.subr.mxu0 0.0
        %8323 = vmatpush2.msra.mxu0 %v7927
        %8324 = vmatprep.subr.mxu0 0.0
        %8325 = vmatpush2.msra.mxu0 %v7926
        %8326 = vmatprep.subr.mxu0 0.0
        %8327 = vmatpush2.msra.mxu0 %v7925
        %8328 = vmatprep.subr.mxu0 0.0
        %8329 = vmatpush2.msra.mxu0 %v7924
        %8330 = vmatprep.subr.mxu0 0.0
        %8331 = vmatpush2.msra.mxu0 %v7923
        %8332 = vmatprep.mubr.f32.mxu0 %v7592
        %8333 = vmatmul.mubr.f32.gmra.mxu0 %v7591
        %v8334 = vpop.f32.mrf.mxu0
        %v8335 = vadd.f32 %v8190, %v8334
        %v8336 = vpop.f32.mrf.mxu0
        %8337 = vmatprep.mubr.f32.mxu0 %v7600
        %8338 = vmatmul.mubr.f32.gmra.mxu0 %v7599
        %v8339 = vpop.f32.mrf.mxu0
        %v8340 = vadd.f32 %v8195, %v8339
        %v8341 = vpop.f32.mrf.mxu0
        %8342 = vmatprep.mubr.f32.mxu0 %v7608
        %8343 = vmatmul.mubr.f32.gmra.mxu0 %v7607
        %v8344 = vpop.f32.mrf.mxu0
        %v8345 = vadd.f32 %v8200, %v8344
        %v8346 = vpop.f32.mrf.mxu0
        %8347 = vmatprep.mubr.f32.mxu0 %v7616
        %8348 = vmatmul.mubr.f32.gmra.mxu0 %v7615
        %v8349 = vpop.f32.mrf.mxu0
        %v8350 = vadd.f32 %v8205, %v8349
        %v8351 = vpop.f32.mrf.mxu0
        %8352 = vmatprep.mubr.f32.mxu0 %v7624
        %8353 = vmatmul.mubr.f32.gmra.mxu0 %v7623
        %v8354 = vpop.f32.mrf.mxu0
        %v8355 = vadd.f32 %v8210, %v8354
        %v8356 = vpop.f32.mrf.mxu0
        %8357 = vmatprep.mubr.f32.mxu0 %v7632
        %8358 = vmatmul.mubr.f32.gmra.mxu0 %v7631
        %v8359 = vpop.f32.mrf.mxu0
        %v8360 = vadd.f32 %v8215, %v8359
        %v8361 = vpop.f32.mrf.mxu0
        %8362 = vmatprep.mubr.f32.mxu0 %v7640
        %8363 = vmatmul.mubr.f32.gmra.mxu0 %v7639
        %v8364 = vpop.f32.mrf.mxu0
        %v8365 = vadd.f32 %v8220, %v8364
        %v8366 = vpop.f32.mrf.mxu0
        %8367 = vmatprep.mubr.f32.mxu0 %v7648
        %8368 = vmatmul.mubr.f32.gmra.mxu0 %v7647
        %v8369 = vpop.f32.mrf.mxu0
        %v8370 = vadd.f32 %v8225, %v8369
        %v8371 = vpop.f32.mrf.mxu0
        %8372 = vmatprep.mubr.f32.mxu0 %v7656
        %8373 = vmatmul.mubr.f32.gmra.mxu0 %v7655
        %v8374 = vpop.f32.mrf.mxu0
        %v8375 = vadd.f32 %v8230, %v8374
        %v8376 = vpop.f32.mrf.mxu0
        %8377 = vmatprep.mubr.f32.mxu0 %v7664
        %8378 = vmatmul.mubr.f32.gmra.mxu0 %v7663
        %v8379 = vpop.f32.mrf.mxu0
        %v8380 = vadd.f32 %v8235, %v8379
        %v8381 = vpop.f32.mrf.mxu0
        %8382 = vmatprep.mubr.f32.mxu0 %v7672
        %8383 = vmatmul.mubr.f32.gmra.mxu0 %v7671
        %v8384 = vpop.f32.mrf.mxu0
        %v8385 = vadd.f32 %v8240, %v8384
        %v8386 = vpop.f32.mrf.mxu0
        %8387 = vmatprep.mubr.f32.mxu0 %v7680
        %8388 = vmatmul.mubr.f32.gmra.mxu0 %v7679
        %v8389 = vpop.f32.mrf.mxu0
        %v8390 = vadd.f32 %v8245, %v8389
        %v8391 = vpop.f32.mrf.mxu0
        %8392 = vmatprep.mubr.f32.mxu0 %v7688
        %8393 = vmatmul.mubr.f32.gmra.mxu0 %v7687
        %v8394 = vpop.f32.mrf.mxu0
        %v8395 = vadd.f32 %v8250, %v8394
        %v8396 = vpop.f32.mrf.mxu0
        %8397 = vmatprep.mubr.f32.mxu0 %v7696
        %8398 = vmatmul.mubr.f32.gmra.mxu0 %v7695
        %v8399 = vpop.f32.mrf.mxu0
        %v8400 = vadd.f32 %v8255, %v8399
        %v8401 = vpop.f32.mrf.mxu0
        %8402 = vmatprep.mubr.f32.mxu0 %v7704
        %8403 = vmatmul.mubr.f32.gmra.mxu0 %v7703
        %v8404 = vpop.f32.mrf.mxu0
        %v8405 = vadd.f32 %v8260, %v8404
        %v8406 = vpop.f32.mrf.mxu0
        %8407 = vmatprep.mubr.f32.mxu0 %v7712
        %8408 = vmatmul.mubr.f32.gmra.mxu0 %v7711
        %v8409 = vpop.f32.mrf.mxu0
        %v8410 = vadd.f32 %v8265, %v8409
        %v8411 = vpop.f32.mrf.mxu0
        %8412 = vdwg.mxu0
        %8413 = vmatprep.subr.mxu0 0.0
        %8414 = vmatpush1.msra.mxu0 %v7954
        %8415 = vmatprep.subr.mxu0 0.0
        %8416 = vmatpush1.msra.mxu0 %v7953
        %8417 = vmatprep.subr.mxu0 0.0
        %8418 = vmatpush1.msra.mxu0 %v7952
        %8419 = vmatprep.subr.mxu0 0.0
        %8420 = vmatpush1.msra.mxu0 %v7951
        %8421 = vmatprep.subr.mxu0 0.0
        %8422 = vmatpush1.msra.mxu0 %v7950
        %8423 = vmatprep.subr.mxu0 0.0
        %8424 = vmatpush1.msra.mxu0 %v7949
        %8425 = vmatprep.subr.mxu0 0.0
        %8426 = vmatpush1.msra.mxu0 %v7948
        %8427 = vmatprep.subr.mxu0 0.0
        %8428 = vmatpush1.msra.mxu0 %v7947
        %8429 = vmatprep.subr.mxu0 0.0
        %8430 = vmatpush1.msra.mxu0 %v7946
        %8431 = vmatprep.subr.mxu0 0.0
        %8432 = vmatpush1.msra.mxu0 %v7945
        %8433 = vmatprep.subr.mxu0 0.0
        %8434 = vmatpush1.msra.mxu0 %v7944
        %8435 = vmatprep.subr.mxu0 0.0
        %8436 = vmatpush1.msra.mxu0 %v7943
        %8437 = vmatprep.subr.mxu0 0.0
        %8438 = vmatpush1.msra.mxu0 %v7942
        %8439 = vmatprep.subr.mxu0 0.0
        %8440 = vmatpush1.msra.mxu0 %v7941
        %8441 = vmatprep.subr.mxu0 0.0
        %8442 = vmatpush1.msra.mxu0 %v7940
        %8443 = vmatprep.subr.mxu0 0.0
        %8444 = vmatpush1.msra.mxu0 %v7939
        %8445 = vmatprep.subr.mxu0 0.0
        %8446 = vmatpush2.msra.mxu0 %v7970
        %8447 = vmatprep.subr.mxu0 0.0
        %8448 = vmatpush2.msra.mxu0 %v7969
        %8449 = vmatprep.subr.mxu0 0.0
        %8450 = vmatpush2.msra.mxu0 %v7968
        %8451 = vmatprep.subr.mxu0 0.0
        %8452 = vmatpush2.msra.mxu0 %v7967
        %8453 = vmatprep.subr.mxu0 0.0
        %8454 = vmatpush2.msra.mxu0 %v7966
        %8455 = vmatprep.subr.mxu0 0.0
        %8456 = vmatpush2.msra.mxu0 %v7965
        %8457 = vmatprep.subr.mxu0 0.0
        %8458 = vmatpush2.msra.mxu0 %v7964
        %8459 = vmatprep.subr.mxu0 0.0
        %8460 = vmatpush2.msra.mxu0 %v7963
        %8461 = vmatprep.subr.mxu0 0.0
        %8462 = vmatpush2.msra.mxu0 %v7962
        %8463 = vmatprep.subr.mxu0 0.0
        %8464 = vmatpush2.msra.mxu0 %v7961
        %8465 = vmatprep.subr.mxu0 0.0
        %8466 = vmatpush2.msra.mxu0 %v7960
        %8467 = vmatprep.subr.mxu0 0.0
        %8468 = vmatpush2.msra.mxu0 %v7959
        %8469 = vmatprep.subr.mxu0 0.0
        %8470 = vmatpush2.msra.mxu0 %v7958
        %8471 = vmatprep.subr.mxu0 0.0
        %8472 = vmatpush2.msra.mxu0 %v7957
        %8473 = vmatprep.subr.mxu0 0.0
        %8474 = vmatpush2.msra.mxu0 %v7956
        %8475 = vmatprep.subr.mxu0 0.0
        %8476 = vmatpush2.msra.mxu0 %v7955
        %8477 = vmatprep.mubr.f32.mxu0 %v7594
        %8478 = vmatmul.mubr.f32.gmra.mxu0 %v7593
        %v8479 = vpop.f32.mrf.mxu0
        %v8480 = vadd.f32 %v8335, %v8479
        %v8481 = vpop.f32.mrf.mxu0
        %8482 = vmatprep.mubr.f32.mxu0 %v7602
        %8483 = vmatmul.mubr.f32.gmra.mxu0 %v7601
        %v8484 = vpop.f32.mrf.mxu0
        %v8485 = vadd.f32 %v8340, %v8484
        %v8486 = vpop.f32.mrf.mxu0
        %8487 = vmatprep.mubr.f32.mxu0 %v7610
        %8488 = vmatmul.mubr.f32.gmra.mxu0 %v7609
        %v8489 = vpop.f32.mrf.mxu0
        %v8490 = vadd.f32 %v8345, %v8489
        %v8491 = vpop.f32.mrf.mxu0
        %8492 = vmatprep.mubr.f32.mxu0 %v7618
        %8493 = vmatmul.mubr.f32.gmra.mxu0 %v7617
        %v8494 = vpop.f32.mrf.mxu0
        %v8495 = vadd.f32 %v8350, %v8494
        %v8496 = vpop.f32.mrf.mxu0
        %8497 = vmatprep.mubr.f32.mxu0 %v7626
        %8498 = vmatmul.mubr.f32.gmra.mxu0 %v7625
        %v8499 = vpop.f32.mrf.mxu0
        %v8500 = vadd.f32 %v8355, %v8499
        %v8501 = vpop.f32.mrf.mxu0
        %8502 = vmatprep.mubr.f32.mxu0 %v7634
        %8503 = vmatmul.mubr.f32.gmra.mxu0 %v7633
        %v8504 = vpop.f32.mrf.mxu0
        %v8505 = vadd.f32 %v8360, %v8504
        %v8506 = vpop.f32.mrf.mxu0
        %8507 = vmatprep.mubr.f32.mxu0 %v7642
        %8508 = vmatmul.mubr.f32.gmra.mxu0 %v7641
        %v8509 = vpop.f32.mrf.mxu0
        %v8510 = vadd.f32 %v8365, %v8509
        %v8511 = vpop.f32.mrf.mxu0
        %8512 = vmatprep.mubr.f32.mxu0 %v7650
        %8513 = vmatmul.mubr.f32.gmra.mxu0 %v7649
        %v8514 = vpop.f32.mrf.mxu0
        %v8515 = vadd.f32 %v8370, %v8514
        %v8516 = vpop.f32.mrf.mxu0
        %8517 = vmatprep.mubr.f32.mxu0 %v7658
        %8518 = vmatmul.mubr.f32.gmra.mxu0 %v7657
        %v8519 = vpop.f32.mrf.mxu0
        %v8520 = vadd.f32 %v8375, %v8519
        %v8521 = vpop.f32.mrf.mxu0
        %8522 = vmatprep.mubr.f32.mxu0 %v7666
        %8523 = vmatmul.mubr.f32.gmra.mxu0 %v7665
        %v8524 = vpop.f32.mrf.mxu0
        %v8525 = vadd.f32 %v8380, %v8524
        %v8526 = vpop.f32.mrf.mxu0
        %8527 = vmatprep.mubr.f32.mxu0 %v7674
        %8528 = vmatmul.mubr.f32.gmra.mxu0 %v7673
        %v8529 = vpop.f32.mrf.mxu0
        %v8530 = vadd.f32 %v8385, %v8529
        %v8531 = vpop.f32.mrf.mxu0
        %8532 = vmatprep.mubr.f32.mxu0 %v7682
        %8533 = vmatmul.mubr.f32.gmra.mxu0 %v7681
        %v8534 = vpop.f32.mrf.mxu0
        %v8535 = vadd.f32 %v8390, %v8534
        %v8536 = vpop.f32.mrf.mxu0
        %8537 = vmatprep.mubr.f32.mxu0 %v7690
        %8538 = vmatmul.mubr.f32.gmra.mxu0 %v7689
        %v8539 = vpop.f32.mrf.mxu0
        %v8540 = vadd.f32 %v8395, %v8539
        %v8541 = vpop.f32.mrf.mxu0
        %8542 = vmatprep.mubr.f32.mxu0 %v7698
        %8543 = vmatmul.mubr.f32.gmra.mxu0 %v7697
        %v8544 = vpop.f32.mrf.mxu0
        %v8545 = vadd.f32 %v8400, %v8544
        %v8546 = vpop.f32.mrf.mxu0
        %8547 = vmatprep.mubr.f32.mxu0 %v7706
        %8548 = vmatmul.mubr.f32.gmra.mxu0 %v7705
        %v8549 = vpop.f32.mrf.mxu0
        %v8550 = vadd.f32 %v8405, %v8549
        %v8551 = vpop.f32.mrf.mxu0
        %8552 = vmatprep.mubr.f32.mxu0 %v7714
        %8553 = vmatmul.mubr.f32.gmra.mxu0 %v7713
        %v8554 = vpop.f32.mrf.mxu0
        %v8555 = vadd.f32 %v8410, %v8554
        %v8556 = vpop.f32.mrf.mxu0
        %8557 = vdwg.mxu0
        %8558 = vst [vmem:[%s410] sm:$0xff] %v8480
        %8559 = vst [vmem:[%s410 + $0x8] sm:$0xff] %v8485
        %8560 = vst [vmem:[%s410 + $0x10] sm:$0xff] %v8490
        %8561 = vst [vmem:[%s410 + $0x18] sm:$0xff] %v8495
        %8562 = vst [vmem:[%s410 + $0x20] sm:$0xff] %v8500
        %8563 = vst [vmem:[%s410 + $0x28] sm:$0xff] %v8505
        %8564 = vst [vmem:[%s410 + $0x30] sm:$0xff] %v8510
        %8565 = vst [vmem:[%s410 + $0x38] sm:$0xff] %v8515
        %8566 = vst [vmem:[%s410 + $0x40] sm:$0xff] %v8520
        %8567 = vst [vmem:[%s410 + $0x48] sm:$0xff] %v8525
        %8568 = vst [vmem:[%s410 + $0x50] sm:$0xff] %v8530
        %8569 = vst [vmem:[%s410 + $0x58] sm:$0xff] %v8535
        %8570 = vst [vmem:[%s410 + $0x60] sm:$0xff] %v8540
        %8571 = vst [vmem:[%s410 + $0x68] sm:$0xff] %v8545
        %8572 = vst [vmem:[%s410 + $0x70] sm:$0xff] %v8550
        %8573 = vst [vmem:[%s410 + $0x78] sm:$0xff] %v8555
        %s8574 = sand.u32 %s191, 1
        %s8575 = scalar_lea.sflag [#allocation4], %s8574
        %s8576 = sand.u32 %s191, 1
        %s8577 = smul.addr %s8576, 128
        %s8578 = scalar_lea.vmem [#allocation11], %s8577
        %s8579 = sand.u32 %s217, 1
        %s8580 = scalar_lea.sflag [#allocation13], %s8579
        %s8581 = sand.u32 %s217, 1
        %s8582 = smul.addr %s8581, 1024
        %s8583 = scalar_lea.vmem [#allocation12], %s8582
        // Predicated region
        $region69: #{tpu_custom_call.1} parent=47 // pred_check
          %p8584 = pneg %p201
        $region70: #{tpu_custom_call.1} parent=47 // pred_check_branch
          %8586 = sbr.rel (%p8584) target = $region72
        $region71: #{tpu_custom_call.1} parent=47 // pred_region
          %s8587 = smul.u32 16, %s31
          %s8589 = ssub.s32 2048, 2048
          %8590 = vsyncadd %s8575, %s8589
          %s8591 = smul.addr %s8587, 128
          %s8592 = scalar_lea.hbm %s7, %s8591
          %s8593 = sshll.u32 %s8578, 4
          %s8594 = int_to_ptr.vmem [resolvable:$true] %s8593
          %8599 = dma.vmem_to_hbm [thread:$0]  %s8594, 2048, %s8592, %s8575, 128, 128, 8
        $region72: #{tpu_custom_call.1} parent=47 // pred_fallthru
          _
        // Predicated region
        $region73: #{tpu_custom_call.1} parent=47 // pred_check
          %p8600 = pneg %p227
        $region74: #{tpu_custom_call.1} parent=47 // pred_check_branch
          %8602 = sbr.rel (%p8600) target = $region76
        $region75: #{tpu_custom_call.1} parent=47 // pred_region
          %s8603 = smul.u32 16, %s31
          %s8605 = ssub.s32 16384, 16384
          %8606 = vsyncadd %s8580, %s8605
          %s8607 = smul.addr %s8603, 8
          %s8608 = smul.addr %s8607, 128
          %s8609 = scalar_lea.hbm %s8, %s8608
          %s8610 = sshll.u32 %s8583, 4
          %s8611 = int_to_ptr.vmem [resolvable:$true] %s8610
          %8616 = dma.vmem_to_hbm [thread:$0]  %s8611, 16384, %s8609, %s8580, 1024, 1024, 64
        $region76: #{tpu_custom_call.1} parent=47 // pred_fallthru
          _
      $region48: #{tpu_custom_call.1} parent=5 // pred_fallthru
        _
      %p8617 = scmp.le.s32.totalorder 2, %s26
      // Predicated region
      $region77: #{tpu_custom_call.1} parent=5 // pred_check
        %p8618 = pneg %p8617
      $region78: #{tpu_custom_call.1} parent=5 // pred_check_branch
        %8620 = sbr.rel (%p8618) target = $region80
      $region79: #{tpu_custom_call.1} parent=5 // pred_region
        %s8621 = ssub.s32 %s26, 2
        // Predicated region
        $region81: #{tpu_custom_call.1} parent=79 // pred_check
          %p8622 = pneg %p207
        $region82: #{tpu_custom_call.1} parent=79 // pred_check_branch
          %8624 = sbr.rel (%p8622) target = $region84
        $region83: #{tpu_custom_call.1} parent=79 // pred_region
          %s8625 = sand.u32 %s192, 1
          %s8626 = scalar_lea.sflag [#allocation4], %s8625
          %s8627 = sand.u32 %s192, 1
          %s8628 = smul.addr %s8627, 128
          %s8629 = scalar_lea.vmem [#allocation11], %s8628
          %8630 = dma.done %s8626, 2048
        $region84: #{tpu_custom_call.1} parent=79 // pred_fallthru
          _
        // Predicated region
        $region85: #{tpu_custom_call.1} parent=79 // pred_check
          %p8631 = pneg %p233
        $region86: #{tpu_custom_call.1} parent=79 // pred_check_branch
          %8633 = sbr.rel (%p8631) target = $region88
        $region87: #{tpu_custom_call.1} parent=79 // pred_region
          %s8634 = sand.u32 %s218, 1
          %s8635 = scalar_lea.sflag [#allocation13], %s8634
          %s8636 = sand.u32 %s218, 1
          %s8637 = smul.addr %s8636, 1024
          %s8638 = scalar_lea.vmem [#allocation12], %s8637
          %8639 = dma.done %s8635, 16384
        $region88: #{tpu_custom_call.1} parent=79 // pred_fallthru
          _
      $region80: #{tpu_custom_call.1} parent=5 // pred_fallthru
        _
    $region6: #{tpu_custom_call.1} parent=1 // loop_footer
      %s30 = sadd.s32 1, %s26
    $region7: #{tpu_custom_call.1} parent=1 // loop_footer_branch
      %25 = sbr.rel target = $region3
    $region8: #{tpu_custom_call.1} parent=1 // loop_exit
      _
    %8640 = vsyncpa [#allocation3], 1
    %s8641 = scalar_lea.sflag [#allocation3], 1
    %8642 = vsyncpa %s8641, 1
    %8643 = vsyncpa [#allocation6], 1
    %8644 = vsyncpa [#allocation9], 1
    %8645 = vsyncpa [#allocation4], 1
    %s8646 = scalar_lea.sflag [#allocation4], 1
    %8647 = vsyncpa %s8646, 1
    %8648 = vsyncpa [#allocation13], 1
    %s8649 = scalar_lea.sflag [#allocation13], 1
    %8650 = vsyncpa %s8649, 1

</llo_original>
